<compile_context>
chip_gen: v5e
topology: v5e:2x2
jax: 0.10.0
libtpu: 0.0.40
codegen_flags: <defaults>
</compile_context>

<pallas_src>
import jax
import jax.numpy as jnp
from jax.experimental import pallas as pl
from jax.experimental.pallas import tpu as pltpu

# Small shapes consistent with the module's forward (x: [batch, max_seq_len]).
B = 2            # logical batch size
BP = 8           # batch padded to a full sublane tile inside the kernel
T = 6            # max_seq_len
V = 16           # vocab_size
E = 32           # embed_dim
H = 32           # lstm_units  (4*H = 128 -> fused gates fill one lane vreg)
LAT = 16         # latent_dim
L = 5            # LSTM layers
WIDE = 4 * H     # 128: fused gate width == universal padded feature/lane width

assert WIDE == 128 and E <= WIDE and H <= WIDE and 2 * LAT <= WIDE and V <= WIDE


# ----------------------------- kernel helpers ------------------------------
def _lstm_layer(xproj, whh_bf, g_scale, g_off, ys_ref, *, const_input=False):
    """One LSTM layer over T steps.

    xproj: [T*BP, WIDE] f32 pre-computed input projection (+bias), or
           [BP, WIDE] when const_input=True (identical input every step).
    whh_bf: [WIDE, WIDE] bf16 recurrent weights, rows >= H exactly zero.
    Writes the 128-lane-wide hidden state of every step into ys_ref (f32) and
    returns the final hidden state as bf16 [BP, WIDE].
    """
    h_bf = jnp.zeros((BP, WIDE), jnp.bfloat16)
    c = jnp.zeros((BP, WIDE), jnp.float32)   # only lanes [0, H) are meaningful
    for t in range(T):
        xp_t = xproj if const_input else xproj[t * BP:(t + 1) * BP, :]
        # Recurrent MXU pass: bf16 x bf16, f32 accumulate; zero rows >= H of
        # Whh make the junk lanes of h_bf harmless.
        gates = xp_t + jnp.dot(h_bf, whh_bf, preferred_element_type=jnp.float32)
        # One EUP pass: sigmoid everywhere; tanh on the g band via
        # 2*sigmoid(2x) - 1 (the factor 2 is pre-folded into the weights).
        act = jax.nn.sigmoid(gates) * g_scale + g_off
        # XLU rolls align the f/g/o bands with the i band (lanes [0, H)).
        f_a = pltpu.roll(act, shift=3 * H, axis=1)
        g_a = pltpu.roll(act, shift=2 * H, axis=1)
        o_a = pltpu.roll(act, shift=H, axis=1)
        c = f_a * c + act * g_a               # lanes [0, H) hold the true cell
        h_f32 = o_a * jnp.tanh(c)             # 128-lane-wide hidden state
        ys_ref[pl.ds(t * BP, BP), :] = h_f32  # 8-row, lane-dense f32 store
        h_bf = h_f32.astype(jnp.bfloat16)     # bf16 feed-back for the MXU
    return h_bf


def _lstm_stack(x0_bf, wih_ref, whh_ref, b_ref, g_scale, g_off, ys_ref,
                *, const_l0):
    """5-layer stacked LSTM; per-layer weights sliced from the VMEM refs.

    Layer 0 reads x0_bf (kernel input / constant decoder input); layers >= 1
    read the previous layer's wide hidden states back out of ys_ref.
    """
    xproj0 = (jnp.dot(x0_bf, wih_ref[0], preferred_element_type=jnp.float32)
              + b_ref[0])
    h_last = _lstm_layer(xproj0, whh_ref[0], g_scale, g_off, ys_ref,
                         const_input=const_l0)
    for layer in range(1, L):
        xs_bf = ys_ref[...].astype(jnp.bfloat16)          # [T*BP, WIDE]
        xproj = (jnp.dot(xs_bf, wih_ref[layer],
                         preferred_element_type=jnp.float32) + b_ref[layer])
        h_last = _lstm_layer(xproj, whh_ref[layer], g_scale, g_off, ys_ref)
    # TODO(synk): inter-layer dropout (p=0.3) is train-only; eval semantics.
    return h_last


# --------------------------------- kernel ----------------------------------
def taxon_vae_kernel(x_ref, eps_ref,
                     enc_wih_ref, enc_whh_ref, enc_b_ref,
                     zstat_w_ref, zstat_b_ref,
                     rep_w_ref, rep_b_ref,
                     dec_wih_ref, dec_whh_ref, dec_b_ref,
                     out_w_ref, out_b_ref,
                     logits_ref, zstat_ref,
                     ys_ref):
    # Hoisted per-lane gate constants (tanh-on-g-band via scaled sigmoid).
    lane = jax.lax.broadcasted_iota(jnp.int32, (BP, WIDE), 1)
    g_band = (lane >= 2 * H) & (lane < 3 * H)
    g_scale = jnp.where(g_band, 2.0, 1.0)
    g_off = jnp.where(g_band, -1.0, 0.0)

    # ---- encoder: 5-layer LSTM, keep final hidden state of the last layer ----
    h_last = _lstm_stack(x_ref[...], enc_wih_ref, enc_whh_ref, enc_b_ref,
                         g_scale, g_off, ys_ref, const_l0=False)   # [BP, WIDE] bf16

    # z_mean (lanes [0,LAT)) and z_log_var (lanes [LAT,2LAT)) in one lane-dense
    # matmul + store; zero rows >= H of zstat_w kill the wide-h junk lanes.
    zstats = (jnp.dot(h_last, zstat_w_ref[...],
                      preferred_element_type=jnp.float32) + zstat_b_ref[...])
    zstat_ref[...] = zstats

    # ---- reparameterize (stays 128 lanes wide): z = mu + eps * exp(0.5*logvar)
    zlv = pltpu.roll(zstats, shift=WIDE - LAT, axis=1)   # z_log_var -> lanes [0,LAT)
    z_wide = zstats + eps_ref[...] * jnp.exp(0.5 * zlv)  # lanes >= LAT are junk
    # rep_w rows >= LAT are zero, so the junk lanes never leak.
    h_init = (jnp.dot(z_wide.astype(jnp.bfloat16), rep_w_ref[...],
                      preferred_element_type=jnp.float32) + rep_b_ref[...])

    # ---- decoder: repeat_vector(z) is a constant input for all T steps ----
    _lstm_stack(h_init.astype(jnp.bfloat16), dec_wih_ref, dec_whh_ref, dec_b_ref,
                g_scale, g_off, ys_ref, const_l0=True)

    # ---- fused output projection: one matmul, one lane-dense store (raw logits)
    dec_seq = ys_ref[...].astype(jnp.bfloat16)                     # [T*BP, WIDE]
    logits_ref[...] = (jnp.dot(dec_seq, out_w_ref[...],
                               preferred_element_type=jnp.float32)
                       + out_b_ref[...])


# --------------------------------- wrapper ----------------------------------
@jax.jit
def taxon_vae_forward(token_ids, kparams, eps):
    """token_ids: [B, T] int32, eps: [B, LAT] -> (logits [B,T,V], z_mean, z_log_var)."""
    # Embedding gather (bf16 table, cols >= E zero, row 0 zero) - plain-JAX glue.
    emb = kparams["emb"][token_ids]                                # [B, T, WIDE] bf16
    emb_p = jnp.pad(emb, ((0, BP - B), (0, 0), (0, 0)))
    x_tm = emb_p.transpose(1, 0, 2).reshape(T * BP, WIDE)          # time-major
    eps_w = jnp.pad(eps.astype(jnp.float32),
                    ((0, BP - B), (0, WIDE - LAT)))                # [BP, WIDE]

    vmem = pl.BlockSpec(memory_space=pltpu.MemorySpace.VMEM)
    out_shapes = (
        jax.ShapeDtypeStruct((T * BP, WIDE), jnp.float32),   # logits, time-major, padded lanes
        jax.ShapeDtypeStruct((BP, WIDE), jnp.float32),       # [z_mean | z_log_var | 0...]
    )
    logits_w, zstats = pl.pallas_call(
        taxon_vae_kernel,
        out_shape=out_shapes,
        in_specs=[vmem] * 14,
        out_specs=(vmem, vmem),
        scratch_shapes=[pltpu.VMEM((T * BP, WIDE), jnp.float32)],  # per-layer ys
    )(x_tm, eps_w,
      kparams["enc_wih"], kparams["enc_whh"], kparams["enc_b"],
      kparams["zstat_w"], kparams["zstat_b"],
      kparams["rep_w"], kparams["rep_b"],
      kparams["dec_wih"], kparams["dec_whh"], kparams["dec_b"],
      kparams["out_w"], kparams["out_b"])

    logits = logits_w.reshape(T, BP, WIDE).transpose(1, 0, 2)[:B, :, :V]
    return logits, zstats[:B, :LAT], zstats[:B, LAT:2 * LAT]


# --------------------------- parameter preparation ---------------------------
def init_params(key):
    """Natural (PyTorch-equivalent) f32 parameters."""
    ks = jax.random.split(key, 15)

    def nrm(k, shape, scale=0.1):
        return scale * jax.random.normal(k, shape, dtype=jnp.float32)

    emb = nrm(ks[0], (V, E))
    emb = emb.at[0].set(0.0)                     # nn.Embedding padding_idx=0
    return dict(
        embedding=emb,
        enc_wih=nrm(ks[1], (L, E, 4 * H)),       # W_ih^T per layer (i,f,g,o)
        enc_whh=nrm(ks[2], (L, H, 4 * H)),       # W_hh^T per layer
        enc_b=nrm(ks[3], (L, 1, 4 * H)),         # b_ih + b_hh
        zm_w=nrm(ks[4], (H, LAT)),
        zm_b=nrm(ks[5], (1, LAT)),
        zv_w=nrm(ks[6], (H, LAT)),
        zv_b=nrm(ks[7], (1, LAT)),
        rep_w=nrm(ks[8], (LAT, E)),
        rep_b=nrm(ks[9], (1, E)),
        dec_wih=nrm(ks[10], (L, E, 4 * H)),
        dec_whh=nrm(ks[11], (L, H, 4 * H)),
        dec_b=nrm(ks[12], (L, 1, 4 * H)),
        out_w=nrm(ks[13], (H, V)),
        out_b=nrm(ks[14], (1, V)),
    )


def prepare_params(p):
    """Pad / pre-scale / cast the natural params into the kernel's MXU layout.

    * g-band columns (cols [2H,3H)) of Wih/Whh/b scaled by 2 (tanh = 2*sigmoid(2x)-1;
      the factor 2 is exact in bf16).
    * Row dims zero-padded to WIDE=128 so the wide 128-lane hidden state can be
      fed back / forward without any lane slicing (junk lanes hit zero rows).
    * Matmul weights cast to bf16 (f32 accumulation in-kernel); biases stay f32.
    """
    f32, bf16 = jnp.float32, jnp.bfloat16

    def prep_stack(wih, whh, b):
        wih = wih.at[:, :, 2 * H:3 * H].multiply(2.0)
        whh = whh.at[:, :, 2 * H:3 * H].multiply(2.0)
        b = b.at[:, :, 2 * H:3 * H].multiply(2.0)
        wih = jnp.pad(wih, ((0, 0), (0, WIDE - wih.shape[1]), (0, 0)))
        whh = jnp.pad(whh, ((0, 0), (0, WIDE - whh.shape[1]), (0, 0)))
        return wih.astype(bf16), whh.astype(bf16), b.astype(f32)

    enc_wih, enc_whh, enc_b = prep_stack(p["enc_wih"], p["enc_whh"], p["enc_b"])
    dec_wih, dec_whh, dec_b = prep_stack(p["dec_wih"], p["dec_whh"], p["dec_b"])

    zstat_w = (jnp.zeros((WIDE, WIDE), f32)
               .at[:H, :LAT].set(p["zm_w"])
               .at[:H, LAT:2 * LAT].set(p["zv_w"]))
    zstat_b = (jnp.zeros((1, WIDE), f32)
               .at[:, :LAT].set(p["zm_b"])
               .at[:, LAT:2 * LAT].set(p["zv_b"]))

    rep_w = jnp.zeros((WIDE, WIDE), f32).at[:LAT, :E].set(p["rep_w"])
    rep_b = jnp.zeros((1, WIDE), f32).at[:, :E].set(p["rep_b"])

    out_w = jnp.zeros((WIDE, WIDE), f32).at[:H, :V].set(p["out_w"])
    out_b = jnp.zeros((1, WIDE), f32).at[:, :V].set(p["out_b"])

    emb = jnp.pad(p["embedding"], ((0, 0), (0, WIDE - E)))

    return dict(
        emb=emb.astype(bf16),
        enc_wih=enc_wih, enc_whh=enc_whh, enc_b=enc_b,
        zstat_w=zstat_w.astype(bf16), zstat_b=zstat_b,
        rep_w=rep_w.astype(bf16), rep_b=rep_b,
        dec_wih=dec_wih, dec_whh=dec_whh, dec_b=dec_b,
        out_w=out_w.astype(bf16), out_b=out_b,
    )


# ----------------------- pure-JAX reference (for checking) -----------------------
def _ref_lstm_stack(x_btf, wih, whh, b):
    seq, h = x_btf, None
    for layer in range(L):
        w_i, w_h, bb = wih[layer], whh[layer], b[layer]
        n = seq.shape[0]
        h = jnp.zeros((n, H), jnp.float32)
        c = jnp.zeros((n, H), jnp.float32)
        outs = []
        for t in range(seq.shape[1]):
            g = seq[:, t, :] @ w_i + h @ w_h + bb
            i_g = jax.nn.sigmoid(g[:, 0 * H:1 * H])
            f_g = jax.nn.sigmoid(g[:, 1 * H:2 * H])
            g_g = jnp.tanh(g[:, 2 * H:3 * H])
            o_g = jax.nn.sigmoid(g[:, 3 * H:4 * H])
            c = f_g * c + i_g * g_g
            h = o_g * jnp.tanh(c)
            outs.append(h)
        seq = jnp.stack(outs, axis=1)
    return seq, h


def taxon_vae_reference(token_ids, params, eps):
    emb = params["embedding"][token_ids].astype(jnp.float32)
    _, h_last = _ref_lstm_stack(emb, params["enc_wih"], params["enc_whh"],
                                params["enc_b"])
    z_mean = h_last @ params["zm_w"] + params["zm_b"]
    z_log_var = h_last @ params["zv_w"] + params["zv_b"]
    z = z_mean + eps * jnp.exp(0.5 * z_log_var)
    h_init = z @ params["rep_w"] + params["rep_b"]
    dec_in = jnp.tile(h_init[:, None, :], (1, T, 1))
    dec_seq, _ = _ref_lstm_stack(dec_in, params["dec_wih"], params["dec_whh"],
                                 params["dec_b"])
    logits = dec_seq @ params["out_w"] + params["out_b"]
    return logits, z_mean, z_log_var


if __name__ == "__main__":
    key = jax.random.PRNGKey(0)
    pkey, xkey, ekey = jax.random.split(key, 3)
    params = init_params(pkey)
    kparams = prepare_params(params)
    x = jax.random.randint(xkey, (B, T), 0, V, dtype=jnp.int32)   # [batch, max_seq_len]
    eps = jax.random.normal(ekey, (B, LAT), dtype=jnp.float32)    # reparam noise

    logits, z_mean, z_log_var = taxon_vae_forward(x, kparams, eps)
    jax.block_until_ready((logits, z_mean, z_log_var))

    assert logits.shape == (B, T, V)
    assert z_mean.shape == (B, LAT)
    assert z_log_var.shape == (B, LAT)

    # Correctness check against a pure-f32 JAX reference (same params / eps).
    # Tolerance reflects bf16 MXU operands with f32 accumulation.
    r_logits, r_zm, r_zlv = taxon_vae_reference(x, params, eps)
    assert jnp.allclose(z_mean, r_zm, atol=2e-2, rtol=2e-2)
    assert jnp.allclose(z_log_var, r_zlv, atol=2e-2, rtol=2e-2)
    assert jnp.allclose(logits, r_logits, atol=2e-2, rtol=2e-2)

    print("KERNEL_OK")
</pallas_src>

<mosaic_0001>
module attributes {stable_mosaic.version = 11 : i64} {
  func.func @taxon_vae_kernel(%arg0: memref<48x128xbf16, #tpu.memory_space<vmem>>, %arg1: memref<8x128xf32, #tpu.memory_space<vmem>>, %arg2: memref<5x128x128xbf16, #tpu.memory_space<vmem>>, %arg3: memref<5x128x128xbf16, #tpu.memory_space<vmem>>, %arg4: memref<5x1x128xf32, #tpu.memory_space<vmem>>, %arg5: memref<128x128xbf16, #tpu.memory_space<vmem>>, %arg6: memref<1x128xf32, #tpu.memory_space<vmem>>, %arg7: memref<128x128xbf16, #tpu.memory_space<vmem>>, %arg8: memref<1x128xf32, #tpu.memory_space<vmem>>, %arg9: memref<5x128x128xbf16, #tpu.memory_space<vmem>>, %arg10: memref<5x128x128xbf16, #tpu.memory_space<vmem>>, %arg11: memref<5x1x128xf32, #tpu.memory_space<vmem>>, %arg12: memref<128x128xbf16, #tpu.memory_space<vmem>>, %arg13: memref<1x128xf32, #tpu.memory_space<vmem>>, %arg14: memref<48x128xf32, #tpu.memory_space<vmem>>, %arg15: memref<8x128xf32, #tpu.memory_space<vmem>>, %arg16: memref<48x128xf32, #tpu.memory_space<vmem>>) attributes {dimension_semantics = [], scalar_prefetch = 0 : i64, scratch_operands = 1 : i64, tpu.core_type = #tpu.core_type<tc>} {
    %0 = tpu.iota {dimensions = array<i32: 1>} : vector<8x128xi32>
    %c64_i32 = arith.constant 64 : i32
    %1 = vector.broadcast %c64_i32 : i32 to vector<8x128xi32>
    %2 = arith.cmpi sge, %0, %1 : vector<8x128xi32>
    %c96_i32 = arith.constant 96 : i32
    %3 = vector.broadcast %c96_i32 : i32 to vector<8x128xi32>
    %4 = arith.cmpi slt, %0, %3 : vector<8x128xi32>
    %5 = arith.andi %2, %4 : vector<8x128xi1>
    %cst = arith.constant 2.000000e+00 : f32
    %cst_0 = arith.constant 1.000000e+00 : f32
    %6 = vector.broadcast %cst : f32 to vector<8x128xf32>
    %7 = vector.broadcast %cst_0 : f32 to vector<8x128xf32>
    %8 = arith.select %5, %6, %7 : vector<8x128xi1>, vector<8x128xf32>
    %cst_1 = arith.constant -1.000000e+00 : f32
    %cst_2 = arith.constant 0.000000e+00 : f32
    %9 = vector.broadcast %cst_1 : f32 to vector<8x128xf32>
    %10 = vector.broadcast %cst_2 : f32 to vector<8x128xf32>
    %11 = arith.select %5, %9, %10 : vector<8x128xi1>, vector<8x128xf32>
    %c0 = arith.constant 0 : index
    %c0_3 = arith.constant 0 : index
    %12 = vector.load %arg0[%c0, %c0_3] : memref<48x128xbf16, #tpu.memory_space<vmem>>, vector<48x128xbf16>
    %c0_4 = arith.constant 0 : index
    %c0_5 = arith.constant 0 : index
    %c0_6 = arith.constant 0 : index
    %13 = vector.load %arg2[%c0_4, %c0_5, %c0_6] : memref<5x128x128xbf16, #tpu.memory_space<vmem>>, vector<1x128x128xbf16>
    %14 = vector.shape_cast %13 : vector<1x128x128xbf16> to vector<128x128xbf16>
    %cst_7 = arith.constant dense<0.000000e+00> : vector<48x128xf32>
    %15 = tpu.matmul %12, %14, %cst_7 {dimension_numbers = #tpu.dot_dimension_numbers<[1], [0], [0], [1], [0, 0, 1, 1], [], []>} : vector<48x128xbf16>, vector<128x128xbf16>, vector<48x128xf32> -> vector<48x128xf32>
    %c0_8 = arith.constant 0 : index
    %c0_9 = arith.constant 0 : index
    %c0_10 = arith.constant 0 : index
    %16 = vector.load %arg4[%c0_8, %c0_9, %c0_10] : memref<5x1x128xf32, #tpu.memory_space<vmem>>, vector<1x1x128xf32>
    %17 = vector.shape_cast %16 : vector<1x1x128xf32> to vector<1x128xf32>
    %18 = vector.broadcast %17 : vector<1x128xf32> to vector<48x128xf32>
    %19 = arith.addf %15, %18 : vector<48x128xf32>
    %c0_11 = arith.constant 0 : index
    %c0_12 = arith.constant 0 : index
    %c0_13 = arith.constant 0 : index
    %20 = vector.load %arg3[%c0_11, %c0_12, %c0_13] : memref<5x128x128xbf16, #tpu.memory_space<vmem>>, vector<1x128x128xbf16>
    %21 = vector.shape_cast %20 : vector<1x128x128xbf16> to vector<128x128xbf16>
    %cst_14 = arith.constant 0.000000e+00 : bf16
    %22 = vector.broadcast %cst_14 : bf16 to vector<8x128xbf16>
    %cst_15 = arith.constant 0.000000e+00 : f32
    %23 = vector.broadcast %cst_15 : f32 to vector<8x128xf32>
    %24 = vector.extract_strided_slice %19 {offsets = [0, 0], sizes = [8, 128], strides = [1, 1]} : vector<48x128xf32> to vector<8x128xf32>
    %cst_16 = arith.constant dense<0.000000e+00> : vector<8x128xf32>
    %25 = tpu.matmul %22, %21, %cst_16 {dimension_numbers = #tpu.dot_dimension_numbers<[1], [0], [0], [1], [0, 0, 1, 1], [], []>} : vector<8x128xbf16>, vector<128x128xbf16>, vector<8x128xf32> -> vector<8x128xf32>
    %26 = arith.addf %24, %25 : vector<8x128xf32>
    %27 = arith.negf %26 : vector<8x128xf32>
    %28 = math.exp %27 : vector<8x128xf32>
    %cst_17 = arith.constant 1.000000e+00 : f32
    %29 = vector.broadcast %cst_17 : f32 to vector<8x128xf32>
    %30 = arith.addf %29, %28 : vector<8x128xf32>
    %31 = arith.divf %29, %30 : vector<8x128xf32>
    %32 = arith.mulf %31, %8 : vector<8x128xf32>
    %33 = arith.addf %32, %11 : vector<8x128xf32>
    %c96_i32_18 = arith.constant 96 : i32
    %34 = tpu.dynamic_rotate %33 by %c96_i32_18 dim 1 : vector<8x128xf32>, i32 -> vector<8x128xf32>
    %c64_i32_19 = arith.constant 64 : i32
    %35 = tpu.dynamic_rotate %33 by %c64_i32_19 dim 1 : vector<8x128xf32>, i32 -> vector<8x128xf32>
    %c32_i32 = arith.constant 32 : i32
    %36 = tpu.dynamic_rotate %33 by %c32_i32 dim 1 : vector<8x128xf32>, i32 -> vector<8x128xf32>
    %37 = arith.mulf %34, %23 : vector<8x128xf32>
    %38 = arith.mulf %33, %35 : vector<8x128xf32>
    %39 = arith.addf %37, %38 : vector<8x128xf32>
    %40 = math.tanh %39 : vector<8x128xf32>
    %41 = arith.mulf %36, %40 : vector<8x128xf32>
    %c0_20 = arith.constant 0 : index
    %c0_21 = arith.constant 0 : index
    %42 = vector.load %arg16[%c0_20, %c0_21] : memref<48x128xf32, #tpu.memory_space<vmem>>, vector<8x128xf32>
    tpu.vector_store %arg16[%c0_20, %c0_21], %41 {strides = array<i32>} : memref<48x128xf32, #tpu.memory_space<vmem>>, vector<8x128xf32>,
    %43 = arith.truncf %41 : vector<8x128xf32> to vector<8x128xbf16>
    %44 = vector.extract_strided_slice %19 {offsets = [8, 0], sizes = [8, 128], strides = [1, 1]} : vector<48x128xf32> to vector<8x128xf32>
    %cst_22 = arith.constant dense<0.000000e+00> : vector<8x128xf32>
    %45 = tpu.matmul %43, %21, %cst_22 {dimension_numbers = #tpu.dot_dimension_numbers<[1], [0], [0], [1], [0, 0, 1, 1], [], []>} : vector<8x128xbf16>, vector<128x128xbf16>, vector<8x128xf32> -> vector<8x128xf32>
    %46 = arith.addf %44, %45 : vector<8x128xf32>
    %47 = arith.negf %46 : vector<8x128xf32>
    %48 = math.exp %47 : vector<8x128xf32>
    %cst_23 = arith.constant 1.000000e+00 : f32
    %49 = vector.broadcast %cst_23 : f32 to vector<8x128xf32>
    %50 = arith.addf %49, %48 : vector<8x128xf32>
    %51 = arith.divf %49, %50 : vector<8x128xf32>
    %52 = arith.mulf %51, %8 : vector<8x128xf32>
    %53 = arith.addf %52, %11 : vector<8x128xf32>
    %c96_i32_24 = arith.constant 96 : i32
    %54 = tpu.dynamic_rotate %53 by %c96_i32_24 dim 1 : vector<8x128xf32>, i32 -> vector<8x128xf32>
    %c64_i32_25 = arith.constant 64 : i32
    %55 = tpu.dynamic_rotate %53 by %c64_i32_25 dim 1 : vector<8x128xf32>, i32 -> vector<8x128xf32>
    %c32_i32_26 = arith.constant 32 : i32
    %56 = tpu.dynamic_rotate %53 by %c32_i32_26 dim 1 : vector<8x128xf32>, i32 -> vector<8x128xf32>
    %57 = arith.mulf %54, %39 : vector<8x128xf32>
    %58 = arith.mulf %53, %55 : vector<8x128xf32>
    %59 = arith.addf %57, %58 : vector<8x128xf32>
    %60 = math.tanh %59 : vector<8x128xf32>
    %61 = arith.mulf %56, %60 : vector<8x128xf32>
    %c8 = arith.constant 8 : index
    %c0_27 = arith.constant 0 : index
    %62 = vector.load %arg16[%c8, %c0_27] : memref<48x128xf32, #tpu.memory_space<vmem>>, vector<8x128xf32>
    tpu.vector_store %arg16[%c8, %c0_27], %61 {strides = array<i32>} : memref<48x128xf32, #tpu.memory_space<vmem>>, vector<8x128xf32>,
    %63 = arith.truncf %61 : vector<8x128xf32> to vector<8x128xbf16>
    %64 = vector.extract_strided_slice %19 {offsets = [16, 0], sizes = [8, 128], strides = [1, 1]} : vector<48x128xf32> to vector<8x128xf32>
    %cst_28 = arith.constant dense<0.000000e+00> : vector<8x128xf32>
    %65 = tpu.matmul %63, %21, %cst_28 {dimension_numbers = #tpu.dot_dimension_numbers<[1], [0], [0], [1], [0, 0, 1, 1], [], []>} : vector<8x128xbf16>, vector<128x128xbf16>, vector<8x128xf32> -> vector<8x128xf32>
    %66 = arith.addf %64, %65 : vector<8x128xf32>
    %67 = arith.negf %66 : vector<8x128xf32>
    %68 = math.exp %67 : vector<8x128xf32>
    %cst_29 = arith.constant 1.000000e+00 : f32
    %69 = vector.broadcast %cst_29 : f32 to vector<8x128xf32>
    %70 = arith.addf %69, %68 : vector<8x128xf32>
    %71 = arith.divf %69, %70 : vector<8x128xf32>
    %72 = arith.mulf %71, %8 : vector<8x128xf32>
    %73 = arith.addf %72, %11 : vector<8x128xf32>
    %c96_i32_30 = arith.constant 96 : i32
    %74 = tpu.dynamic_rotate %73 by %c96_i32_30 dim 1 : vector<8x128xf32>, i32 -> vector<8x128xf32>
    %c64_i32_31 = arith.constant 64 : i32
    %75 = tpu.dynamic_rotate %73 by %c64_i32_31 dim 1 : vector<8x128xf32>, i32 -> vector<8x128xf32>
    %c32_i32_32 = arith.constant 32 : i32
    %76 = tpu.dynamic_rotate %73 by %c32_i32_32 dim 1 : vector<8x128xf32>, i32 -> vector<8x128xf32>
    %77 = arith.mulf %74, %59 : vector<8x128xf32>
    %78 = arith.mulf %73, %75 : vector<8x128xf32>
    %79 = arith.addf %77, %78 : vector<8x128xf32>
    %80 = math.tanh %79 : vector<8x128xf32>
    %81 = arith.mulf %76, %80 : vector<8x128xf32>
    %c16 = arith.constant 16 : index
    %c0_33 = arith.constant 0 : index
    %82 = vector.load %arg16[%c16, %c0_33] : memref<48x128xf32, #tpu.memory_space<vmem>>, vector<8x128xf32>
    tpu.vector_store %arg16[%c16, %c0_33], %81 {strides = array<i32>} : memref<48x128xf32, #tpu.memory_space<vmem>>, vector<8x128xf32>,
    %83 = arith.truncf %81 : vector<8x128xf32> to vector<8x128xbf16>
    %84 = vector.extract_strided_slice %19 {offsets = [24, 0], sizes = [8, 128], strides = [1, 1]} : vector<48x128xf32> to vector<8x128xf32>
    %cst_34 = arith.constant dense<0.000000e+00> : vector<8x128xf32>
    %85 = tpu.matmul %83, %21, %cst_34 {dimension_numbers = #tpu.dot_dimension_numbers<[1], [0], [0], [1], [0, 0, 1, 1], [], []>} : vector<8x128xbf16>, vector<128x128xbf16>, vector<8x128xf32> -> vector<8x128xf32>
    %86 = arith.addf %84, %85 : vector<8x128xf32>
    %87 = arith.negf %86 : vector<8x128xf32>
    %88 = math.exp %87 : vector<8x128xf32>
    %cst_35 = arith.constant 1.000000e+00 : f32
    %89 = vector.broadcast %cst_35 : f32 to vector<8x128xf32>
    %90 = arith.addf %89, %88 : vector<8x128xf32>
    %91 = arith.divf %89, %90 : vector<8x128xf32>
    %92 = arith.mulf %91, %8 : vector<8x128xf32>
    %93 = arith.addf %92, %11 : vector<8x128xf32>
    %c96_i32_36 = arith.constant 96 : i32
    %94 = tpu.dynamic_rotate %93 by %c96_i32_36 dim 1 : vector<8x128xf32>, i32 -> vector<8x128xf32>
    %c64_i32_37 = arith.constant 64 : i32
    %95 = tpu.dynamic_rotate %93 by %c64_i32_37 dim 1 : vector<8x128xf32>, i32 -> vector<8x128xf32>
    %c32_i32_38 = arith.constant 32 : i32
    %96 = tpu.dynamic_rotate %93 by %c32_i32_38 dim 1 : vector<8x128xf32>, i32 -> vector<8x128xf32>
    %97 = arith.mulf %94, %79 : vector<8x128xf32>
    %98 = arith.mulf %93, %95 : vector<8x128xf32>
    %99 = arith.addf %97, %98 : vector<8x128xf32>
    %100 = math.tanh %99 : vector<8x128xf32>
    %101 = arith.mulf %96, %100 : vector<8x128xf32>
    %c24 = arith.constant 24 : index
    %c0_39 = arith.constant 0 : index
    %102 = vector.load %arg16[%c24, %c0_39] : memref<48x128xf32, #tpu.memory_space<vmem>>, vector<8x128xf32>
    tpu.vector_store %arg16[%c24, %c0_39], %101 {strides = array<i32>} : memref<48x128xf32, #tpu.memory_space<vmem>>, vector<8x128xf32>,
    %103 = arith.truncf %101 : vector<8x128xf32> to vector<8x128xbf16>
    %104 = vector.extract_strided_slice %19 {offsets = [32, 0], sizes = [8, 128], strides = [1, 1]} : vector<48x128xf32> to vector<8x128xf32>
    %cst_40 = arith.constant dense<0.000000e+00> : vector<8x128xf32>
    %105 = tpu.matmul %103, %21, %cst_40 {dimension_numbers = #tpu.dot_dimension_numbers<[1], [0], [0], [1], [0, 0, 1, 1], [], []>} : vector<8x128xbf16>, vector<128x128xbf16>, vector<8x128xf32> -> vector<8x128xf32>
    %106 = arith.addf %104, %105 : vector<8x128xf32>
    %107 = arith.negf %106 : vector<8x128xf32>
    %108 = math.exp %107 : vector<8x128xf32>
    %cst_41 = arith.constant 1.000000e+00 : f32
    %109 = vector.broadcast %cst_41 : f32 to vector<8x128xf32>
    %110 = arith.addf %109, %108 : vector<8x128xf32>
    %111 = arith.divf %109, %110 : vector<8x128xf32>
    %112 = arith.mulf %111, %8 : vector<8x128xf32>
    %113 = arith.addf %112, %11 : vector<8x128xf32>
    %c96_i32_42 = arith.constant 96 : i32
    %114 = tpu.dynamic_rotate %113 by %c96_i32_42 dim 1 : vector<8x128xf32>, i32 -> vector<8x128xf32>
    %c64_i32_43 = arith.constant 64 : i32
    %115 = tpu.dynamic_rotate %113 by %c64_i32_43 dim 1 : vector<8x128xf32>, i32 -> vector<8x128xf32>
    %c32_i32_44 = arith.constant 32 : i32
    %116 = tpu.dynamic_rotate %113 by %c32_i32_44 dim 1 : vector<8x128xf32>, i32 -> vector<8x128xf32>
    %117 = arith.mulf %114, %99 : vector<8x128xf32>
    %118 = arith.mulf %113, %115 : vector<8x128xf32>
    %119 = arith.addf %117, %118 : vector<8x128xf32>
    %120 = math.tanh %119 : vector<8x128xf32>
    %121 = arith.mulf %116, %120 : vector<8x128xf32>
    %c32 = arith.constant 32 : index
    %c0_45 = arith.constant 0 : index
    %122 = vector.load %arg16[%c32, %c0_45] : memref<48x128xf32, #tpu.memory_space<vmem>>, vector<8x128xf32>
    tpu.vector_store %arg16[%c32, %c0_45], %121 {strides = array<i32>} : memref<48x128xf32, #tpu.memory_space<vmem>>, vector<8x128xf32>,
    %123 = arith.truncf %121 : vector<8x128xf32> to vector<8x128xbf16>
    %124 = vector.extract_strided_slice %19 {offsets = [40, 0], sizes = [8, 128], strides = [1, 1]} : vector<48x128xf32> to vector<8x128xf32>
    %cst_46 = arith.constant dense<0.000000e+00> : vector<8x128xf32>
    %125 = tpu.matmul %123, %21, %cst_46 {dimension_numbers = #tpu.dot_dimension_numbers<[1], [0], [0], [1], [0, 0, 1, 1], [], []>} : vector<8x128xbf16>, vector<128x128xbf16>, vector<8x128xf32> -> vector<8x128xf32>
    %126 = arith.addf %124, %125 : vector<8x128xf32>
    %127 = arith.negf %126 : vector<8x128xf32>
    %128 = math.exp %127 : vector<8x128xf32>
    %cst_47 = arith.constant 1.000000e+00 : f32
    %129 = vector.broadcast %cst_47 : f32 to vector<8x128xf32>
    %130 = arith.addf %129, %128 : vector<8x128xf32>
    %131 = arith.divf %129, %130 : vector<8x128xf32>
    %132 = arith.mulf %131, %8 : vector<8x128xf32>
    %133 = arith.addf %132, %11 : vector<8x128xf32>
    %c96_i32_48 = arith.constant 96 : i32
    %134 = tpu.dynamic_rotate %133 by %c96_i32_48 dim 1 : vector<8x128xf32>, i32 -> vector<8x128xf32>
    %c64_i32_49 = arith.constant 64 : i32
    %135 = tpu.dynamic_rotate %133 by %c64_i32_49 dim 1 : vector<8x128xf32>, i32 -> vector<8x128xf32>
    %c32_i32_50 = arith.constant 32 : i32
    %136 = tpu.dynamic_rotate %133 by %c32_i32_50 dim 1 : vector<8x128xf32>, i32 -> vector<8x128xf32>
    %137 = arith.mulf %134, %119 : vector<8x128xf32>
    %138 = arith.mulf %133, %135 : vector<8x128xf32>
    %139 = arith.addf %137, %138 : vector<8x128xf32>
    %140 = math.tanh %139 : vector<8x128xf32>
    %141 = arith.mulf %136, %140 : vector<8x128xf32>
    %c40 = arith.constant 40 : index
    %c0_51 = arith.constant 0 : index
    %142 = vector.load %arg16[%c40, %c0_51] : memref<48x128xf32, #tpu.memory_space<vmem>>, vector<8x128xf32>
    tpu.vector_store %arg16[%c40, %c0_51], %141 {strides = array<i32>} : memref<48x128xf32, #tpu.memory_space<vmem>>, vector<8x128xf32>,
    %c0_52 = arith.constant 0 : index
    %c0_53 = arith.constant 0 : index
    %143 = vector.load %arg16[%c0_52, %c0_53] : memref<48x128xf32, #tpu.memory_space<vmem>>, vector<48x128xf32>
    %144 = arith.truncf %143 : vector<48x128xf32> to vector<48x128xbf16>
    %c1 = arith.constant 1 : index
    %c0_54 = arith.constant 0 : index
    %c0_55 = arith.constant 0 : index
    %145 = vector.load %arg2[%c1, %c0_54, %c0_55] : memref<5x128x128xbf16, #tpu.memory_space<vmem>>, vector<1x128x128xbf16>
    %146 = vector.shape_cast %145 : vector<1x128x128xbf16> to vector<128x128xbf16>
    %cst_56 = arith.constant dense<0.000000e+00> : vector<48x128xf32>
    %147 = tpu.matmul %144, %146, %cst_56 {dimension_numbers = #tpu.dot_dimension_numbers<[1], [0], [0], [1], [0, 0, 1, 1], [], []>} : vector<48x128xbf16>, vector<128x128xbf16>, vector<48x128xf32> -> vector<48x128xf32>
    %c1_57 = arith.constant 1 : index
    %c0_58 = arith.constant 0 : index
    %c0_59 = arith.constant 0 : index
    %148 = vector.load %arg4[%c1_57, %c0_58, %c0_59] : memref<5x1x128xf32, #tpu.memory_space<vmem>>, vector<1x1x128xf32>
    %149 = vector.shape_cast %148 : vector<1x1x128xf32> to vector<1x128xf32>
    %150 = vector.broadcast %149 : vector<1x128xf32> to vector<48x128xf32>
    %151 = arith.addf %147, %150 : vector<48x128xf32>
    %c1_60 = arith.constant 1 : index
    %c0_61 = arith.constant 0 : index
    %c0_62 = arith.constant 0 : index
    %152 = vector.load %arg3[%c1_60, %c0_61, %c0_62] : memref<5x128x128xbf16, #tpu.memory_space<vmem>>, vector<1x128x128xbf16>
    %153 = vector.shape_cast %152 : vector<1x128x128xbf16> to vector<128x128xbf16>
    %cst_63 = arith.constant 0.000000e+00 : bf16
    %154 = vector.broadcast %cst_63 : bf16 to vector<8x128xbf16>
    %cst_64 = arith.constant 0.000000e+00 : f32
    %155 = vector.broadcast %cst_64 : f32 to vector<8x128xf32>
    %156 = vector.extract_strided_slice %151 {offsets = [0, 0], sizes = [8, 128], strides = [1, 1]} : vector<48x128xf32> to vector<8x128xf32>
    %cst_65 = arith.constant dense<0.000000e+00> : vector<8x128xf32>
    %157 = tpu.matmul %154, %153, %cst_65 {dimension_numbers = #tpu.dot_dimension_numbers<[1], [0], [0], [1], [0, 0, 1, 1], [], []>} : vector<8x128xbf16>, vector<128x128xbf16>, vector<8x128xf32> -> vector<8x128xf32>
    %158 = arith.addf %156, %157 : vector<8x128xf32>
    %159 = arith.negf %158 : vector<8x128xf32>
    %160 = math.exp %159 : vector<8x128xf32>
    %cst_66 = arith.constant 1.000000e+00 : f32
    %161 = vector.broadcast %cst_66 : f32 to vector<8x128xf32>
    %162 = arith.addf %161, %160 : vector<8x128xf32>
    %163 = arith.divf %161, %162 : vector<8x128xf32>
    %164 = arith.mulf %163, %8 : vector<8x128xf32>
    %165 = arith.addf %164, %11 : vector<8x128xf32>
    %c96_i32_67 = arith.constant 96 : i32
    %166 = tpu.dynamic_rotate %165 by %c96_i32_67 dim 1 : vector<8x128xf32>, i32 -> vector<8x128xf32>
    %c64_i32_68 = arith.constant 64 : i32
    %167 = tpu.dynamic_rotate %165 by %c64_i32_68 dim 1 : vector<8x128xf32>, i32 -> vector<8x128xf32>
    %c32_i32_69 = arith.constant 32 : i32
    %168 = tpu.dynamic_rotate %165 by %c32_i32_69 dim 1 : vector<8x128xf32>, i32 -> vector<8x128xf32>
    %169 = arith.mulf %166, %155 : vector<8x128xf32>
    %170 = arith.mulf %165, %167 : vector<8x128xf32>
    %171 = arith.addf %169, %170 : vector<8x128xf32>
    %172 = math.tanh %171 : vector<8x128xf32>
    %173 = arith.mulf %168, %172 : vector<8x128xf32>
    %c0_70 = arith.constant 0 : index
    %c0_71 = arith.constant 0 : index
    %174 = vector.load %arg16[%c0_70, %c0_71] : memref<48x128xf32, #tpu.memory_space<vmem>>, vector<8x128xf32>
    tpu.vector_store %arg16[%c0_70, %c0_71], %173 {strides = array<i32>} : memref<48x128xf32, #tpu.memory_space<vmem>>, vector<8x128xf32>,
    %175 = arith.truncf %173 : vector<8x128xf32> to vector<8x128xbf16>
    %176 = vector.extract_strided_slice %151 {offsets = [8, 0], sizes = [8, 128], strides = [1, 1]} : vector<48x128xf32> to vector<8x128xf32>
    %cst_72 = arith.constant dense<0.000000e+00> : vector<8x128xf32>
    %177 = tpu.matmul %175, %153, %cst_72 {dimension_numbers = #tpu.dot_dimension_numbers<[1], [0], [0], [1], [0, 0, 1, 1], [], []>} : vector<8x128xbf16>, vector<128x128xbf16>, vector<8x128xf32> -> vector<8x128xf32>
    %178 = arith.addf %176, %177 : vector<8x128xf32>
    %179 = arith.negf %178 : vector<8x128xf32>
    %180 = math.exp %179 : vector<8x128xf32>
    %cst_73 = arith.constant 1.000000e+00 : f32
    %181 = vector.broadcast %cst_73 : f32 to vector<8x128xf32>
    %182 = arith.addf %181, %180 : vector<8x128xf32>
    %183 = arith.divf %181, %182 : vector<8x128xf32>
    %184 = arith.mulf %183, %8 : vector<8x128xf32>
    %185 = arith.addf %184, %11 : vector<8x128xf32>
    %c96_i32_74 = arith.constant 96 : i32
    %186 = tpu.dynamic_rotate %185 by %c96_i32_74 dim 1 : vector<8x128xf32>, i32 -> vector<8x128xf32>
    %c64_i32_75 = arith.constant 64 : i32
    %187 = tpu.dynamic_rotate %185 by %c64_i32_75 dim 1 : vector<8x128xf32>, i32 -> vector<8x128xf32>
    %c32_i32_76 = arith.constant 32 : i32
    %188 = tpu.dynamic_rotate %185 by %c32_i32_76 dim 1 : vector<8x128xf32>, i32 -> vector<8x128xf32>
    %189 = arith.mulf %186, %171 : vector<8x128xf32>
    %190 = arith.mulf %185, %187 : vector<8x128xf32>
    %191 = arith.addf %189, %190 : vector<8x128xf32>
    %192 = math.tanh %191 : vector<8x128xf32>
    %193 = arith.mulf %188, %192 : vector<8x128xf32>
    %c8_77 = arith.constant 8 : index
    %c0_78 = arith.constant 0 : index
    %194 = vector.load %arg16[%c8_77, %c0_78] : memref<48x128xf32, #tpu.memory_space<vmem>>, vector<8x128xf32>
    tpu.vector_store %arg16[%c8_77, %c0_78], %193 {strides = array<i32>} : memref<48x128xf32, #tpu.memory_space<vmem>>, vector<8x128xf32>,
    %195 = arith.truncf %193 : vector<8x128xf32> to vector<8x128xbf16>
    %196 = vector.extract_strided_slice %151 {offsets = [16, 0], sizes = [8, 128], strides = [1, 1]} : vector<48x128xf32> to vector<8x128xf32>
    %cst_79 = arith.constant dense<0.000000e+00> : vector<8x128xf32>
    %197 = tpu.matmul %195, %153, %cst_79 {dimension_numbers = #tpu.dot_dimension_numbers<[1], [0], [0], [1], [0, 0, 1, 1], [], []>} : vector<8x128xbf16>, vector<128x128xbf16>, vector<8x128xf32> -> vector<8x128xf32>
    %198 = arith.addf %196, %197 : vector<8x128xf32>
    %199 = arith.negf %198 : vector<8x128xf32>
    %200 = math.exp %199 : vector<8x128xf32>
    %cst_80 = arith.constant 1.000000e+00 : f32
    %201 = vector.broadcast %cst_80 : f32 to vector<8x128xf32>
    %202 = arith.addf %201, %200 : vector<8x128xf32>
    %203 = arith.divf %201, %202 : vector<8x128xf32>
    %204 = arith.mulf %203, %8 : vector<8x128xf32>
    %205 = arith.addf %204, %11 : vector<8x128xf32>
    %c96_i32_81 = arith.constant 96 : i32
    %206 = tpu.dynamic_rotate %205 by %c96_i32_81 dim 1 : vector<8x128xf32>, i32 -> vector<8x128xf32>
    %c64_i32_82 = arith.constant 64 : i32
    %207 = tpu.dynamic_rotate %205 by %c64_i32_82 dim 1 : vector<8x128xf32>, i32 -> vector<8x128xf32>
    %c32_i32_83 = arith.constant 32 : i32
    %208 = tpu.dynamic_rotate %205 by %c32_i32_83 dim 1 : vector<8x128xf32>, i32 -> vector<8x128xf32>
    %209 = arith.mulf %206, %191 : vector<8x128xf32>
    %210 = arith.mulf %205, %207 : vector<8x128xf32>
    %211 = arith.addf %209, %210 : vector<8x128xf32>
    %212 = math.tanh %211 : vector<8x128xf32>
    %213 = arith.mulf %208, %212 : vector<8x128xf32>
    %c16_84 = arith.constant 16 : index
    %c0_85 = arith.constant 0 : index
    %214 = vector.load %arg16[%c16_84, %c0_85] : memref<48x128xf32, #tpu.memory_space<vmem>>, vector<8x128xf32>
    tpu.vector_store %arg16[%c16_84, %c0_85], %213 {strides = array<i32>} : memref<48x128xf32, #tpu.memory_space<vmem>>, vector<8x128xf32>,
    %215 = arith.truncf %213 : vector<8x128xf32> to vector<8x128xbf16>
    %216 = vector.extract_strided_slice %151 {offsets = [24, 0], sizes = [8, 128], strides = [1, 1]} : vector<48x128xf32> to vector<8x128xf32>
    %cst_86 = arith.constant dense<0.000000e+00> : vector<8x128xf32>
    %217 = tpu.matmul %215, %153, %cst_86 {dimension_numbers = #tpu.dot_dimension_numbers<[1], [0], [0], [1], [0, 0, 1, 1], [], []>} : vector<8x128xbf16>, vector<128x128xbf16>, vector<8x128xf32> -> vector<8x128xf32>
    %218 = arith.addf %216, %217 : vector<8x128xf32>
    %219 = arith.negf %218 : vector<8x128xf32>
    %220 = math.exp %219 : vector<8x128xf32>
    %cst_87 = arith.constant 1.000000e+00 : f32
    %221 = vector.broadcast %cst_87 : f32 to vector<8x128xf32>
    %222 = arith.addf %221, %220 : vector<8x128xf32>
    %223 = arith.divf %221, %222 : vector<8x128xf32>
    %224 = arith.mulf %223, %8 : vector<8x128xf32>
    %225 = arith.addf %224, %11 : vector<8x128xf32>
    %c96_i32_88 = arith.constant 96 : i32
    %226 = tpu.dynamic_rotate %225 by %c96_i32_88 dim 1 : vector<8x128xf32>, i32 -> vector<8x128xf32>
    %c64_i32_89 = arith.constant 64 : i32
    %227 = tpu.dynamic_rotate %225 by %c64_i32_89 dim 1 : vector<8x128xf32>, i32 -> vector<8x128xf32>
    %c32_i32_90 = arith.constant 32 : i32
    %228 = tpu.dynamic_rotate %225 by %c32_i32_90 dim 1 : vector<8x128xf32>, i32 -> vector<8x128xf32>
    %229 = arith.mulf %226, %211 : vector<8x128xf32>
    %230 = arith.mulf %225, %227 : vector<8x128xf32>
    %231 = arith.addf %229, %230 : vector<8x128xf32>
    %232 = math.tanh %231 : vector<8x128xf32>
    %233 = arith.mulf %228, %232 : vector<8x128xf32>
    %c24_91 = arith.constant 24 : index
    %c0_92 = arith.constant 0 : index
    %234 = vector.load %arg16[%c24_91, %c0_92] : memref<48x128xf32, #tpu.memory_space<vmem>>, vector<8x128xf32>
    tpu.vector_store %arg16[%c24_91, %c0_92], %233 {strides = array<i32>} : memref<48x128xf32, #tpu.memory_space<vmem>>, vector<8x128xf32>,
    %235 = arith.truncf %233 : vector<8x128xf32> to vector<8x128xbf16>
    %236 = vector.extract_strided_slice %151 {offsets = [32, 0], sizes = [8, 128], strides = [1, 1]} : vector<48x128xf32> to vector<8x128xf32>
    %cst_93 = arith.constant dense<0.000000e+00> : vector<8x128xf32>
    %237 = tpu.matmul %235, %153, %cst_93 {dimension_numbers = #tpu.dot_dimension_numbers<[1], [0], [0], [1], [0, 0, 1, 1], [], []>} : vector<8x128xbf16>, vector<128x128xbf16>, vector<8x128xf32> -> vector<8x128xf32>
    %238 = arith.addf %236, %237 : vector<8x128xf32>
    %239 = arith.negf %238 : vector<8x128xf32>
    %240 = math.exp %239 : vector<8x128xf32>
    %cst_94 = arith.constant 1.000000e+00 : f32
    %241 = vector.broadcast %cst_94 : f32 to vector<8x128xf32>
    %242 = arith.addf %241, %240 : vector<8x128xf32>
    %243 = arith.divf %241, %242 : vector<8x128xf32>
    %244 = arith.mulf %243, %8 : vector<8x128xf32>
    %245 = arith.addf %244, %11 : vector<8x128xf32>
    %c96_i32_95 = arith.constant 96 : i32
    %246 = tpu.dynamic_rotate %245 by %c96_i32_95 dim 1 : vector<8x128xf32>, i32 -> vector<8x128xf32>
    %c64_i32_96 = arith.constant 64 : i32
    %247 = tpu.dynamic_rotate %245 by %c64_i32_96 dim 1 : vector<8x128xf32>, i32 -> vector<8x128xf32>
    %c32_i32_97 = arith.constant 32 : i32
    %248 = tpu.dynamic_rotate %245 by %c32_i32_97 dim 1 : vector<8x128xf32>, i32 -> vector<8x128xf32>
    %249 = arith.mulf %246, %231 : vector<8x128xf32>
    %250 = arith.mulf %245, %247 : vector<8x128xf32>
    %251 = arith.addf %249, %250 : vector<8x128xf32>
    %252 = math.tanh %251 : vector<8x128xf32>
    %253 = arith.mulf %248, %252 : vector<8x128xf32>
    %c32_98 = arith.constant 32 : index
    %c0_99 = arith.constant 0 : index
    %254 = vector.load %arg16[%c32_98, %c0_99] : memref<48x128xf32, #tpu.memory_space<vmem>>, vector<8x128xf32>
    tpu.vector_store %arg16[%c32_98, %c0_99], %253 {strides = array<i32>} : memref<48x128xf32, #tpu.memory_space<vmem>>, vector<8x128xf32>,
    %255 = arith.truncf %253 : vector<8x128xf32> to vector<8x128xbf16>
    %256 = vector.extract_strided_slice %151 {offsets = [40, 0], sizes = [8, 128], strides = [1, 1]} : vector<48x128xf32> to vector<8x128xf32>
    %cst_100 = arith.constant dense<0.000000e+00> : vector<8x128xf32>
    %257 = tpu.matmul %255, %153, %cst_100 {dimension_numbers = #tpu.dot_dimension_numbers<[1], [0], [0], [1], [0, 0, 1, 1], [], []>} : vector<8x128xbf16>, vector<128x128xbf16>, vector<8x128xf32> -> vector<8x128xf32>
    %258 = arith.addf %256, %257 : vector<8x128xf32>
    %259 = arith.negf %258 : vector<8x128xf32>
    %260 = math.exp %259 : vector<8x128xf32>
    %cst_101 = arith.constant 1.000000e+00 : f32
    %261 = vector.broadcast %cst_101 : f32 to vector<8x128xf32>
    %262 = arith.addf %261, %260 : vector<8x128xf32>
    %263 = arith.divf %261, %262 : vector<8x128xf32>
    %264 = arith.mulf %263, %8 : vector<8x128xf32>
    %265 = arith.addf %264, %11 : vector<8x128xf32>
    %c96_i32_102 = arith.constant 96 : i32
    %266 = tpu.dynamic_rotate %265 by %c96_i32_102 dim 1 : vector<8x128xf32>, i32 -> vector<8x128xf32>
    %c64_i32_103 = arith.constant 64 : i32
    %267 = tpu.dynamic_rotate %265 by %c64_i32_103 dim 1 : vector<8x128xf32>, i32 -> vector<8x128xf32>
    %c32_i32_104 = arith.constant 32 : i32
    %268 = tpu.dynamic_rotate %265 by %c32_i32_104 dim 1 : vector<8x128xf32>, i32 -> vector<8x128xf32>
    %269 = arith.mulf %266, %251 : vector<8x128xf32>
    %270 = arith.mulf %265, %267 : vector<8x128xf32>
    %271 = arith.addf %269, %270 : vector<8x128xf32>
    %272 = math.tanh %271 : vector<8x128xf32>
    %273 = arith.mulf %268, %272 : vector<8x128xf32>
    %c40_105 = arith.constant 40 : index
    %c0_106 = arith.constant 0 : index
    %274 = vector.load %arg16[%c40_105, %c0_106] : memref<48x128xf32, #tpu.memory_space<vmem>>, vector<8x128xf32>
    tpu.vector_store %arg16[%c40_105, %c0_106], %273 {strides = array<i32>} : memref<48x128xf32, #tpu.memory_space<vmem>>, vector<8x128xf32>,
    %c0_107 = arith.constant 0 : index
    %c0_108 = arith.constant 0 : index
    %275 = vector.load %arg16[%c0_107, %c0_108] : memref<48x128xf32, #tpu.memory_space<vmem>>, vector<48x128xf32>
    %276 = arith.truncf %275 : vector<48x128xf32> to vector<48x128xbf16>
    %c2 = arith.constant 2 : index
    %c0_109 = arith.constant 0 : index
    %c0_110 = arith.constant 0 : index
    %277 = vector.load %arg2[%c2, %c0_109, %c0_110] : memref<5x128x128xbf16, #tpu.memory_space<vmem>>, vector<1x128x128xbf16>
    %278 = vector.shape_cast %277 : vector<1x128x128xbf16> to vector<128x128xbf16>
    %cst_111 = arith.constant dense<0.000000e+00> : vector<48x128xf32>
    %279 = tpu.matmul %276, %278, %cst_111 {dimension_numbers = #tpu.dot_dimension_numbers<[1], [0], [0], [1], [0, 0, 1, 1], [], []>} : vector<48x128xbf16>, vector<128x128xbf16>, vector<48x128xf32> -> vector<48x128xf32>
    %c2_112 = arith.constant 2 : index
    %c0_113 = arith.constant 0 : index
    %c0_114 = arith.constant 0 : index
    %280 = vector.load %arg4[%c2_112, %c0_113, %c0_114] : memref<5x1x128xf32, #tpu.memory_space<vmem>>, vector<1x1x128xf32>
    %281 = vector.shape_cast %280 : vector<1x1x128xf32> to vector<1x128xf32>
    %282 = vector.broadcast %281 : vector<1x128xf32> to vector<48x128xf32>
    %283 = arith.addf %279, %282 : vector<48x128xf32>
    %c2_115 = arith.constant 2 : index
    %c0_116 = arith.constant 0 : index
    %c0_117 = arith.constant 0 : index
    %284 = vector.load %arg3[%c2_115, %c0_116, %c0_117] : memref<5x128x128xbf16, #tpu.memory_space<vmem>>, vector<1x128x128xbf16>
    %285 = vector.shape_cast %284 : vector<1x128x128xbf16> to vector<128x128xbf16>
    %cst_118 = arith.constant 0.000000e+00 : bf16
    %286 = vector.broadcast %cst_118 : bf16 to vector<8x128xbf16>
    %cst_119 = arith.constant 0.000000e+00 : f32
    %287 = vector.broadcast %cst_119 : f32 to vector<8x128xf32>
    %288 = vector.extract_strided_slice %283 {offsets = [0, 0], sizes = [8, 128], strides = [1, 1]} : vector<48x128xf32> to vector<8x128xf32>
    %cst_120 = arith.constant dense<0.000000e+00> : vector<8x128xf32>
    %289 = tpu.matmul %286, %285, %cst_120 {dimension_numbers = #tpu.dot_dimension_numbers<[1], [0], [0], [1], [0, 0, 1, 1], [], []>} : vector<8x128xbf16>, vector<128x128xbf16>, vector<8x128xf32> -> vector<8x128xf32>
    %290 = arith.addf %288, %289 : vector<8x128xf32>
    %291 = arith.negf %290 : vector<8x128xf32>
    %292 = math.exp %291 : vector<8x128xf32>
    %cst_121 = arith.constant 1.000000e+00 : f32
    %293 = vector.broadcast %cst_121 : f32 to vector<8x128xf32>
    %294 = arith.addf %293, %292 : vector<8x128xf32>
    %295 = arith.divf %293, %294 : vector<8x128xf32>
    %296 = arith.mulf %295, %8 : vector<8x128xf32>
    %297 = arith.addf %296, %11 : vector<8x128xf32>
    %c96_i32_122 = arith.constant 96 : i32
    %298 = tpu.dynamic_rotate %297 by %c96_i32_122 dim 1 : vector<8x128xf32>, i32 -> vector<8x128xf32>
    %c64_i32_123 = arith.constant 64 : i32
    %299 = tpu.dynamic_rotate %297 by %c64_i32_123 dim 1 : vector<8x128xf32>, i32 -> vector<8x128xf32>
    %c32_i32_124 = arith.constant 32 : i32
    %300 = tpu.dynamic_rotate %297 by %c32_i32_124 dim 1 : vector<8x128xf32>, i32 -> vector<8x128xf32>
    %301 = arith.mulf %298, %287 : vector<8x128xf32>
    %302 = arith.mulf %297, %299 : vector<8x128xf32>
    %303 = arith.addf %301, %302 : vector<8x128xf32>
    %304 = math.tanh %303 : vector<8x128xf32>
    %305 = arith.mulf %300, %304 : vector<8x128xf32>
    %c0_125 = arith.constant 0 : index
    %c0_126 = arith.constant 0 : index
    %306 = vector.load %arg16[%c0_125, %c0_126] : memref<48x128xf32, #tpu.memory_space<vmem>>, vector<8x128xf32>
    tpu.vector_store %arg16[%c0_125, %c0_126], %305 {strides = array<i32>} : memref<48x128xf32, #tpu.memory_space<vmem>>, vector<8x128xf32>,
    %307 = arith.truncf %305 : vector<8x128xf32> to vector<8x128xbf16>
    %308 = vector.extract_strided_slice %283 {offsets = [8, 0], sizes = [8, 128], strides = [1, 1]} : vector<48x128xf32> to vector<8x128xf32>
    %cst_127 = arith.constant dense<0.000000e+00> : vector<8x128xf32>
    %309 = tpu.matmul %307, %285, %cst_127 {dimension_numbers = #tpu.dot_dimension_numbers<[1], [0], [0], [1], [0, 0, 1, 1], [], []>} : vector<8x128xbf16>, vector<128x128xbf16>, vector<8x128xf32> -> vector<8x128xf32>
    %310 = arith.addf %308, %309 : vector<8x128xf32>
    %311 = arith.negf %310 : vector<8x128xf32>
    %312 = math.exp %311 : vector<8x128xf32>
    %cst_128 = arith.constant 1.000000e+00 : f32
    %313 = vector.broadcast %cst_128 : f32 to vector<8x128xf32>
    %314 = arith.addf %313, %312 : vector<8x128xf32>
    %315 = arith.divf %313, %314 : vector<8x128xf32>
    %316 = arith.mulf %315, %8 : vector<8x128xf32>
    %317 = arith.addf %316, %11 : vector<8x128xf32>
    %c96_i32_129 = arith.constant 96 : i32
    %318 = tpu.dynamic_rotate %317 by %c96_i32_129 dim 1 : vector<8x128xf32>, i32 -> vector<8x128xf32>
    %c64_i32_130 = arith.constant 64 : i32
    %319 = tpu.dynamic_rotate %317 by %c64_i32_130 dim 1 : vector<8x128xf32>, i32 -> vector<8x128xf32>
    %c32_i32_131 = arith.constant 32 : i32
    %320 = tpu.dynamic_rotate %317 by %c32_i32_131 dim 1 : vector<8x128xf32>, i32 -> vector<8x128xf32>
    %321 = arith.mulf %318, %303 : vector<8x128xf32>
    %322 = arith.mulf %317, %319 : vector<8x128xf32>
    %323 = arith.addf %321, %322 : vector<8x128xf32>
    %324 = math.tanh %323 : vector<8x128xf32>
    %325 = arith.mulf %320, %324 : vector<8x128xf32>
    %c8_132 = arith.constant 8 : index
    %c0_133 = arith.constant 0 : index
    %326 = vector.load %arg16[%c8_132, %c0_133] : memref<48x128xf32, #tpu.memory_space<vmem>>, vector<8x128xf32>
    tpu.vector_store %arg16[%c8_132, %c0_133], %325 {strides = array<i32>} : memref<48x128xf32, #tpu.memory_space<vmem>>, vector<8x128xf32>,
    %327 = arith.truncf %325 : vector<8x128xf32> to vector<8x128xbf16>
    %328 = vector.extract_strided_slice %283 {offsets = [16, 0], sizes = [8, 128], strides = [1, 1]} : vector<48x128xf32> to vector<8x128xf32>
    %cst_134 = arith.constant dense<0.000000e+00> : vector<8x128xf32>
    %329 = tpu.matmul %327, %285, %cst_134 {dimension_numbers = #tpu.dot_dimension_numbers<[1], [0], [0], [1], [0, 0, 1, 1], [], []>} : vector<8x128xbf16>, vector<128x128xbf16>, vector<8x128xf32> -> vector<8x128xf32>
    %330 = arith.addf %328, %329 : vector<8x128xf32>
    %331 = arith.negf %330 : vector<8x128xf32>
    %332 = math.exp %331 : vector<8x128xf32>
    %cst_135 = arith.constant 1.000000e+00 : f32
    %333 = vector.broadcast %cst_135 : f32 to vector<8x128xf32>
    %334 = arith.addf %333, %332 : vector<8x128xf32>
    %335 = arith.divf %333, %334 : vector<8x128xf32>
    %336 = arith.mulf %335, %8 : vector<8x128xf32>
    %337 = arith.addf %336, %11 : vector<8x128xf32>
    %c96_i32_136 = arith.constant 96 : i32
    %338 = tpu.dynamic_rotate %337 by %c96_i32_136 dim 1 : vector<8x128xf32>, i32 -> vector<8x128xf32>
    %c64_i32_137 = arith.constant 64 : i32
    %339 = tpu.dynamic_rotate %337 by %c64_i32_137 dim 1 : vector<8x128xf32>, i32 -> vector<8x128xf32>
    %c32_i32_138 = arith.constant 32 : i32
    %340 = tpu.dynamic_rotate %337 by %c32_i32_138 dim 1 : vector<8x128xf32>, i32 -> vector<8x128xf32>
    %341 = arith.mulf %338, %323 : vector<8x128xf32>
    %342 = arith.mulf %337, %339 : vector<8x128xf32>
    %343 = arith.addf %341, %342 : vector<8x128xf32>
    %344 = math.tanh %343 : vector<8x128xf32>
    %345 = arith.mulf %340, %344 : vector<8x128xf32>
    %c16_139 = arith.constant 16 : index
    %c0_140 = arith.constant 0 : index
    %346 = vector.load %arg16[%c16_139, %c0_140] : memref<48x128xf32, #tpu.memory_space<vmem>>, vector<8x128xf32>
    tpu.vector_store %arg16[%c16_139, %c0_140], %345 {strides = array<i32>} : memref<48x128xf32, #tpu.memory_space<vmem>>, vector<8x128xf32>,
    %347 = arith.truncf %345 : vector<8x128xf32> to vector<8x128xbf16>
    %348 = vector.extract_strided_slice %283 {offsets = [24, 0], sizes = [8, 128], strides = [1, 1]} : vector<48x128xf32> to vector<8x128xf32>
    %cst_141 = arith.constant dense<0.000000e+00> : vector<8x128xf32>
    %349 = tpu.matmul %347, %285, %cst_141 {dimension_numbers = #tpu.dot_dimension_numbers<[1], [0], [0], [1], [0, 0, 1, 1], [], []>} : vector<8x128xbf16>, vector<128x128xbf16>, vector<8x128xf32> -> vector<8x128xf32>
    %350 = arith.addf %348, %349 : vector<8x128xf32>
    %351 = arith.negf %350 : vector<8x128xf32>
    %352 = math.exp %351 : vector<8x128xf32>
    %cst_142 = arith.constant 1.000000e+00 : f32
    %353 = vector.broadcast %cst_142 : f32 to vector<8x128xf32>
    %354 = arith.addf %353, %352 : vector<8x128xf32>
    %355 = arith.divf %353, %354 : vector<8x128xf32>
    %356 = arith.mulf %355, %8 : vector<8x128xf32>
    %357 = arith.addf %356, %11 : vector<8x128xf32>
    %c96_i32_143 = arith.constant 96 : i32
    %358 = tpu.dynamic_rotate %357 by %c96_i32_143 dim 1 : vector<8x128xf32>, i32 -> vector<8x128xf32>
    %c64_i32_144 = arith.constant 64 : i32
    %359 = tpu.dynamic_rotate %357 by %c64_i32_144 dim 1 : vector<8x128xf32>, i32 -> vector<8x128xf32>
    %c32_i32_145 = arith.constant 32 : i32
    %360 = tpu.dynamic_rotate %357 by %c32_i32_145 dim 1 : vector<8x128xf32>, i32 -> vector<8x128xf32>
    %361 = arith.mulf %358, %343 : vector<8x128xf32>
    %362 = arith.mulf %357, %359 : vector<8x128xf32>
    %363 = arith.addf %361, %362 : vector<8x128xf32>
    %364 = math.tanh %363 : vector<8x128xf32>
    %365 = arith.mulf %360, %364 : vector<8x128xf32>
    %c24_146 = arith.constant 24 : index
    %c0_147 = arith.constant 0 : index
    %366 = vector.load %arg16[%c24_146, %c0_147] : memref<48x128xf32, #tpu.memory_space<vmem>>, vector<8x128xf32>
    tpu.vector_store %arg16[%c24_146, %c0_147], %365 {strides = array<i32>} : memref<48x128xf32, #tpu.memory_space<vmem>>, vector<8x128xf32>,
    %367 = arith.truncf %365 : vector<8x128xf32> to vector<8x128xbf16>
    %368 = vector.extract_strided_slice %283 {offsets = [32, 0], sizes = [8, 128], strides = [1, 1]} : vector<48x128xf32> to vector<8x128xf32>
    %cst_148 = arith.constant dense<0.000000e+00> : vector<8x128xf32>
    %369 = tpu.matmul %367, %285, %cst_148 {dimension_numbers = #tpu.dot_dimension_numbers<[1], [0], [0], [1], [0, 0, 1, 1], [], []>} : vector<8x128xbf16>, vector<128x128xbf16>, vector<8x128xf32> -> vector<8x128xf32>
    %370 = arith.addf %368, %369 : vector<8x128xf32>
    %371 = arith.negf %370 : vector<8x128xf32>
    %372 = math.exp %371 : vector<8x128xf32>
    %cst_149 = arith.constant 1.000000e+00 : f32
    %373 = vector.broadcast %cst_149 : f32 to vector<8x128xf32>
    %374 = arith.addf %373, %372 : vector<8x128xf32>
    %375 = arith.divf %373, %374 : vector<8x128xf32>
    %376 = arith.mulf %375, %8 : vector<8x128xf32>
    %377 = arith.addf %376, %11 : vector<8x128xf32>
    %c96_i32_150 = arith.constant 96 : i32
    %378 = tpu.dynamic_rotate %377 by %c96_i32_150 dim 1 : vector<8x128xf32>, i32 -> vector<8x128xf32>
    %c64_i32_151 = arith.constant 64 : i32
    %379 = tpu.dynamic_rotate %377 by %c64_i32_151 dim 1 : vector<8x128xf32>, i32 -> vector<8x128xf32>
    %c32_i32_152 = arith.constant 32 : i32
    %380 = tpu.dynamic_rotate %377 by %c32_i32_152 dim 1 : vector<8x128xf32>, i32 -> vector<8x128xf32>
    %381 = arith.mulf %378, %363 : vector<8x128xf32>
    %382 = arith.mulf %377, %379 : vector<8x128xf32>
    %383 = arith.addf %381, %382 : vector<8x128xf32>
    %384 = math.tanh %383 : vector<8x128xf32>
    %385 = arith.mulf %380, %384 : vector<8x128xf32>
    %c32_153 = arith.constant 32 : index
    %c0_154 = arith.constant 0 : index
    %386 = vector.load %arg16[%c32_153, %c0_154] : memref<48x128xf32, #tpu.memory_space<vmem>>, vector<8x128xf32>
    tpu.vector_store %arg16[%c32_153, %c0_154], %385 {strides = array<i32>} : memref<48x128xf32, #tpu.memory_space<vmem>>, vector<8x128xf32>,
    %387 = arith.truncf %385 : vector<8x128xf32> to vector<8x128xbf16>
    %388 = vector.extract_strided_slice %283 {offsets = [40, 0], sizes = [8, 128], strides = [1, 1]} : vector<48x128xf32> to vector<8x128xf32>
    %cst_155 = arith.constant dense<0.000000e+00> : vector<8x128xf32>
    %389 = tpu.matmul %387, %285, %cst_155 {dimension_numbers = #tpu.dot_dimension_numbers<[1], [0], [0], [1], [0, 0, 1, 1], [], []>} : vector<8x128xbf16>, vector<128x128xbf16>, vector<8x128xf32> -> vector<8x128xf32>
    %390 = arith.addf %388, %389 : vector<8x128xf32>
    %391 = arith.negf %390 : vector<8x128xf32>
    %392 = math.exp %391 : vector<8x128xf32>
    %cst_156 = arith.constant 1.000000e+00 : f32
    %393 = vector.broadcast %cst_156 : f32 to vector<8x128xf32>
    %394 = arith.addf %393, %392 : vector<8x128xf32>
    %395 = arith.divf %393, %394 : vector<8x128xf32>
    %396 = arith.mulf %395, %8 : vector<8x128xf32>
    %397 = arith.addf %396, %11 : vector<8x128xf32>
    %c96_i32_157 = arith.constant 96 : i32
    %398 = tpu.dynamic_rotate %397 by %c96_i32_157 dim 1 : vector<8x128xf32>, i32 -> vector<8x128xf32>
    %c64_i32_158 = arith.constant 64 : i32
    %399 = tpu.dynamic_rotate %397 by %c64_i32_158 dim 1 : vector<8x128xf32>, i32 -> vector<8x128xf32>
    %c32_i32_159 = arith.constant 32 : i32
    %400 = tpu.dynamic_rotate %397 by %c32_i32_159 dim 1 : vector<8x128xf32>, i32 -> vector<8x128xf32>
    %401 = arith.mulf %398, %383 : vector<8x128xf32>
    %402 = arith.mulf %397, %399 : vector<8x128xf32>
    %403 = arith.addf %401, %402 : vector<8x128xf32>
    %404 = math.tanh %403 : vector<8x128xf32>
    %405 = arith.mulf %400, %404 : vector<8x128xf32>
    %c40_160 = arith.constant 40 : index
    %c0_161 = arith.constant 0 : index
    %406 = vector.load %arg16[%c40_160, %c0_161] : memref<48x128xf32, #tpu.memory_space<vmem>>, vector<8x128xf32>
    tpu.vector_store %arg16[%c40_160, %c0_161], %405 {strides = array<i32>} : memref<48x128xf32, #tpu.memory_space<vmem>>, vector<8x128xf32>,
    %c0_162 = arith.constant 0 : index
    %c0_163 = arith.constant 0 : index
    %407 = vector.load %arg16[%c0_162, %c0_163] : memref<48x128xf32, #tpu.memory_space<vmem>>, vector<48x128xf32>
    %408 = arith.truncf %407 : vector<48x128xf32> to vector<48x128xbf16>
    %c3 = arith.constant 3 : index
    %c0_164 = arith.constant 0 : index
    %c0_165 = arith.constant 0 : index
    %409 = vector.load %arg2[%c3, %c0_164, %c0_165] : memref<5x128x128xbf16, #tpu.memory_space<vmem>>, vector<1x128x128xbf16>
    %410 = vector.shape_cast %409 : vector<1x128x128xbf16> to vector<128x128xbf16>
    %cst_166 = arith.constant dense<0.000000e+00> : vector<48x128xf32>
    %411 = tpu.matmul %408, %410, %cst_166 {dimension_numbers = #tpu.dot_dimension_numbers<[1], [0], [0], [1], [0, 0, 1, 1], [], []>} : vector<48x128xbf16>, vector<128x128xbf16>, vector<48x128xf32> -> vector<48x128xf32>
    %c3_167 = arith.constant 3 : index
    %c0_168 = arith.constant 0 : index
    %c0_169 = arith.constant 0 : index
    %412 = vector.load %arg4[%c3_167, %c0_168, %c0_169] : memref<5x1x128xf32, #tpu.memory_space<vmem>>, vector<1x1x128xf32>
    %413 = vector.shape_cast %412 : vector<1x1x128xf32> to vector<1x128xf32>
    %414 = vector.broadcast %413 : vector<1x128xf32> to vector<48x128xf32>
    %415 = arith.addf %411, %414 : vector<48x128xf32>
    %c3_170 = arith.constant 3 : index
    %c0_171 = arith.constant 0 : index
    %c0_172 = arith.constant 0 : index
    %416 = vector.load %arg3[%c3_170, %c0_171, %c0_172] : memref<5x128x128xbf16, #tpu.memory_space<vmem>>, vector<1x128x128xbf16>
    %417 = vector.shape_cast %416 : vector<1x128x128xbf16> to vector<128x128xbf16>
    %cst_173 = arith.constant 0.000000e+00 : bf16
    %418 = vector.broadcast %cst_173 : bf16 to vector<8x128xbf16>
    %cst_174 = arith.constant 0.000000e+00 : f32
    %419 = vector.broadcast %cst_174 : f32 to vector<8x128xf32>
    %420 = vector.extract_strided_slice %415 {offsets = [0, 0], sizes = [8, 128], strides = [1, 1]} : vector<48x128xf32> to vector<8x128xf32>
    %cst_175 = arith.constant dense<0.000000e+00> : vector<8x128xf32>
    %421 = tpu.matmul %418, %417, %cst_175 {dimension_numbers = #tpu.dot_dimension_numbers<[1], [0], [0], [1], [0, 0, 1, 1], [], []>} : vector<8x128xbf16>, vector<128x128xbf16>, vector<8x128xf32> -> vector<8x128xf32>
    %422 = arith.addf %420, %421 : vector<8x128xf32>
    %423 = arith.negf %422 : vector<8x128xf32>
    %424 = math.exp %423 : vector<8x128xf32>
    %cst_176 = arith.constant 1.000000e+00 : f32
    %425 = vector.broadcast %cst_176 : f32 to vector<8x128xf32>
    %426 = arith.addf %425, %424 : vector<8x128xf32>
    %427 = arith.divf %425, %426 : vector<8x128xf32>
    %428 = arith.mulf %427, %8 : vector<8x128xf32>
    %429 = arith.addf %428, %11 : vector<8x128xf32>
    %c96_i32_177 = arith.constant 96 : i32
    %430 = tpu.dynamic_rotate %429 by %c96_i32_177 dim 1 : vector<8x128xf32>, i32 -> vector<8x128xf32>
    %c64_i32_178 = arith.constant 64 : i32
    %431 = tpu.dynamic_rotate %429 by %c64_i32_178 dim 1 : vector<8x128xf32>, i32 -> vector<8x128xf32>
    %c32_i32_179 = arith.constant 32 : i32
    %432 = tpu.dynamic_rotate %429 by %c32_i32_179 dim 1 : vector<8x128xf32>, i32 -> vector<8x128xf32>
    %433 = arith.mulf %430, %419 : vector<8x128xf32>
    %434 = arith.mulf %429, %431 : vector<8x128xf32>
    %435 = arith.addf %433, %434 : vector<8x128xf32>
    %436 = math.tanh %435 : vector<8x128xf32>
    %437 = arith.mulf %432, %436 : vector<8x128xf32>
    %c0_180 = arith.constant 0 : index
    %c0_181 = arith.constant 0 : index
    %438 = vector.load %arg16[%c0_180, %c0_181] : memref<48x128xf32, #tpu.memory_space<vmem>>, vector<8x128xf32>
    tpu.vector_store %arg16[%c0_180, %c0_181], %437 {strides = array<i32>} : memref<48x128xf32, #tpu.memory_space<vmem>>, vector<8x128xf32>,
    %439 = arith.truncf %437 : vector<8x128xf32> to vector<8x128xbf16>
    %440 = vector.extract_strided_slice %415 {offsets = [8, 0], sizes = [8, 128], strides = [1, 1]} : vector<48x128xf32> to vector<8x128xf32>
    %cst_182 = arith.constant dense<0.000000e+00> : vector<8x128xf32>
    %441 = tpu.matmul %439, %417, %cst_182 {dimension_numbers = #tpu.dot_dimension_numbers<[1], [0], [0], [1], [0, 0, 1, 1], [], []>} : vector<8x128xbf16>, vector<128x128xbf16>, vector<8x128xf32> -> vector<8x128xf32>
    %442 = arith.addf %440, %441 : vector<8x128xf32>
    %443 = arith.negf %442 : vector<8x128xf32>
    %444 = math.exp %443 : vector<8x128xf32>
    %cst_183 = arith.constant 1.000000e+00 : f32
    %445 = vector.broadcast %cst_183 : f32 to vector<8x128xf32>
    %446 = arith.addf %445, %444 : vector<8x128xf32>
    %447 = arith.divf %445, %446 : vector<8x128xf32>
    %448 = arith.mulf %447, %8 : vector<8x128xf32>
    %449 = arith.addf %448, %11 : vector<8x128xf32>
    %c96_i32_184 = arith.constant 96 : i32
    %450 = tpu.dynamic_rotate %449 by %c96_i32_184 dim 1 : vector<8x128xf32>, i32 -> vector<8x128xf32>
    %c64_i32_185 = arith.constant 64 : i32
    %451 = tpu.dynamic_rotate %449 by %c64_i32_185 dim 1 : vector<8x128xf32>, i32 -> vector<8x128xf32>
    %c32_i32_186 = arith.constant 32 : i32
    %452 = tpu.dynamic_rotate %449 by %c32_i32_186 dim 1 : vector<8x128xf32>, i32 -> vector<8x128xf32>
    %453 = arith.mulf %450, %435 : vector<8x128xf32>
    %454 = arith.mulf %449, %451 : vector<8x128xf32>
    %455 = arith.addf %453, %454 : vector<8x128xf32>
    %456 = math.tanh %455 : vector<8x128xf32>
    %457 = arith.mulf %452, %456 : vector<8x128xf32>
    %c8_187 = arith.constant 8 : index
    %c0_188 = arith.constant 0 : index
    %458 = vector.load %arg16[%c8_187, %c0_188] : memref<48x128xf32, #tpu.memory_space<vmem>>, vector<8x128xf32>
    tpu.vector_store %arg16[%c8_187, %c0_188], %457 {strides = array<i32>} : memref<48x128xf32, #tpu.memory_space<vmem>>, vector<8x128xf32>,
    %459 = arith.truncf %457 : vector<8x128xf32> to vector<8x128xbf16>
    %460 = vector.extract_strided_slice %415 {offsets = [16, 0], sizes = [8, 128], strides = [1, 1]} : vector<48x128xf32> to vector<8x128xf32>
    %cst_189 = arith.constant dense<0.000000e+00> : vector<8x128xf32>
    %461 = tpu.matmul %459, %417, %cst_189 {dimension_numbers = #tpu.dot_dimension_numbers<[1], [0], [0], [1], [0, 0, 1, 1], [], []>} : vector<8x128xbf16>, vector<128x128xbf16>, vector<8x128xf32> -> vector<8x128xf32>
    %462 = arith.addf %460, %461 : vector<8x128xf32>
    %463 = arith.negf %462 : vector<8x128xf32>
    %464 = math.exp %463 : vector<8x128xf32>
    %cst_190 = arith.constant 1.000000e+00 : f32
    %465 = vector.broadcast %cst_190 : f32 to vector<8x128xf32>
    %466 = arith.addf %465, %464 : vector<8x128xf32>
    %467 = arith.divf %465, %466 : vector<8x128xf32>
    %468 = arith.mulf %467, %8 : vector<8x128xf32>
    %469 = arith.addf %468, %11 : vector<8x128xf32>
    %c96_i32_191 = arith.constant 96 : i32
    %470 = tpu.dynamic_rotate %469 by %c96_i32_191 dim 1 : vector<8x128xf32>, i32 -> vector<8x128xf32>
    %c64_i32_192 = arith.constant 64 : i32
    %471 = tpu.dynamic_rotate %469 by %c64_i32_192 dim 1 : vector<8x128xf32>, i32 -> vector<8x128xf32>
    %c32_i32_193 = arith.constant 32 : i32
    %472 = tpu.dynamic_rotate %469 by %c32_i32_193 dim 1 : vector<8x128xf32>, i32 -> vector<8x128xf32>
    %473 = arith.mulf %470, %455 : vector<8x128xf32>
    %474 = arith.mulf %469, %471 : vector<8x128xf32>
    %475 = arith.addf %473, %474 : vector<8x128xf32>
    %476 = math.tanh %475 : vector<8x128xf32>
    %477 = arith.mulf %472, %476 : vector<8x128xf32>
    %c16_194 = arith.constant 16 : index
    %c0_195 = arith.constant 0 : index
    %478 = vector.load %arg16[%c16_194, %c0_195] : memref<48x128xf32, #tpu.memory_space<vmem>>, vector<8x128xf32>
    tpu.vector_store %arg16[%c16_194, %c0_195], %477 {strides = array<i32>} : memref<48x128xf32, #tpu.memory_space<vmem>>, vector<8x128xf32>,
    %479 = arith.truncf %477 : vector<8x128xf32> to vector<8x128xbf16>
    %480 = vector.extract_strided_slice %415 {offsets = [24, 0], sizes = [8, 128], strides = [1, 1]} : vector<48x128xf32> to vector<8x128xf32>
    %cst_196 = arith.constant dense<0.000000e+00> : vector<8x128xf32>
    %481 = tpu.matmul %479, %417, %cst_196 {dimension_numbers = #tpu.dot_dimension_numbers<[1], [0], [0], [1], [0, 0, 1, 1], [], []>} : vector<8x128xbf16>, vector<128x128xbf16>, vector<8x128xf32> -> vector<8x128xf32>
    %482 = arith.addf %480, %481 : vector<8x128xf32>
    %483 = arith.negf %482 : vector<8x128xf32>
    %484 = math.exp %483 : vector<8x128xf32>
    %cst_197 = arith.constant 1.000000e+00 : f32
    %485 = vector.broadcast %cst_197 : f32 to vector<8x128xf32>
    %486 = arith.addf %485, %484 : vector<8x128xf32>
    %487 = arith.divf %485, %486 : vector<8x128xf32>
    %488 = arith.mulf %487, %8 : vector<8x128xf32>
    %489 = arith.addf %488, %11 : vector<8x128xf32>
    %c96_i32_198 = arith.constant 96 : i32
    %490 = tpu.dynamic_rotate %489 by %c96_i32_198 dim 1 : vector<8x128xf32>, i32 -> vector<8x128xf32>
    %c64_i32_199 = arith.constant 64 : i32
    %491 = tpu.dynamic_rotate %489 by %c64_i32_199 dim 1 : vector<8x128xf32>, i32 -> vector<8x128xf32>
    %c32_i32_200 = arith.constant 32 : i32
    %492 = tpu.dynamic_rotate %489 by %c32_i32_200 dim 1 : vector<8x128xf32>, i32 -> vector<8x128xf32>
    %493 = arith.mulf %490, %475 : vector<8x128xf32>
    %494 = arith.mulf %489, %491 : vector<8x128xf32>
    %495 = arith.addf %493, %494 : vector<8x128xf32>
    %496 = math.tanh %495 : vector<8x128xf32>
    %497 = arith.mulf %492, %496 : vector<8x128xf32>
    %c24_201 = arith.constant 24 : index
    %c0_202 = arith.constant 0 : index
    %498 = vector.load %arg16[%c24_201, %c0_202] : memref<48x128xf32, #tpu.memory_space<vmem>>, vector<8x128xf32>
    tpu.vector_store %arg16[%c24_201, %c0_202], %497 {strides = array<i32>} : memref<48x128xf32, #tpu.memory_space<vmem>>, vector<8x128xf32>,
    %499 = arith.truncf %497 : vector<8x128xf32> to vector<8x128xbf16>
    %500 = vector.extract_strided_slice %415 {offsets = [32, 0], sizes = [8, 128], strides = [1, 1]} : vector<48x128xf32> to vector<8x128xf32>
    %cst_203 = arith.constant dense<0.000000e+00> : vector<8x128xf32>
    %501 = tpu.matmul %499, %417, %cst_203 {dimension_numbers = #tpu.dot_dimension_numbers<[1], [0], [0], [1], [0, 0, 1, 1], [], []>} : vector<8x128xbf16>, vector<128x128xbf16>, vector<8x128xf32> -> vector<8x128xf32>
    %502 = arith.addf %500, %501 : vector<8x128xf32>
    %503 = arith.negf %502 : vector<8x128xf32>
    %504 = math.exp %503 : vector<8x128xf32>
    %cst_204 = arith.constant 1.000000e+00 : f32
    %505 = vector.broadcast %cst_204 : f32 to vector<8x128xf32>
    %506 = arith.addf %505, %504 : vector<8x128xf32>
    %507 = arith.divf %505, %506 : vector<8x128xf32>
    %508 = arith.mulf %507, %8 : vector<8x128xf32>
    %509 = arith.addf %508, %11 : vector<8x128xf32>
    %c96_i32_205 = arith.constant 96 : i32
    %510 = tpu.dynamic_rotate %509 by %c96_i32_205 dim 1 : vector<8x128xf32>, i32 -> vector<8x128xf32>
    %c64_i32_206 = arith.constant 64 : i32
    %511 = tpu.dynamic_rotate %509 by %c64_i32_206 dim 1 : vector<8x128xf32>, i32 -> vector<8x128xf32>
    %c32_i32_207 = arith.constant 32 : i32
    %512 = tpu.dynamic_rotate %509 by %c32_i32_207 dim 1 : vector<8x128xf32>, i32 -> vector<8x128xf32>
    %513 = arith.mulf %510, %495 : vector<8x128xf32>
    %514 = arith.mulf %509, %511 : vector<8x128xf32>
    %515 = arith.addf %513, %514 : vector<8x128xf32>
    %516 = math.tanh %515 : vector<8x128xf32>
    %517 = arith.mulf %512, %516 : vector<8x128xf32>
    %c32_208 = arith.constant 32 : index
    %c0_209 = arith.constant 0 : index
    %518 = vector.load %arg16[%c32_208, %c0_209] : memref<48x128xf32, #tpu.memory_space<vmem>>, vector<8x128xf32>
    tpu.vector_store %arg16[%c32_208, %c0_209], %517 {strides = array<i32>} : memref<48x128xf32, #tpu.memory_space<vmem>>, vector<8x128xf32>,
    %519 = arith.truncf %517 : vector<8x128xf32> to vector<8x128xbf16>
    %520 = vector.extract_strided_slice %415 {offsets = [40, 0], sizes = [8, 128], strides = [1, 1]} : vector<48x128xf32> to vector<8x128xf32>
    %cst_210 = arith.constant dense<0.000000e+00> : vector<8x128xf32>
    %521 = tpu.matmul %519, %417, %cst_210 {dimension_numbers = #tpu.dot_dimension_numbers<[1], [0], [0], [1], [0, 0, 1, 1], [], []>} : vector<8x128xbf16>, vector<128x128xbf16>, vector<8x128xf32> -> vector<8x128xf32>
    %522 = arith.addf %520, %521 : vector<8x128xf32>
    %523 = arith.negf %522 : vector<8x128xf32>
    %524 = math.exp %523 : vector<8x128xf32>
    %cst_211 = arith.constant 1.000000e+00 : f32
    %525 = vector.broadcast %cst_211 : f32 to vector<8x128xf32>
    %526 = arith.addf %525, %524 : vector<8x128xf32>
    %527 = arith.divf %525, %526 : vector<8x128xf32>
    %528 = arith.mulf %527, %8 : vector<8x128xf32>
    %529 = arith.addf %528, %11 : vector<8x128xf32>
    %c96_i32_212 = arith.constant 96 : i32
    %530 = tpu.dynamic_rotate %529 by %c96_i32_212 dim 1 : vector<8x128xf32>, i32 -> vector<8x128xf32>
    %c64_i32_213 = arith.constant 64 : i32
    %531 = tpu.dynamic_rotate %529 by %c64_i32_213 dim 1 : vector<8x128xf32>, i32 -> vector<8x128xf32>
    %c32_i32_214 = arith.constant 32 : i32
    %532 = tpu.dynamic_rotate %529 by %c32_i32_214 dim 1 : vector<8x128xf32>, i32 -> vector<8x128xf32>
    %533 = arith.mulf %530, %515 : vector<8x128xf32>
    %534 = arith.mulf %529, %531 : vector<8x128xf32>
    %535 = arith.addf %533, %534 : vector<8x128xf32>
    %536 = math.tanh %535 : vector<8x128xf32>
    %537 = arith.mulf %532, %536 : vector<8x128xf32>
    %c40_215 = arith.constant 40 : index
    %c0_216 = arith.constant 0 : index
    %538 = vector.load %arg16[%c40_215, %c0_216] : memref<48x128xf32, #tpu.memory_space<vmem>>, vector<8x128xf32>
    tpu.vector_store %arg16[%c40_215, %c0_216], %537 {strides = array<i32>} : memref<48x128xf32, #tpu.memory_space<vmem>>, vector<8x128xf32>,
    %c0_217 = arith.constant 0 : index
    %c0_218 = arith.constant 0 : index
    %539 = vector.load %arg16[%c0_217, %c0_218] : memref<48x128xf32, #tpu.memory_space<vmem>>, vector<48x128xf32>
    %540 = arith.truncf %539 : vector<48x128xf32> to vector<48x128xbf16>
    %c4 = arith.constant 4 : index
    %c0_219 = arith.constant 0 : index
    %c0_220 = arith.constant 0 : index
    %541 = vector.load %arg2[%c4, %c0_219, %c0_220] : memref<5x128x128xbf16, #tpu.memory_space<vmem>>, vector<1x128x128xbf16>
    %542 = vector.shape_cast %541 : vector<1x128x128xbf16> to vector<128x128xbf16>
    %cst_221 = arith.constant dense<0.000000e+00> : vector<48x128xf32>
    %543 = tpu.matmul %540, %542, %cst_221 {dimension_numbers = #tpu.dot_dimension_numbers<[1], [0], [0], [1], [0, 0, 1, 1], [], []>} : vector<48x128xbf16>, vector<128x128xbf16>, vector<48x128xf32> -> vector<48x128xf32>
    %c4_222 = arith.constant 4 : index
    %c0_223 = arith.constant 0 : index
    %c0_224 = arith.constant 0 : index
    %544 = vector.load %arg4[%c4_222, %c0_223, %c0_224] : memref<5x1x128xf32, #tpu.memory_space<vmem>>, vector<1x1x128xf32>
    %545 = vector.shape_cast %544 : vector<1x1x128xf32> to vector<1x128xf32>
    %546 = vector.broadcast %545 : vector<1x128xf32> to vector<48x128xf32>
    %547 = arith.addf %543, %546 : vector<48x128xf32>
    %c4_225 = arith.constant 4 : index
    %c0_226 = arith.constant 0 : index
    %c0_227 = arith.constant 0 : index
    %548 = vector.load %arg3[%c4_225, %c0_226, %c0_227] : memref<5x128x128xbf16, #tpu.memory_space<vmem>>, vector<1x128x128xbf16>
    %549 = vector.shape_cast %548 : vector<1x128x128xbf16> to vector<128x128xbf16>
    %cst_228 = arith.constant 0.000000e+00 : bf16
    %550 = vector.broadcast %cst_228 : bf16 to vector<8x128xbf16>
    %cst_229 = arith.constant 0.000000e+00 : f32
    %551 = vector.broadcast %cst_229 : f32 to vector<8x128xf32>
    %552 = vector.extract_strided_slice %547 {offsets = [0, 0], sizes = [8, 128], strides = [1, 1]} : vector<48x128xf32> to vector<8x128xf32>
    %cst_230 = arith.constant dense<0.000000e+00> : vector<8x128xf32>
    %553 = tpu.matmul %550, %549, %cst_230 {dimension_numbers = #tpu.dot_dimension_numbers<[1], [0], [0], [1], [0, 0, 1, 1], [], []>} : vector<8x128xbf16>, vector<128x128xbf16>, vector<8x128xf32> -> vector<8x128xf32>
    %554 = arith.addf %552, %553 : vector<8x128xf32>
    %555 = arith.negf %554 : vector<8x128xf32>
    %556 = math.exp %555 : vector<8x128xf32>
    %cst_231 = arith.constant 1.000000e+00 : f32
    %557 = vector.broadcast %cst_231 : f32 to vector<8x128xf32>
    %558 = arith.addf %557, %556 : vector<8x128xf32>
    %559 = arith.divf %557, %558 : vector<8x128xf32>
    %560 = arith.mulf %559, %8 : vector<8x128xf32>
    %561 = arith.addf %560, %11 : vector<8x128xf32>
    %c96_i32_232 = arith.constant 96 : i32
    %562 = tpu.dynamic_rotate %561 by %c96_i32_232 dim 1 : vector<8x128xf32>, i32 -> vector<8x128xf32>
    %c64_i32_233 = arith.constant 64 : i32
    %563 = tpu.dynamic_rotate %561 by %c64_i32_233 dim 1 : vector<8x128xf32>, i32 -> vector<8x128xf32>
    %c32_i32_234 = arith.constant 32 : i32
    %564 = tpu.dynamic_rotate %561 by %c32_i32_234 dim 1 : vector<8x128xf32>, i32 -> vector<8x128xf32>
    %565 = arith.mulf %562, %551 : vector<8x128xf32>
    %566 = arith.mulf %561, %563 : vector<8x128xf32>
    %567 = arith.addf %565, %566 : vector<8x128xf32>
    %568 = math.tanh %567 : vector<8x128xf32>
    %569 = arith.mulf %564, %568 : vector<8x128xf32>
    %c0_235 = arith.constant 0 : index
    %c0_236 = arith.constant 0 : index
    %570 = vector.load %arg16[%c0_235, %c0_236] : memref<48x128xf32, #tpu.memory_space<vmem>>, vector<8x128xf32>
    tpu.vector_store %arg16[%c0_235, %c0_236], %569 {strides = array<i32>} : memref<48x128xf32, #tpu.memory_space<vmem>>, vector<8x128xf32>,
    %571 = arith.truncf %569 : vector<8x128xf32> to vector<8x128xbf16>
    %572 = vector.extract_strided_slice %547 {offsets = [8, 0], sizes = [8, 128], strides = [1, 1]} : vector<48x128xf32> to vector<8x128xf32>
    %cst_237 = arith.constant dense<0.000000e+00> : vector<8x128xf32>
    %573 = tpu.matmul %571, %549, %cst_237 {dimension_numbers = #tpu.dot_dimension_numbers<[1], [0], [0], [1], [0, 0, 1, 1], [], []>} : vector<8x128xbf16>, vector<128x128xbf16>, vector<8x128xf32> -> vector<8x128xf32>
    %574 = arith.addf %572, %573 : vector<8x128xf32>
    %575 = arith.negf %574 : vector<8x128xf32>
    %576 = math.exp %575 : vector<8x128xf32>
    %cst_238 = arith.constant 1.000000e+00 : f32
    %577 = vector.broadcast %cst_238 : f32 to vector<8x128xf32>
    %578 = arith.addf %577, %576 : vector<8x128xf32>
    %579 = arith.divf %577, %578 : vector<8x128xf32>
    %580 = arith.mulf %579, %8 : vector<8x128xf32>
    %581 = arith.addf %580, %11 : vector<8x128xf32>
    %c96_i32_239 = arith.constant 96 : i32
    %582 = tpu.dynamic_rotate %581 by %c96_i32_239 dim 1 : vector<8x128xf32>, i32 -> vector<8x128xf32>
    %c64_i32_240 = arith.constant 64 : i32
    %583 = tpu.dynamic_rotate %581 by %c64_i32_240 dim 1 : vector<8x128xf32>, i32 -> vector<8x128xf32>
    %c32_i32_241 = arith.constant 32 : i32
    %584 = tpu.dynamic_rotate %581 by %c32_i32_241 dim 1 : vector<8x128xf32>, i32 -> vector<8x128xf32>
    %585 = arith.mulf %582, %567 : vector<8x128xf32>
    %586 = arith.mulf %581, %583 : vector<8x128xf32>
    %587 = arith.addf %585, %586 : vector<8x128xf32>
    %588 = math.tanh %587 : vector<8x128xf32>
    %589 = arith.mulf %584, %588 : vector<8x128xf32>
    %c8_242 = arith.constant 8 : index
    %c0_243 = arith.constant 0 : index
    %590 = vector.load %arg16[%c8_242, %c0_243] : memref<48x128xf32, #tpu.memory_space<vmem>>, vector<8x128xf32>
    tpu.vector_store %arg16[%c8_242, %c0_243], %589 {strides = array<i32>} : memref<48x128xf32, #tpu.memory_space<vmem>>, vector<8x128xf32>,
    %591 = arith.truncf %589 : vector<8x128xf32> to vector<8x128xbf16>
    %592 = vector.extract_strided_slice %547 {offsets = [16, 0], sizes = [8, 128], strides = [1, 1]} : vector<48x128xf32> to vector<8x128xf32>
    %cst_244 = arith.constant dense<0.000000e+00> : vector<8x128xf32>
    %593 = tpu.matmul %591, %549, %cst_244 {dimension_numbers = #tpu.dot_dimension_numbers<[1], [0], [0], [1], [0, 0, 1, 1], [], []>} : vector<8x128xbf16>, vector<128x128xbf16>, vector<8x128xf32> -> vector<8x128xf32>
    %594 = arith.addf %592, %593 : vector<8x128xf32>
    %595 = arith.negf %594 : vector<8x128xf32>
    %596 = math.exp %595 : vector<8x128xf32>
    %cst_245 = arith.constant 1.000000e+00 : f32
    %597 = vector.broadcast %cst_245 : f32 to vector<8x128xf32>
    %598 = arith.addf %597, %596 : vector<8x128xf32>
    %599 = arith.divf %597, %598 : vector<8x128xf32>
    %600 = arith.mulf %599, %8 : vector<8x128xf32>
    %601 = arith.addf %600, %11 : vector<8x128xf32>
    %c96_i32_246 = arith.constant 96 : i32
    %602 = tpu.dynamic_rotate %601 by %c96_i32_246 dim 1 : vector<8x128xf32>, i32 -> vector<8x128xf32>
    %c64_i32_247 = arith.constant 64 : i32
    %603 = tpu.dynamic_rotate %601 by %c64_i32_247 dim 1 : vector<8x128xf32>, i32 -> vector<8x128xf32>
    %c32_i32_248 = arith.constant 32 : i32
    %604 = tpu.dynamic_rotate %601 by %c32_i32_248 dim 1 : vector<8x128xf32>, i32 -> vector<8x128xf32>
    %605 = arith.mulf %602, %587 : vector<8x128xf32>
    %606 = arith.mulf %601, %603 : vector<8x128xf32>
    %607 = arith.addf %605, %606 : vector<8x128xf32>
    %608 = math.tanh %607 : vector<8x128xf32>
    %609 = arith.mulf %604, %608 : vector<8x128xf32>
    %c16_249 = arith.constant 16 : index
    %c0_250 = arith.constant 0 : index
    %610 = vector.load %arg16[%c16_249, %c0_250] : memref<48x128xf32, #tpu.memory_space<vmem>>, vector<8x128xf32>
    tpu.vector_store %arg16[%c16_249, %c0_250], %609 {strides = array<i32>} : memref<48x128xf32, #tpu.memory_space<vmem>>, vector<8x128xf32>,
    %611 = arith.truncf %609 : vector<8x128xf32> to vector<8x128xbf16>
    %612 = vector.extract_strided_slice %547 {offsets = [24, 0], sizes = [8, 128], strides = [1, 1]} : vector<48x128xf32> to vector<8x128xf32>
    %cst_251 = arith.constant dense<0.000000e+00> : vector<8x128xf32>
    %613 = tpu.matmul %611, %549, %cst_251 {dimension_numbers = #tpu.dot_dimension_numbers<[1], [0], [0], [1], [0, 0, 1, 1], [], []>} : vector<8x128xbf16>, vector<128x128xbf16>, vector<8x128xf32> -> vector<8x128xf32>
    %614 = arith.addf %612, %613 : vector<8x128xf32>
    %615 = arith.negf %614 : vector<8x128xf32>
    %616 = math.exp %615 : vector<8x128xf32>
    %cst_252 = arith.constant 1.000000e+00 : f32
    %617 = vector.broadcast %cst_252 : f32 to vector<8x128xf32>
    %618 = arith.addf %617, %616 : vector<8x128xf32>
    %619 = arith.divf %617, %618 : vector<8x128xf32>
    %620 = arith.mulf %619, %8 : vector<8x128xf32>
    %621 = arith.addf %620, %11 : vector<8x128xf32>
    %c96_i32_253 = arith.constant 96 : i32
    %622 = tpu.dynamic_rotate %621 by %c96_i32_253 dim 1 : vector<8x128xf32>, i32 -> vector<8x128xf32>
    %c64_i32_254 = arith.constant 64 : i32
    %623 = tpu.dynamic_rotate %621 by %c64_i32_254 dim 1 : vector<8x128xf32>, i32 -> vector<8x128xf32>
    %c32_i32_255 = arith.constant 32 : i32
    %624 = tpu.dynamic_rotate %621 by %c32_i32_255 dim 1 : vector<8x128xf32>, i32 -> vector<8x128xf32>
    %625 = arith.mulf %622, %607 : vector<8x128xf32>
    %626 = arith.mulf %621, %623 : vector<8x128xf32>
    %627 = arith.addf %625, %626 : vector<8x128xf32>
    %628 = math.tanh %627 : vector<8x128xf32>
    %629 = arith.mulf %624, %628 : vector<8x128xf32>
    %c24_256 = arith.constant 24 : index
    %c0_257 = arith.constant 0 : index
    %630 = vector.load %arg16[%c24_256, %c0_257] : memref<48x128xf32, #tpu.memory_space<vmem>>, vector<8x128xf32>
    tpu.vector_store %arg16[%c24_256, %c0_257], %629 {strides = array<i32>} : memref<48x128xf32, #tpu.memory_space<vmem>>, vector<8x128xf32>,
    %631 = arith.truncf %629 : vector<8x128xf32> to vector<8x128xbf16>
    %632 = vector.extract_strided_slice %547 {offsets = [32, 0], sizes = [8, 128], strides = [1, 1]} : vector<48x128xf32> to vector<8x128xf32>
    %cst_258 = arith.constant dense<0.000000e+00> : vector<8x128xf32>
    %633 = tpu.matmul %631, %549, %cst_258 {dimension_numbers = #tpu.dot_dimension_numbers<[1], [0], [0], [1], [0, 0, 1, 1], [], []>} : vector<8x128xbf16>, vector<128x128xbf16>, vector<8x128xf32> -> vector<8x128xf32>
    %634 = arith.addf %632, %633 : vector<8x128xf32>
    %635 = arith.negf %634 : vector<8x128xf32>
    %636 = math.exp %635 : vector<8x128xf32>
    %cst_259 = arith.constant 1.000000e+00 : f32
    %637 = vector.broadcast %cst_259 : f32 to vector<8x128xf32>
    %638 = arith.addf %637, %636 : vector<8x128xf32>
    %639 = arith.divf %637, %638 : vector<8x128xf32>
    %640 = arith.mulf %639, %8 : vector<8x128xf32>
    %641 = arith.addf %640, %11 : vector<8x128xf32>
    %c96_i32_260 = arith.constant 96 : i32
    %642 = tpu.dynamic_rotate %641 by %c96_i32_260 dim 1 : vector<8x128xf32>, i32 -> vector<8x128xf32>
    %c64_i32_261 = arith.constant 64 : i32
    %643 = tpu.dynamic_rotate %641 by %c64_i32_261 dim 1 : vector<8x128xf32>, i32 -> vector<8x128xf32>
    %c32_i32_262 = arith.constant 32 : i32
    %644 = tpu.dynamic_rotate %641 by %c32_i32_262 dim 1 : vector<8x128xf32>, i32 -> vector<8x128xf32>
    %645 = arith.mulf %642, %627 : vector<8x128xf32>
    %646 = arith.mulf %641, %643 : vector<8x128xf32>
    %647 = arith.addf %645, %646 : vector<8x128xf32>
    %648 = math.tanh %647 : vector<8x128xf32>
    %649 = arith.mulf %644, %648 : vector<8x128xf32>
    %c32_263 = arith.constant 32 : index
    %c0_264 = arith.constant 0 : index
    %650 = vector.load %arg16[%c32_263, %c0_264] : memref<48x128xf32, #tpu.memory_space<vmem>>, vector<8x128xf32>
    tpu.vector_store %arg16[%c32_263, %c0_264], %649 {strides = array<i32>} : memref<48x128xf32, #tpu.memory_space<vmem>>, vector<8x128xf32>,
    %651 = arith.truncf %649 : vector<8x128xf32> to vector<8x128xbf16>
    %652 = vector.extract_strided_slice %547 {offsets = [40, 0], sizes = [8, 128], strides = [1, 1]} : vector<48x128xf32> to vector<8x128xf32>
    %cst_265 = arith.constant dense<0.000000e+00> : vector<8x128xf32>
    %653 = tpu.matmul %651, %549, %cst_265 {dimension_numbers = #tpu.dot_dimension_numbers<[1], [0], [0], [1], [0, 0, 1, 1], [], []>} : vector<8x128xbf16>, vector<128x128xbf16>, vector<8x128xf32> -> vector<8x128xf32>
    %654 = arith.addf %652, %653 : vector<8x128xf32>
    %655 = arith.negf %654 : vector<8x128xf32>
    %656 = math.exp %655 : vector<8x128xf32>
    %cst_266 = arith.constant 1.000000e+00 : f32
    %657 = vector.broadcast %cst_266 : f32 to vector<8x128xf32>
    %658 = arith.addf %657, %656 : vector<8x128xf32>
    %659 = arith.divf %657, %658 : vector<8x128xf32>
    %660 = arith.mulf %659, %8 : vector<8x128xf32>
    %661 = arith.addf %660, %11 : vector<8x128xf32>
    %c96_i32_267 = arith.constant 96 : i32
    %662 = tpu.dynamic_rotate %661 by %c96_i32_267 dim 1 : vector<8x128xf32>, i32 -> vector<8x128xf32>
    %c64_i32_268 = arith.constant 64 : i32
    %663 = tpu.dynamic_rotate %661 by %c64_i32_268 dim 1 : vector<8x128xf32>, i32 -> vector<8x128xf32>
    %c32_i32_269 = arith.constant 32 : i32
    %664 = tpu.dynamic_rotate %661 by %c32_i32_269 dim 1 : vector<8x128xf32>, i32 -> vector<8x128xf32>
    %665 = arith.mulf %662, %647 : vector<8x128xf32>
    %666 = arith.mulf %661, %663 : vector<8x128xf32>
    %667 = arith.addf %665, %666 : vector<8x128xf32>
    %668 = math.tanh %667 : vector<8x128xf32>
    %669 = arith.mulf %664, %668 : vector<8x128xf32>
    %c40_270 = arith.constant 40 : index
    %c0_271 = arith.constant 0 : index
    %670 = vector.load %arg16[%c40_270, %c0_271] : memref<48x128xf32, #tpu.memory_space<vmem>>, vector<8x128xf32>
    tpu.vector_store %arg16[%c40_270, %c0_271], %669 {strides = array<i32>} : memref<48x128xf32, #tpu.memory_space<vmem>>, vector<8x128xf32>,
    %671 = arith.truncf %669 : vector<8x128xf32> to vector<8x128xbf16>
    %c0_272 = arith.constant 0 : index
    %c0_273 = arith.constant 0 : index
    %672 = vector.load %arg5[%c0_272, %c0_273] : memref<128x128xbf16, #tpu.memory_space<vmem>>, vector<128x128xbf16>
    %cst_274 = arith.constant dense<0.000000e+00> : vector<8x128xf32>
    %673 = tpu.matmul %671, %672, %cst_274 {dimension_numbers = #tpu.dot_dimension_numbers<[1], [0], [0], [1], [0, 0, 1, 1], [], []>} : vector<8x128xbf16>, vector<128x128xbf16>, vector<8x128xf32> -> vector<8x128xf32>
    %c0_275 = arith.constant 0 : index
    %c0_276 = arith.constant 0 : index
    %674 = vector.load %arg6[%c0_275, %c0_276] : memref<1x128xf32, #tpu.memory_space<vmem>>, vector<1x128xf32>
    %675 = vector.broadcast %674 : vector<1x128xf32> to vector<8x128xf32>
    %676 = arith.addf %673, %675 : vector<8x128xf32>
    %c0_277 = arith.constant 0 : index
    %c0_278 = arith.constant 0 : index
    %677 = vector.load %arg15[%c0_277, %c0_278] : memref<8x128xf32, #tpu.memory_space<vmem>>, vector<8x128xf32>
    tpu.vector_store %arg15[%c0_277, %c0_278], %676 {strides = array<i32>} : memref<8x128xf32, #tpu.memory_space<vmem>>, vector<8x128xf32>,
    %c112_i32 = arith.constant 112 : i32
    %678 = tpu.dynamic_rotate %676 by %c112_i32 dim 1 : vector<8x128xf32>, i32 -> vector<8x128xf32>
    %c0_279 = arith.constant 0 : index
    %c0_280 = arith.constant 0 : index
    %679 = vector.load %arg1[%c0_279, %c0_280] : memref<8x128xf32, #tpu.memory_space<vmem>>, vector<8x128xf32>
    %cst_281 = arith.constant 5.000000e-01 : f32
    %680 = vector.broadcast %cst_281 : f32 to vector<8x128xf32>
    %681 = arith.mulf %680, %678 : vector<8x128xf32>
    %682 = math.exp %681 : vector<8x128xf32>
    %683 = arith.mulf %679, %682 : vector<8x128xf32>
    %684 = arith.addf %676, %683 : vector<8x128xf32>
    %685 = arith.truncf %684 : vector<8x128xf32> to vector<8x128xbf16>
    %c0_282 = arith.constant 0 : index
    %c0_283 = arith.constant 0 : index
    %686 = vector.load %arg7[%c0_282, %c0_283] : memref<128x128xbf16, #tpu.memory_space<vmem>>, vector<128x128xbf16>
    %cst_284 = arith.constant dense<0.000000e+00> : vector<8x128xf32>
    %687 = tpu.matmul %685, %686, %cst_284 {dimension_numbers = #tpu.dot_dimension_numbers<[1], [0], [0], [1], [0, 0, 1, 1], [], []>} : vector<8x128xbf16>, vector<128x128xbf16>, vector<8x128xf32> -> vector<8x128xf32>
    %c0_285 = arith.constant 0 : index
    %c0_286 = arith.constant 0 : index
    %688 = vector.load %arg8[%c0_285, %c0_286] : memref<1x128xf32, #tpu.memory_space<vmem>>, vector<1x128xf32>
    %689 = vector.broadcast %688 : vector<1x128xf32> to vector<8x128xf32>
    %690 = arith.addf %687, %689 : vector<8x128xf32>
    %691 = arith.truncf %690 : vector<8x128xf32> to vector<8x128xbf16>
    %c0_287 = arith.constant 0 : index
    %c0_288 = arith.constant 0 : index
    %c0_289 = arith.constant 0 : index
    %692 = vector.load %arg9[%c0_287, %c0_288, %c0_289] : memref<5x128x128xbf16, #tpu.memory_space<vmem>>, vector<1x128x128xbf16>
    %693 = vector.shape_cast %692 : vector<1x128x128xbf16> to vector<128x128xbf16>
    %cst_290 = arith.constant dense<0.000000e+00> : vector<8x128xf32>
    %694 = tpu.matmul %691, %693, %cst_290 {dimension_numbers = #tpu.dot_dimension_numbers<[1], [0], [0], [1], [0, 0, 1, 1], [], []>} : vector<8x128xbf16>, vector<128x128xbf16>, vector<8x128xf32> -> vector<8x128xf32>
    %c0_291 = arith.constant 0 : index
    %c0_292 = arith.constant 0 : index
    %c0_293 = arith.constant 0 : index
    %695 = vector.load %arg11[%c0_291, %c0_292, %c0_293] : memref<5x1x128xf32, #tpu.memory_space<vmem>>, vector<1x1x128xf32>
    %696 = vector.shape_cast %695 : vector<1x1x128xf32> to vector<1x128xf32>
    %697 = vector.broadcast %696 : vector<1x128xf32> to vector<8x128xf32>
    %698 = arith.addf %694, %697 : vector<8x128xf32>
    %c0_294 = arith.constant 0 : index
    %c0_295 = arith.constant 0 : index
    %c0_296 = arith.constant 0 : index
    %699 = vector.load %arg10[%c0_294, %c0_295, %c0_296] : memref<5x128x128xbf16, #tpu.memory_space<vmem>>, vector<1x128x128xbf16>
    %700 = vector.shape_cast %699 : vector<1x128x128xbf16> to vector<128x128xbf16>
    %cst_297 = arith.constant 0.000000e+00 : bf16
    %701 = vector.broadcast %cst_297 : bf16 to vector<8x128xbf16>
    %cst_298 = arith.constant 0.000000e+00 : f32
    %702 = vector.broadcast %cst_298 : f32 to vector<8x128xf32>
    %cst_299 = arith.constant dense<0.000000e+00> : vector<8x128xf32>
    %703 = tpu.matmul %701, %700, %cst_299 {dimension_numbers = #tpu.dot_dimension_numbers<[1], [0], [0], [1], [0, 0, 1, 1], [], []>} : vector<8x128xbf16>, vector<128x128xbf16>, vector<8x128xf32> -> vector<8x128xf32>
    %704 = arith.addf %698, %703 : vector<8x128xf32>
    %705 = arith.negf %704 : vector<8x128xf32>
    %706 = math.exp %705 : vector<8x128xf32>
    %cst_300 = arith.constant 1.000000e+00 : f32
    %707 = vector.broadcast %cst_300 : f32 to vector<8x128xf32>
    %708 = arith.addf %707, %706 : vector<8x128xf32>
    %709 = arith.divf %707, %708 : vector<8x128xf32>
    %710 = arith.mulf %709, %8 : vector<8x128xf32>
    %711 = arith.addf %710, %11 : vector<8x128xf32>
    %c96_i32_301 = arith.constant 96 : i32
    %712 = tpu.dynamic_rotate %711 by %c96_i32_301 dim 1 : vector<8x128xf32>, i32 -> vector<8x128xf32>
    %c64_i32_302 = arith.constant 64 : i32
    %713 = tpu.dynamic_rotate %711 by %c64_i32_302 dim 1 : vector<8x128xf32>, i32 -> vector<8x128xf32>
    %c32_i32_303 = arith.constant 32 : i32
    %714 = tpu.dynamic_rotate %711 by %c32_i32_303 dim 1 : vector<8x128xf32>, i32 -> vector<8x128xf32>
    %715 = arith.mulf %712, %702 : vector<8x128xf32>
    %716 = arith.mulf %711, %713 : vector<8x128xf32>
    %717 = arith.addf %715, %716 : vector<8x128xf32>
    %718 = math.tanh %717 : vector<8x128xf32>
    %719 = arith.mulf %714, %718 : vector<8x128xf32>
    %c0_304 = arith.constant 0 : index
    %c0_305 = arith.constant 0 : index
    %720 = vector.load %arg16[%c0_304, %c0_305] : memref<48x128xf32, #tpu.memory_space<vmem>>, vector<8x128xf32>
    tpu.vector_store %arg16[%c0_304, %c0_305], %719 {strides = array<i32>} : memref<48x128xf32, #tpu.memory_space<vmem>>, vector<8x128xf32>,
    %721 = arith.truncf %719 : vector<8x128xf32> to vector<8x128xbf16>
    %cst_306 = arith.constant dense<0.000000e+00> : vector<8x128xf32>
    %722 = tpu.matmul %721, %700, %cst_306 {dimension_numbers = #tpu.dot_dimension_numbers<[1], [0], [0], [1], [0, 0, 1, 1], [], []>} : vector<8x128xbf16>, vector<128x128xbf16>, vector<8x128xf32> -> vector<8x128xf32>
    %723 = arith.addf %698, %722 : vector<8x128xf32>
    %724 = arith.negf %723 : vector<8x128xf32>
    %725 = math.exp %724 : vector<8x128xf32>
    %cst_307 = arith.constant 1.000000e+00 : f32
    %726 = vector.broadcast %cst_307 : f32 to vector<8x128xf32>
    %727 = arith.addf %726, %725 : vector<8x128xf32>
    %728 = arith.divf %726, %727 : vector<8x128xf32>
    %729 = arith.mulf %728, %8 : vector<8x128xf32>
    %730 = arith.addf %729, %11 : vector<8x128xf32>
    %c96_i32_308 = arith.constant 96 : i32
    %731 = tpu.dynamic_rotate %730 by %c96_i32_308 dim 1 : vector<8x128xf32>, i32 -> vector<8x128xf32>
    %c64_i32_309 = arith.constant 64 : i32
    %732 = tpu.dynamic_rotate %730 by %c64_i32_309 dim 1 : vector<8x128xf32>, i32 -> vector<8x128xf32>
    %c32_i32_310 = arith.constant 32 : i32
    %733 = tpu.dynamic_rotate %730 by %c32_i32_310 dim 1 : vector<8x128xf32>, i32 -> vector<8x128xf32>
    %734 = arith.mulf %731, %717 : vector<8x128xf32>
    %735 = arith.mulf %730, %732 : vector<8x128xf32>
    %736 = arith.addf %734, %735 : vector<8x128xf32>
    %737 = math.tanh %736 : vector<8x128xf32>
    %738 = arith.mulf %733, %737 : vector<8x128xf32>
    %c8_311 = arith.constant 8 : index
    %c0_312 = arith.constant 0 : index
    %739 = vector.load %arg16[%c8_311, %c0_312] : memref<48x128xf32, #tpu.memory_space<vmem>>, vector<8x128xf32>
    tpu.vector_store %arg16[%c8_311, %c0_312], %738 {strides = array<i32>} : memref<48x128xf32, #tpu.memory_space<vmem>>, vector<8x128xf32>,
    %740 = arith.truncf %738 : vector<8x128xf32> to vector<8x128xbf16>
    %cst_313 = arith.constant dense<0.000000e+00> : vector<8x128xf32>
    %741 = tpu.matmul %740, %700, %cst_313 {dimension_numbers = #tpu.dot_dimension_numbers<[1], [0], [0], [1], [0, 0, 1, 1], [], []>} : vector<8x128xbf16>, vector<128x128xbf16>, vector<8x128xf32> -> vector<8x128xf32>
    %742 = arith.addf %698, %741 : vector<8x128xf32>
    %743 = arith.negf %742 : vector<8x128xf32>
    %744 = math.exp %743 : vector<8x128xf32>
    %cst_314 = arith.constant 1.000000e+00 : f32
    %745 = vector.broadcast %cst_314 : f32 to vector<8x128xf32>
    %746 = arith.addf %745, %744 : vector<8x128xf32>
    %747 = arith.divf %745, %746 : vector<8x128xf32>
    %748 = arith.mulf %747, %8 : vector<8x128xf32>
    %749 = arith.addf %748, %11 : vector<8x128xf32>
    %c96_i32_315 = arith.constant 96 : i32
    %750 = tpu.dynamic_rotate %749 by %c96_i32_315 dim 1 : vector<8x128xf32>, i32 -> vector<8x128xf32>
    %c64_i32_316 = arith.constant 64 : i32
    %751 = tpu.dynamic_rotate %749 by %c64_i32_316 dim 1 : vector<8x128xf32>, i32 -> vector<8x128xf32>
    %c32_i32_317 = arith.constant 32 : i32
    %752 = tpu.dynamic_rotate %749 by %c32_i32_317 dim 1 : vector<8x128xf32>, i32 -> vector<8x128xf32>
    %753 = arith.mulf %750, %736 : vector<8x128xf32>
    %754 = arith.mulf %749, %751 : vector<8x128xf32>
    %755 = arith.addf %753, %754 : vector<8x128xf32>
    %756 = math.tanh %755 : vector<8x128xf32>
    %757 = arith.mulf %752, %756 : vector<8x128xf32>
    %c16_318 = arith.constant 16 : index
    %c0_319 = arith.constant 0 : index
    %758 = vector.load %arg16[%c16_318, %c0_319] : memref<48x128xf32, #tpu.memory_space<vmem>>, vector<8x128xf32>
    tpu.vector_store %arg16[%c16_318, %c0_319], %757 {strides = array<i32>} : memref<48x128xf32, #tpu.memory_space<vmem>>, vector<8x128xf32>,
    %759 = arith.truncf %757 : vector<8x128xf32> to vector<8x128xbf16>
    %cst_320 = arith.constant dense<0.000000e+00> : vector<8x128xf32>
    %760 = tpu.matmul %759, %700, %cst_320 {dimension_numbers = #tpu.dot_dimension_numbers<[1], [0], [0], [1], [0, 0, 1, 1], [], []>} : vector<8x128xbf16>, vector<128x128xbf16>, vector<8x128xf32> -> vector<8x128xf32>
    %761 = arith.addf %698, %760 : vector<8x128xf32>
    %762 = arith.negf %761 : vector<8x128xf32>
    %763 = math.exp %762 : vector<8x128xf32>
    %cst_321 = arith.constant 1.000000e+00 : f32
    %764 = vector.broadcast %cst_321 : f32 to vector<8x128xf32>
    %765 = arith.addf %764, %763 : vector<8x128xf32>
    %766 = arith.divf %764, %765 : vector<8x128xf32>
    %767 = arith.mulf %766, %8 : vector<8x128xf32>
    %768 = arith.addf %767, %11 : vector<8x128xf32>
    %c96_i32_322 = arith.constant 96 : i32
    %769 = tpu.dynamic_rotate %768 by %c96_i32_322 dim 1 : vector<8x128xf32>, i32 -> vector<8x128xf32>
    %c64_i32_323 = arith.constant 64 : i32
    %770 = tpu.dynamic_rotate %768 by %c64_i32_323 dim 1 : vector<8x128xf32>, i32 -> vector<8x128xf32>
    %c32_i32_324 = arith.constant 32 : i32
    %771 = tpu.dynamic_rotate %768 by %c32_i32_324 dim 1 : vector<8x128xf32>, i32 -> vector<8x128xf32>
    %772 = arith.mulf %769, %755 : vector<8x128xf32>
    %773 = arith.mulf %768, %770 : vector<8x128xf32>
    %774 = arith.addf %772, %773 : vector<8x128xf32>
    %775 = math.tanh %774 : vector<8x128xf32>
    %776 = arith.mulf %771, %775 : vector<8x128xf32>
    %c24_325 = arith.constant 24 : index
    %c0_326 = arith.constant 0 : index
    %777 = vector.load %arg16[%c24_325, %c0_326] : memref<48x128xf32, #tpu.memory_space<vmem>>, vector<8x128xf32>
    tpu.vector_store %arg16[%c24_325, %c0_326], %776 {strides = array<i32>} : memref<48x128xf32, #tpu.memory_space<vmem>>, vector<8x128xf32>,
    %778 = arith.truncf %776 : vector<8x128xf32> to vector<8x128xbf16>
    %cst_327 = arith.constant dense<0.000000e+00> : vector<8x128xf32>
    %779 = tpu.matmul %778, %700, %cst_327 {dimension_numbers = #tpu.dot_dimension_numbers<[1], [0], [0], [1], [0, 0, 1, 1], [], []>} : vector<8x128xbf16>, vector<128x128xbf16>, vector<8x128xf32> -> vector<8x128xf32>
    %780 = arith.addf %698, %779 : vector<8x128xf32>
    %781 = arith.negf %780 : vector<8x128xf32>
    %782 = math.exp %781 : vector<8x128xf32>
    %cst_328 = arith.constant 1.000000e+00 : f32
    %783 = vector.broadcast %cst_328 : f32 to vector<8x128xf32>
    %784 = arith.addf %783, %782 : vector<8x128xf32>
    %785 = arith.divf %783, %784 : vector<8x128xf32>
    %786 = arith.mulf %785, %8 : vector<8x128xf32>
    %787 = arith.addf %786, %11 : vector<8x128xf32>
    %c96_i32_329 = arith.constant 96 : i32
    %788 = tpu.dynamic_rotate %787 by %c96_i32_329 dim 1 : vector<8x128xf32>, i32 -> vector<8x128xf32>
    %c64_i32_330 = arith.constant 64 : i32
    %789 = tpu.dynamic_rotate %787 by %c64_i32_330 dim 1 : vector<8x128xf32>, i32 -> vector<8x128xf32>
    %c32_i32_331 = arith.constant 32 : i32
    %790 = tpu.dynamic_rotate %787 by %c32_i32_331 dim 1 : vector<8x128xf32>, i32 -> vector<8x128xf32>
    %791 = arith.mulf %788, %774 : vector<8x128xf32>
    %792 = arith.mulf %787, %789 : vector<8x128xf32>
    %793 = arith.addf %791, %792 : vector<8x128xf32>
    %794 = math.tanh %793 : vector<8x128xf32>
    %795 = arith.mulf %790, %794 : vector<8x128xf32>
    %c32_332 = arith.constant 32 : index
    %c0_333 = arith.constant 0 : index
    %796 = vector.load %arg16[%c32_332, %c0_333] : memref<48x128xf32, #tpu.memory_space<vmem>>, vector<8x128xf32>
    tpu.vector_store %arg16[%c32_332, %c0_333], %795 {strides = array<i32>} : memref<48x128xf32, #tpu.memory_space<vmem>>, vector<8x128xf32>,
    %797 = arith.truncf %795 : vector<8x128xf32> to vector<8x128xbf16>
    %cst_334 = arith.constant dense<0.000000e+00> : vector<8x128xf32>
    %798 = tpu.matmul %797, %700, %cst_334 {dimension_numbers = #tpu.dot_dimension_numbers<[1], [0], [0], [1], [0, 0, 1, 1], [], []>} : vector<8x128xbf16>, vector<128x128xbf16>, vector<8x128xf32> -> vector<8x128xf32>
    %799 = arith.addf %698, %798 : vector<8x128xf32>
    %800 = arith.negf %799 : vector<8x128xf32>
    %801 = math.exp %800 : vector<8x128xf32>
    %cst_335 = arith.constant 1.000000e+00 : f32
    %802 = vector.broadcast %cst_335 : f32 to vector<8x128xf32>
    %803 = arith.addf %802, %801 : vector<8x128xf32>
    %804 = arith.divf %802, %803 : vector<8x128xf32>
    %805 = arith.mulf %804, %8 : vector<8x128xf32>
    %806 = arith.addf %805, %11 : vector<8x128xf32>
    %c96_i32_336 = arith.constant 96 : i32
    %807 = tpu.dynamic_rotate %806 by %c96_i32_336 dim 1 : vector<8x128xf32>, i32 -> vector<8x128xf32>
    %c64_i32_337 = arith.constant 64 : i32
    %808 = tpu.dynamic_rotate %806 by %c64_i32_337 dim 1 : vector<8x128xf32>, i32 -> vector<8x128xf32>
    %c32_i32_338 = arith.constant 32 : i32
    %809 = tpu.dynamic_rotate %806 by %c32_i32_338 dim 1 : vector<8x128xf32>, i32 -> vector<8x128xf32>
    %810 = arith.mulf %807, %793 : vector<8x128xf32>
    %811 = arith.mulf %806, %808 : vector<8x128xf32>
    %812 = arith.addf %810, %811 : vector<8x128xf32>
    %813 = math.tanh %812 : vector<8x128xf32>
    %814 = arith.mulf %809, %813 : vector<8x128xf32>
    %c40_339 = arith.constant 40 : index
    %c0_340 = arith.constant 0 : index
    %815 = vector.load %arg16[%c40_339, %c0_340] : memref<48x128xf32, #tpu.memory_space<vmem>>, vector<8x128xf32>
    tpu.vector_store %arg16[%c40_339, %c0_340], %814 {strides = array<i32>} : memref<48x128xf32, #tpu.memory_space<vmem>>, vector<8x128xf32>,
    %c0_341 = arith.constant 0 : index
    %c0_342 = arith.constant 0 : index
    %816 = vector.load %arg16[%c0_341, %c0_342] : memref<48x128xf32, #tpu.memory_space<vmem>>, vector<48x128xf32>
    %817 = arith.truncf %816 : vector<48x128xf32> to vector<48x128xbf16>
    %c1_343 = arith.constant 1 : index
    %c0_344 = arith.constant 0 : index
    %c0_345 = arith.constant 0 : index
    %818 = vector.load %arg9[%c1_343, %c0_344, %c0_345] : memref<5x128x128xbf16, #tpu.memory_space<vmem>>, vector<1x128x128xbf16>
    %819 = vector.shape_cast %818 : vector<1x128x128xbf16> to vector<128x128xbf16>
    %cst_346 = arith.constant dense<0.000000e+00> : vector<48x128xf32>
    %820 = tpu.matmul %817, %819, %cst_346 {dimension_numbers = #tpu.dot_dimension_numbers<[1], [0], [0], [1], [0, 0, 1, 1], [], []>} : vector<48x128xbf16>, vector<128x128xbf16>, vector<48x128xf32> -> vector<48x128xf32>
    %c1_347 = arith.constant 1 : index
    %c0_348 = arith.constant 0 : index
    %c0_349 = arith.constant 0 : index
    %821 = vector.load %arg11[%c1_347, %c0_348, %c0_349] : memref<5x1x128xf32, #tpu.memory_space<vmem>>, vector<1x1x128xf32>
    %822 = vector.shape_cast %821 : vector<1x1x128xf32> to vector<1x128xf32>
    %823 = vector.broadcast %822 : vector<1x128xf32> to vector<48x128xf32>
    %824 = arith.addf %820, %823 : vector<48x128xf32>
    %c1_350 = arith.constant 1 : index
    %c0_351 = arith.constant 0 : index
    %c0_352 = arith.constant 0 : index
    %825 = vector.load %arg10[%c1_350, %c0_351, %c0_352] : memref<5x128x128xbf16, #tpu.memory_space<vmem>>, vector<1x128x128xbf16>
    %826 = vector.shape_cast %825 : vector<1x128x128xbf16> to vector<128x128xbf16>
    %cst_353 = arith.constant 0.000000e+00 : bf16
    %827 = vector.broadcast %cst_353 : bf16 to vector<8x128xbf16>
    %cst_354 = arith.constant 0.000000e+00 : f32
    %828 = vector.broadcast %cst_354 : f32 to vector<8x128xf32>
    %829 = vector.extract_strided_slice %824 {offsets = [0, 0], sizes = [8, 128], strides = [1, 1]} : vector<48x128xf32> to vector<8x128xf32>
    %cst_355 = arith.constant dense<0.000000e+00> : vector<8x128xf32>
    %830 = tpu.matmul %827, %826, %cst_355 {dimension_numbers = #tpu.dot_dimension_numbers<[1], [0], [0], [1], [0, 0, 1, 1], [], []>} : vector<8x128xbf16>, vector<128x128xbf16>, vector<8x128xf32> -> vector<8x128xf32>
    %831 = arith.addf %829, %830 : vector<8x128xf32>
    %832 = arith.negf %831 : vector<8x128xf32>
    %833 = math.exp %832 : vector<8x128xf32>
    %cst_356 = arith.constant 1.000000e+00 : f32
    %834 = vector.broadcast %cst_356 : f32 to vector<8x128xf32>
    %835 = arith.addf %834, %833 : vector<8x128xf32>
    %836 = arith.divf %834, %835 : vector<8x128xf32>
    %837 = arith.mulf %836, %8 : vector<8x128xf32>
    %838 = arith.addf %837, %11 : vector<8x128xf32>
    %c96_i32_357 = arith.constant 96 : i32
    %839 = tpu.dynamic_rotate %838 by %c96_i32_357 dim 1 : vector<8x128xf32>, i32 -> vector<8x128xf32>
    %c64_i32_358 = arith.constant 64 : i32
    %840 = tpu.dynamic_rotate %838 by %c64_i32_358 dim 1 : vector<8x128xf32>, i32 -> vector<8x128xf32>
    %c32_i32_359 = arith.constant 32 : i32
    %841 = tpu.dynamic_rotate %838 by %c32_i32_359 dim 1 : vector<8x128xf32>, i32 -> vector<8x128xf32>
    %842 = arith.mulf %839, %828 : vector<8x128xf32>
    %843 = arith.mulf %838, %840 : vector<8x128xf32>
    %844 = arith.addf %842, %843 : vector<8x128xf32>
    %845 = math.tanh %844 : vector<8x128xf32>
    %846 = arith.mulf %841, %845 : vector<8x128xf32>
    %c0_360 = arith.constant 0 : index
    %c0_361 = arith.constant 0 : index
    %847 = vector.load %arg16[%c0_360, %c0_361] : memref<48x128xf32, #tpu.memory_space<vmem>>, vector<8x128xf32>
    tpu.vector_store %arg16[%c0_360, %c0_361], %846 {strides = array<i32>} : memref<48x128xf32, #tpu.memory_space<vmem>>, vector<8x128xf32>,
    %848 = arith.truncf %846 : vector<8x128xf32> to vector<8x128xbf16>
    %849 = vector.extract_strided_slice %824 {offsets = [8, 0], sizes = [8, 128], strides = [1, 1]} : vector<48x128xf32> to vector<8x128xf32>
    %cst_362 = arith.constant dense<0.000000e+00> : vector<8x128xf32>
    %850 = tpu.matmul %848, %826, %cst_362 {dimension_numbers = #tpu.dot_dimension_numbers<[1], [0], [0], [1], [0, 0, 1, 1], [], []>} : vector<8x128xbf16>, vector<128x128xbf16>, vector<8x128xf32> -> vector<8x128xf32>
    %851 = arith.addf %849, %850 : vector<8x128xf32>
    %852 = arith.negf %851 : vector<8x128xf32>
    %853 = math.exp %852 : vector<8x128xf32>
    %cst_363 = arith.constant 1.000000e+00 : f32
    %854 = vector.broadcast %cst_363 : f32 to vector<8x128xf32>
    %855 = arith.addf %854, %853 : vector<8x128xf32>
    %856 = arith.divf %854, %855 : vector<8x128xf32>
    %857 = arith.mulf %856, %8 : vector<8x128xf32>
    %858 = arith.addf %857, %11 : vector<8x128xf32>
    %c96_i32_364 = arith.constant 96 : i32
    %859 = tpu.dynamic_rotate %858 by %c96_i32_364 dim 1 : vector<8x128xf32>, i32 -> vector<8x128xf32>
    %c64_i32_365 = arith.constant 64 : i32
    %860 = tpu.dynamic_rotate %858 by %c64_i32_365 dim 1 : vector<8x128xf32>, i32 -> vector<8x128xf32>
    %c32_i32_366 = arith.constant 32 : i32
    %861 = tpu.dynamic_rotate %858 by %c32_i32_366 dim 1 : vector<8x128xf32>, i32 -> vector<8x128xf32>
    %862 = arith.mulf %859, %844 : vector<8x128xf32>
    %863 = arith.mulf %858, %860 : vector<8x128xf32>
    %864 = arith.addf %862, %863 : vector<8x128xf32>
    %865 = math.tanh %864 : vector<8x128xf32>
    %866 = arith.mulf %861, %865 : vector<8x128xf32>
    %c8_367 = arith.constant 8 : index
    %c0_368 = arith.constant 0 : index
    %867 = vector.load %arg16[%c8_367, %c0_368] : memref<48x128xf32, #tpu.memory_space<vmem>>, vector<8x128xf32>
    tpu.vector_store %arg16[%c8_367, %c0_368], %866 {strides = array<i32>} : memref<48x128xf32, #tpu.memory_space<vmem>>, vector<8x128xf32>,
    %868 = arith.truncf %866 : vector<8x128xf32> to vector<8x128xbf16>
    %869 = vector.extract_strided_slice %824 {offsets = [16, 0], sizes = [8, 128], strides = [1, 1]} : vector<48x128xf32> to vector<8x128xf32>
    %cst_369 = arith.constant dense<0.000000e+00> : vector<8x128xf32>
    %870 = tpu.matmul %868, %826, %cst_369 {dimension_numbers = #tpu.dot_dimension_numbers<[1], [0], [0], [1], [0, 0, 1, 1], [], []>} : vector<8x128xbf16>, vector<128x128xbf16>, vector<8x128xf32> -> vector<8x128xf32>
    %871 = arith.addf %869, %870 : vector<8x128xf32>
    %872 = arith.negf %871 : vector<8x128xf32>
    %873 = math.exp %872 : vector<8x128xf32>
    %cst_370 = arith.constant 1.000000e+00 : f32
    %874 = vector.broadcast %cst_370 : f32 to vector<8x128xf32>
    %875 = arith.addf %874, %873 : vector<8x128xf32>
    %876 = arith.divf %874, %875 : vector<8x128xf32>
    %877 = arith.mulf %876, %8 : vector<8x128xf32>
    %878 = arith.addf %877, %11 : vector<8x128xf32>
    %c96_i32_371 = arith.constant 96 : i32
    %879 = tpu.dynamic_rotate %878 by %c96_i32_371 dim 1 : vector<8x128xf32>, i32 -> vector<8x128xf32>
    %c64_i32_372 = arith.constant 64 : i32
    %880 = tpu.dynamic_rotate %878 by %c64_i32_372 dim 1 : vector<8x128xf32>, i32 -> vector<8x128xf32>
    %c32_i32_373 = arith.constant 32 : i32
    %881 = tpu.dynamic_rotate %878 by %c32_i32_373 dim 1 : vector<8x128xf32>, i32 -> vector<8x128xf32>
    %882 = arith.mulf %879, %864 : vector<8x128xf32>
    %883 = arith.mulf %878, %880 : vector<8x128xf32>
    %884 = arith.addf %882, %883 : vector<8x128xf32>
    %885 = math.tanh %884 : vector<8x128xf32>
    %886 = arith.mulf %881, %885 : vector<8x128xf32>
    %c16_374 = arith.constant 16 : index
    %c0_375 = arith.constant 0 : index
    %887 = vector.load %arg16[%c16_374, %c0_375] : memref<48x128xf32, #tpu.memory_space<vmem>>, vector<8x128xf32>
    tpu.vector_store %arg16[%c16_374, %c0_375], %886 {strides = array<i32>} : memref<48x128xf32, #tpu.memory_space<vmem>>, vector<8x128xf32>,
    %888 = arith.truncf %886 : vector<8x128xf32> to vector<8x128xbf16>
    %889 = vector.extract_strided_slice %824 {offsets = [24, 0], sizes = [8, 128], strides = [1, 1]} : vector<48x128xf32> to vector<8x128xf32>
    %cst_376 = arith.constant dense<0.000000e+00> : vector<8x128xf32>
    %890 = tpu.matmul %888, %826, %cst_376 {dimension_numbers = #tpu.dot_dimension_numbers<[1], [0], [0], [1], [0, 0, 1, 1], [], []>} : vector<8x128xbf16>, vector<128x128xbf16>, vector<8x128xf32> -> vector<8x128xf32>
    %891 = arith.addf %889, %890 : vector<8x128xf32>
    %892 = arith.negf %891 : vector<8x128xf32>
    %893 = math.exp %892 : vector<8x128xf32>
    %cst_377 = arith.constant 1.000000e+00 : f32
    %894 = vector.broadcast %cst_377 : f32 to vector<8x128xf32>
    %895 = arith.addf %894, %893 : vector<8x128xf32>
    %896 = arith.divf %894, %895 : vector<8x128xf32>
    %897 = arith.mulf %896, %8 : vector<8x128xf32>
    %898 = arith.addf %897, %11 : vector<8x128xf32>
    %c96_i32_378 = arith.constant 96 : i32
    %899 = tpu.dynamic_rotate %898 by %c96_i32_378 dim 1 : vector<8x128xf32>, i32 -> vector<8x128xf32>
    %c64_i32_379 = arith.constant 64 : i32
    %900 = tpu.dynamic_rotate %898 by %c64_i32_379 dim 1 : vector<8x128xf32>, i32 -> vector<8x128xf32>
    %c32_i32_380 = arith.constant 32 : i32
    %901 = tpu.dynamic_rotate %898 by %c32_i32_380 dim 1 : vector<8x128xf32>, i32 -> vector<8x128xf32>
    %902 = arith.mulf %899, %884 : vector<8x128xf32>
    %903 = arith.mulf %898, %900 : vector<8x128xf32>
    %904 = arith.addf %902, %903 : vector<8x128xf32>
    %905 = math.tanh %904 : vector<8x128xf32>
    %906 = arith.mulf %901, %905 : vector<8x128xf32>
    %c24_381 = arith.constant 24 : index
    %c0_382 = arith.constant 0 : index
    %907 = vector.load %arg16[%c24_381, %c0_382] : memref<48x128xf32, #tpu.memory_space<vmem>>, vector<8x128xf32>
    tpu.vector_store %arg16[%c24_381, %c0_382], %906 {strides = array<i32>} : memref<48x128xf32, #tpu.memory_space<vmem>>, vector<8x128xf32>,
    %908 = arith.truncf %906 : vector<8x128xf32> to vector<8x128xbf16>
    %909 = vector.extract_strided_slice %824 {offsets = [32, 0], sizes = [8, 128], strides = [1, 1]} : vector<48x128xf32> to vector<8x128xf32>
    %cst_383 = arith.constant dense<0.000000e+00> : vector<8x128xf32>
    %910 = tpu.matmul %908, %826, %cst_383 {dimension_numbers = #tpu.dot_dimension_numbers<[1], [0], [0], [1], [0, 0, 1, 1], [], []>} : vector<8x128xbf16>, vector<128x128xbf16>, vector<8x128xf32> -> vector<8x128xf32>
    %911 = arith.addf %909, %910 : vector<8x128xf32>
    %912 = arith.negf %911 : vector<8x128xf32>
    %913 = math.exp %912 : vector<8x128xf32>
    %cst_384 = arith.constant 1.000000e+00 : f32
    %914 = vector.broadcast %cst_384 : f32 to vector<8x128xf32>
    %915 = arith.addf %914, %913 : vector<8x128xf32>
    %916 = arith.divf %914, %915 : vector<8x128xf32>
    %917 = arith.mulf %916, %8 : vector<8x128xf32>
    %918 = arith.addf %917, %11 : vector<8x128xf32>
    %c96_i32_385 = arith.constant 96 : i32
    %919 = tpu.dynamic_rotate %918 by %c96_i32_385 dim 1 : vector<8x128xf32>, i32 -> vector<8x128xf32>
    %c64_i32_386 = arith.constant 64 : i32
    %920 = tpu.dynamic_rotate %918 by %c64_i32_386 dim 1 : vector<8x128xf32>, i32 -> vector<8x128xf32>
    %c32_i32_387 = arith.constant 32 : i32
    %921 = tpu.dynamic_rotate %918 by %c32_i32_387 dim 1 : vector<8x128xf32>, i32 -> vector<8x128xf32>
    %922 = arith.mulf %919, %904 : vector<8x128xf32>
    %923 = arith.mulf %918, %920 : vector<8x128xf32>
    %924 = arith.addf %922, %923 : vector<8x128xf32>
    %925 = math.tanh %924 : vector<8x128xf32>
    %926 = arith.mulf %921, %925 : vector<8x128xf32>
    %c32_388 = arith.constant 32 : index
    %c0_389 = arith.constant 0 : index
    %927 = vector.load %arg16[%c32_388, %c0_389] : memref<48x128xf32, #tpu.memory_space<vmem>>, vector<8x128xf32>
    tpu.vector_store %arg16[%c32_388, %c0_389], %926 {strides = array<i32>} : memref<48x128xf32, #tpu.memory_space<vmem>>, vector<8x128xf32>,
    %928 = arith.truncf %926 : vector<8x128xf32> to vector<8x128xbf16>
    %929 = vector.extract_strided_slice %824 {offsets = [40, 0], sizes = [8, 128], strides = [1, 1]} : vector<48x128xf32> to vector<8x128xf32>
    %cst_390 = arith.constant dense<0.000000e+00> : vector<8x128xf32>
    %930 = tpu.matmul %928, %826, %cst_390 {dimension_numbers = #tpu.dot_dimension_numbers<[1], [0], [0], [1], [0, 0, 1, 1], [], []>} : vector<8x128xbf16>, vector<128x128xbf16>, vector<8x128xf32> -> vector<8x128xf32>
    %931 = arith.addf %929, %930 : vector<8x128xf32>
    %932 = arith.negf %931 : vector<8x128xf32>
    %933 = math.exp %932 : vector<8x128xf32>
    %cst_391 = arith.constant 1.000000e+00 : f32
    %934 = vector.broadcast %cst_391 : f32 to vector<8x128xf32>
    %935 = arith.addf %934, %933 : vector<8x128xf32>
    %936 = arith.divf %934, %935 : vector<8x128xf32>
    %937 = arith.mulf %936, %8 : vector<8x128xf32>
    %938 = arith.addf %937, %11 : vector<8x128xf32>
    %c96_i32_392 = arith.constant 96 : i32
    %939 = tpu.dynamic_rotate %938 by %c96_i32_392 dim 1 : vector<8x128xf32>, i32 -> vector<8x128xf32>
    %c64_i32_393 = arith.constant 64 : i32
    %940 = tpu.dynamic_rotate %938 by %c64_i32_393 dim 1 : vector<8x128xf32>, i32 -> vector<8x128xf32>
    %c32_i32_394 = arith.constant 32 : i32
    %941 = tpu.dynamic_rotate %938 by %c32_i32_394 dim 1 : vector<8x128xf32>, i32 -> vector<8x128xf32>
    %942 = arith.mulf %939, %924 : vector<8x128xf32>
    %943 = arith.mulf %938, %940 : vector<8x128xf32>
    %944 = arith.addf %942, %943 : vector<8x128xf32>
    %945 = math.tanh %944 : vector<8x128xf32>
    %946 = arith.mulf %941, %945 : vector<8x128xf32>
    %c40_395 = arith.constant 40 : index
    %c0_396 = arith.constant 0 : index
    %947 = vector.load %arg16[%c40_395, %c0_396] : memref<48x128xf32, #tpu.memory_space<vmem>>, vector<8x128xf32>
    tpu.vector_store %arg16[%c40_395, %c0_396], %946 {strides = array<i32>} : memref<48x128xf32, #tpu.memory_space<vmem>>, vector<8x128xf32>,
    %c0_397 = arith.constant 0 : index
    %c0_398 = arith.constant 0 : index
    %948 = vector.load %arg16[%c0_397, %c0_398] : memref<48x128xf32, #tpu.memory_space<vmem>>, vector<48x128xf32>
    %949 = arith.truncf %948 : vector<48x128xf32> to vector<48x128xbf16>
    %c2_399 = arith.constant 2 : index
    %c0_400 = arith.constant 0 : index
    %c0_401 = arith.constant 0 : index
    %950 = vector.load %arg9[%c2_399, %c0_400, %c0_401] : memref<5x128x128xbf16, #tpu.memory_space<vmem>>, vector<1x128x128xbf16>
    %951 = vector.shape_cast %950 : vector<1x128x128xbf16> to vector<128x128xbf16>
    %cst_402 = arith.constant dense<0.000000e+00> : vector<48x128xf32>
    %952 = tpu.matmul %949, %951, %cst_402 {dimension_numbers = #tpu.dot_dimension_numbers<[1], [0], [0], [1], [0, 0, 1, 1], [], []>} : vector<48x128xbf16>, vector<128x128xbf16>, vector<48x128xf32> -> vector<48x128xf32>
    %c2_403 = arith.constant 2 : index
    %c0_404 = arith.constant 0 : index
    %c0_405 = arith.constant 0 : index
    %953 = vector.load %arg11[%c2_403, %c0_404, %c0_405] : memref<5x1x128xf32, #tpu.memory_space<vmem>>, vector<1x1x128xf32>
    %954 = vector.shape_cast %953 : vector<1x1x128xf32> to vector<1x128xf32>
    %955 = vector.broadcast %954 : vector<1x128xf32> to vector<48x128xf32>
    %956 = arith.addf %952, %955 : vector<48x128xf32>
    %c2_406 = arith.constant 2 : index
    %c0_407 = arith.constant 0 : index
    %c0_408 = arith.constant 0 : index
    %957 = vector.load %arg10[%c2_406, %c0_407, %c0_408] : memref<5x128x128xbf16, #tpu.memory_space<vmem>>, vector<1x128x128xbf16>
    %958 = vector.shape_cast %957 : vector<1x128x128xbf16> to vector<128x128xbf16>
    %cst_409 = arith.constant 0.000000e+00 : bf16
    %959 = vector.broadcast %cst_409 : bf16 to vector<8x128xbf16>
    %cst_410 = arith.constant 0.000000e+00 : f32
    %960 = vector.broadcast %cst_410 : f32 to vector<8x128xf32>
    %961 = vector.extract_strided_slice %956 {offsets = [0, 0], sizes = [8, 128], strides = [1, 1]} : vector<48x128xf32> to vector<8x128xf32>
    %cst_411 = arith.constant dense<0.000000e+00> : vector<8x128xf32>
    %962 = tpu.matmul %959, %958, %cst_411 {dimension_numbers = #tpu.dot_dimension_numbers<[1], [0], [0], [1], [0, 0, 1, 1], [], []>} : vector<8x128xbf16>, vector<128x128xbf16>, vector<8x128xf32> -> vector<8x128xf32>
    %963 = arith.addf %961, %962 : vector<8x128xf32>
    %964 = arith.negf %963 : vector<8x128xf32>
    %965 = math.exp %964 : vector<8x128xf32>
    %cst_412 = arith.constant 1.000000e+00 : f32
    %966 = vector.broadcast %cst_412 : f32 to vector<8x128xf32>
    %967 = arith.addf %966, %965 : vector<8x128xf32>
    %968 = arith.divf %966, %967 : vector<8x128xf32>
    %969 = arith.mulf %968, %8 : vector<8x128xf32>
    %970 = arith.addf %969, %11 : vector<8x128xf32>
    %c96_i32_413 = arith.constant 96 : i32
    %971 = tpu.dynamic_rotate %970 by %c96_i32_413 dim 1 : vector<8x128xf32>, i32 -> vector<8x128xf32>
    %c64_i32_414 = arith.constant 64 : i32
    %972 = tpu.dynamic_rotate %970 by %c64_i32_414 dim 1 : vector<8x128xf32>, i32 -> vector<8x128xf32>
    %c32_i32_415 = arith.constant 32 : i32
    %973 = tpu.dynamic_rotate %970 by %c32_i32_415 dim 1 : vector<8x128xf32>, i32 -> vector<8x128xf32>
    %974 = arith.mulf %971, %960 : vector<8x128xf32>
    %975 = arith.mulf %970, %972 : vector<8x128xf32>
    %976 = arith.addf %974, %975 : vector<8x128xf32>
    %977 = math.tanh %976 : vector<8x128xf32>
    %978 = arith.mulf %973, %977 : vector<8x128xf32>
    %c0_416 = arith.constant 0 : index
    %c0_417 = arith.constant 0 : index
    %979 = vector.load %arg16[%c0_416, %c0_417] : memref<48x128xf32, #tpu.memory_space<vmem>>, vector<8x128xf32>
    tpu.vector_store %arg16[%c0_416, %c0_417], %978 {strides = array<i32>} : memref<48x128xf32, #tpu.memory_space<vmem>>, vector<8x128xf32>,
    %980 = arith.truncf %978 : vector<8x128xf32> to vector<8x128xbf16>
    %981 = vector.extract_strided_slice %956 {offsets = [8, 0], sizes = [8, 128], strides = [1, 1]} : vector<48x128xf32> to vector<8x128xf32>
    %cst_418 = arith.constant dense<0.000000e+00> : vector<8x128xf32>
    %982 = tpu.matmul %980, %958, %cst_418 {dimension_numbers = #tpu.dot_dimension_numbers<[1], [0], [0], [1], [0, 0, 1, 1], [], []>} : vector<8x128xbf16>, vector<128x128xbf16>, vector<8x128xf32> -> vector<8x128xf32>
    %983 = arith.addf %981, %982 : vector<8x128xf32>
    %984 = arith.negf %983 : vector<8x128xf32>
    %985 = math.exp %984 : vector<8x128xf32>
    %cst_419 = arith.constant 1.000000e+00 : f32
    %986 = vector.broadcast %cst_419 : f32 to vector<8x128xf32>
    %987 = arith.addf %986, %985 : vector<8x128xf32>
    %988 = arith.divf %986, %987 : vector<8x128xf32>
    %989 = arith.mulf %988, %8 : vector<8x128xf32>
    %990 = arith.addf %989, %11 : vector<8x128xf32>
    %c96_i32_420 = arith.constant 96 : i32
    %991 = tpu.dynamic_rotate %990 by %c96_i32_420 dim 1 : vector<8x128xf32>, i32 -> vector<8x128xf32>
    %c64_i32_421 = arith.constant 64 : i32
    %992 = tpu.dynamic_rotate %990 by %c64_i32_421 dim 1 : vector<8x128xf32>, i32 -> vector<8x128xf32>
    %c32_i32_422 = arith.constant 32 : i32
    %993 = tpu.dynamic_rotate %990 by %c32_i32_422 dim 1 : vector<8x128xf32>, i32 -> vector<8x128xf32>
    %994 = arith.mulf %991, %976 : vector<8x128xf32>
    %995 = arith.mulf %990, %992 : vector<8x128xf32>
    %996 = arith.addf %994, %995 : vector<8x128xf32>
    %997 = math.tanh %996 : vector<8x128xf32>
    %998 = arith.mulf %993, %997 : vector<8x128xf32>
    %c8_423 = arith.constant 8 : index
    %c0_424 = arith.constant 0 : index
    %999 = vector.load %arg16[%c8_423, %c0_424] : memref<48x128xf32, #tpu.memory_space<vmem>>, vector<8x128xf32>
    tpu.vector_store %arg16[%c8_423, %c0_424], %998 {strides = array<i32>} : memref<48x128xf32, #tpu.memory_space<vmem>>, vector<8x128xf32>,
    %1000 = arith.truncf %998 : vector<8x128xf32> to vector<8x128xbf16>
    %1001 = vector.extract_strided_slice %956 {offsets = [16, 0], sizes = [8, 128], strides = [1, 1]} : vector<48x128xf32> to vector<8x128xf32>
    %cst_425 = arith.constant dense<0.000000e+00> : vector<8x128xf32>
    %1002 = tpu.matmul %1000, %958, %cst_425 {dimension_numbers = #tpu.dot_dimension_numbers<[1], [0], [0], [1], [0, 0, 1, 1], [], []>} : vector<8x128xbf16>, vector<128x128xbf16>, vector<8x128xf32> -> vector<8x128xf32>
    %1003 = arith.addf %1001, %1002 : vector<8x128xf32>
    %1004 = arith.negf %1003 : vector<8x128xf32>
    %1005 = math.exp %1004 : vector<8x128xf32>
    %cst_426 = arith.constant 1.000000e+00 : f32
    %1006 = vector.broadcast %cst_426 : f32 to vector<8x128xf32>
    %1007 = arith.addf %1006, %1005 : vector<8x128xf32>
    %1008 = arith.divf %1006, %1007 : vector<8x128xf32>
    %1009 = arith.mulf %1008, %8 : vector<8x128xf32>
    %1010 = arith.addf %1009, %11 : vector<8x128xf32>
    %c96_i32_427 = arith.constant 96 : i32
    %1011 = tpu.dynamic_rotate %1010 by %c96_i32_427 dim 1 : vector<8x128xf32>, i32 -> vector<8x128xf32>
    %c64_i32_428 = arith.constant 64 : i32
    %1012 = tpu.dynamic_rotate %1010 by %c64_i32_428 dim 1 : vector<8x128xf32>, i32 -> vector<8x128xf32>
    %c32_i32_429 = arith.constant 32 : i32
    %1013 = tpu.dynamic_rotate %1010 by %c32_i32_429 dim 1 : vector<8x128xf32>, i32 -> vector<8x128xf32>
    %1014 = arith.mulf %1011, %996 : vector<8x128xf32>
    %1015 = arith.mulf %1010, %1012 : vector<8x128xf32>
    %1016 = arith.addf %1014, %1015 : vector<8x128xf32>
    %1017 = math.tanh %1016 : vector<8x128xf32>
    %1018 = arith.mulf %1013, %1017 : vector<8x128xf32>
    %c16_430 = arith.constant 16 : index
    %c0_431 = arith.constant 0 : index
    %1019 = vector.load %arg16[%c16_430, %c0_431] : memref<48x128xf32, #tpu.memory_space<vmem>>, vector<8x128xf32>
    tpu.vector_store %arg16[%c16_430, %c0_431], %1018 {strides = array<i32>} : memref<48x128xf32, #tpu.memory_space<vmem>>, vector<8x128xf32>,
    %1020 = arith.truncf %1018 : vector<8x128xf32> to vector<8x128xbf16>
    %1021 = vector.extract_strided_slice %956 {offsets = [24, 0], sizes = [8, 128], strides = [1, 1]} : vector<48x128xf32> to vector<8x128xf32>
    %cst_432 = arith.constant dense<0.000000e+00> : vector<8x128xf32>
    %1022 = tpu.matmul %1020, %958, %cst_432 {dimension_numbers = #tpu.dot_dimension_numbers<[1], [0], [0], [1], [0, 0, 1, 1], [], []>} : vector<8x128xbf16>, vector<128x128xbf16>, vector<8x128xf32> -> vector<8x128xf32>
    %1023 = arith.addf %1021, %1022 : vector<8x128xf32>
    %1024 = arith.negf %1023 : vector<8x128xf32>
    %1025 = math.exp %1024 : vector<8x128xf32>
    %cst_433 = arith.constant 1.000000e+00 : f32
    %1026 = vector.broadcast %cst_433 : f32 to vector<8x128xf32>
    %1027 = arith.addf %1026, %1025 : vector<8x128xf32>
    %1028 = arith.divf %1026, %1027 : vector<8x128xf32>
    %1029 = arith.mulf %1028, %8 : vector<8x128xf32>
    %1030 = arith.addf %1029, %11 : vector<8x128xf32>
    %c96_i32_434 = arith.constant 96 : i32
    %1031 = tpu.dynamic_rotate %1030 by %c96_i32_434 dim 1 : vector<8x128xf32>, i32 -> vector<8x128xf32>
    %c64_i32_435 = arith.constant 64 : i32
    %1032 = tpu.dynamic_rotate %1030 by %c64_i32_435 dim 1 : vector<8x128xf32>, i32 -> vector<8x128xf32>
    %c32_i32_436 = arith.constant 32 : i32
    %1033 = tpu.dynamic_rotate %1030 by %c32_i32_436 dim 1 : vector<8x128xf32>, i32 -> vector<8x128xf32>
    %1034 = arith.mulf %1031, %1016 : vector<8x128xf32>
    %1035 = arith.mulf %1030, %1032 : vector<8x128xf32>
    %1036 = arith.addf %1034, %1035 : vector<8x128xf32>
    %1037 = math.tanh %1036 : vector<8x128xf32>
    %1038 = arith.mulf %1033, %1037 : vector<8x128xf32>
    %c24_437 = arith.constant 24 : index
    %c0_438 = arith.constant 0 : index
    %1039 = vector.load %arg16[%c24_437, %c0_438] : memref<48x128xf32, #tpu.memory_space<vmem>>, vector<8x128xf32>
    tpu.vector_store %arg16[%c24_437, %c0_438], %1038 {strides = array<i32>} : memref<48x128xf32, #tpu.memory_space<vmem>>, vector<8x128xf32>,
    %1040 = arith.truncf %1038 : vector<8x128xf32> to vector<8x128xbf16>
    %1041 = vector.extract_strided_slice %956 {offsets = [32, 0], sizes = [8, 128], strides = [1, 1]} : vector<48x128xf32> to vector<8x128xf32>
    %cst_439 = arith.constant dense<0.000000e+00> : vector<8x128xf32>
    %1042 = tpu.matmul %1040, %958, %cst_439 {dimension_numbers = #tpu.dot_dimension_numbers<[1], [0], [0], [1], [0, 0, 1, 1], [], []>} : vector<8x128xbf16>, vector<128x128xbf16>, vector<8x128xf32> -> vector<8x128xf32>
    %1043 = arith.addf %1041, %1042 : vector<8x128xf32>
    %1044 = arith.negf %1043 : vector<8x128xf32>
    %1045 = math.exp %1044 : vector<8x128xf32>
    %cst_440 = arith.constant 1.000000e+00 : f32
    %1046 = vector.broadcast %cst_440 : f32 to vector<8x128xf32>
    %1047 = arith.addf %1046, %1045 : vector<8x128xf32>
    %1048 = arith.divf %1046, %1047 : vector<8x128xf32>
    %1049 = arith.mulf %1048, %8 : vector<8x128xf32>
    %1050 = arith.addf %1049, %11 : vector<8x128xf32>
    %c96_i32_441 = arith.constant 96 : i32
    %1051 = tpu.dynamic_rotate %1050 by %c96_i32_441 dim 1 : vector<8x128xf32>, i32 -> vector<8x128xf32>
    %c64_i32_442 = arith.constant 64 : i32
    %1052 = tpu.dynamic_rotate %1050 by %c64_i32_442 dim 1 : vector<8x128xf32>, i32 -> vector<8x128xf32>
    %c32_i32_443 = arith.constant 32 : i32
    %1053 = tpu.dynamic_rotate %1050 by %c32_i32_443 dim 1 : vector<8x128xf32>, i32 -> vector<8x128xf32>
    %1054 = arith.mulf %1051, %1036 : vector<8x128xf32>
    %1055 = arith.mulf %1050, %1052 : vector<8x128xf32>
    %1056 = arith.addf %1054, %1055 : vector<8x128xf32>
    %1057 = math.tanh %1056 : vector<8x128xf32>
    %1058 = arith.mulf %1053, %1057 : vector<8x128xf32>
    %c32_444 = arith.constant 32 : index
    %c0_445 = arith.constant 0 : index
    %1059 = vector.load %arg16[%c32_444, %c0_445] : memref<48x128xf32, #tpu.memory_space<vmem>>, vector<8x128xf32>
    tpu.vector_store %arg16[%c32_444, %c0_445], %1058 {strides = array<i32>} : memref<48x128xf32, #tpu.memory_space<vmem>>, vector<8x128xf32>,
    %1060 = arith.truncf %1058 : vector<8x128xf32> to vector<8x128xbf16>
    %1061 = vector.extract_strided_slice %956 {offsets = [40, 0], sizes = [8, 128], strides = [1, 1]} : vector<48x128xf32> to vector<8x128xf32>
    %cst_446 = arith.constant dense<0.000000e+00> : vector<8x128xf32>
    %1062 = tpu.matmul %1060, %958, %cst_446 {dimension_numbers = #tpu.dot_dimension_numbers<[1], [0], [0], [1], [0, 0, 1, 1], [], []>} : vector<8x128xbf16>, vector<128x128xbf16>, vector<8x128xf32> -> vector<8x128xf32>
    %1063 = arith.addf %1061, %1062 : vector<8x128xf32>
    %1064 = arith.negf %1063 : vector<8x128xf32>
    %1065 = math.exp %1064 : vector<8x128xf32>
    %cst_447 = arith.constant 1.000000e+00 : f32
    %1066 = vector.broadcast %cst_447 : f32 to vector<8x128xf32>
    %1067 = arith.addf %1066, %1065 : vector<8x128xf32>
    %1068 = arith.divf %1066, %1067 : vector<8x128xf32>
    %1069 = arith.mulf %1068, %8 : vector<8x128xf32>
    %1070 = arith.addf %1069, %11 : vector<8x128xf32>
    %c96_i32_448 = arith.constant 96 : i32
    %1071 = tpu.dynamic_rotate %1070 by %c96_i32_448 dim 1 : vector<8x128xf32>, i32 -> vector<8x128xf32>
    %c64_i32_449 = arith.constant 64 : i32
    %1072 = tpu.dynamic_rotate %1070 by %c64_i32_449 dim 1 : vector<8x128xf32>, i32 -> vector<8x128xf32>
    %c32_i32_450 = arith.constant 32 : i32
    %1073 = tpu.dynamic_rotate %1070 by %c32_i32_450 dim 1 : vector<8x128xf32>, i32 -> vector<8x128xf32>
    %1074 = arith.mulf %1071, %1056 : vector<8x128xf32>
    %1075 = arith.mulf %1070, %1072 : vector<8x128xf32>
    %1076 = arith.addf %1074, %1075 : vector<8x128xf32>
    %1077 = math.tanh %1076 : vector<8x128xf32>
    %1078 = arith.mulf %1073, %1077 : vector<8x128xf32>
    %c40_451 = arith.constant 40 : index
    %c0_452 = arith.constant 0 : index
    %1079 = vector.load %arg16[%c40_451, %c0_452] : memref<48x128xf32, #tpu.memory_space<vmem>>, vector<8x128xf32>
    tpu.vector_store %arg16[%c40_451, %c0_452], %1078 {strides = array<i32>} : memref<48x128xf32, #tpu.memory_space<vmem>>, vector<8x128xf32>,
    %c0_453 = arith.constant 0 : index
    %c0_454 = arith.constant 0 : index
    %1080 = vector.load %arg16[%c0_453, %c0_454] : memref<48x128xf32, #tpu.memory_space<vmem>>, vector<48x128xf32>
    %1081 = arith.truncf %1080 : vector<48x128xf32> to vector<48x128xbf16>
    %c3_455 = arith.constant 3 : index
    %c0_456 = arith.constant 0 : index
    %c0_457 = arith.constant 0 : index
    %1082 = vector.load %arg9[%c3_455, %c0_456, %c0_457] : memref<5x128x128xbf16, #tpu.memory_space<vmem>>, vector<1x128x128xbf16>
    %1083 = vector.shape_cast %1082 : vector<1x128x128xbf16> to vector<128x128xbf16>
    %cst_458 = arith.constant dense<0.000000e+00> : vector<48x128xf32>
    %1084 = tpu.matmul %1081, %1083, %cst_458 {dimension_numbers = #tpu.dot_dimension_numbers<[1], [0], [0], [1], [0, 0, 1, 1], [], []>} : vector<48x128xbf16>, vector<128x128xbf16>, vector<48x128xf32> -> vector<48x128xf32>
    %c3_459 = arith.constant 3 : index
    %c0_460 = arith.constant 0 : index
    %c0_461 = arith.constant 0 : index
    %1085 = vector.load %arg11[%c3_459, %c0_460, %c0_461] : memref<5x1x128xf32, #tpu.memory_space<vmem>>, vector<1x1x128xf32>
    %1086 = vector.shape_cast %1085 : vector<1x1x128xf32> to vector<1x128xf32>
    %1087 = vector.broadcast %1086 : vector<1x128xf32> to vector<48x128xf32>
    %1088 = arith.addf %1084, %1087 : vector<48x128xf32>
    %c3_462 = arith.constant 3 : index
    %c0_463 = arith.constant 0 : index
    %c0_464 = arith.constant 0 : index
    %1089 = vector.load %arg10[%c3_462, %c0_463, %c0_464] : memref<5x128x128xbf16, #tpu.memory_space<vmem>>, vector<1x128x128xbf16>
    %1090 = vector.shape_cast %1089 : vector<1x128x128xbf16> to vector<128x128xbf16>
    %cst_465 = arith.constant 0.000000e+00 : bf16
    %1091 = vector.broadcast %cst_465 : bf16 to vector<8x128xbf16>
    %cst_466 = arith.constant 0.000000e+00 : f32
    %1092 = vector.broadcast %cst_466 : f32 to vector<8x128xf32>
    %1093 = vector.extract_strided_slice %1088 {offsets = [0, 0], sizes = [8, 128], strides = [1, 1]} : vector<48x128xf32> to vector<8x128xf32>
    %cst_467 = arith.constant dense<0.000000e+00> : vector<8x128xf32>
    %1094 = tpu.matmul %1091, %1090, %cst_467 {dimension_numbers = #tpu.dot_dimension_numbers<[1], [0], [0], [1], [0, 0, 1, 1], [], []>} : vector<8x128xbf16>, vector<128x128xbf16>, vector<8x128xf32> -> vector<8x128xf32>
    %1095 = arith.addf %1093, %1094 : vector<8x128xf32>
    %1096 = arith.negf %1095 : vector<8x128xf32>
    %1097 = math.exp %1096 : vector<8x128xf32>
    %cst_468 = arith.constant 1.000000e+00 : f32
    %1098 = vector.broadcast %cst_468 : f32 to vector<8x128xf32>
    %1099 = arith.addf %1098, %1097 : vector<8x128xf32>
    %1100 = arith.divf %1098, %1099 : vector<8x128xf32>
    %1101 = arith.mulf %1100, %8 : vector<8x128xf32>
    %1102 = arith.addf %1101, %11 : vector<8x128xf32>
    %c96_i32_469 = arith.constant 96 : i32
    %1103 = tpu.dynamic_rotate %1102 by %c96_i32_469 dim 1 : vector<8x128xf32>, i32 -> vector<8x128xf32>
    %c64_i32_470 = arith.constant 64 : i32
    %1104 = tpu.dynamic_rotate %1102 by %c64_i32_470 dim 1 : vector<8x128xf32>, i32 -> vector<8x128xf32>
    %c32_i32_471 = arith.constant 32 : i32
    %1105 = tpu.dynamic_rotate %1102 by %c32_i32_471 dim 1 : vector<8x128xf32>, i32 -> vector<8x128xf32>
    %1106 = arith.mulf %1103, %1092 : vector<8x128xf32>
    %1107 = arith.mulf %1102, %1104 : vector<8x128xf32>
    %1108 = arith.addf %1106, %1107 : vector<8x128xf32>
    %1109 = math.tanh %1108 : vector<8x128xf32>
    %1110 = arith.mulf %1105, %1109 : vector<8x128xf32>
    %c0_472 = arith.constant 0 : index
    %c0_473 = arith.constant 0 : index
    %1111 = vector.load %arg16[%c0_472, %c0_473] : memref<48x128xf32, #tpu.memory_space<vmem>>, vector<8x128xf32>
    tpu.vector_store %arg16[%c0_472, %c0_473], %1110 {strides = array<i32>} : memref<48x128xf32, #tpu.memory_space<vmem>>, vector<8x128xf32>,
    %1112 = arith.truncf %1110 : vector<8x128xf32> to vector<8x128xbf16>
    %1113 = vector.extract_strided_slice %1088 {offsets = [8, 0], sizes = [8, 128], strides = [1, 1]} : vector<48x128xf32> to vector<8x128xf32>
    %cst_474 = arith.constant dense<0.000000e+00> : vector<8x128xf32>
    %1114 = tpu.matmul %1112, %1090, %cst_474 {dimension_numbers = #tpu.dot_dimension_numbers<[1], [0], [0], [1], [0, 0, 1, 1], [], []>} : vector<8x128xbf16>, vector<128x128xbf16>, vector<8x128xf32> -> vector<8x128xf32>
    %1115 = arith.addf %1113, %1114 : vector<8x128xf32>
    %1116 = arith.negf %1115 : vector<8x128xf32>
    %1117 = math.exp %1116 : vector<8x128xf32>
    %cst_475 = arith.constant 1.000000e+00 : f32
    %1118 = vector.broadcast %cst_475 : f32 to vector<8x128xf32>
    %1119 = arith.addf %1118, %1117 : vector<8x128xf32>
    %1120 = arith.divf %1118, %1119 : vector<8x128xf32>
    %1121 = arith.mulf %1120, %8 : vector<8x128xf32>
    %1122 = arith.addf %1121, %11 : vector<8x128xf32>
    %c96_i32_476 = arith.constant 96 : i32
    %1123 = tpu.dynamic_rotate %1122 by %c96_i32_476 dim 1 : vector<8x128xf32>, i32 -> vector<8x128xf32>
    %c64_i32_477 = arith.constant 64 : i32
    %1124 = tpu.dynamic_rotate %1122 by %c64_i32_477 dim 1 : vector<8x128xf32>, i32 -> vector<8x128xf32>
    %c32_i32_478 = arith.constant 32 : i32
    %1125 = tpu.dynamic_rotate %1122 by %c32_i32_478 dim 1 : vector<8x128xf32>, i32 -> vector<8x128xf32>
    %1126 = arith.mulf %1123, %1108 : vector<8x128xf32>
    %1127 = arith.mulf %1122, %1124 : vector<8x128xf32>
    %1128 = arith.addf %1126, %1127 : vector<8x128xf32>
    %1129 = math.tanh %1128 : vector<8x128xf32>
    %1130 = arith.mulf %1125, %1129 : vector<8x128xf32>
    %c8_479 = arith.constant 8 : index
    %c0_480 = arith.constant 0 : index
    %1131 = vector.load %arg16[%c8_479, %c0_480] : memref<48x128xf32, #tpu.memory_space<vmem>>, vector<8x128xf32>
    tpu.vector_store %arg16[%c8_479, %c0_480], %1130 {strides = array<i32>} : memref<48x128xf32, #tpu.memory_space<vmem>>, vector<8x128xf32>,
    %1132 = arith.truncf %1130 : vector<8x128xf32> to vector<8x128xbf16>
    %1133 = vector.extract_strided_slice %1088 {offsets = [16, 0], sizes = [8, 128], strides = [1, 1]} : vector<48x128xf32> to vector<8x128xf32>
    %cst_481 = arith.constant dense<0.000000e+00> : vector<8x128xf32>
    %1134 = tpu.matmul %1132, %1090, %cst_481 {dimension_numbers = #tpu.dot_dimension_numbers<[1], [0], [0], [1], [0, 0, 1, 1], [], []>} : vector<8x128xbf16>, vector<128x128xbf16>, vector<8x128xf32> -> vector<8x128xf32>
    %1135 = arith.addf %1133, %1134 : vector<8x128xf32>
    %1136 = arith.negf %1135 : vector<8x128xf32>
    %1137 = math.exp %1136 : vector<8x128xf32>
    %cst_482 = arith.constant 1.000000e+00 : f32
    %1138 = vector.broadcast %cst_482 : f32 to vector<8x128xf32>
    %1139 = arith.addf %1138, %1137 : vector<8x128xf32>
    %1140 = arith.divf %1138, %1139 : vector<8x128xf32>
    %1141 = arith.mulf %1140, %8 : vector<8x128xf32>
    %1142 = arith.addf %1141, %11 : vector<8x128xf32>
    %c96_i32_483 = arith.constant 96 : i32
    %1143 = tpu.dynamic_rotate %1142 by %c96_i32_483 dim 1 : vector<8x128xf32>, i32 -> vector<8x128xf32>
    %c64_i32_484 = arith.constant 64 : i32
    %1144 = tpu.dynamic_rotate %1142 by %c64_i32_484 dim 1 : vector<8x128xf32>, i32 -> vector<8x128xf32>
    %c32_i32_485 = arith.constant 32 : i32
    %1145 = tpu.dynamic_rotate %1142 by %c32_i32_485 dim 1 : vector<8x128xf32>, i32 -> vector<8x128xf32>
    %1146 = arith.mulf %1143, %1128 : vector<8x128xf32>
    %1147 = arith.mulf %1142, %1144 : vector<8x128xf32>
    %1148 = arith.addf %1146, %1147 : vector<8x128xf32>
    %1149 = math.tanh %1148 : vector<8x128xf32>
    %1150 = arith.mulf %1145, %1149 : vector<8x128xf32>
    %c16_486 = arith.constant 16 : index
    %c0_487 = arith.constant 0 : index
    %1151 = vector.load %arg16[%c16_486, %c0_487] : memref<48x128xf32, #tpu.memory_space<vmem>>, vector<8x128xf32>
    tpu.vector_store %arg16[%c16_486, %c0_487], %1150 {strides = array<i32>} : memref<48x128xf32, #tpu.memory_space<vmem>>, vector<8x128xf32>,
    %1152 = arith.truncf %1150 : vector<8x128xf32> to vector<8x128xbf16>
    %1153 = vector.extract_strided_slice %1088 {offsets = [24, 0], sizes = [8, 128], strides = [1, 1]} : vector<48x128xf32> to vector<8x128xf32>
    %cst_488 = arith.constant dense<0.000000e+00> : vector<8x128xf32>
    %1154 = tpu.matmul %1152, %1090, %cst_488 {dimension_numbers = #tpu.dot_dimension_numbers<[1], [0], [0], [1], [0, 0, 1, 1], [], []>} : vector<8x128xbf16>, vector<128x128xbf16>, vector<8x128xf32> -> vector<8x128xf32>
    %1155 = arith.addf %1153, %1154 : vector<8x128xf32>
    %1156 = arith.negf %1155 : vector<8x128xf32>
    %1157 = math.exp %1156 : vector<8x128xf32>
    %cst_489 = arith.constant 1.000000e+00 : f32
    %1158 = vector.broadcast %cst_489 : f32 to vector<8x128xf32>
    %1159 = arith.addf %1158, %1157 : vector<8x128xf32>
    %1160 = arith.divf %1158, %1159 : vector<8x128xf32>
    %1161 = arith.mulf %1160, %8 : vector<8x128xf32>
    %1162 = arith.addf %1161, %11 : vector<8x128xf32>
    %c96_i32_490 = arith.constant 96 : i32
    %1163 = tpu.dynamic_rotate %1162 by %c96_i32_490 dim 1 : vector<8x128xf32>, i32 -> vector<8x128xf32>
    %c64_i32_491 = arith.constant 64 : i32
    %1164 = tpu.dynamic_rotate %1162 by %c64_i32_491 dim 1 : vector<8x128xf32>, i32 -> vector<8x128xf32>
    %c32_i32_492 = arith.constant 32 : i32
    %1165 = tpu.dynamic_rotate %1162 by %c32_i32_492 dim 1 : vector<8x128xf32>, i32 -> vector<8x128xf32>
    %1166 = arith.mulf %1163, %1148 : vector<8x128xf32>
    %1167 = arith.mulf %1162, %1164 : vector<8x128xf32>
    %1168 = arith.addf %1166, %1167 : vector<8x128xf32>
    %1169 = math.tanh %1168 : vector<8x128xf32>
    %1170 = arith.mulf %1165, %1169 : vector<8x128xf32>
    %c24_493 = arith.constant 24 : index
    %c0_494 = arith.constant 0 : index
    %1171 = vector.load %arg16[%c24_493, %c0_494] : memref<48x128xf32, #tpu.memory_space<vmem>>, vector<8x128xf32>
    tpu.vector_store %arg16[%c24_493, %c0_494], %1170 {strides = array<i32>} : memref<48x128xf32, #tpu.memory_space<vmem>>, vector<8x128xf32>,
    %1172 = arith.truncf %1170 : vector<8x128xf32> to vector<8x128xbf16>
    %1173 = vector.extract_strided_slice %1088 {offsets = [32, 0], sizes = [8, 128], strides = [1, 1]} : vector<48x128xf32> to vector<8x128xf32>
    %cst_495 = arith.constant dense<0.000000e+00> : vector<8x128xf32>
    %1174 = tpu.matmul %1172, %1090, %cst_495 {dimension_numbers = #tpu.dot_dimension_numbers<[1], [0], [0], [1], [0, 0, 1, 1], [], []>} : vector<8x128xbf16>, vector<128x128xbf16>, vector<8x128xf32> -> vector<8x128xf32>
    %1175 = arith.addf %1173, %1174 : vector<8x128xf32>
    %1176 = arith.negf %1175 : vector<8x128xf32>
    %1177 = math.exp %1176 : vector<8x128xf32>
    %cst_496 = arith.constant 1.000000e+00 : f32
    %1178 = vector.broadcast %cst_496 : f32 to vector<8x128xf32>
    %1179 = arith.addf %1178, %1177 : vector<8x128xf32>
    %1180 = arith.divf %1178, %1179 : vector<8x128xf32>
    %1181 = arith.mulf %1180, %8 : vector<8x128xf32>
    %1182 = arith.addf %1181, %11 : vector<8x128xf32>
    %c96_i32_497 = arith.constant 96 : i32
    %1183 = tpu.dynamic_rotate %1182 by %c96_i32_497 dim 1 : vector<8x128xf32>, i32 -> vector<8x128xf32>
    %c64_i32_498 = arith.constant 64 : i32
    %1184 = tpu.dynamic_rotate %1182 by %c64_i32_498 dim 1 : vector<8x128xf32>, i32 -> vector<8x128xf32>
    %c32_i32_499 = arith.constant 32 : i32
    %1185 = tpu.dynamic_rotate %1182 by %c32_i32_499 dim 1 : vector<8x128xf32>, i32 -> vector<8x128xf32>
    %1186 = arith.mulf %1183, %1168 : vector<8x128xf32>
    %1187 = arith.mulf %1182, %1184 : vector<8x128xf32>
    %1188 = arith.addf %1186, %1187 : vector<8x128xf32>
    %1189 = math.tanh %1188 : vector<8x128xf32>
    %1190 = arith.mulf %1185, %1189 : vector<8x128xf32>
    %c32_500 = arith.constant 32 : index
    %c0_501 = arith.constant 0 : index
    %1191 = vector.load %arg16[%c32_500, %c0_501] : memref<48x128xf32, #tpu.memory_space<vmem>>, vector<8x128xf32>
    tpu.vector_store %arg16[%c32_500, %c0_501], %1190 {strides = array<i32>} : memref<48x128xf32, #tpu.memory_space<vmem>>, vector<8x128xf32>,
    %1192 = arith.truncf %1190 : vector<8x128xf32> to vector<8x128xbf16>
    %1193 = vector.extract_strided_slice %1088 {offsets = [40, 0], sizes = [8, 128], strides = [1, 1]} : vector<48x128xf32> to vector<8x128xf32>
    %cst_502 = arith.constant dense<0.000000e+00> : vector<8x128xf32>
    %1194 = tpu.matmul %1192, %1090, %cst_502 {dimension_numbers = #tpu.dot_dimension_numbers<[1], [0], [0], [1], [0, 0, 1, 1], [], []>} : vector<8x128xbf16>, vector<128x128xbf16>, vector<8x128xf32> -> vector<8x128xf32>
    %1195 = arith.addf %1193, %1194 : vector<8x128xf32>
    %1196 = arith.negf %1195 : vector<8x128xf32>
    %1197 = math.exp %1196 : vector<8x128xf32>
    %cst_503 = arith.constant 1.000000e+00 : f32
    %1198 = vector.broadcast %cst_503 : f32 to vector<8x128xf32>
    %1199 = arith.addf %1198, %1197 : vector<8x128xf32>
    %1200 = arith.divf %1198, %1199 : vector<8x128xf32>
    %1201 = arith.mulf %1200, %8 : vector<8x128xf32>
    %1202 = arith.addf %1201, %11 : vector<8x128xf32>
    %c96_i32_504 = arith.constant 96 : i32
    %1203 = tpu.dynamic_rotate %1202 by %c96_i32_504 dim 1 : vector<8x128xf32>, i32 -> vector<8x128xf32>
    %c64_i32_505 = arith.constant 64 : i32
    %1204 = tpu.dynamic_rotate %1202 by %c64_i32_505 dim 1 : vector<8x128xf32>, i32 -> vector<8x128xf32>
    %c32_i32_506 = arith.constant 32 : i32
    %1205 = tpu.dynamic_rotate %1202 by %c32_i32_506 dim 1 : vector<8x128xf32>, i32 -> vector<8x128xf32>
    %1206 = arith.mulf %1203, %1188 : vector<8x128xf32>
    %1207 = arith.mulf %1202, %1204 : vector<8x128xf32>
    %1208 = arith.addf %1206, %1207 : vector<8x128xf32>
    %1209 = math.tanh %1208 : vector<8x128xf32>
    %1210 = arith.mulf %1205, %1209 : vector<8x128xf32>
    %c40_507 = arith.constant 40 : index
    %c0_508 = arith.constant 0 : index
    %1211 = vector.load %arg16[%c40_507, %c0_508] : memref<48x128xf32, #tpu.memory_space<vmem>>, vector<8x128xf32>
    tpu.vector_store %arg16[%c40_507, %c0_508], %1210 {strides = array<i32>} : memref<48x128xf32, #tpu.memory_space<vmem>>, vector<8x128xf32>,
    %c0_509 = arith.constant 0 : index
    %c0_510 = arith.constant 0 : index
    %1212 = vector.load %arg16[%c0_509, %c0_510] : memref<48x128xf32, #tpu.memory_space<vmem>>, vector<48x128xf32>
    %1213 = arith.truncf %1212 : vector<48x128xf32> to vector<48x128xbf16>
    %c4_511 = arith.constant 4 : index
    %c0_512 = arith.constant 0 : index
    %c0_513 = arith.constant 0 : index
    %1214 = vector.load %arg9[%c4_511, %c0_512, %c0_513] : memref<5x128x128xbf16, #tpu.memory_space<vmem>>, vector<1x128x128xbf16>
    %1215 = vector.shape_cast %1214 : vector<1x128x128xbf16> to vector<128x128xbf16>
    %cst_514 = arith.constant dense<0.000000e+00> : vector<48x128xf32>
    %1216 = tpu.matmul %1213, %1215, %cst_514 {dimension_numbers = #tpu.dot_dimension_numbers<[1], [0], [0], [1], [0, 0, 1, 1], [], []>} : vector<48x128xbf16>, vector<128x128xbf16>, vector<48x128xf32> -> vector<48x128xf32>
    %c4_515 = arith.constant 4 : index
    %c0_516 = arith.constant 0 : index
    %c0_517 = arith.constant 0 : index
    %1217 = vector.load %arg11[%c4_515, %c0_516, %c0_517] : memref<5x1x128xf32, #tpu.memory_space<vmem>>, vector<1x1x128xf32>
    %1218 = vector.shape_cast %1217 : vector<1x1x128xf32> to vector<1x128xf32>
    %1219 = vector.broadcast %1218 : vector<1x128xf32> to vector<48x128xf32>
    %1220 = arith.addf %1216, %1219 : vector<48x128xf32>
    %c4_518 = arith.constant 4 : index
    %c0_519 = arith.constant 0 : index
    %c0_520 = arith.constant 0 : index
    %1221 = vector.load %arg10[%c4_518, %c0_519, %c0_520] : memref<5x128x128xbf16, #tpu.memory_space<vmem>>, vector<1x128x128xbf16>
    %1222 = vector.shape_cast %1221 : vector<1x128x128xbf16> to vector<128x128xbf16>
    %cst_521 = arith.constant 0.000000e+00 : bf16
    %1223 = vector.broadcast %cst_521 : bf16 to vector<8x128xbf16>
    %cst_522 = arith.constant 0.000000e+00 : f32
    %1224 = vector.broadcast %cst_522 : f32 to vector<8x128xf32>
    %1225 = vector.extract_strided_slice %1220 {offsets = [0, 0], sizes = [8, 128], strides = [1, 1]} : vector<48x128xf32> to vector<8x128xf32>
    %cst_523 = arith.constant dense<0.000000e+00> : vector<8x128xf32>
    %1226 = tpu.matmul %1223, %1222, %cst_523 {dimension_numbers = #tpu.dot_dimension_numbers<[1], [0], [0], [1], [0, 0, 1, 1], [], []>} : vector<8x128xbf16>, vector<128x128xbf16>, vector<8x128xf32> -> vector<8x128xf32>
    %1227 = arith.addf %1225, %1226 : vector<8x128xf32>
    %1228 = arith.negf %1227 : vector<8x128xf32>
    %1229 = math.exp %1228 : vector<8x128xf32>
    %cst_524 = arith.constant 1.000000e+00 : f32
    %1230 = vector.broadcast %cst_524 : f32 to vector<8x128xf32>
    %1231 = arith.addf %1230, %1229 : vector<8x128xf32>
    %1232 = arith.divf %1230, %1231 : vector<8x128xf32>
    %1233 = arith.mulf %1232, %8 : vector<8x128xf32>
    %1234 = arith.addf %1233, %11 : vector<8x128xf32>
    %c96_i32_525 = arith.constant 96 : i32
    %1235 = tpu.dynamic_rotate %1234 by %c96_i32_525 dim 1 : vector<8x128xf32>, i32 -> vector<8x128xf32>
    %c64_i32_526 = arith.constant 64 : i32
    %1236 = tpu.dynamic_rotate %1234 by %c64_i32_526 dim 1 : vector<8x128xf32>, i32 -> vector<8x128xf32>
    %c32_i32_527 = arith.constant 32 : i32
    %1237 = tpu.dynamic_rotate %1234 by %c32_i32_527 dim 1 : vector<8x128xf32>, i32 -> vector<8x128xf32>
    %1238 = arith.mulf %1235, %1224 : vector<8x128xf32>
    %1239 = arith.mulf %1234, %1236 : vector<8x128xf32>
    %1240 = arith.addf %1238, %1239 : vector<8x128xf32>
    %1241 = math.tanh %1240 : vector<8x128xf32>
    %1242 = arith.mulf %1237, %1241 : vector<8x128xf32>
    %c0_528 = arith.constant 0 : index
    %c0_529 = arith.constant 0 : index
    %1243 = vector.load %arg16[%c0_528, %c0_529] : memref<48x128xf32, #tpu.memory_space<vmem>>, vector<8x128xf32>
    tpu.vector_store %arg16[%c0_528, %c0_529], %1242 {strides = array<i32>} : memref<48x128xf32, #tpu.memory_space<vmem>>, vector<8x128xf32>,
    %1244 = arith.truncf %1242 : vector<8x128xf32> to vector<8x128xbf16>
    %1245 = vector.extract_strided_slice %1220 {offsets = [8, 0], sizes = [8, 128], strides = [1, 1]} : vector<48x128xf32> to vector<8x128xf32>
    %cst_530 = arith.constant dense<0.000000e+00> : vector<8x128xf32>
    %1246 = tpu.matmul %1244, %1222, %cst_530 {dimension_numbers = #tpu.dot_dimension_numbers<[1], [0], [0], [1], [0, 0, 1, 1], [], []>} : vector<8x128xbf16>, vector<128x128xbf16>, vector<8x128xf32> -> vector<8x128xf32>
    %1247 = arith.addf %1245, %1246 : vector<8x128xf32>
    %1248 = arith.negf %1247 : vector<8x128xf32>
    %1249 = math.exp %1248 : vector<8x128xf32>
    %cst_531 = arith.constant 1.000000e+00 : f32
    %1250 = vector.broadcast %cst_531 : f32 to vector<8x128xf32>
    %1251 = arith.addf %1250, %1249 : vector<8x128xf32>
    %1252 = arith.divf %1250, %1251 : vector<8x128xf32>
    %1253 = arith.mulf %1252, %8 : vector<8x128xf32>
    %1254 = arith.addf %1253, %11 : vector<8x128xf32>
    %c96_i32_532 = arith.constant 96 : i32
    %1255 = tpu.dynamic_rotate %1254 by %c96_i32_532 dim 1 : vector<8x128xf32>, i32 -> vector<8x128xf32>
    %c64_i32_533 = arith.constant 64 : i32
    %1256 = tpu.dynamic_rotate %1254 by %c64_i32_533 dim 1 : vector<8x128xf32>, i32 -> vector<8x128xf32>
    %c32_i32_534 = arith.constant 32 : i32
    %1257 = tpu.dynamic_rotate %1254 by %c32_i32_534 dim 1 : vector<8x128xf32>, i32 -> vector<8x128xf32>
    %1258 = arith.mulf %1255, %1240 : vector<8x128xf32>
    %1259 = arith.mulf %1254, %1256 : vector<8x128xf32>
    %1260 = arith.addf %1258, %1259 : vector<8x128xf32>
    %1261 = math.tanh %1260 : vector<8x128xf32>
    %1262 = arith.mulf %1257, %1261 : vector<8x128xf32>
    %c8_535 = arith.constant 8 : index
    %c0_536 = arith.constant 0 : index
    %1263 = vector.load %arg16[%c8_535, %c0_536] : memref<48x128xf32, #tpu.memory_space<vmem>>, vector<8x128xf32>
    tpu.vector_store %arg16[%c8_535, %c0_536], %1262 {strides = array<i32>} : memref<48x128xf32, #tpu.memory_space<vmem>>, vector<8x128xf32>,
    %1264 = arith.truncf %1262 : vector<8x128xf32> to vector<8x128xbf16>
    %1265 = vector.extract_strided_slice %1220 {offsets = [16, 0], sizes = [8, 128], strides = [1, 1]} : vector<48x128xf32> to vector<8x128xf32>
    %cst_537 = arith.constant dense<0.000000e+00> : vector<8x128xf32>
    %1266 = tpu.matmul %1264, %1222, %cst_537 {dimension_numbers = #tpu.dot_dimension_numbers<[1], [0], [0], [1], [0, 0, 1, 1], [], []>} : vector<8x128xbf16>, vector<128x128xbf16>, vector<8x128xf32> -> vector<8x128xf32>
    %1267 = arith.addf %1265, %1266 : vector<8x128xf32>
    %1268 = arith.negf %1267 : vector<8x128xf32>
    %1269 = math.exp %1268 : vector<8x128xf32>
    %cst_538 = arith.constant 1.000000e+00 : f32
    %1270 = vector.broadcast %cst_538 : f32 to vector<8x128xf32>
    %1271 = arith.addf %1270, %1269 : vector<8x128xf32>
    %1272 = arith.divf %1270, %1271 : vector<8x128xf32>
    %1273 = arith.mulf %1272, %8 : vector<8x128xf32>
    %1274 = arith.addf %1273, %11 : vector<8x128xf32>
    %c96_i32_539 = arith.constant 96 : i32
    %1275 = tpu.dynamic_rotate %1274 by %c96_i32_539 dim 1 : vector<8x128xf32>, i32 -> vector<8x128xf32>
    %c64_i32_540 = arith.constant 64 : i32
    %1276 = tpu.dynamic_rotate %1274 by %c64_i32_540 dim 1 : vector<8x128xf32>, i32 -> vector<8x128xf32>
    %c32_i32_541 = arith.constant 32 : i32
    %1277 = tpu.dynamic_rotate %1274 by %c32_i32_541 dim 1 : vector<8x128xf32>, i32 -> vector<8x128xf32>
    %1278 = arith.mulf %1275, %1260 : vector<8x128xf32>
    %1279 = arith.mulf %1274, %1276 : vector<8x128xf32>
    %1280 = arith.addf %1278, %1279 : vector<8x128xf32>
    %1281 = math.tanh %1280 : vector<8x128xf32>
    %1282 = arith.mulf %1277, %1281 : vector<8x128xf32>
    %c16_542 = arith.constant 16 : index
    %c0_543 = arith.constant 0 : index
    %1283 = vector.load %arg16[%c16_542, %c0_543] : memref<48x128xf32, #tpu.memory_space<vmem>>, vector<8x128xf32>
    tpu.vector_store %arg16[%c16_542, %c0_543], %1282 {strides = array<i32>} : memref<48x128xf32, #tpu.memory_space<vmem>>, vector<8x128xf32>,
    %1284 = arith.truncf %1282 : vector<8x128xf32> to vector<8x128xbf16>
    %1285 = vector.extract_strided_slice %1220 {offsets = [24, 0], sizes = [8, 128], strides = [1, 1]} : vector<48x128xf32> to vector<8x128xf32>
    %cst_544 = arith.constant dense<0.000000e+00> : vector<8x128xf32>
    %1286 = tpu.matmul %1284, %1222, %cst_544 {dimension_numbers = #tpu.dot_dimension_numbers<[1], [0], [0], [1], [0, 0, 1, 1], [], []>} : vector<8x128xbf16>, vector<128x128xbf16>, vector<8x128xf32> -> vector<8x128xf32>
    %1287 = arith.addf %1285, %1286 : vector<8x128xf32>
    %1288 = arith.negf %1287 : vector<8x128xf32>
    %1289 = math.exp %1288 : vector<8x128xf32>
    %cst_545 = arith.constant 1.000000e+00 : f32
    %1290 = vector.broadcast %cst_545 : f32 to vector<8x128xf32>
    %1291 = arith.addf %1290, %1289 : vector<8x128xf32>
    %1292 = arith.divf %1290, %1291 : vector<8x128xf32>
    %1293 = arith.mulf %1292, %8 : vector<8x128xf32>
    %1294 = arith.addf %1293, %11 : vector<8x128xf32>
    %c96_i32_546 = arith.constant 96 : i32
    %1295 = tpu.dynamic_rotate %1294 by %c96_i32_546 dim 1 : vector<8x128xf32>, i32 -> vector<8x128xf32>
    %c64_i32_547 = arith.constant 64 : i32
    %1296 = tpu.dynamic_rotate %1294 by %c64_i32_547 dim 1 : vector<8x128xf32>, i32 -> vector<8x128xf32>
    %c32_i32_548 = arith.constant 32 : i32
    %1297 = tpu.dynamic_rotate %1294 by %c32_i32_548 dim 1 : vector<8x128xf32>, i32 -> vector<8x128xf32>
    %1298 = arith.mulf %1295, %1280 : vector<8x128xf32>
    %1299 = arith.mulf %1294, %1296 : vector<8x128xf32>
    %1300 = arith.addf %1298, %1299 : vector<8x128xf32>
    %1301 = math.tanh %1300 : vector<8x128xf32>
    %1302 = arith.mulf %1297, %1301 : vector<8x128xf32>
    %c24_549 = arith.constant 24 : index
    %c0_550 = arith.constant 0 : index
    %1303 = vector.load %arg16[%c24_549, %c0_550] : memref<48x128xf32, #tpu.memory_space<vmem>>, vector<8x128xf32>
    tpu.vector_store %arg16[%c24_549, %c0_550], %1302 {strides = array<i32>} : memref<48x128xf32, #tpu.memory_space<vmem>>, vector<8x128xf32>,
    %1304 = arith.truncf %1302 : vector<8x128xf32> to vector<8x128xbf16>
    %1305 = vector.extract_strided_slice %1220 {offsets = [32, 0], sizes = [8, 128], strides = [1, 1]} : vector<48x128xf32> to vector<8x128xf32>
    %cst_551 = arith.constant dense<0.000000e+00> : vector<8x128xf32>
    %1306 = tpu.matmul %1304, %1222, %cst_551 {dimension_numbers = #tpu.dot_dimension_numbers<[1], [0], [0], [1], [0, 0, 1, 1], [], []>} : vector<8x128xbf16>, vector<128x128xbf16>, vector<8x128xf32> -> vector<8x128xf32>
    %1307 = arith.addf %1305, %1306 : vector<8x128xf32>
    %1308 = arith.negf %1307 : vector<8x128xf32>
    %1309 = math.exp %1308 : vector<8x128xf32>
    %cst_552 = arith.constant 1.000000e+00 : f32
    %1310 = vector.broadcast %cst_552 : f32 to vector<8x128xf32>
    %1311 = arith.addf %1310, %1309 : vector<8x128xf32>
    %1312 = arith.divf %1310, %1311 : vector<8x128xf32>
    %1313 = arith.mulf %1312, %8 : vector<8x128xf32>
    %1314 = arith.addf %1313, %11 : vector<8x128xf32>
    %c96_i32_553 = arith.constant 96 : i32
    %1315 = tpu.dynamic_rotate %1314 by %c96_i32_553 dim 1 : vector<8x128xf32>, i32 -> vector<8x128xf32>
    %c64_i32_554 = arith.constant 64 : i32
    %1316 = tpu.dynamic_rotate %1314 by %c64_i32_554 dim 1 : vector<8x128xf32>, i32 -> vector<8x128xf32>
    %c32_i32_555 = arith.constant 32 : i32
    %1317 = tpu.dynamic_rotate %1314 by %c32_i32_555 dim 1 : vector<8x128xf32>, i32 -> vector<8x128xf32>
    %1318 = arith.mulf %1315, %1300 : vector<8x128xf32>
    %1319 = arith.mulf %1314, %1316 : vector<8x128xf32>
    %1320 = arith.addf %1318, %1319 : vector<8x128xf32>
    %1321 = math.tanh %1320 : vector<8x128xf32>
    %1322 = arith.mulf %1317, %1321 : vector<8x128xf32>
    %c32_556 = arith.constant 32 : index
    %c0_557 = arith.constant 0 : index
    %1323 = vector.load %arg16[%c32_556, %c0_557] : memref<48x128xf32, #tpu.memory_space<vmem>>, vector<8x128xf32>
    tpu.vector_store %arg16[%c32_556, %c0_557], %1322 {strides = array<i32>} : memref<48x128xf32, #tpu.memory_space<vmem>>, vector<8x128xf32>,
    %1324 = arith.truncf %1322 : vector<8x128xf32> to vector<8x128xbf16>
    %1325 = vector.extract_strided_slice %1220 {offsets = [40, 0], sizes = [8, 128], strides = [1, 1]} : vector<48x128xf32> to vector<8x128xf32>
    %cst_558 = arith.constant dense<0.000000e+00> : vector<8x128xf32>
    %1326 = tpu.matmul %1324, %1222, %cst_558 {dimension_numbers = #tpu.dot_dimension_numbers<[1], [0], [0], [1], [0, 0, 1, 1], [], []>} : vector<8x128xbf16>, vector<128x128xbf16>, vector<8x128xf32> -> vector<8x128xf32>
    %1327 = arith.addf %1325, %1326 : vector<8x128xf32>
    %1328 = arith.negf %1327 : vector<8x128xf32>
    %1329 = math.exp %1328 : vector<8x128xf32>
    %cst_559 = arith.constant 1.000000e+00 : f32
    %1330 = vector.broadcast %cst_559 : f32 to vector<8x128xf32>
    %1331 = arith.addf %1330, %1329 : vector<8x128xf32>
    %1332 = arith.divf %1330, %1331 : vector<8x128xf32>
    %1333 = arith.mulf %1332, %8 : vector<8x128xf32>
    %1334 = arith.addf %1333, %11 : vector<8x128xf32>
    %c96_i32_560 = arith.constant 96 : i32
    %1335 = tpu.dynamic_rotate %1334 by %c96_i32_560 dim 1 : vector<8x128xf32>, i32 -> vector<8x128xf32>
    %c64_i32_561 = arith.constant 64 : i32
    %1336 = tpu.dynamic_rotate %1334 by %c64_i32_561 dim 1 : vector<8x128xf32>, i32 -> vector<8x128xf32>
    %c32_i32_562 = arith.constant 32 : i32
    %1337 = tpu.dynamic_rotate %1334 by %c32_i32_562 dim 1 : vector<8x128xf32>, i32 -> vector<8x128xf32>
    %1338 = arith.mulf %1335, %1320 : vector<8x128xf32>
    %1339 = arith.mulf %1334, %1336 : vector<8x128xf32>
    %1340 = arith.addf %1338, %1339 : vector<8x128xf32>
    %1341 = math.tanh %1340 : vector<8x128xf32>
    %1342 = arith.mulf %1337, %1341 : vector<8x128xf32>
    %c40_563 = arith.constant 40 : index
    %c0_564 = arith.constant 0 : index
    %1343 = vector.load %arg16[%c40_563, %c0_564] : memref<48x128xf32, #tpu.memory_space<vmem>>, vector<8x128xf32>
    tpu.vector_store %arg16[%c40_563, %c0_564], %1342 {strides = array<i32>} : memref<48x128xf32, #tpu.memory_space<vmem>>, vector<8x128xf32>,
    %c0_565 = arith.constant 0 : index
    %c0_566 = arith.constant 0 : index
    %1344 = vector.load %arg16[%c0_565, %c0_566] : memref<48x128xf32, #tpu.memory_space<vmem>>, vector<48x128xf32>
    %1345 = arith.truncf %1344 : vector<48x128xf32> to vector<48x128xbf16>
    %c0_567 = arith.constant 0 : index
    %c0_568 = arith.constant 0 : index
    %1346 = vector.load %arg12[%c0_567, %c0_568] : memref<128x128xbf16, #tpu.memory_space<vmem>>, vector<128x128xbf16>
    %cst_569 = arith.constant dense<0.000000e+00> : vector<48x128xf32>
    %1347 = tpu.matmul %1345, %1346, %cst_569 {dimension_numbers = #tpu.dot_dimension_numbers<[1], [0], [0], [1], [0, 0, 1, 1], [], []>} : vector<48x128xbf16>, vector<128x128xbf16>, vector<48x128xf32> -> vector<48x128xf32>
    %c0_570 = arith.constant 0 : index
    %c0_571 = arith.constant 0 : index
    %1348 = vector.load %arg13[%c0_570, %c0_571] : memref<1x128xf32, #tpu.memory_space<vmem>>, vector<1x128xf32>
    %1349 = vector.broadcast %1348 : vector<1x128xf32> to vector<48x128xf32>
    %1350 = arith.addf %1347, %1349 : vector<48x128xf32>
    %c0_572 = arith.constant 0 : index
    %c0_573 = arith.constant 0 : index
    %1351 = vector.load %arg14[%c0_572, %c0_573] : memref<48x128xf32, #tpu.memory_space<vmem>>, vector<48x128xf32>
    tpu.vector_store %arg14[%c0_572, %c0_573], %1350 {strides = array<i32>} : memref<48x128xf32, #tpu.memory_space<vmem>>, vector<48x128xf32>,
    return
  }
}

</mosaic_0001>

<llo_original>
// kernel: taxon_vae_forward.1
$region0: #{taxon_vae_forward.1}
  #allocation0 [shape = 'u32[]', space=smem, size = 0x4, offset = 0x4, fixed_abs, tag = 'smem constant byte address 0x4 - core index']
  #allocation1 [shape = 'u32[72,128]{1,0:T(1,128)}', space=vmem, size = 0x9000, scoped, tag = 'internal scratch']
  #allocation2 [shape = 'f32[48,128]{1,0:T(8,128)}', space=vmem, size = 0x6000, scoped, tag = 'scratch operand']
  %s0 = inlined_call_operand.vmem [shape: bf16[48,128], index: 0, kind: input, shape index: {}]
  %s1 = inlined_call_operand.vmem [shape: f32[8,128], index: 1, kind: input, shape index: {}]
  %s2 = inlined_call_operand.hbm [shape: bf16[5,128,128], index: 2, kind: input, shape index: {}]
  %s3 = inlined_call_operand.hbm [shape: bf16[5,128,128], index: 3, kind: input, shape index: {}]
  %s4 = inlined_call_operand.vmem [shape: f32[5,1,128], index: 4, kind: input, shape index: {}]
  %s5 = inlined_call_operand.vmem [shape: bf16[128,128], index: 5, kind: input, shape index: {}]
  %s6 = inlined_call_operand.vmem [shape: f32[1,128], index: 6, kind: input, shape index: {}]
  %s7 = inlined_call_operand.vmem [shape: bf16[128,128], index: 7, kind: input, shape index: {}]
  %s8 = inlined_call_operand.vmem [shape: f32[1,128], index: 8, kind: input, shape index: {}]
  %s9 = inlined_call_operand.hbm [shape: bf16[5,128,128], index: 9, kind: input, shape index: {}]
  %s10 = inlined_call_operand.hbm [shape: bf16[5,128,128], index: 10, kind: input, shape index: {}]
  %s11 = inlined_call_operand.vmem [shape: f32[5,1,128], index: 11, kind: input, shape index: {}]
  %s12 = inlined_call_operand.hbm [shape: bf16[128,128], index: 12, kind: input, shape index: {}]
  %s13 = inlined_call_operand.vmem [shape: f32[1,128], index: 13, kind: input, shape index: {}]
  %s14 = inlined_call_operand.vmem [shape: f32[48,128], index: 14, kind: output, shape index: {0}]
  %s15 = inlined_call_operand.vmem [shape: f32[8,128], index: 15, kind: output, shape index: {1}]
  %16 = xla_tuple %s14, %s15
  %s17 = sld [smem:[#allocation0]]
  $region94: #{taxon_vae_forward.1} parent=0
    _
  %s19 = ssub.s32 1, %s17
  %s20 = scalar_select 0, %s19, %s17
  $region1: #{taxon_vae_forward.1} parent=0
    #allocation3 [shape = 'u8[163840]{0}', space=vmem, size = 0x28000, scoped, tag = 'input window, operand 2, single buffered']
    #allocation4 [shape = 's32[1]{0}', space=sflag, size = 0x4, scoped, tag = 'scoped memory for taxon_vae_forward.1']
    #allocation5 [shape = 'u8[163840]{0}', space=vmem, size = 0x28000, scoped, tag = 'input window, operand 3, single buffered']
    #allocation6 [shape = 's32[1]{0}', space=sflag, size = 0x4, scoped, tag = 'scoped memory for taxon_vae_forward.1']
    #allocation7 [shape = 'u8[163840]{0}', space=vmem, size = 0x28000, scoped, tag = 'input window, operand 9, single buffered']
    #allocation8 [shape = 'u8[163840]{0}', space=vmem, size = 0x28000, scoped, tag = 'input window, operand 10, single buffered']
    #allocation9 [shape = 's32[1]{0}', space=sflag, size = 0x4, scoped, tag = 'scoped memory for taxon_vae_forward.1']
    #allocation10 [shape = 'u8[32768]{0}', space=vmem, size = 0x8000, scoped, tag = 'input window, operand 12, single buffered']
    %21 = vsyncpa [#allocation4], 0
    %22 = vsyncpa [#allocation6], 0
    %23 = vsyncpa [#allocation9], 0
    // Predicated region
    $region2: #{taxon_vae_forward.1} parent=1 // pred_check
      _
    $region3: #{taxon_vae_forward.1} parent=1 // pred_check_branch
      %25 = sbr.rel (0) target = $region5
    $region4: #{taxon_vae_forward.1} parent=1 // pred_region
      _
    $region5: #{taxon_vae_forward.1} parent=1 // pred_fallthru
      _
    // Predicated region
    $region6: #{taxon_vae_forward.1} parent=1 // pred_check
      _
    $region7: #{taxon_vae_forward.1} parent=1 // pred_check_branch
      %27 = sbr.rel (0) target = $region9
    $region8: #{taxon_vae_forward.1} parent=1 // pred_region
      _
    $region9: #{taxon_vae_forward.1} parent=1 // pred_fallthru
      _
    // Predicated region
    $region10: #{taxon_vae_forward.1} parent=1 // pred_check
      _
    $region11: #{taxon_vae_forward.1} parent=1 // pred_check_branch
      %29 = sbr.rel (0) target = $region13
    $region12: #{taxon_vae_forward.1} parent=1 // pred_region
      %31 = vsyncadd [#allocation4], 0
      %s32 = sshll.u32 %s2, 4
      %s33 = int_to_ptr.hbm [resolvable:$true] %s32
      %s34 = sshll.u32 [#allocation3], 4
      %s35 = int_to_ptr.vmem [resolvable:$true] %s34
      %40 = dma.hbm_to_vmem [thread:$0]  %s33, 5120, %s35, [#allocation4], 64, 64, 4
    $region13: #{taxon_vae_forward.1} parent=1 // pred_fallthru
      _
    // Predicated region
    $region14: #{taxon_vae_forward.1} parent=1 // pred_check
      _
    $region15: #{taxon_vae_forward.1} parent=1 // pred_check_branch
      %42 = sbr.rel (0) target = $region17
    $region16: #{taxon_vae_forward.1} parent=1 // pred_region
      %44 = vsyncadd [#allocation6], 0
      %s45 = sshll.u32 %s3, 4
      %s46 = int_to_ptr.hbm [resolvable:$true] %s45
      %s47 = sshll.u32 [#allocation5], 4
      %s48 = int_to_ptr.vmem [resolvable:$true] %s47
      %53 = dma.hbm_to_vmem [thread:$0]  %s46, 5120, %s48, [#allocation6], 64, 64, 4
    $region17: #{taxon_vae_forward.1} parent=1 // pred_fallthru
      _
    // Predicated region
    $region18: #{taxon_vae_forward.1} parent=1 // pred_check
      _
    $region19: #{taxon_vae_forward.1} parent=1 // pred_check_branch
      %55 = sbr.rel (0) target = $region21
    $region20: #{taxon_vae_forward.1} parent=1 // pred_region
      _
    $region21: #{taxon_vae_forward.1} parent=1 // pred_fallthru
      _
    // Predicated region
    $region22: #{taxon_vae_forward.1} parent=1 // pred_check
      _
    $region23: #{taxon_vae_forward.1} parent=1 // pred_check_branch
      %57 = sbr.rel (0) target = $region25
    $region24: #{taxon_vae_forward.1} parent=1 // pred_region
      _
    $region25: #{taxon_vae_forward.1} parent=1 // pred_fallthru
      _
    // Predicated region
    $region26: #{taxon_vae_forward.1} parent=1 // pred_check
      _
    $region27: #{taxon_vae_forward.1} parent=1 // pred_check_branch
      %59 = sbr.rel (0) target = $region29
    $region28: #{taxon_vae_forward.1} parent=1 // pred_region
      _
    $region29: #{taxon_vae_forward.1} parent=1 // pred_fallthru
      _
    // Predicated region
    $region30: #{taxon_vae_forward.1} parent=1 // pred_check
      _
    $region31: #{taxon_vae_forward.1} parent=1 // pred_check_branch
      %61 = sbr.rel (0) target = $region33
    $region32: #{taxon_vae_forward.1} parent=1 // pred_region
      _
    $region33: #{taxon_vae_forward.1} parent=1 // pred_fallthru
      _
    // Predicated region
    $region34: #{taxon_vae_forward.1} parent=1 // pred_check
      _
    $region35: #{taxon_vae_forward.1} parent=1 // pred_check_branch
      %63 = sbr.rel (0) target = $region37
    $region36: #{taxon_vae_forward.1} parent=1 // pred_region
      _
    $region37: #{taxon_vae_forward.1} parent=1 // pred_fallthru
      _
    // Predicated region
    $region38: #{taxon_vae_forward.1} parent=1 // pred_check
      _
    $region39: #{taxon_vae_forward.1} parent=1 // pred_check_branch
      %65 = sbr.rel (0) target = $region41
    $region40: #{taxon_vae_forward.1} parent=1 // pred_region
      %67 = vsyncadd [#allocation6], 0
      %s68 = sshll.u32 %s9, 4
      %s69 = int_to_ptr.hbm [resolvable:$true] %s68
      %s70 = sshll.u32 [#allocation7], 4
      %s71 = int_to_ptr.vmem [resolvable:$true] %s70
      %76 = dma.hbm_to_vmem [thread:$0]  %s69, 5120, %s71, [#allocation6], 64, 64, 4
    $region41: #{taxon_vae_forward.1} parent=1 // pred_fallthru
      _
    // Predicated region
    $region42: #{taxon_vae_forward.1} parent=1 // pred_check
      _
    $region43: #{taxon_vae_forward.1} parent=1 // pred_check_branch
      %78 = sbr.rel (0) target = $region45
    $region44: #{taxon_vae_forward.1} parent=1 // pred_region
      %80 = vsyncadd [#allocation9], 0
      %s81 = sshll.u32 %s10, 4
      %s82 = int_to_ptr.hbm [resolvable:$true] %s81
      %s83 = sshll.u32 [#allocation8], 4
      %s84 = int_to_ptr.vmem [resolvable:$true] %s83
      %89 = dma.hbm_to_vmem [thread:$0]  %s82, 5120, %s84, [#allocation9], 64, 64, 4
    $region45: #{taxon_vae_forward.1} parent=1 // pred_fallthru
      _
    // Predicated region
    $region46: #{taxon_vae_forward.1} parent=1 // pred_check
      _
    $region47: #{taxon_vae_forward.1} parent=1 // pred_check_branch
      %91 = sbr.rel (0) target = $region49
    $region48: #{taxon_vae_forward.1} parent=1 // pred_region
      _
    $region49: #{taxon_vae_forward.1} parent=1 // pred_fallthru
      _
    // Predicated region
    $region50: #{taxon_vae_forward.1} parent=1 // pred_check
      _
    $region51: #{taxon_vae_forward.1} parent=1 // pred_check_branch
      %93 = sbr.rel (0) target = $region53
    $region52: #{taxon_vae_forward.1} parent=1 // pred_region
      %95 = vsyncadd [#allocation9], 0
      %s96 = sshll.u32 %s12, 4
      %s97 = int_to_ptr.hbm [resolvable:$true] %s96
      %s98 = sshll.u32 [#allocation10], 4
      %s99 = int_to_ptr.vmem [resolvable:$true] %s98
      %104 = dma.hbm_to_vmem [thread:$0]  %s97, 1024, %s99, [#allocation9], 64, 64, 4
    $region53: #{taxon_vae_forward.1} parent=1 // pred_fallthru
      _
    // Predicated region
    $region54: #{taxon_vae_forward.1} parent=1 // pred_check
      _
    $region55: #{taxon_vae_forward.1} parent=1 // pred_check_branch
      %106 = sbr.rel (0) target = $region57
    $region56: #{taxon_vae_forward.1} parent=1 // pred_region
      _
    $region57: #{taxon_vae_forward.1} parent=1 // pred_fallthru
      _
    // Predicated region
    $region58: #{taxon_vae_forward.1} parent=1 // pred_check
      _
    $region59: #{taxon_vae_forward.1} parent=1 // pred_check_branch
      %108 = sbr.rel (0) target = $region61
    $region60: #{taxon_vae_forward.1} parent=1 // pred_region
      %110 = dma.done [#allocation4], 5120
    $region61: #{taxon_vae_forward.1} parent=1 // pred_fallthru
      _
    // Predicated region
    $region62: #{taxon_vae_forward.1} parent=1 // pred_check
      _
    $region63: #{taxon_vae_forward.1} parent=1 // pred_check_branch
      %112 = sbr.rel (0) target = $region65
    $region64: #{taxon_vae_forward.1} parent=1 // pred_region
      %114 = dma.done [#allocation6], 5120
    $region65: #{taxon_vae_forward.1} parent=1 // pred_fallthru
      _
    // Predicated region
    $region66: #{taxon_vae_forward.1} parent=1 // pred_check
      _
    $region67: #{taxon_vae_forward.1} parent=1 // pred_check_branch
      %116 = sbr.rel (0) target = $region69
    $region68: #{taxon_vae_forward.1} parent=1 // pred_region
      %118 = dma.done [#allocation6], 5120
    $region69: #{taxon_vae_forward.1} parent=1 // pred_fallthru
      _
    // Predicated region
    $region70: #{taxon_vae_forward.1} parent=1 // pred_check
      _
    $region71: #{taxon_vae_forward.1} parent=1 // pred_check_branch
      %120 = sbr.rel (0) target = $region73
    $region72: #{taxon_vae_forward.1} parent=1 // pred_region
      %122 = dma.done [#allocation9], 5120
    $region73: #{taxon_vae_forward.1} parent=1 // pred_fallthru
      _
    // Predicated region
    $region74: #{taxon_vae_forward.1} parent=1 // pred_check
      _
    $region75: #{taxon_vae_forward.1} parent=1 // pred_check_branch
      %124 = sbr.rel (0) target = $region77
    $region76: #{taxon_vae_forward.1} parent=1 // pred_region
      %126 = dma.done [#allocation9], 1024
    $region77: #{taxon_vae_forward.1} parent=1 // pred_fallthru
      _
    %v128 = vlaneseq
    %v129 = vand.u32 %v128, 127
    %vm130 = vcmp.ge.s32.totalorder %v129, 64
    %vm131 = vcmp.lt.s32.totalorder %v129, 96
    %vm132 = vmand %vm130, %vm131
    %v133 = vsel %vm132, 2.0, 1.0
    %v134 = vsel %vm132, -1.0, 0.0
    %v135 = vld [vmem:[%s0] sm:$0xf]
    %v136 = vld [vmem:[%s0 + $0x4] sm:$0xf]
    %v137 = vld [vmem:[%s0 + $0x8] sm:$0xf]
    %v138 = vld [vmem:[%s0 + $0xc] sm:$0xf]
    %v139 = vld [vmem:[%s0 + $0x10] sm:$0xf]
    %v140 = vld [vmem:[%s0 + $0x14] sm:$0xf]
    %v141 = vld [vmem:[#allocation3] sm:$0xf]
    %v142 = vld [vmem:[#allocation3 + $0x4] sm:$0xf]
    %v143 = vld [vmem:[#allocation3 + $0x8] sm:$0xf]
    %v144 = vld [vmem:[#allocation3 + $0xc] sm:$0xf]
    %v145 = vld [vmem:[#allocation3 + $0x10] sm:$0xf]
    %v146 = vld [vmem:[#allocation3 + $0x14] sm:$0xf]
    %v147 = vld [vmem:[#allocation3 + $0x18] sm:$0xf]
    %v148 = vld [vmem:[#allocation3 + $0x1c] sm:$0xf]
    %v149 = vld [vmem:[#allocation3 + $0x20] sm:$0xf]
    %v150 = vld [vmem:[#allocation3 + $0x24] sm:$0xf]
    %v151 = vld [vmem:[#allocation3 + $0x28] sm:$0xf]
    %v152 = vld [vmem:[#allocation3 + $0x2c] sm:$0xf]
    %v153 = vld [vmem:[#allocation3 + $0x30] sm:$0xf]
    %v154 = vld [vmem:[#allocation3 + $0x34] sm:$0xf]
    %v155 = vld [vmem:[#allocation3 + $0x38] sm:$0xf]
    %v156 = vld [vmem:[#allocation3 + $0x3c] sm:$0xf]
    %v157 = vld [vmem:[%s4] sm:$0x1]
    %v159 = vperm.slane %v157, 0
    %v167 = vunpack.c.l.b16 %v135
    %v168 = vunpack.c.l.b16 %v136
    %v169 = vunpack.c.l.b16 %v137
    %v170 = vunpack.c.l.b16 %v138
    %v171 = vunpack.c.l.b16 %v139
    %v172 = vunpack.c.l.b16 %v140
    %v173 = vpack.c.b16 %v168, %v167
    %v174 = vpack.c.b16 %v170, %v169
    %v175 = vpack.c.b16 %v172, %v171
    %v195 = vunpack.c.l.b16 %v141
    %v196 = vunpack.c.l.b16 %v142
    %v197 = vunpack.c.l.b16 %v143
    %v198 = vunpack.c.l.b16 %v144
    %v199 = vunpack.c.l.b16 %v145
    %v200 = vunpack.c.l.b16 %v146
    %v201 = vunpack.c.l.b16 %v147
    %v202 = vunpack.c.l.b16 %v148
    %v203 = vunpack.c.l.b16 %v149
    %v204 = vunpack.c.l.b16 %v150
    %v205 = vunpack.c.l.b16 %v151
    %v206 = vunpack.c.l.b16 %v152
    %v207 = vunpack.c.l.b16 %v153
    %v208 = vunpack.c.l.b16 %v154
    %v209 = vunpack.c.l.b16 %v155
    %v210 = vunpack.c.l.b16 %v156
    %v211 = vpack.c.b16 %v196, %v195
    %v212 = vpack.c.b16 %v198, %v197
    %v213 = vpack.c.b16 %v200, %v199
    %v214 = vpack.c.b16 %v202, %v201
    %v215 = vpack.c.b16 %v204, %v203
    %v216 = vpack.c.b16 %v206, %v205
    %v217 = vpack.c.b16 %v208, %v207
    %v218 = vpack.c.b16 %v210, %v209
    %227 = vmatpush.bf16.msra.mxu0 %v218
    %228 = vmatpush.bf16.msra.mxu0 %v217
    %229 = vmatpush.bf16.msra.mxu0 %v216
    %230 = vmatpush.bf16.msra.mxu0 %v215
    %231 = vmatpush.bf16.msra.mxu0 %v214
    %232 = vmatpush.bf16.msra.mxu0 %v213
    %233 = vmatpush.bf16.msra.mxu0 %v212
    %234 = vmatpush.bf16.msra.mxu0 %v211
    %235 = vmatmul.bf16.gmra.mxu0 %v173
    %v236 = vpop.f32.mrf.mxu0
    %v237 = vadd.f32 %v159, %v236
    %v238 = vpop.f32.mrf.mxu0
    %v239 = vadd.f32 %v159, %v238
    %240 = vmatmul.bf16.gmra.mxu0 %v174
    %v241 = vpop.f32.mrf.mxu0
    %v242 = vadd.f32 %v159, %v241
    %v243 = vpop.f32.mrf.mxu0
    %v244 = vadd.f32 %v159, %v243
    %245 = vmatmul.bf16.gmra.mxu0 %v175
    %v246 = vpop.f32.mrf.mxu0
    %v247 = vadd.f32 %v159, %v246
    %v248 = vpop.f32.mrf.mxu0
    %v249 = vadd.f32 %v159, %v248
    %250 = vdwg.mxu0
    %v251 = vld [vmem:[#allocation5] sm:$0xf]
    %v252 = vld [vmem:[#allocation5 + $0x4] sm:$0xf]
    %v253 = vld [vmem:[#allocation5 + $0x8] sm:$0xf]
    %v254 = vld [vmem:[#allocation5 + $0xc] sm:$0xf]
    %v255 = vld [vmem:[#allocation5 + $0x10] sm:$0xf]
    %v256 = vld [vmem:[#allocation5 + $0x14] sm:$0xf]
    %v257 = vld [vmem:[#allocation5 + $0x18] sm:$0xf]
    %v258 = vld [vmem:[#allocation5 + $0x1c] sm:$0xf]
    %v259 = vld [vmem:[#allocation5 + $0x20] sm:$0xf]
    %v260 = vld [vmem:[#allocation5 + $0x24] sm:$0xf]
    %v261 = vld [vmem:[#allocation5 + $0x28] sm:$0xf]
    %v262 = vld [vmem:[#allocation5 + $0x2c] sm:$0xf]
    %v263 = vld [vmem:[#allocation5 + $0x30] sm:$0xf]
    %v264 = vld [vmem:[#allocation5 + $0x34] sm:$0xf]
    %v265 = vld [vmem:[#allocation5 + $0x38] sm:$0xf]
    %v266 = vld [vmem:[#allocation5 + $0x3c] sm:$0xf]
    %v283 = vunpack.c.l.b16 %v251
    %v284 = vunpack.c.l.b16 %v252
    %v285 = vunpack.c.l.b16 %v253
    %v286 = vunpack.c.l.b16 %v254
    %v287 = vunpack.c.l.b16 %v255
    %v288 = vunpack.c.l.b16 %v256
    %v289 = vunpack.c.l.b16 %v257
    %v290 = vunpack.c.l.b16 %v258
    %v291 = vunpack.c.l.b16 %v259
    %v292 = vunpack.c.l.b16 %v260
    %v293 = vunpack.c.l.b16 %v261
    %v294 = vunpack.c.l.b16 %v262
    %v295 = vunpack.c.l.b16 %v263
    %v296 = vunpack.c.l.b16 %v264
    %v297 = vunpack.c.l.b16 %v265
    %v298 = vunpack.c.l.b16 %v266
    %v299 = vpack.c.b16 %v284, %v283
    %v300 = vpack.c.b16 %v286, %v285
    %v301 = vpack.c.b16 %v288, %v287
    %v302 = vpack.c.b16 %v290, %v289
    %v303 = vpack.c.b16 %v292, %v291
    %v304 = vpack.c.b16 %v294, %v293
    %v305 = vpack.c.b16 %v296, %v295
    %v306 = vpack.c.b16 %v298, %v297
    %315 = vmatpush.bf16.msra.mxu0 %v306
    %316 = vmatpush.bf16.msra.mxu0 %v305
    %317 = vmatpush.bf16.msra.mxu0 %v304
    %318 = vmatpush.bf16.msra.mxu0 %v303
    %319 = vmatpush.bf16.msra.mxu0 %v302
    %320 = vmatpush.bf16.msra.mxu0 %v301
    %321 = vmatpush.bf16.msra.mxu0 %v300
    %322 = vmatpush.bf16.msra.mxu0 %v299
    %323 = vmatmul.bf16.gmra.mxu0 0
    %v324 = vpop.f32.mrf.mxu0
    %v325 = vadd.f32 0.0, %v324
    %v326 = vpop.f32.mrf.mxu0
    %327 = vdwg.mxu0
    %v328 = vadd.f32 %v237, %v325
    %v329 = vxor.u32 %v328, 2147483648
    %v330 = vmul.f32 %v329, 1.442695
    %v331 = vpow.pop %v330
    %v332 = vadd.f32 %v331, 1.0
    %v333 = vrcp.pop %v332
    %v334 = vmul.f32 %v332, %v333
    %v335 = vsub.f32 1.0, %v334
    %v336 = vmul.f32 %v333, %v335
    %v337 = vadd.f32 %v333, %v336
    %vm338 = vweird.f32 %v332
    %vm339 = vweird.f32 %v333
    %vm340 = vmor %vm338, %vm339
    %v341 = vsel %vm340, %v333, %v337
    %v342 = vand.u32 2147483647, %v332
    %vm343 = vcmp.eq.f32.partialorder %v342, 8.507059e+37
    %v344 = vand.u32 %v332, 2147483648
    %v345 = vor.u32 1.1754944e-38, %v344
    %v346 = vsel %vm343, %v345, %v341
    %v347 = vmul.f32 1.0, %v346
    %v348 = vmul.f32 %v347, %v133
    %v349 = vadd.f32 %v348, %v134
    %350 = vrot.lane.b32.xlu0 %v349, 96
    %v351 = vpop.permute.xlu0 %350
    %352 = vrot.lane.b32.xlu0 %v349, 64
    %v353 = vpop.permute.xlu0 %352
    %354 = vrot.lane.b32.xlu0 %v349, 32
    %v355 = vpop.permute.xlu0 %354
    %v356 = vmul.f32 %v351, 0.0
    %v357 = vmul.f32 %v349, %v353
    %v358 = vadd.f32 %v356, %v357
    %v359 = vtanh.pop %v358
    %v360 = vmul.f32 %v355, %v359
    %361 = vst [vmem:[#allocation2] sm:$0xff] %v360
    %v362 = vpack.c.bf16 %v360, %v360
    %363 = vmatpush.bf16.msra.mxu0 %v306
    %364 = vmatpush.bf16.msra.mxu0 %v305
    %365 = vmatpush.bf16.msra.mxu0 %v304
    %366 = vmatpush.bf16.msra.mxu0 %v303
    %367 = vmatpush.bf16.msra.mxu0 %v302
    %368 = vmatpush.bf16.msra.mxu0 %v301
    %369 = vmatpush.bf16.msra.mxu0 %v300
    %370 = vmatpush.bf16.msra.mxu0 %v299
    %371 = vmatmul.bf16.gmra.mxu0 %v362
    %v372 = vpop.f32.mrf.mxu0
    %v373 = vadd.f32 0.0, %v372
    %v374 = vpop.f32.mrf.mxu0
    %375 = vdwg.mxu0
    %v376 = vadd.f32 %v239, %v373
    %v377 = vxor.u32 %v376, 2147483648
    %v378 = vmul.f32 %v377, 1.442695
    %v379 = vpow.pop %v378
    %v380 = vadd.f32 %v379, 1.0
    %v381 = vrcp.pop %v380
    %v382 = vmul.f32 %v380, %v381
    %v383 = vsub.f32 1.0, %v382
    %v384 = vmul.f32 %v381, %v383
    %v385 = vadd.f32 %v381, %v384
    %vm386 = vweird.f32 %v380
    %vm387 = vweird.f32 %v381
    %vm388 = vmor %vm386, %vm387
    %v389 = vsel %vm388, %v381, %v385
    %v390 = vand.u32 2147483647, %v380
    %vm391 = vcmp.eq.f32.partialorder %v390, 8.507059e+37
    %v392 = vand.u32 %v380, 2147483648
    %v393 = vor.u32 1.1754944e-38, %v392
    %v394 = vsel %vm391, %v393, %v389
    %v395 = vmul.f32 1.0, %v394
    %v396 = vmul.f32 %v395, %v133
    %v397 = vadd.f32 %v396, %v134
    %398 = vrot.lane.b32.xlu0 %v397, 96
    %v399 = vpop.permute.xlu0 %398
    %400 = vrot.lane.b32.xlu0 %v397, 64
    %v401 = vpop.permute.xlu0 %400
    %402 = vrot.lane.b32.xlu0 %v397, 32
    %v403 = vpop.permute.xlu0 %402
    %v404 = vmul.f32 %v399, %v358
    %v405 = vmul.f32 %v397, %v401
    %v406 = vadd.f32 %v404, %v405
    %v407 = vtanh.pop %v406
    %v408 = vmul.f32 %v403, %v407
    %409 = vst [vmem:[#allocation2 + $0x8] sm:$0xff] %v408
    %v410 = vpack.c.bf16 %v408, %v408
    %411 = vmatpush.bf16.msra.mxu0 %v306
    %412 = vmatpush.bf16.msra.mxu0 %v305
    %413 = vmatpush.bf16.msra.mxu0 %v304
    %414 = vmatpush.bf16.msra.mxu0 %v303
    %415 = vmatpush.bf16.msra.mxu0 %v302
    %416 = vmatpush.bf16.msra.mxu0 %v301
    %417 = vmatpush.bf16.msra.mxu0 %v300
    %418 = vmatpush.bf16.msra.mxu0 %v299
    %419 = vmatmul.bf16.gmra.mxu0 %v410
    %v420 = vpop.f32.mrf.mxu0
    %v421 = vadd.f32 0.0, %v420
    %v422 = vpop.f32.mrf.mxu0
    %423 = vdwg.mxu0
    %v424 = vadd.f32 %v242, %v421
    %v425 = vxor.u32 %v424, 2147483648
    %v426 = vmul.f32 %v425, 1.442695
    %v427 = vpow.pop %v426
    %v428 = vadd.f32 %v427, 1.0
    %v429 = vrcp.pop %v428
    %v430 = vmul.f32 %v428, %v429
    %v431 = vsub.f32 1.0, %v430
    %v432 = vmul.f32 %v429, %v431
    %v433 = vadd.f32 %v429, %v432
    %vm434 = vweird.f32 %v428
    %vm435 = vweird.f32 %v429
    %vm436 = vmor %vm434, %vm435
    %v437 = vsel %vm436, %v429, %v433
    %v438 = vand.u32 2147483647, %v428
    %vm439 = vcmp.eq.f32.partialorder %v438, 8.507059e+37
    %v440 = vand.u32 %v428, 2147483648
    %v441 = vor.u32 1.1754944e-38, %v440
    %v442 = vsel %vm439, %v441, %v437
    %v443 = vmul.f32 1.0, %v442
    %v444 = vmul.f32 %v443, %v133
    %v445 = vadd.f32 %v444, %v134
    %446 = vrot.lane.b32.xlu0 %v445, 96
    %v447 = vpop.permute.xlu0 %446
    %448 = vrot.lane.b32.xlu0 %v445, 64
    %v449 = vpop.permute.xlu0 %448
    %450 = vrot.lane.b32.xlu0 %v445, 32
    %v451 = vpop.permute.xlu0 %450
    %v452 = vmul.f32 %v447, %v406
    %v453 = vmul.f32 %v445, %v449
    %v454 = vadd.f32 %v452, %v453
    %v455 = vtanh.pop %v454
    %v456 = vmul.f32 %v451, %v455
    %457 = vst [vmem:[#allocation2 + $0x10] sm:$0xff] %v456
    %v458 = vpack.c.bf16 %v456, %v456
    %459 = vmatpush.bf16.msra.mxu0 %v306
    %460 = vmatpush.bf16.msra.mxu0 %v305
    %461 = vmatpush.bf16.msra.mxu0 %v304
    %462 = vmatpush.bf16.msra.mxu0 %v303
    %463 = vmatpush.bf16.msra.mxu0 %v302
    %464 = vmatpush.bf16.msra.mxu0 %v301
    %465 = vmatpush.bf16.msra.mxu0 %v300
    %466 = vmatpush.bf16.msra.mxu0 %v299
    %467 = vmatmul.bf16.gmra.mxu0 %v458
    %v468 = vpop.f32.mrf.mxu0
    %v469 = vadd.f32 0.0, %v468
    %v470 = vpop.f32.mrf.mxu0
    %471 = vdwg.mxu0
    %v472 = vadd.f32 %v244, %v469
    %v473 = vxor.u32 %v472, 2147483648
    %v474 = vmul.f32 %v473, 1.442695
    %v475 = vpow.pop %v474
    %v476 = vadd.f32 %v475, 1.0
    %v477 = vrcp.pop %v476
    %v478 = vmul.f32 %v476, %v477
    %v479 = vsub.f32 1.0, %v478
    %v480 = vmul.f32 %v477, %v479
    %v481 = vadd.f32 %v477, %v480
    %vm482 = vweird.f32 %v476
    %vm483 = vweird.f32 %v477
    %vm484 = vmor %vm482, %vm483
    %v485 = vsel %vm484, %v477, %v481
    %v486 = vand.u32 2147483647, %v476
    %vm487 = vcmp.eq.f32.partialorder %v486, 8.507059e+37
    %v488 = vand.u32 %v476, 2147483648
    %v489 = vor.u32 1.1754944e-38, %v488
    %v490 = vsel %vm487, %v489, %v485
    %v491 = vmul.f32 1.0, %v490
    %v492 = vmul.f32 %v491, %v133
    %v493 = vadd.f32 %v492, %v134
    %494 = vrot.lane.b32.xlu0 %v493, 96
    %v495 = vpop.permute.xlu0 %494
    %496 = vrot.lane.b32.xlu0 %v493, 64
    %v497 = vpop.permute.xlu0 %496
    %498 = vrot.lane.b32.xlu0 %v493, 32
    %v499 = vpop.permute.xlu0 %498
    %v500 = vmul.f32 %v495, %v454
    %v501 = vmul.f32 %v493, %v497
    %v502 = vadd.f32 %v500, %v501
    %v503 = vtanh.pop %v502
    %v504 = vmul.f32 %v499, %v503
    %505 = vst [vmem:[#allocation2 + $0x18] sm:$0xff] %v504
    %v506 = vpack.c.bf16 %v504, %v504
    %507 = vmatpush.bf16.msra.mxu0 %v306
    %508 = vmatpush.bf16.msra.mxu0 %v305
    %509 = vmatpush.bf16.msra.mxu0 %v304
    %510 = vmatpush.bf16.msra.mxu0 %v303
    %511 = vmatpush.bf16.msra.mxu0 %v302
    %512 = vmatpush.bf16.msra.mxu0 %v301
    %513 = vmatpush.bf16.msra.mxu0 %v300
    %514 = vmatpush.bf16.msra.mxu0 %v299
    %515 = vmatmul.bf16.gmra.mxu0 %v506
    %v516 = vpop.f32.mrf.mxu0
    %v517 = vadd.f32 0.0, %v516
    %v518 = vpop.f32.mrf.mxu0
    %519 = vdwg.mxu0
    %v520 = vadd.f32 %v247, %v517
    %v521 = vxor.u32 %v520, 2147483648
    %v522 = vmul.f32 %v521, 1.442695
    %v523 = vpow.pop %v522
    %v524 = vadd.f32 %v523, 1.0
    %v525 = vrcp.pop %v524
    %v526 = vmul.f32 %v524, %v525
    %v527 = vsub.f32 1.0, %v526
    %v528 = vmul.f32 %v525, %v527
    %v529 = vadd.f32 %v525, %v528
    %vm530 = vweird.f32 %v524
    %vm531 = vweird.f32 %v525
    %vm532 = vmor %vm530, %vm531
    %v533 = vsel %vm532, %v525, %v529
    %v534 = vand.u32 2147483647, %v524
    %vm535 = vcmp.eq.f32.partialorder %v534, 8.507059e+37
    %v536 = vand.u32 %v524, 2147483648
    %v537 = vor.u32 1.1754944e-38, %v536
    %v538 = vsel %vm535, %v537, %v533
    %v539 = vmul.f32 1.0, %v538
    %v540 = vmul.f32 %v539, %v133
    %v541 = vadd.f32 %v540, %v134
    %542 = vrot.lane.b32.xlu0 %v541, 96
    %v543 = vpop.permute.xlu0 %542
    %544 = vrot.lane.b32.xlu0 %v541, 64
    %v545 = vpop.permute.xlu0 %544
    %546 = vrot.lane.b32.xlu0 %v541, 32
    %v547 = vpop.permute.xlu0 %546
    %v548 = vmul.f32 %v543, %v502
    %v549 = vmul.f32 %v541, %v545
    %v550 = vadd.f32 %v548, %v549
    %v551 = vtanh.pop %v550
    %v552 = vmul.f32 %v547, %v551
    %553 = vst [vmem:[#allocation2 + $0x20] sm:$0xff] %v552
    %v554 = vpack.c.bf16 %v552, %v552
    %555 = vmatpush.bf16.msra.mxu0 %v306
    %556 = vmatpush.bf16.msra.mxu0 %v305
    %557 = vmatpush.bf16.msra.mxu0 %v304
    %558 = vmatpush.bf16.msra.mxu0 %v303
    %559 = vmatpush.bf16.msra.mxu0 %v302
    %560 = vmatpush.bf16.msra.mxu0 %v301
    %561 = vmatpush.bf16.msra.mxu0 %v300
    %562 = vmatpush.bf16.msra.mxu0 %v299
    %563 = vmatmul.bf16.gmra.mxu0 %v554
    %v564 = vpop.f32.mrf.mxu0
    %v565 = vadd.f32 0.0, %v564
    %v566 = vpop.f32.mrf.mxu0
    %567 = vdwg.mxu0
    %v568 = vadd.f32 %v249, %v565
    %v569 = vxor.u32 %v568, 2147483648
    %v570 = vmul.f32 %v569, 1.442695
    %v571 = vpow.pop %v570
    %v572 = vadd.f32 %v571, 1.0
    %v573 = vrcp.pop %v572
    %v574 = vmul.f32 %v572, %v573
    %v575 = vsub.f32 1.0, %v574
    %v576 = vmul.f32 %v573, %v575
    %v577 = vadd.f32 %v573, %v576
    %vm578 = vweird.f32 %v572
    %vm579 = vweird.f32 %v573
    %vm580 = vmor %vm578, %vm579
    %v581 = vsel %vm580, %v573, %v577
    %v582 = vand.u32 2147483647, %v572
    %vm583 = vcmp.eq.f32.partialorder %v582, 8.507059e+37
    %v584 = vand.u32 %v572, 2147483648
    %v585 = vor.u32 1.1754944e-38, %v584
    %v586 = vsel %vm583, %v585, %v581
    %v587 = vmul.f32 1.0, %v586
    %v588 = vmul.f32 %v587, %v133
    %v589 = vadd.f32 %v588, %v134
    %590 = vrot.lane.b32.xlu0 %v589, 96
    %v591 = vpop.permute.xlu0 %590
    %592 = vrot.lane.b32.xlu0 %v589, 64
    %v593 = vpop.permute.xlu0 %592
    %594 = vrot.lane.b32.xlu0 %v589, 32
    %v595 = vpop.permute.xlu0 %594
    %v596 = vmul.f32 %v591, %v550
    %v597 = vmul.f32 %v589, %v593
    %v598 = vadd.f32 %v596, %v597
    %v599 = vtanh.pop %v598
    %v600 = vmul.f32 %v595, %v599
    %601 = vst [vmem:[#allocation2 + $0x28] sm:$0xff] %v600
    %v602 = vld [vmem:[#allocation2] sm:$0xff]
    %v603 = vld [vmem:[#allocation2 + $0x8] sm:$0xff]
    %v604 = vld [vmem:[#allocation2 + $0x10] sm:$0xff]
    %v605 = vld [vmem:[#allocation2 + $0x18] sm:$0xff]
    %v606 = vld [vmem:[#allocation2 + $0x20] sm:$0xff]
    %v607 = vld [vmem:[#allocation2 + $0x28] sm:$0xff]
    %v608 = vpack.c.bf16 %v603, %v602
    %v609 = vpack.c.bf16 %v605, %v604
    %v610 = vpack.c.bf16 %v607, %v606
    %s611 = scalar_lea.vmem [#allocation3], 64
    %v612 = vld [vmem:[%s611] sm:$0xf]
    %v613 = vld [vmem:[%s611 + $0x4] sm:$0xf]
    %v614 = vld [vmem:[%s611 + $0x8] sm:$0xf]
    %v615 = vld [vmem:[%s611 + $0xc] sm:$0xf]
    %v616 = vld [vmem:[%s611 + $0x10] sm:$0xf]
    %v617 = vld [vmem:[%s611 + $0x14] sm:$0xf]
    %v618 = vld [vmem:[%s611 + $0x18] sm:$0xf]
    %v619 = vld [vmem:[%s611 + $0x1c] sm:$0xf]
    %v620 = vld [vmem:[%s611 + $0x20] sm:$0xf]
    %v621 = vld [vmem:[%s611 + $0x24] sm:$0xf]
    %v622 = vld [vmem:[%s611 + $0x28] sm:$0xf]
    %v623 = vld [vmem:[%s611 + $0x2c] sm:$0xf]
    %v624 = vld [vmem:[%s611 + $0x30] sm:$0xf]
    %v625 = vld [vmem:[%s611 + $0x34] sm:$0xf]
    %v626 = vld [vmem:[%s611 + $0x38] sm:$0xf]
    %v627 = vld [vmem:[%s611 + $0x3c] sm:$0xf]
    %s628 = scalar_lea.vmem %s4, 1
    %v629 = vld [vmem:[%s628] sm:$0x1]
    %v631 = vperm.slane %v629, 0
    %v649 = vunpack.c.l.b16 %v612
    %v650 = vunpack.c.l.b16 %v613
    %v651 = vunpack.c.l.b16 %v614
    %v652 = vunpack.c.l.b16 %v615
    %v653 = vunpack.c.l.b16 %v616
    %v654 = vunpack.c.l.b16 %v617
    %v655 = vunpack.c.l.b16 %v618
    %v656 = vunpack.c.l.b16 %v619
    %v657 = vunpack.c.l.b16 %v620
    %v658 = vunpack.c.l.b16 %v621
    %v659 = vunpack.c.l.b16 %v622
    %v660 = vunpack.c.l.b16 %v623
    %v661 = vunpack.c.l.b16 %v624
    %v662 = vunpack.c.l.b16 %v625
    %v663 = vunpack.c.l.b16 %v626
    %v664 = vunpack.c.l.b16 %v627
    %v665 = vpack.c.b16 %v650, %v649
    %v666 = vpack.c.b16 %v652, %v651
    %v667 = vpack.c.b16 %v654, %v653
    %v668 = vpack.c.b16 %v656, %v655
    %v669 = vpack.c.b16 %v658, %v657
    %v670 = vpack.c.b16 %v660, %v659
    %v671 = vpack.c.b16 %v662, %v661
    %v672 = vpack.c.b16 %v664, %v663
    %681 = vmatpush.bf16.msra.mxu0 %v672
    %682 = vmatpush.bf16.msra.mxu0 %v671
    %683 = vmatpush.bf16.msra.mxu0 %v670
    %684 = vmatpush.bf16.msra.mxu0 %v669
    %685 = vmatpush.bf16.msra.mxu0 %v668
    %686 = vmatpush.bf16.msra.mxu0 %v667
    %687 = vmatpush.bf16.msra.mxu0 %v666
    %688 = vmatpush.bf16.msra.mxu0 %v665
    %689 = vmatmul.bf16.gmra.mxu0 %v608
    %v690 = vpop.f32.mrf.mxu0
    %v691 = vadd.f32 %v631, %v690
    %v692 = vpop.f32.mrf.mxu0
    %v693 = vadd.f32 %v631, %v692
    %694 = vmatmul.bf16.gmra.mxu0 %v609
    %v695 = vpop.f32.mrf.mxu0
    %v696 = vadd.f32 %v631, %v695
    %v697 = vpop.f32.mrf.mxu0
    %v698 = vadd.f32 %v631, %v697
    %699 = vmatmul.bf16.gmra.mxu0 %v610
    %v700 = vpop.f32.mrf.mxu0
    %v701 = vadd.f32 %v631, %v700
    %v702 = vpop.f32.mrf.mxu0
    %v703 = vadd.f32 %v631, %v702
    %704 = vdwg.mxu0
    %s705 = scalar_lea.vmem [#allocation5], 64
    %v706 = vld [vmem:[%s705] sm:$0xf]
    %v707 = vld [vmem:[%s705 + $0x4] sm:$0xf]
    %v708 = vld [vmem:[%s705 + $0x8] sm:$0xf]
    %v709 = vld [vmem:[%s705 + $0xc] sm:$0xf]
    %v710 = vld [vmem:[%s705 + $0x10] sm:$0xf]
    %v711 = vld [vmem:[%s705 + $0x14] sm:$0xf]
    %v712 = vld [vmem:[%s705 + $0x18] sm:$0xf]
    %v713 = vld [vmem:[%s705 + $0x1c] sm:$0xf]
    %v714 = vld [vmem:[%s705 + $0x20] sm:$0xf]
    %v715 = vld [vmem:[%s705 + $0x24] sm:$0xf]
    %v716 = vld [vmem:[%s705 + $0x28] sm:$0xf]
    %v717 = vld [vmem:[%s705 + $0x2c] sm:$0xf]
    %v718 = vld [vmem:[%s705 + $0x30] sm:$0xf]
    %v719 = vld [vmem:[%s705 + $0x34] sm:$0xf]
    %v720 = vld [vmem:[%s705 + $0x38] sm:$0xf]
    %v721 = vld [vmem:[%s705 + $0x3c] sm:$0xf]
    %v738 = vunpack.c.l.b16 %v706
    %v739 = vunpack.c.l.b16 %v707
    %v740 = vunpack.c.l.b16 %v708
    %v741 = vunpack.c.l.b16 %v709
    %v742 = vunpack.c.l.b16 %v710
    %v743 = vunpack.c.l.b16 %v711
    %v744 = vunpack.c.l.b16 %v712
    %v745 = vunpack.c.l.b16 %v713
    %v746 = vunpack.c.l.b16 %v714
    %v747 = vunpack.c.l.b16 %v715
    %v748 = vunpack.c.l.b16 %v716
    %v749 = vunpack.c.l.b16 %v717
    %v750 = vunpack.c.l.b16 %v718
    %v751 = vunpack.c.l.b16 %v719
    %v752 = vunpack.c.l.b16 %v720
    %v753 = vunpack.c.l.b16 %v721
    %v754 = vpack.c.b16 %v739, %v738
    %v755 = vpack.c.b16 %v741, %v740
    %v756 = vpack.c.b16 %v743, %v742
    %v757 = vpack.c.b16 %v745, %v744
    %v758 = vpack.c.b16 %v747, %v746
    %v759 = vpack.c.b16 %v749, %v748
    %v760 = vpack.c.b16 %v751, %v750
    %v761 = vpack.c.b16 %v753, %v752
    %770 = vmatpush.bf16.msra.mxu0 %v761
    %771 = vmatpush.bf16.msra.mxu0 %v760
    %772 = vmatpush.bf16.msra.mxu0 %v759
    %773 = vmatpush.bf16.msra.mxu0 %v758
    %774 = vmatpush.bf16.msra.mxu0 %v757
    %775 = vmatpush.bf16.msra.mxu0 %v756
    %776 = vmatpush.bf16.msra.mxu0 %v755
    %777 = vmatpush.bf16.msra.mxu0 %v754
    %778 = vmatmul.bf16.gmra.mxu0 0
    %v779 = vpop.f32.mrf.mxu0
    %v780 = vadd.f32 0.0, %v779
    %v781 = vpop.f32.mrf.mxu0
    %782 = vdwg.mxu0
    %v783 = vadd.f32 %v691, %v780
    %v784 = vxor.u32 %v783, 2147483648
    %v785 = vmul.f32 %v784, 1.442695
    %v786 = vpow.pop %v785
    %v787 = vadd.f32 %v786, 1.0
    %v788 = vrcp.pop %v787
    %v789 = vmul.f32 %v787, %v788
    %v790 = vsub.f32 1.0, %v789
    %v791 = vmul.f32 %v788, %v790
    %v792 = vadd.f32 %v788, %v791
    %vm793 = vweird.f32 %v787
    %vm794 = vweird.f32 %v788
    %vm795 = vmor %vm793, %vm794
    %v796 = vsel %vm795, %v788, %v792
    %v797 = vand.u32 2147483647, %v787
    %vm798 = vcmp.eq.f32.partialorder %v797, 8.507059e+37
    %v799 = vand.u32 %v787, 2147483648
    %v800 = vor.u32 1.1754944e-38, %v799
    %v801 = vsel %vm798, %v800, %v796
    %v802 = vmul.f32 1.0, %v801
    %v803 = vmul.f32 %v802, %v133
    %v804 = vadd.f32 %v803, %v134
    %805 = vrot.lane.b32.xlu0 %v804, 96
    %v806 = vpop.permute.xlu0 %805
    %807 = vrot.lane.b32.xlu0 %v804, 64
    %v808 = vpop.permute.xlu0 %807
    %809 = vrot.lane.b32.xlu0 %v804, 32
    %v810 = vpop.permute.xlu0 %809
    %v811 = vmul.f32 %v806, 0.0
    %v812 = vmul.f32 %v804, %v808
    %v813 = vadd.f32 %v811, %v812
    %v814 = vtanh.pop %v813
    %v815 = vmul.f32 %v810, %v814
    %816 = vst [vmem:[#allocation2] sm:$0xff] %v815
    %v817 = vpack.c.bf16 %v815, %v815
    %818 = vmatpush.bf16.msra.mxu0 %v761
    %819 = vmatpush.bf16.msra.mxu0 %v760
    %820 = vmatpush.bf16.msra.mxu0 %v759
    %821 = vmatpush.bf16.msra.mxu0 %v758
    %822 = vmatpush.bf16.msra.mxu0 %v757
    %823 = vmatpush.bf16.msra.mxu0 %v756
    %824 = vmatpush.bf16.msra.mxu0 %v755
    %825 = vmatpush.bf16.msra.mxu0 %v754
    %826 = vmatmul.bf16.gmra.mxu0 %v817
    %v827 = vpop.f32.mrf.mxu0
    %v828 = vadd.f32 0.0, %v827
    %v829 = vpop.f32.mrf.mxu0
    %830 = vdwg.mxu0
    %v831 = vadd.f32 %v693, %v828
    %v832 = vxor.u32 %v831, 2147483648
    %v833 = vmul.f32 %v832, 1.442695
    %v834 = vpow.pop %v833
    %v835 = vadd.f32 %v834, 1.0
    %v836 = vrcp.pop %v835
    %v837 = vmul.f32 %v835, %v836
    %v838 = vsub.f32 1.0, %v837
    %v839 = vmul.f32 %v836, %v838
    %v840 = vadd.f32 %v836, %v839
    %vm841 = vweird.f32 %v835
    %vm842 = vweird.f32 %v836
    %vm843 = vmor %vm841, %vm842
    %v844 = vsel %vm843, %v836, %v840
    %v845 = vand.u32 2147483647, %v835
    %vm846 = vcmp.eq.f32.partialorder %v845, 8.507059e+37
    %v847 = vand.u32 %v835, 2147483648
    %v848 = vor.u32 1.1754944e-38, %v847
    %v849 = vsel %vm846, %v848, %v844
    %v850 = vmul.f32 1.0, %v849
    %v851 = vmul.f32 %v850, %v133
    %v852 = vadd.f32 %v851, %v134
    %853 = vrot.lane.b32.xlu0 %v852, 96
    %v854 = vpop.permute.xlu0 %853
    %855 = vrot.lane.b32.xlu0 %v852, 64
    %v856 = vpop.permute.xlu0 %855
    %857 = vrot.lane.b32.xlu0 %v852, 32
    %v858 = vpop.permute.xlu0 %857
    %v859 = vmul.f32 %v854, %v813
    %v860 = vmul.f32 %v852, %v856
    %v861 = vadd.f32 %v859, %v860
    %v862 = vtanh.pop %v861
    %v863 = vmul.f32 %v858, %v862
    %864 = vst [vmem:[#allocation2 + $0x8] sm:$0xff] %v863
    %v865 = vpack.c.bf16 %v863, %v863
    %866 = vmatpush.bf16.msra.mxu0 %v761
    %867 = vmatpush.bf16.msra.mxu0 %v760
    %868 = vmatpush.bf16.msra.mxu0 %v759
    %869 = vmatpush.bf16.msra.mxu0 %v758
    %870 = vmatpush.bf16.msra.mxu0 %v757
    %871 = vmatpush.bf16.msra.mxu0 %v756
    %872 = vmatpush.bf16.msra.mxu0 %v755
    %873 = vmatpush.bf16.msra.mxu0 %v754
    %874 = vmatmul.bf16.gmra.mxu0 %v865
    %v875 = vpop.f32.mrf.mxu0
    %v876 = vadd.f32 0.0, %v875
    %v877 = vpop.f32.mrf.mxu0
    %878 = vdwg.mxu0
    %v879 = vadd.f32 %v696, %v876
    %v880 = vxor.u32 %v879, 2147483648
    %v881 = vmul.f32 %v880, 1.442695
    %v882 = vpow.pop %v881
    %v883 = vadd.f32 %v882, 1.0
    %v884 = vrcp.pop %v883
    %v885 = vmul.f32 %v883, %v884
    %v886 = vsub.f32 1.0, %v885
    %v887 = vmul.f32 %v884, %v886
    %v888 = vadd.f32 %v884, %v887
    %vm889 = vweird.f32 %v883
    %vm890 = vweird.f32 %v884
    %vm891 = vmor %vm889, %vm890
    %v892 = vsel %vm891, %v884, %v888
    %v893 = vand.u32 2147483647, %v883
    %vm894 = vcmp.eq.f32.partialorder %v893, 8.507059e+37
    %v895 = vand.u32 %v883, 2147483648
    %v896 = vor.u32 1.1754944e-38, %v895
    %v897 = vsel %vm894, %v896, %v892
    %v898 = vmul.f32 1.0, %v897
    %v899 = vmul.f32 %v898, %v133
    %v900 = vadd.f32 %v899, %v134
    %901 = vrot.lane.b32.xlu0 %v900, 96
    %v902 = vpop.permute.xlu0 %901
    %903 = vrot.lane.b32.xlu0 %v900, 64
    %v904 = vpop.permute.xlu0 %903
    %905 = vrot.lane.b32.xlu0 %v900, 32
    %v906 = vpop.permute.xlu0 %905
    %v907 = vmul.f32 %v902, %v861
    %v908 = vmul.f32 %v900, %v904
    %v909 = vadd.f32 %v907, %v908
    %v910 = vtanh.pop %v909
    %v911 = vmul.f32 %v906, %v910
    %912 = vst [vmem:[#allocation2 + $0x10] sm:$0xff] %v911
    %v913 = vpack.c.bf16 %v911, %v911
    %914 = vmatpush.bf16.msra.mxu0 %v761
    %915 = vmatpush.bf16.msra.mxu0 %v760
    %916 = vmatpush.bf16.msra.mxu0 %v759
    %917 = vmatpush.bf16.msra.mxu0 %v758
    %918 = vmatpush.bf16.msra.mxu0 %v757
    %919 = vmatpush.bf16.msra.mxu0 %v756
    %920 = vmatpush.bf16.msra.mxu0 %v755
    %921 = vmatpush.bf16.msra.mxu0 %v754
    %922 = vmatmul.bf16.gmra.mxu0 %v913
    %v923 = vpop.f32.mrf.mxu0
    %v924 = vadd.f32 0.0, %v923
    %v925 = vpop.f32.mrf.mxu0
    %926 = vdwg.mxu0
    %v927 = vadd.f32 %v698, %v924
    %v928 = vxor.u32 %v927, 2147483648
    %v929 = vmul.f32 %v928, 1.442695
    %v930 = vpow.pop %v929
    %v931 = vadd.f32 %v930, 1.0
    %v932 = vrcp.pop %v931
    %v933 = vmul.f32 %v931, %v932
    %v934 = vsub.f32 1.0, %v933
    %v935 = vmul.f32 %v932, %v934
    %v936 = vadd.f32 %v932, %v935
    %vm937 = vweird.f32 %v931
    %vm938 = vweird.f32 %v932
    %vm939 = vmor %vm937, %vm938
    %v940 = vsel %vm939, %v932, %v936
    %v941 = vand.u32 2147483647, %v931
    %vm942 = vcmp.eq.f32.partialorder %v941, 8.507059e+37
    %v943 = vand.u32 %v931, 2147483648
    %v944 = vor.u32 1.1754944e-38, %v943
    %v945 = vsel %vm942, %v944, %v940
    %v946 = vmul.f32 1.0, %v945
    %v947 = vmul.f32 %v946, %v133
    %v948 = vadd.f32 %v947, %v134
    %949 = vrot.lane.b32.xlu0 %v948, 96
    %v950 = vpop.permute.xlu0 %949
    %951 = vrot.lane.b32.xlu0 %v948, 64
    %v952 = vpop.permute.xlu0 %951
    %953 = vrot.lane.b32.xlu0 %v948, 32
    %v954 = vpop.permute.xlu0 %953
    %v955 = vmul.f32 %v950, %v909
    %v956 = vmul.f32 %v948, %v952
    %v957 = vadd.f32 %v955, %v956
    %v958 = vtanh.pop %v957
    %v959 = vmul.f32 %v954, %v958
    %960 = vst [vmem:[#allocation2 + $0x18] sm:$0xff] %v959
    %v961 = vpack.c.bf16 %v959, %v959
    %962 = vmatpush.bf16.msra.mxu0 %v761
    %963 = vmatpush.bf16.msra.mxu0 %v760
    %964 = vmatpush.bf16.msra.mxu0 %v759
    %965 = vmatpush.bf16.msra.mxu0 %v758
    %966 = vmatpush.bf16.msra.mxu0 %v757
    %967 = vmatpush.bf16.msra.mxu0 %v756
    %968 = vmatpush.bf16.msra.mxu0 %v755
    %969 = vmatpush.bf16.msra.mxu0 %v754
    %970 = vmatmul.bf16.gmra.mxu0 %v961
    %v971 = vpop.f32.mrf.mxu0
    %v972 = vadd.f32 0.0, %v971
    %v973 = vpop.f32.mrf.mxu0
    %974 = vdwg.mxu0
    %v975 = vadd.f32 %v701, %v972
    %v976 = vxor.u32 %v975, 2147483648
    %v977 = vmul.f32 %v976, 1.442695
    %v978 = vpow.pop %v977
    %v979 = vadd.f32 %v978, 1.0
    %v980 = vrcp.pop %v979
    %v981 = vmul.f32 %v979, %v980
    %v982 = vsub.f32 1.0, %v981
    %v983 = vmul.f32 %v980, %v982
    %v984 = vadd.f32 %v980, %v983
    %vm985 = vweird.f32 %v979
    %vm986 = vweird.f32 %v980
    %vm987 = vmor %vm985, %vm986
    %v988 = vsel %vm987, %v980, %v984
    %v989 = vand.u32 2147483647, %v979
    %vm990 = vcmp.eq.f32.partialorder %v989, 8.507059e+37
    %v991 = vand.u32 %v979, 2147483648
    %v992 = vor.u32 1.1754944e-38, %v991
    %v993 = vsel %vm990, %v992, %v988
    %v994 = vmul.f32 1.0, %v993
    %v995 = vmul.f32 %v994, %v133
    %v996 = vadd.f32 %v995, %v134
    %997 = vrot.lane.b32.xlu0 %v996, 96
    %v998 = vpop.permute.xlu0 %997
    %999 = vrot.lane.b32.xlu0 %v996, 64
    %v1000 = vpop.permute.xlu0 %999
    %1001 = vrot.lane.b32.xlu0 %v996, 32
    %v1002 = vpop.permute.xlu0 %1001
    %v1003 = vmul.f32 %v998, %v957
    %v1004 = vmul.f32 %v996, %v1000
    %v1005 = vadd.f32 %v1003, %v1004
    %v1006 = vtanh.pop %v1005
    %v1007 = vmul.f32 %v1002, %v1006
    %1008 = vst [vmem:[#allocation2 + $0x20] sm:$0xff] %v1007
    %v1009 = vpack.c.bf16 %v1007, %v1007
    %1010 = vmatpush.bf16.msra.mxu0 %v761
    %1011 = vmatpush.bf16.msra.mxu0 %v760
    %1012 = vmatpush.bf16.msra.mxu0 %v759
    %1013 = vmatpush.bf16.msra.mxu0 %v758
    %1014 = vmatpush.bf16.msra.mxu0 %v757
    %1015 = vmatpush.bf16.msra.mxu0 %v756
    %1016 = vmatpush.bf16.msra.mxu0 %v755
    %1017 = vmatpush.bf16.msra.mxu0 %v754
    %1018 = vmatmul.bf16.gmra.mxu0 %v1009
    %v1019 = vpop.f32.mrf.mxu0
    %v1020 = vadd.f32 0.0, %v1019
    %v1021 = vpop.f32.mrf.mxu0
    %1022 = vdwg.mxu0
    %v1023 = vadd.f32 %v703, %v1020
    %v1024 = vxor.u32 %v1023, 2147483648
    %v1025 = vmul.f32 %v1024, 1.442695
    %v1026 = vpow.pop %v1025
    %v1027 = vadd.f32 %v1026, 1.0
    %v1028 = vrcp.pop %v1027
    %v1029 = vmul.f32 %v1027, %v1028
    %v1030 = vsub.f32 1.0, %v1029
    %v1031 = vmul.f32 %v1028, %v1030
    %v1032 = vadd.f32 %v1028, %v1031
    %vm1033 = vweird.f32 %v1027
    %vm1034 = vweird.f32 %v1028
    %vm1035 = vmor %vm1033, %vm1034
    %v1036 = vsel %vm1035, %v1028, %v1032
    %v1037 = vand.u32 2147483647, %v1027
    %vm1038 = vcmp.eq.f32.partialorder %v1037, 8.507059e+37
    %v1039 = vand.u32 %v1027, 2147483648
    %v1040 = vor.u32 1.1754944e-38, %v1039
    %v1041 = vsel %vm1038, %v1040, %v1036
    %v1042 = vmul.f32 1.0, %v1041
    %v1043 = vmul.f32 %v1042, %v133
    %v1044 = vadd.f32 %v1043, %v134
    %1045 = vrot.lane.b32.xlu0 %v1044, 96
    %v1046 = vpop.permute.xlu0 %1045
    %1047 = vrot.lane.b32.xlu0 %v1044, 64
    %v1048 = vpop.permute.xlu0 %1047
    %1049 = vrot.lane.b32.xlu0 %v1044, 32
    %v1050 = vpop.permute.xlu0 %1049
    %v1051 = vmul.f32 %v1046, %v1005
    %v1052 = vmul.f32 %v1044, %v1048
    %v1053 = vadd.f32 %v1051, %v1052
    %v1054 = vtanh.pop %v1053
    %v1055 = vmul.f32 %v1050, %v1054
    %1056 = vst [vmem:[#allocation2 + $0x28] sm:$0xff] %v1055
    %v1057 = vld [vmem:[#allocation2] sm:$0xff]
    %v1058 = vld [vmem:[#allocation2 + $0x8] sm:$0xff]
    %v1059 = vld [vmem:[#allocation2 + $0x10] sm:$0xff]
    %v1060 = vld [vmem:[#allocation2 + $0x18] sm:$0xff]
    %v1061 = vld [vmem:[#allocation2 + $0x20] sm:$0xff]
    %v1062 = vld [vmem:[#allocation2 + $0x28] sm:$0xff]
    %v1063 = vpack.c.bf16 %v1058, %v1057
    %v1064 = vpack.c.bf16 %v1060, %v1059
    %v1065 = vpack.c.bf16 %v1062, %v1061
    %s1066 = scalar_lea.vmem [#allocation3], 128
    %v1067 = vld [vmem:[%s1066] sm:$0xf]
    %v1068 = vld [vmem:[%s1066 + $0x4] sm:$0xf]
    %v1069 = vld [vmem:[%s1066 + $0x8] sm:$0xf]
    %v1070 = vld [vmem:[%s1066 + $0xc] sm:$0xf]
    %v1071 = vld [vmem:[%s1066 + $0x10] sm:$0xf]
    %v1072 = vld [vmem:[%s1066 + $0x14] sm:$0xf]
    %v1073 = vld [vmem:[%s1066 + $0x18] sm:$0xf]
    %v1074 = vld [vmem:[%s1066 + $0x1c] sm:$0xf]
    %v1075 = vld [vmem:[%s1066 + $0x20] sm:$0xf]
    %v1076 = vld [vmem:[%s1066 + $0x24] sm:$0xf]
    %v1077 = vld [vmem:[%s1066 + $0x28] sm:$0xf]
    %v1078 = vld [vmem:[%s1066 + $0x2c] sm:$0xf]
    %v1079 = vld [vmem:[%s1066 + $0x30] sm:$0xf]
    %v1080 = vld [vmem:[%s1066 + $0x34] sm:$0xf]
    %v1081 = vld [vmem:[%s1066 + $0x38] sm:$0xf]
    %v1082 = vld [vmem:[%s1066 + $0x3c] sm:$0xf]
    %s1083 = scalar_lea.vmem %s4, 2
    %v1084 = vld [vmem:[%s1083] sm:$0x1]
    %v1086 = vperm.slane %v1084, 0
    %v1104 = vunpack.c.l.b16 %v1067
    %v1105 = vunpack.c.l.b16 %v1068
    %v1106 = vunpack.c.l.b16 %v1069
    %v1107 = vunpack.c.l.b16 %v1070
    %v1108 = vunpack.c.l.b16 %v1071
    %v1109 = vunpack.c.l.b16 %v1072
    %v1110 = vunpack.c.l.b16 %v1073
    %v1111 = vunpack.c.l.b16 %v1074
    %v1112 = vunpack.c.l.b16 %v1075
    %v1113 = vunpack.c.l.b16 %v1076
    %v1114 = vunpack.c.l.b16 %v1077
    %v1115 = vunpack.c.l.b16 %v1078
    %v1116 = vunpack.c.l.b16 %v1079
    %v1117 = vunpack.c.l.b16 %v1080
    %v1118 = vunpack.c.l.b16 %v1081
    %v1119 = vunpack.c.l.b16 %v1082
    %v1120 = vpack.c.b16 %v1105, %v1104
    %v1121 = vpack.c.b16 %v1107, %v1106
    %v1122 = vpack.c.b16 %v1109, %v1108
    %v1123 = vpack.c.b16 %v1111, %v1110
    %v1124 = vpack.c.b16 %v1113, %v1112
    %v1125 = vpack.c.b16 %v1115, %v1114
    %v1126 = vpack.c.b16 %v1117, %v1116
    %v1127 = vpack.c.b16 %v1119, %v1118
    %1136 = vmatpush.bf16.msra.mxu0 %v1127
    %1137 = vmatpush.bf16.msra.mxu0 %v1126
    %1138 = vmatpush.bf16.msra.mxu0 %v1125
    %1139 = vmatpush.bf16.msra.mxu0 %v1124
    %1140 = vmatpush.bf16.msra.mxu0 %v1123
    %1141 = vmatpush.bf16.msra.mxu0 %v1122
    %1142 = vmatpush.bf16.msra.mxu0 %v1121
    %1143 = vmatpush.bf16.msra.mxu0 %v1120
    %1144 = vmatmul.bf16.gmra.mxu0 %v1063
    %v1145 = vpop.f32.mrf.mxu0
    %v1146 = vadd.f32 %v1086, %v1145
    %v1147 = vpop.f32.mrf.mxu0
    %v1148 = vadd.f32 %v1086, %v1147
    %1149 = vmatmul.bf16.gmra.mxu0 %v1064
    %v1150 = vpop.f32.mrf.mxu0
    %v1151 = vadd.f32 %v1086, %v1150
    %v1152 = vpop.f32.mrf.mxu0
    %v1153 = vadd.f32 %v1086, %v1152
    %1154 = vmatmul.bf16.gmra.mxu0 %v1065
    %v1155 = vpop.f32.mrf.mxu0
    %v1156 = vadd.f32 %v1086, %v1155
    %v1157 = vpop.f32.mrf.mxu0
    %v1158 = vadd.f32 %v1086, %v1157
    %1159 = vdwg.mxu0
    %s1160 = scalar_lea.vmem [#allocation5], 128
    %v1161 = vld [vmem:[%s1160] sm:$0xf]
    %v1162 = vld [vmem:[%s1160 + $0x4] sm:$0xf]
    %v1163 = vld [vmem:[%s1160 + $0x8] sm:$0xf]
    %v1164 = vld [vmem:[%s1160 + $0xc] sm:$0xf]
    %v1165 = vld [vmem:[%s1160 + $0x10] sm:$0xf]
    %v1166 = vld [vmem:[%s1160 + $0x14] sm:$0xf]
    %v1167 = vld [vmem:[%s1160 + $0x18] sm:$0xf]
    %v1168 = vld [vmem:[%s1160 + $0x1c] sm:$0xf]
    %v1169 = vld [vmem:[%s1160 + $0x20] sm:$0xf]
    %v1170 = vld [vmem:[%s1160 + $0x24] sm:$0xf]
    %v1171 = vld [vmem:[%s1160 + $0x28] sm:$0xf]
    %v1172 = vld [vmem:[%s1160 + $0x2c] sm:$0xf]
    %v1173 = vld [vmem:[%s1160 + $0x30] sm:$0xf]
    %v1174 = vld [vmem:[%s1160 + $0x34] sm:$0xf]
    %v1175 = vld [vmem:[%s1160 + $0x38] sm:$0xf]
    %v1176 = vld [vmem:[%s1160 + $0x3c] sm:$0xf]
    %v1193 = vunpack.c.l.b16 %v1161
    %v1194 = vunpack.c.l.b16 %v1162
    %v1195 = vunpack.c.l.b16 %v1163
    %v1196 = vunpack.c.l.b16 %v1164
    %v1197 = vunpack.c.l.b16 %v1165
    %v1198 = vunpack.c.l.b16 %v1166
    %v1199 = vunpack.c.l.b16 %v1167
    %v1200 = vunpack.c.l.b16 %v1168
    %v1201 = vunpack.c.l.b16 %v1169
    %v1202 = vunpack.c.l.b16 %v1170
    %v1203 = vunpack.c.l.b16 %v1171
    %v1204 = vunpack.c.l.b16 %v1172
    %v1205 = vunpack.c.l.b16 %v1173
    %v1206 = vunpack.c.l.b16 %v1174
    %v1207 = vunpack.c.l.b16 %v1175
    %v1208 = vunpack.c.l.b16 %v1176
    %v1209 = vpack.c.b16 %v1194, %v1193
    %v1210 = vpack.c.b16 %v1196, %v1195
    %v1211 = vpack.c.b16 %v1198, %v1197
    %v1212 = vpack.c.b16 %v1200, %v1199
    %v1213 = vpack.c.b16 %v1202, %v1201
    %v1214 = vpack.c.b16 %v1204, %v1203
    %v1215 = vpack.c.b16 %v1206, %v1205
    %v1216 = vpack.c.b16 %v1208, %v1207
    %1225 = vmatpush.bf16.msra.mxu0 %v1216
    %1226 = vmatpush.bf16.msra.mxu0 %v1215
    %1227 = vmatpush.bf16.msra.mxu0 %v1214
    %1228 = vmatpush.bf16.msra.mxu0 %v1213
    %1229 = vmatpush.bf16.msra.mxu0 %v1212
    %1230 = vmatpush.bf16.msra.mxu0 %v1211
    %1231 = vmatpush.bf16.msra.mxu0 %v1210
    %1232 = vmatpush.bf16.msra.mxu0 %v1209
    %1233 = vmatmul.bf16.gmra.mxu0 0
    %v1234 = vpop.f32.mrf.mxu0
    %v1235 = vadd.f32 0.0, %v1234
    %v1236 = vpop.f32.mrf.mxu0
    %1237 = vdwg.mxu0
    %v1238 = vadd.f32 %v1146, %v1235
    %v1239 = vxor.u32 %v1238, 2147483648
    %v1240 = vmul.f32 %v1239, 1.442695
    %v1241 = vpow.pop %v1240
    %v1242 = vadd.f32 %v1241, 1.0
    %v1243 = vrcp.pop %v1242
    %v1244 = vmul.f32 %v1242, %v1243
    %v1245 = vsub.f32 1.0, %v1244
    %v1246 = vmul.f32 %v1243, %v1245
    %v1247 = vadd.f32 %v1243, %v1246
    %vm1248 = vweird.f32 %v1242
    %vm1249 = vweird.f32 %v1243
    %vm1250 = vmor %vm1248, %vm1249
    %v1251 = vsel %vm1250, %v1243, %v1247
    %v1252 = vand.u32 2147483647, %v1242
    %vm1253 = vcmp.eq.f32.partialorder %v1252, 8.507059e+37
    %v1254 = vand.u32 %v1242, 2147483648
    %v1255 = vor.u32 1.1754944e-38, %v1254
    %v1256 = vsel %vm1253, %v1255, %v1251
    %v1257 = vmul.f32 1.0, %v1256
    %v1258 = vmul.f32 %v1257, %v133
    %v1259 = vadd.f32 %v1258, %v134
    %1260 = vrot.lane.b32.xlu0 %v1259, 96
    %v1261 = vpop.permute.xlu0 %1260
    %1262 = vrot.lane.b32.xlu0 %v1259, 64
    %v1263 = vpop.permute.xlu0 %1262
    %1264 = vrot.lane.b32.xlu0 %v1259, 32
    %v1265 = vpop.permute.xlu0 %1264
    %v1266 = vmul.f32 %v1261, 0.0
    %v1267 = vmul.f32 %v1259, %v1263
    %v1268 = vadd.f32 %v1266, %v1267
    %v1269 = vtanh.pop %v1268
    %v1270 = vmul.f32 %v1265, %v1269
    %1271 = vst [vmem:[#allocation2] sm:$0xff] %v1270
    %v1272 = vpack.c.bf16 %v1270, %v1270
    %1273 = vmatpush.bf16.msra.mxu0 %v1216
    %1274 = vmatpush.bf16.msra.mxu0 %v1215
    %1275 = vmatpush.bf16.msra.mxu0 %v1214
    %1276 = vmatpush.bf16.msra.mxu0 %v1213
    %1277 = vmatpush.bf16.msra.mxu0 %v1212
    %1278 = vmatpush.bf16.msra.mxu0 %v1211
    %1279 = vmatpush.bf16.msra.mxu0 %v1210
    %1280 = vmatpush.bf16.msra.mxu0 %v1209
    %1281 = vmatmul.bf16.gmra.mxu0 %v1272
    %v1282 = vpop.f32.mrf.mxu0
    %v1283 = vadd.f32 0.0, %v1282
    %v1284 = vpop.f32.mrf.mxu0
    %1285 = vdwg.mxu0
    %v1286 = vadd.f32 %v1148, %v1283
    %v1287 = vxor.u32 %v1286, 2147483648
    %v1288 = vmul.f32 %v1287, 1.442695
    %v1289 = vpow.pop %v1288
    %v1290 = vadd.f32 %v1289, 1.0
    %v1291 = vrcp.pop %v1290
    %v1292 = vmul.f32 %v1290, %v1291
    %v1293 = vsub.f32 1.0, %v1292
    %v1294 = vmul.f32 %v1291, %v1293
    %v1295 = vadd.f32 %v1291, %v1294
    %vm1296 = vweird.f32 %v1290
    %vm1297 = vweird.f32 %v1291
    %vm1298 = vmor %vm1296, %vm1297
    %v1299 = vsel %vm1298, %v1291, %v1295
    %v1300 = vand.u32 2147483647, %v1290
    %vm1301 = vcmp.eq.f32.partialorder %v1300, 8.507059e+37
    %v1302 = vand.u32 %v1290, 2147483648
    %v1303 = vor.u32 1.1754944e-38, %v1302
    %v1304 = vsel %vm1301, %v1303, %v1299
    %v1305 = vmul.f32 1.0, %v1304
    %v1306 = vmul.f32 %v1305, %v133
    %v1307 = vadd.f32 %v1306, %v134
    %1308 = vrot.lane.b32.xlu0 %v1307, 96
    %v1309 = vpop.permute.xlu0 %1308
    %1310 = vrot.lane.b32.xlu0 %v1307, 64
    %v1311 = vpop.permute.xlu0 %1310
    %1312 = vrot.lane.b32.xlu0 %v1307, 32
    %v1313 = vpop.permute.xlu0 %1312
    %v1314 = vmul.f32 %v1309, %v1268
    %v1315 = vmul.f32 %v1307, %v1311
    %v1316 = vadd.f32 %v1314, %v1315
    %v1317 = vtanh.pop %v1316
    %v1318 = vmul.f32 %v1313, %v1317
    %1319 = vst [vmem:[#allocation2 + $0x8] sm:$0xff] %v1318
    %v1320 = vpack.c.bf16 %v1318, %v1318
    %1321 = vmatpush.bf16.msra.mxu0 %v1216
    %1322 = vmatpush.bf16.msra.mxu0 %v1215
    %1323 = vmatpush.bf16.msra.mxu0 %v1214
    %1324 = vmatpush.bf16.msra.mxu0 %v1213
    %1325 = vmatpush.bf16.msra.mxu0 %v1212
    %1326 = vmatpush.bf16.msra.mxu0 %v1211
    %1327 = vmatpush.bf16.msra.mxu0 %v1210
    %1328 = vmatpush.bf16.msra.mxu0 %v1209
    %1329 = vmatmul.bf16.gmra.mxu0 %v1320
    %v1330 = vpop.f32.mrf.mxu0
    %v1331 = vadd.f32 0.0, %v1330
    %v1332 = vpop.f32.mrf.mxu0
    %1333 = vdwg.mxu0
    %v1334 = vadd.f32 %v1151, %v1331
    %v1335 = vxor.u32 %v1334, 2147483648
    %v1336 = vmul.f32 %v1335, 1.442695
    %v1337 = vpow.pop %v1336
    %v1338 = vadd.f32 %v1337, 1.0
    %v1339 = vrcp.pop %v1338
    %v1340 = vmul.f32 %v1338, %v1339
    %v1341 = vsub.f32 1.0, %v1340
    %v1342 = vmul.f32 %v1339, %v1341
    %v1343 = vadd.f32 %v1339, %v1342
    %vm1344 = vweird.f32 %v1338
    %vm1345 = vweird.f32 %v1339
    %vm1346 = vmor %vm1344, %vm1345
    %v1347 = vsel %vm1346, %v1339, %v1343
    %v1348 = vand.u32 2147483647, %v1338
    %vm1349 = vcmp.eq.f32.partialorder %v1348, 8.507059e+37
    %v1350 = vand.u32 %v1338, 2147483648
    %v1351 = vor.u32 1.1754944e-38, %v1350
    %v1352 = vsel %vm1349, %v1351, %v1347
    %v1353 = vmul.f32 1.0, %v1352
    %v1354 = vmul.f32 %v1353, %v133
    %v1355 = vadd.f32 %v1354, %v134
    %1356 = vrot.lane.b32.xlu0 %v1355, 96
    %v1357 = vpop.permute.xlu0 %1356
    %1358 = vrot.lane.b32.xlu0 %v1355, 64
    %v1359 = vpop.permute.xlu0 %1358
    %1360 = vrot.lane.b32.xlu0 %v1355, 32
    %v1361 = vpop.permute.xlu0 %1360
    %v1362 = vmul.f32 %v1357, %v1316
    %v1363 = vmul.f32 %v1355, %v1359
    %v1364 = vadd.f32 %v1362, %v1363
    %v1365 = vtanh.pop %v1364
    %v1366 = vmul.f32 %v1361, %v1365
    %1367 = vst [vmem:[#allocation2 + $0x10] sm:$0xff] %v1366
    %v1368 = vpack.c.bf16 %v1366, %v1366
    %1369 = vmatpush.bf16.msra.mxu0 %v1216
    %1370 = vmatpush.bf16.msra.mxu0 %v1215
    %1371 = vmatpush.bf16.msra.mxu0 %v1214
    %1372 = vmatpush.bf16.msra.mxu0 %v1213
    %1373 = vmatpush.bf16.msra.mxu0 %v1212
    %1374 = vmatpush.bf16.msra.mxu0 %v1211
    %1375 = vmatpush.bf16.msra.mxu0 %v1210
    %1376 = vmatpush.bf16.msra.mxu0 %v1209
    %1377 = vmatmul.bf16.gmra.mxu0 %v1368
    %v1378 = vpop.f32.mrf.mxu0
    %v1379 = vadd.f32 0.0, %v1378
    %v1380 = vpop.f32.mrf.mxu0
    %1381 = vdwg.mxu0
    %v1382 = vadd.f32 %v1153, %v1379
    %v1383 = vxor.u32 %v1382, 2147483648
    %v1384 = vmul.f32 %v1383, 1.442695
    %v1385 = vpow.pop %v1384
    %v1386 = vadd.f32 %v1385, 1.0
    %v1387 = vrcp.pop %v1386
    %v1388 = vmul.f32 %v1386, %v1387
    %v1389 = vsub.f32 1.0, %v1388
    %v1390 = vmul.f32 %v1387, %v1389
    %v1391 = vadd.f32 %v1387, %v1390
    %vm1392 = vweird.f32 %v1386
    %vm1393 = vweird.f32 %v1387
    %vm1394 = vmor %vm1392, %vm1393
    %v1395 = vsel %vm1394, %v1387, %v1391
    %v1396 = vand.u32 2147483647, %v1386
    %vm1397 = vcmp.eq.f32.partialorder %v1396, 8.507059e+37
    %v1398 = vand.u32 %v1386, 2147483648
    %v1399 = vor.u32 1.1754944e-38, %v1398
    %v1400 = vsel %vm1397, %v1399, %v1395
    %v1401 = vmul.f32 1.0, %v1400
    %v1402 = vmul.f32 %v1401, %v133
    %v1403 = vadd.f32 %v1402, %v134
    %1404 = vrot.lane.b32.xlu0 %v1403, 96
    %v1405 = vpop.permute.xlu0 %1404
    %1406 = vrot.lane.b32.xlu0 %v1403, 64
    %v1407 = vpop.permute.xlu0 %1406
    %1408 = vrot.lane.b32.xlu0 %v1403, 32
    %v1409 = vpop.permute.xlu0 %1408
    %v1410 = vmul.f32 %v1405, %v1364
    %v1411 = vmul.f32 %v1403, %v1407
    %v1412 = vadd.f32 %v1410, %v1411
    %v1413 = vtanh.pop %v1412
    %v1414 = vmul.f32 %v1409, %v1413
    %1415 = vst [vmem:[#allocation2 + $0x18] sm:$0xff] %v1414
    %v1416 = vpack.c.bf16 %v1414, %v1414
    %1417 = vmatpush.bf16.msra.mxu0 %v1216
    %1418 = vmatpush.bf16.msra.mxu0 %v1215
    %1419 = vmatpush.bf16.msra.mxu0 %v1214
    %1420 = vmatpush.bf16.msra.mxu0 %v1213
    %1421 = vmatpush.bf16.msra.mxu0 %v1212
    %1422 = vmatpush.bf16.msra.mxu0 %v1211
    %1423 = vmatpush.bf16.msra.mxu0 %v1210
    %1424 = vmatpush.bf16.msra.mxu0 %v1209
    %1425 = vmatmul.bf16.gmra.mxu0 %v1416
    %v1426 = vpop.f32.mrf.mxu0
    %v1427 = vadd.f32 0.0, %v1426
    %v1428 = vpop.f32.mrf.mxu0
    %1429 = vdwg.mxu0
    %v1430 = vadd.f32 %v1156, %v1427
    %v1431 = vxor.u32 %v1430, 2147483648
    %v1432 = vmul.f32 %v1431, 1.442695
    %v1433 = vpow.pop %v1432
    %v1434 = vadd.f32 %v1433, 1.0
    %v1435 = vrcp.pop %v1434
    %v1436 = vmul.f32 %v1434, %v1435
    %v1437 = vsub.f32 1.0, %v1436
    %v1438 = vmul.f32 %v1435, %v1437
    %v1439 = vadd.f32 %v1435, %v1438
    %vm1440 = vweird.f32 %v1434
    %vm1441 = vweird.f32 %v1435
    %vm1442 = vmor %vm1440, %vm1441
    %v1443 = vsel %vm1442, %v1435, %v1439
    %v1444 = vand.u32 2147483647, %v1434
    %vm1445 = vcmp.eq.f32.partialorder %v1444, 8.507059e+37
    %v1446 = vand.u32 %v1434, 2147483648
    %v1447 = vor.u32 1.1754944e-38, %v1446
    %v1448 = vsel %vm1445, %v1447, %v1443
    %v1449 = vmul.f32 1.0, %v1448
    %v1450 = vmul.f32 %v1449, %v133
    %v1451 = vadd.f32 %v1450, %v134
    %1452 = vrot.lane.b32.xlu0 %v1451, 96
    %v1453 = vpop.permute.xlu0 %1452
    %1454 = vrot.lane.b32.xlu0 %v1451, 64
    %v1455 = vpop.permute.xlu0 %1454
    %1456 = vrot.lane.b32.xlu0 %v1451, 32
    %v1457 = vpop.permute.xlu0 %1456
    %v1458 = vmul.f32 %v1453, %v1412
    %v1459 = vmul.f32 %v1451, %v1455
    %v1460 = vadd.f32 %v1458, %v1459
    %v1461 = vtanh.pop %v1460
    %v1462 = vmul.f32 %v1457, %v1461
    %1463 = vst [vmem:[#allocation2 + $0x20] sm:$0xff] %v1462
    %v1464 = vpack.c.bf16 %v1462, %v1462
    %1465 = vmatpush.bf16.msra.mxu0 %v1216
    %1466 = vmatpush.bf16.msra.mxu0 %v1215
    %1467 = vmatpush.bf16.msra.mxu0 %v1214
    %1468 = vmatpush.bf16.msra.mxu0 %v1213
    %1469 = vmatpush.bf16.msra.mxu0 %v1212
    %1470 = vmatpush.bf16.msra.mxu0 %v1211
    %1471 = vmatpush.bf16.msra.mxu0 %v1210
    %1472 = vmatpush.bf16.msra.mxu0 %v1209
    %1473 = vmatmul.bf16.gmra.mxu0 %v1464
    %v1474 = vpop.f32.mrf.mxu0
    %v1475 = vadd.f32 0.0, %v1474
    %v1476 = vpop.f32.mrf.mxu0
    %1477 = vdwg.mxu0
    %v1478 = vadd.f32 %v1158, %v1475
    %v1479 = vxor.u32 %v1478, 2147483648
    %v1480 = vmul.f32 %v1479, 1.442695
    %v1481 = vpow.pop %v1480
    %v1482 = vadd.f32 %v1481, 1.0
    %v1483 = vrcp.pop %v1482
    %v1484 = vmul.f32 %v1482, %v1483
    %v1485 = vsub.f32 1.0, %v1484
    %v1486 = vmul.f32 %v1483, %v1485
    %v1487 = vadd.f32 %v1483, %v1486
    %vm1488 = vweird.f32 %v1482
    %vm1489 = vweird.f32 %v1483
    %vm1490 = vmor %vm1488, %vm1489
    %v1491 = vsel %vm1490, %v1483, %v1487
    %v1492 = vand.u32 2147483647, %v1482
    %vm1493 = vcmp.eq.f32.partialorder %v1492, 8.507059e+37
    %v1494 = vand.u32 %v1482, 2147483648
    %v1495 = vor.u32 1.1754944e-38, %v1494
    %v1496 = vsel %vm1493, %v1495, %v1491
    %v1497 = vmul.f32 1.0, %v1496
    %v1498 = vmul.f32 %v1497, %v133
    %v1499 = vadd.f32 %v1498, %v134
    %1500 = vrot.lane.b32.xlu0 %v1499, 96
    %v1501 = vpop.permute.xlu0 %1500
    %1502 = vrot.lane.b32.xlu0 %v1499, 64
    %v1503 = vpop.permute.xlu0 %1502
    %1504 = vrot.lane.b32.xlu0 %v1499, 32
    %v1505 = vpop.permute.xlu0 %1504
    %v1506 = vmul.f32 %v1501, %v1460
    %v1507 = vmul.f32 %v1499, %v1503
    %v1508 = vadd.f32 %v1506, %v1507
    %v1509 = vtanh.pop %v1508
    %v1510 = vmul.f32 %v1505, %v1509
    %1511 = vst [vmem:[#allocation2 + $0x28] sm:$0xff] %v1510
    %v1512 = vld [vmem:[#allocation2] sm:$0xff]
    %v1513 = vld [vmem:[#allocation2 + $0x8] sm:$0xff]
    %v1514 = vld [vmem:[#allocation2 + $0x10] sm:$0xff]
    %v1515 = vld [vmem:[#allocation2 + $0x18] sm:$0xff]
    %v1516 = vld [vmem:[#allocation2 + $0x20] sm:$0xff]
    %v1517 = vld [vmem:[#allocation2 + $0x28] sm:$0xff]
    %v1518 = vpack.c.bf16 %v1513, %v1512
    %v1519 = vpack.c.bf16 %v1515, %v1514
    %v1520 = vpack.c.bf16 %v1517, %v1516
    %s1521 = scalar_lea.vmem [#allocation3], 192
    %v1522 = vld [vmem:[%s1521] sm:$0xf]
    %v1523 = vld [vmem:[%s1521 + $0x4] sm:$0xf]
    %v1524 = vld [vmem:[%s1521 + $0x8] sm:$0xf]
    %v1525 = vld [vmem:[%s1521 + $0xc] sm:$0xf]
    %v1526 = vld [vmem:[%s1521 + $0x10] sm:$0xf]
    %v1527 = vld [vmem:[%s1521 + $0x14] sm:$0xf]
    %v1528 = vld [vmem:[%s1521 + $0x18] sm:$0xf]
    %v1529 = vld [vmem:[%s1521 + $0x1c] sm:$0xf]
    %v1530 = vld [vmem:[%s1521 + $0x20] sm:$0xf]
    %v1531 = vld [vmem:[%s1521 + $0x24] sm:$0xf]
    %v1532 = vld [vmem:[%s1521 + $0x28] sm:$0xf]
    %v1533 = vld [vmem:[%s1521 + $0x2c] sm:$0xf]
    %v1534 = vld [vmem:[%s1521 + $0x30] sm:$0xf]
    %v1535 = vld [vmem:[%s1521 + $0x34] sm:$0xf]
    %v1536 = vld [vmem:[%s1521 + $0x38] sm:$0xf]
    %v1537 = vld [vmem:[%s1521 + $0x3c] sm:$0xf]
    %s1538 = scalar_lea.vmem %s4, 3
    %v1539 = vld [vmem:[%s1538] sm:$0x1]
    %v1541 = vperm.slane %v1539, 0
    %v1559 = vunpack.c.l.b16 %v1522
    %v1560 = vunpack.c.l.b16 %v1523
    %v1561 = vunpack.c.l.b16 %v1524
    %v1562 = vunpack.c.l.b16 %v1525
    %v1563 = vunpack.c.l.b16 %v1526
    %v1564 = vunpack.c.l.b16 %v1527
    %v1565 = vunpack.c.l.b16 %v1528
    %v1566 = vunpack.c.l.b16 %v1529
    %v1567 = vunpack.c.l.b16 %v1530
    %v1568 = vunpack.c.l.b16 %v1531
    %v1569 = vunpack.c.l.b16 %v1532
    %v1570 = vunpack.c.l.b16 %v1533
    %v1571 = vunpack.c.l.b16 %v1534
    %v1572 = vunpack.c.l.b16 %v1535
    %v1573 = vunpack.c.l.b16 %v1536
    %v1574 = vunpack.c.l.b16 %v1537
    %v1575 = vpack.c.b16 %v1560, %v1559
    %v1576 = vpack.c.b16 %v1562, %v1561
    %v1577 = vpack.c.b16 %v1564, %v1563
    %v1578 = vpack.c.b16 %v1566, %v1565
    %v1579 = vpack.c.b16 %v1568, %v1567
    %v1580 = vpack.c.b16 %v1570, %v1569
    %v1581 = vpack.c.b16 %v1572, %v1571
    %v1582 = vpack.c.b16 %v1574, %v1573
    %1591 = vmatpush.bf16.msra.mxu0 %v1582
    %1592 = vmatpush.bf16.msra.mxu0 %v1581
    %1593 = vmatpush.bf16.msra.mxu0 %v1580
    %1594 = vmatpush.bf16.msra.mxu0 %v1579
    %1595 = vmatpush.bf16.msra.mxu0 %v1578
    %1596 = vmatpush.bf16.msra.mxu0 %v1577
    %1597 = vmatpush.bf16.msra.mxu0 %v1576
    %1598 = vmatpush.bf16.msra.mxu0 %v1575
    %1599 = vmatmul.bf16.gmra.mxu0 %v1518
    %v1600 = vpop.f32.mrf.mxu0
    %v1601 = vadd.f32 %v1541, %v1600
    %v1602 = vpop.f32.mrf.mxu0
    %v1603 = vadd.f32 %v1541, %v1602
    %1604 = vmatmul.bf16.gmra.mxu0 %v1519
    %v1605 = vpop.f32.mrf.mxu0
    %v1606 = vadd.f32 %v1541, %v1605
    %v1607 = vpop.f32.mrf.mxu0
    %v1608 = vadd.f32 %v1541, %v1607
    %1609 = vmatmul.bf16.gmra.mxu0 %v1520
    %v1610 = vpop.f32.mrf.mxu0
    %v1611 = vadd.f32 %v1541, %v1610
    %v1612 = vpop.f32.mrf.mxu0
    %v1613 = vadd.f32 %v1541, %v1612
    %1614 = vdwg.mxu0
    %s1615 = scalar_lea.vmem [#allocation5], 192
    %v1616 = vld [vmem:[%s1615] sm:$0xf]
    %v1617 = vld [vmem:[%s1615 + $0x4] sm:$0xf]
    %v1618 = vld [vmem:[%s1615 + $0x8] sm:$0xf]
    %v1619 = vld [vmem:[%s1615 + $0xc] sm:$0xf]
    %v1620 = vld [vmem:[%s1615 + $0x10] sm:$0xf]
    %v1621 = vld [vmem:[%s1615 + $0x14] sm:$0xf]
    %v1622 = vld [vmem:[%s1615 + $0x18] sm:$0xf]
    %v1623 = vld [vmem:[%s1615 + $0x1c] sm:$0xf]
    %v1624 = vld [vmem:[%s1615 + $0x20] sm:$0xf]
    %v1625 = vld [vmem:[%s1615 + $0x24] sm:$0xf]
    %v1626 = vld [vmem:[%s1615 + $0x28] sm:$0xf]
    %v1627 = vld [vmem:[%s1615 + $0x2c] sm:$0xf]
    %v1628 = vld [vmem:[%s1615 + $0x30] sm:$0xf]
    %v1629 = vld [vmem:[%s1615 + $0x34] sm:$0xf]
    %v1630 = vld [vmem:[%s1615 + $0x38] sm:$0xf]
    %v1631 = vld [vmem:[%s1615 + $0x3c] sm:$0xf]
    %v1648 = vunpack.c.l.b16 %v1616
    %v1649 = vunpack.c.l.b16 %v1617
    %v1650 = vunpack.c.l.b16 %v1618
    %v1651 = vunpack.c.l.b16 %v1619
    %v1652 = vunpack.c.l.b16 %v1620
    %v1653 = vunpack.c.l.b16 %v1621
    %v1654 = vunpack.c.l.b16 %v1622
    %v1655 = vunpack.c.l.b16 %v1623
    %v1656 = vunpack.c.l.b16 %v1624
    %v1657 = vunpack.c.l.b16 %v1625
    %v1658 = vunpack.c.l.b16 %v1626
    %v1659 = vunpack.c.l.b16 %v1627
    %v1660 = vunpack.c.l.b16 %v1628
    %v1661 = vunpack.c.l.b16 %v1629
    %v1662 = vunpack.c.l.b16 %v1630
    %v1663 = vunpack.c.l.b16 %v1631
    %v1664 = vpack.c.b16 %v1649, %v1648
    %v1665 = vpack.c.b16 %v1651, %v1650
    %v1666 = vpack.c.b16 %v1653, %v1652
    %v1667 = vpack.c.b16 %v1655, %v1654
    %v1668 = vpack.c.b16 %v1657, %v1656
    %v1669 = vpack.c.b16 %v1659, %v1658
    %v1670 = vpack.c.b16 %v1661, %v1660
    %v1671 = vpack.c.b16 %v1663, %v1662
    %1680 = vmatpush.bf16.msra.mxu0 %v1671
    %1681 = vmatpush.bf16.msra.mxu0 %v1670
    %1682 = vmatpush.bf16.msra.mxu0 %v1669
    %1683 = vmatpush.bf16.msra.mxu0 %v1668
    %1684 = vmatpush.bf16.msra.mxu0 %v1667
    %1685 = vmatpush.bf16.msra.mxu0 %v1666
    %1686 = vmatpush.bf16.msra.mxu0 %v1665
    %1687 = vmatpush.bf16.msra.mxu0 %v1664
    %1688 = vmatmul.bf16.gmra.mxu0 0
    %v1689 = vpop.f32.mrf.mxu0
    %v1690 = vadd.f32 0.0, %v1689
    %v1691 = vpop.f32.mrf.mxu0
    %1692 = vdwg.mxu0
    %v1693 = vadd.f32 %v1601, %v1690
    %v1694 = vxor.u32 %v1693, 2147483648
    %v1695 = vmul.f32 %v1694, 1.442695
    %v1696 = vpow.pop %v1695
    %v1697 = vadd.f32 %v1696, 1.0
    %v1698 = vrcp.pop %v1697
    %v1699 = vmul.f32 %v1697, %v1698
    %v1700 = vsub.f32 1.0, %v1699
    %v1701 = vmul.f32 %v1698, %v1700
    %v1702 = vadd.f32 %v1698, %v1701
    %vm1703 = vweird.f32 %v1697
    %vm1704 = vweird.f32 %v1698
    %vm1705 = vmor %vm1703, %vm1704
    %v1706 = vsel %vm1705, %v1698, %v1702
    %v1707 = vand.u32 2147483647, %v1697
    %vm1708 = vcmp.eq.f32.partialorder %v1707, 8.507059e+37
    %v1709 = vand.u32 %v1697, 2147483648
    %v1710 = vor.u32 1.1754944e-38, %v1709
    %v1711 = vsel %vm1708, %v1710, %v1706
    %v1712 = vmul.f32 1.0, %v1711
    %v1713 = vmul.f32 %v1712, %v133
    %v1714 = vadd.f32 %v1713, %v134
    %1715 = vrot.lane.b32.xlu0 %v1714, 96
    %v1716 = vpop.permute.xlu0 %1715
    %1717 = vrot.lane.b32.xlu0 %v1714, 64
    %v1718 = vpop.permute.xlu0 %1717
    %1719 = vrot.lane.b32.xlu0 %v1714, 32
    %v1720 = vpop.permute.xlu0 %1719
    %v1721 = vmul.f32 %v1716, 0.0
    %v1722 = vmul.f32 %v1714, %v1718
    %v1723 = vadd.f32 %v1721, %v1722
    %v1724 = vtanh.pop %v1723
    %v1725 = vmul.f32 %v1720, %v1724
    %1726 = vst [vmem:[#allocation2] sm:$0xff] %v1725
    %v1727 = vpack.c.bf16 %v1725, %v1725
    %1728 = vmatpush.bf16.msra.mxu0 %v1671
    %1729 = vmatpush.bf16.msra.mxu0 %v1670
    %1730 = vmatpush.bf16.msra.mxu0 %v1669
    %1731 = vmatpush.bf16.msra.mxu0 %v1668
    %1732 = vmatpush.bf16.msra.mxu0 %v1667
    %1733 = vmatpush.bf16.msra.mxu0 %v1666
    %1734 = vmatpush.bf16.msra.mxu0 %v1665
    %1735 = vmatpush.bf16.msra.mxu0 %v1664
    %1736 = vmatmul.bf16.gmra.mxu0 %v1727
    %v1737 = vpop.f32.mrf.mxu0
    %v1738 = vadd.f32 0.0, %v1737
    %v1739 = vpop.f32.mrf.mxu0
    %1740 = vdwg.mxu0
    %v1741 = vadd.f32 %v1603, %v1738
    %v1742 = vxor.u32 %v1741, 2147483648
    %v1743 = vmul.f32 %v1742, 1.442695
    %v1744 = vpow.pop %v1743
    %v1745 = vadd.f32 %v1744, 1.0
    %v1746 = vrcp.pop %v1745
    %v1747 = vmul.f32 %v1745, %v1746
    %v1748 = vsub.f32 1.0, %v1747
    %v1749 = vmul.f32 %v1746, %v1748
    %v1750 = vadd.f32 %v1746, %v1749
    %vm1751 = vweird.f32 %v1745
    %vm1752 = vweird.f32 %v1746
    %vm1753 = vmor %vm1751, %vm1752
    %v1754 = vsel %vm1753, %v1746, %v1750
    %v1755 = vand.u32 2147483647, %v1745
    %vm1756 = vcmp.eq.f32.partialorder %v1755, 8.507059e+37
    %v1757 = vand.u32 %v1745, 2147483648
    %v1758 = vor.u32 1.1754944e-38, %v1757
    %v1759 = vsel %vm1756, %v1758, %v1754
    %v1760 = vmul.f32 1.0, %v1759
    %v1761 = vmul.f32 %v1760, %v133
    %v1762 = vadd.f32 %v1761, %v134
    %1763 = vrot.lane.b32.xlu0 %v1762, 96
    %v1764 = vpop.permute.xlu0 %1763
    %1765 = vrot.lane.b32.xlu0 %v1762, 64
    %v1766 = vpop.permute.xlu0 %1765
    %1767 = vrot.lane.b32.xlu0 %v1762, 32
    %v1768 = vpop.permute.xlu0 %1767
    %v1769 = vmul.f32 %v1764, %v1723
    %v1770 = vmul.f32 %v1762, %v1766
    %v1771 = vadd.f32 %v1769, %v1770
    %v1772 = vtanh.pop %v1771
    %v1773 = vmul.f32 %v1768, %v1772
    %1774 = vst [vmem:[#allocation2 + $0x8] sm:$0xff] %v1773
    %v1775 = vpack.c.bf16 %v1773, %v1773
    %1776 = vmatpush.bf16.msra.mxu0 %v1671
    %1777 = vmatpush.bf16.msra.mxu0 %v1670
    %1778 = vmatpush.bf16.msra.mxu0 %v1669
    %1779 = vmatpush.bf16.msra.mxu0 %v1668
    %1780 = vmatpush.bf16.msra.mxu0 %v1667
    %1781 = vmatpush.bf16.msra.mxu0 %v1666
    %1782 = vmatpush.bf16.msra.mxu0 %v1665
    %1783 = vmatpush.bf16.msra.mxu0 %v1664
    %1784 = vmatmul.bf16.gmra.mxu0 %v1775
    %v1785 = vpop.f32.mrf.mxu0
    %v1786 = vadd.f32 0.0, %v1785
    %v1787 = vpop.f32.mrf.mxu0
    %1788 = vdwg.mxu0
    %v1789 = vadd.f32 %v1606, %v1786
    %v1790 = vxor.u32 %v1789, 2147483648
    %v1791 = vmul.f32 %v1790, 1.442695
    %v1792 = vpow.pop %v1791
    %v1793 = vadd.f32 %v1792, 1.0
    %v1794 = vrcp.pop %v1793
    %v1795 = vmul.f32 %v1793, %v1794
    %v1796 = vsub.f32 1.0, %v1795
    %v1797 = vmul.f32 %v1794, %v1796
    %v1798 = vadd.f32 %v1794, %v1797
    %vm1799 = vweird.f32 %v1793
    %vm1800 = vweird.f32 %v1794
    %vm1801 = vmor %vm1799, %vm1800
    %v1802 = vsel %vm1801, %v1794, %v1798
    %v1803 = vand.u32 2147483647, %v1793
    %vm1804 = vcmp.eq.f32.partialorder %v1803, 8.507059e+37
    %v1805 = vand.u32 %v1793, 2147483648
    %v1806 = vor.u32 1.1754944e-38, %v1805
    %v1807 = vsel %vm1804, %v1806, %v1802
    %v1808 = vmul.f32 1.0, %v1807
    %v1809 = vmul.f32 %v1808, %v133
    %v1810 = vadd.f32 %v1809, %v134
    %1811 = vrot.lane.b32.xlu0 %v1810, 96
    %v1812 = vpop.permute.xlu0 %1811
    %1813 = vrot.lane.b32.xlu0 %v1810, 64
    %v1814 = vpop.permute.xlu0 %1813
    %1815 = vrot.lane.b32.xlu0 %v1810, 32
    %v1816 = vpop.permute.xlu0 %1815
    %v1817 = vmul.f32 %v1812, %v1771
    %v1818 = vmul.f32 %v1810, %v1814
    %v1819 = vadd.f32 %v1817, %v1818
    %v1820 = vtanh.pop %v1819
    %v1821 = vmul.f32 %v1816, %v1820
    %1822 = vst [vmem:[#allocation2 + $0x10] sm:$0xff] %v1821
    %v1823 = vpack.c.bf16 %v1821, %v1821
    %1824 = vmatpush.bf16.msra.mxu0 %v1671
    %1825 = vmatpush.bf16.msra.mxu0 %v1670
    %1826 = vmatpush.bf16.msra.mxu0 %v1669
    %1827 = vmatpush.bf16.msra.mxu0 %v1668
    %1828 = vmatpush.bf16.msra.mxu0 %v1667
    %1829 = vmatpush.bf16.msra.mxu0 %v1666
    %1830 = vmatpush.bf16.msra.mxu0 %v1665
    %1831 = vmatpush.bf16.msra.mxu0 %v1664
    %1832 = vmatmul.bf16.gmra.mxu0 %v1823
    %v1833 = vpop.f32.mrf.mxu0
    %v1834 = vadd.f32 0.0, %v1833
    %v1835 = vpop.f32.mrf.mxu0
    %1836 = vdwg.mxu0
    %v1837 = vadd.f32 %v1608, %v1834
    %v1838 = vxor.u32 %v1837, 2147483648
    %v1839 = vmul.f32 %v1838, 1.442695
    %v1840 = vpow.pop %v1839
    %v1841 = vadd.f32 %v1840, 1.0
    %v1842 = vrcp.pop %v1841
    %v1843 = vmul.f32 %v1841, %v1842
    %v1844 = vsub.f32 1.0, %v1843
    %v1845 = vmul.f32 %v1842, %v1844
    %v1846 = vadd.f32 %v1842, %v1845
    %vm1847 = vweird.f32 %v1841
    %vm1848 = vweird.f32 %v1842
    %vm1849 = vmor %vm1847, %vm1848
    %v1850 = vsel %vm1849, %v1842, %v1846
    %v1851 = vand.u32 2147483647, %v1841
    %vm1852 = vcmp.eq.f32.partialorder %v1851, 8.507059e+37
    %v1853 = vand.u32 %v1841, 2147483648
    %v1854 = vor.u32 1.1754944e-38, %v1853
    %v1855 = vsel %vm1852, %v1854, %v1850
    %v1856 = vmul.f32 1.0, %v1855
    %v1857 = vmul.f32 %v1856, %v133
    %v1858 = vadd.f32 %v1857, %v134
    %1859 = vrot.lane.b32.xlu0 %v1858, 96
    %v1860 = vpop.permute.xlu0 %1859
    %1861 = vrot.lane.b32.xlu0 %v1858, 64
    %v1862 = vpop.permute.xlu0 %1861
    %1863 = vrot.lane.b32.xlu0 %v1858, 32
    %v1864 = vpop.permute.xlu0 %1863
    %v1865 = vmul.f32 %v1860, %v1819
    %v1866 = vmul.f32 %v1858, %v1862
    %v1867 = vadd.f32 %v1865, %v1866
    %v1868 = vtanh.pop %v1867
    %v1869 = vmul.f32 %v1864, %v1868
    %1870 = vst [vmem:[#allocation2 + $0x18] sm:$0xff] %v1869
    %v1871 = vpack.c.bf16 %v1869, %v1869
    %1872 = vmatpush.bf16.msra.mxu0 %v1671
    %1873 = vmatpush.bf16.msra.mxu0 %v1670
    %1874 = vmatpush.bf16.msra.mxu0 %v1669
    %1875 = vmatpush.bf16.msra.mxu0 %v1668
    %1876 = vmatpush.bf16.msra.mxu0 %v1667
    %1877 = vmatpush.bf16.msra.mxu0 %v1666
    %1878 = vmatpush.bf16.msra.mxu0 %v1665
    %1879 = vmatpush.bf16.msra.mxu0 %v1664
    %1880 = vmatmul.bf16.gmra.mxu0 %v1871
    %v1881 = vpop.f32.mrf.mxu0
    %v1882 = vadd.f32 0.0, %v1881
    %v1883 = vpop.f32.mrf.mxu0
    %1884 = vdwg.mxu0
    %v1885 = vadd.f32 %v1611, %v1882
    %v1886 = vxor.u32 %v1885, 2147483648
    %v1887 = vmul.f32 %v1886, 1.442695
    %v1888 = vpow.pop %v1887
    %v1889 = vadd.f32 %v1888, 1.0
    %v1890 = vrcp.pop %v1889
    %v1891 = vmul.f32 %v1889, %v1890
    %v1892 = vsub.f32 1.0, %v1891
    %v1893 = vmul.f32 %v1890, %v1892
    %v1894 = vadd.f32 %v1890, %v1893
    %vm1895 = vweird.f32 %v1889
    %vm1896 = vweird.f32 %v1890
    %vm1897 = vmor %vm1895, %vm1896
    %v1898 = vsel %vm1897, %v1890, %v1894
    %v1899 = vand.u32 2147483647, %v1889
    %vm1900 = vcmp.eq.f32.partialorder %v1899, 8.507059e+37
    %v1901 = vand.u32 %v1889, 2147483648
    %v1902 = vor.u32 1.1754944e-38, %v1901
    %v1903 = vsel %vm1900, %v1902, %v1898
    %v1904 = vmul.f32 1.0, %v1903
    %v1905 = vmul.f32 %v1904, %v133
    %v1906 = vadd.f32 %v1905, %v134
    %1907 = vrot.lane.b32.xlu0 %v1906, 96
    %v1908 = vpop.permute.xlu0 %1907
    %1909 = vrot.lane.b32.xlu0 %v1906, 64
    %v1910 = vpop.permute.xlu0 %1909
    %1911 = vrot.lane.b32.xlu0 %v1906, 32
    %v1912 = vpop.permute.xlu0 %1911
    %v1913 = vmul.f32 %v1908, %v1867
    %v1914 = vmul.f32 %v1906, %v1910
    %v1915 = vadd.f32 %v1913, %v1914
    %v1916 = vtanh.pop %v1915
    %v1917 = vmul.f32 %v1912, %v1916
    %1918 = vst [vmem:[#allocation2 + $0x20] sm:$0xff] %v1917
    %v1919 = vpack.c.bf16 %v1917, %v1917
    %1920 = vmatpush.bf16.msra.mxu0 %v1671
    %1921 = vmatpush.bf16.msra.mxu0 %v1670
    %1922 = vmatpush.bf16.msra.mxu0 %v1669
    %1923 = vmatpush.bf16.msra.mxu0 %v1668
    %1924 = vmatpush.bf16.msra.mxu0 %v1667
    %1925 = vmatpush.bf16.msra.mxu0 %v1666
    %1926 = vmatpush.bf16.msra.mxu0 %v1665
    %1927 = vmatpush.bf16.msra.mxu0 %v1664
    %1928 = vmatmul.bf16.gmra.mxu0 %v1919
    %v1929 = vpop.f32.mrf.mxu0
    %v1930 = vadd.f32 0.0, %v1929
    %v1931 = vpop.f32.mrf.mxu0
    %1932 = vdwg.mxu0
    %v1933 = vadd.f32 %v1613, %v1930
    %v1934 = vxor.u32 %v1933, 2147483648
    %v1935 = vmul.f32 %v1934, 1.442695
    %v1936 = vpow.pop %v1935
    %v1937 = vadd.f32 %v1936, 1.0
    %v1938 = vrcp.pop %v1937
    %v1939 = vmul.f32 %v1937, %v1938
    %v1940 = vsub.f32 1.0, %v1939
    %v1941 = vmul.f32 %v1938, %v1940
    %v1942 = vadd.f32 %v1938, %v1941
    %vm1943 = vweird.f32 %v1937
    %vm1944 = vweird.f32 %v1938
    %vm1945 = vmor %vm1943, %vm1944
    %v1946 = vsel %vm1945, %v1938, %v1942
    %v1947 = vand.u32 2147483647, %v1937
    %vm1948 = vcmp.eq.f32.partialorder %v1947, 8.507059e+37
    %v1949 = vand.u32 %v1937, 2147483648
    %v1950 = vor.u32 1.1754944e-38, %v1949
    %v1951 = vsel %vm1948, %v1950, %v1946
    %v1952 = vmul.f32 1.0, %v1951
    %v1953 = vmul.f32 %v1952, %v133
    %v1954 = vadd.f32 %v1953, %v134
    %1955 = vrot.lane.b32.xlu0 %v1954, 96
    %v1956 = vpop.permute.xlu0 %1955
    %1957 = vrot.lane.b32.xlu0 %v1954, 64
    %v1958 = vpop.permute.xlu0 %1957
    %1959 = vrot.lane.b32.xlu0 %v1954, 32
    %v1960 = vpop.permute.xlu0 %1959
    %v1961 = vmul.f32 %v1956, %v1915
    %v1962 = vmul.f32 %v1954, %v1958
    %v1963 = vadd.f32 %v1961, %v1962
    %v1964 = vtanh.pop %v1963
    %v1965 = vmul.f32 %v1960, %v1964
    %1966 = vst [vmem:[#allocation2 + $0x28] sm:$0xff] %v1965
    %v1967 = vld [vmem:[#allocation2] sm:$0xff]
    %v1968 = vld [vmem:[#allocation2 + $0x8] sm:$0xff]
    %v1969 = vld [vmem:[#allocation2 + $0x10] sm:$0xff]
    %v1970 = vld [vmem:[#allocation2 + $0x18] sm:$0xff]
    %v1971 = vld [vmem:[#allocation2 + $0x20] sm:$0xff]
    %v1972 = vld [vmem:[#allocation2 + $0x28] sm:$0xff]
    %v1973 = vpack.c.bf16 %v1968, %v1967
    %v1974 = vpack.c.bf16 %v1970, %v1969
    %v1975 = vpack.c.bf16 %v1972, %v1971
    %s1976 = scalar_lea.vmem [#allocation3], 256
    %v1977 = vld [vmem:[%s1976] sm:$0xf]
    %v1978 = vld [vmem:[%s1976 + $0x4] sm:$0xf]
    %v1979 = vld [vmem:[%s1976 + $0x8] sm:$0xf]
    %v1980 = vld [vmem:[%s1976 + $0xc] sm:$0xf]
    %v1981 = vld [vmem:[%s1976 + $0x10] sm:$0xf]
    %v1982 = vld [vmem:[%s1976 + $0x14] sm:$0xf]
    %v1983 = vld [vmem:[%s1976 + $0x18] sm:$0xf]
    %v1984 = vld [vmem:[%s1976 + $0x1c] sm:$0xf]
    %v1985 = vld [vmem:[%s1976 + $0x20] sm:$0xf]
    %v1986 = vld [vmem:[%s1976 + $0x24] sm:$0xf]
    %v1987 = vld [vmem:[%s1976 + $0x28] sm:$0xf]
    %v1988 = vld [vmem:[%s1976 + $0x2c] sm:$0xf]
    %v1989 = vld [vmem:[%s1976 + $0x30] sm:$0xf]
    %v1990 = vld [vmem:[%s1976 + $0x34] sm:$0xf]
    %v1991 = vld [vmem:[%s1976 + $0x38] sm:$0xf]
    %v1992 = vld [vmem:[%s1976 + $0x3c] sm:$0xf]
    %s1993 = scalar_lea.vmem %s4, 4
    %v1994 = vld [vmem:[%s1993] sm:$0x1]
    %v1996 = vperm.slane %v1994, 0
    %v2014 = vunpack.c.l.b16 %v1977
    %v2015 = vunpack.c.l.b16 %v1978
    %v2016 = vunpack.c.l.b16 %v1979
    %v2017 = vunpack.c.l.b16 %v1980
    %v2018 = vunpack.c.l.b16 %v1981
    %v2019 = vunpack.c.l.b16 %v1982
    %v2020 = vunpack.c.l.b16 %v1983
    %v2021 = vunpack.c.l.b16 %v1984
    %v2022 = vunpack.c.l.b16 %v1985
    %v2023 = vunpack.c.l.b16 %v1986
    %v2024 = vunpack.c.l.b16 %v1987
    %v2025 = vunpack.c.l.b16 %v1988
    %v2026 = vunpack.c.l.b16 %v1989
    %v2027 = vunpack.c.l.b16 %v1990
    %v2028 = vunpack.c.l.b16 %v1991
    %v2029 = vunpack.c.l.b16 %v1992
    %v2030 = vpack.c.b16 %v2015, %v2014
    %v2031 = vpack.c.b16 %v2017, %v2016
    %v2032 = vpack.c.b16 %v2019, %v2018
    %v2033 = vpack.c.b16 %v2021, %v2020
    %v2034 = vpack.c.b16 %v2023, %v2022
    %v2035 = vpack.c.b16 %v2025, %v2024
    %v2036 = vpack.c.b16 %v2027, %v2026
    %v2037 = vpack.c.b16 %v2029, %v2028
    %2046 = vmatpush.bf16.msra.mxu0 %v2037
    %2047 = vmatpush.bf16.msra.mxu0 %v2036
    %2048 = vmatpush.bf16.msra.mxu0 %v2035
    %2049 = vmatpush.bf16.msra.mxu0 %v2034
    %2050 = vmatpush.bf16.msra.mxu0 %v2033
    %2051 = vmatpush.bf16.msra.mxu0 %v2032
    %2052 = vmatpush.bf16.msra.mxu0 %v2031
    %2053 = vmatpush.bf16.msra.mxu0 %v2030
    %2054 = vmatmul.bf16.gmra.mxu0 %v1973
    %v2055 = vpop.f32.mrf.mxu0
    %v2056 = vadd.f32 %v1996, %v2055
    %v2057 = vpop.f32.mrf.mxu0
    %v2058 = vadd.f32 %v1996, %v2057
    %2059 = vmatmul.bf16.gmra.mxu0 %v1974
    %v2060 = vpop.f32.mrf.mxu0
    %v2061 = vadd.f32 %v1996, %v2060
    %v2062 = vpop.f32.mrf.mxu0
    %v2063 = vadd.f32 %v1996, %v2062
    %2064 = vmatmul.bf16.gmra.mxu0 %v1975
    %v2065 = vpop.f32.mrf.mxu0
    %v2066 = vadd.f32 %v1996, %v2065
    %v2067 = vpop.f32.mrf.mxu0
    %v2068 = vadd.f32 %v1996, %v2067
    %2069 = vdwg.mxu0
    %s2070 = scalar_lea.vmem [#allocation5], 256
    %v2071 = vld [vmem:[%s2070] sm:$0xf]
    %v2072 = vld [vmem:[%s2070 + $0x4] sm:$0xf]
    %v2073 = vld [vmem:[%s2070 + $0x8] sm:$0xf]
    %v2074 = vld [vmem:[%s2070 + $0xc] sm:$0xf]
    %v2075 = vld [vmem:[%s2070 + $0x10] sm:$0xf]
    %v2076 = vld [vmem:[%s2070 + $0x14] sm:$0xf]
    %v2077 = vld [vmem:[%s2070 + $0x18] sm:$0xf]
    %v2078 = vld [vmem:[%s2070 + $0x1c] sm:$0xf]
    %v2079 = vld [vmem:[%s2070 + $0x20] sm:$0xf]
    %v2080 = vld [vmem:[%s2070 + $0x24] sm:$0xf]
    %v2081 = vld [vmem:[%s2070 + $0x28] sm:$0xf]
    %v2082 = vld [vmem:[%s2070 + $0x2c] sm:$0xf]
    %v2083 = vld [vmem:[%s2070 + $0x30] sm:$0xf]
    %v2084 = vld [vmem:[%s2070 + $0x34] sm:$0xf]
    %v2085 = vld [vmem:[%s2070 + $0x38] sm:$0xf]
    %v2086 = vld [vmem:[%s2070 + $0x3c] sm:$0xf]
    %v2103 = vunpack.c.l.b16 %v2071
    %v2104 = vunpack.c.l.b16 %v2072
    %v2105 = vunpack.c.l.b16 %v2073
    %v2106 = vunpack.c.l.b16 %v2074
    %v2107 = vunpack.c.l.b16 %v2075
    %v2108 = vunpack.c.l.b16 %v2076
    %v2109 = vunpack.c.l.b16 %v2077
    %v2110 = vunpack.c.l.b16 %v2078
    %v2111 = vunpack.c.l.b16 %v2079
    %v2112 = vunpack.c.l.b16 %v2080
    %v2113 = vunpack.c.l.b16 %v2081
    %v2114 = vunpack.c.l.b16 %v2082
    %v2115 = vunpack.c.l.b16 %v2083
    %v2116 = vunpack.c.l.b16 %v2084
    %v2117 = vunpack.c.l.b16 %v2085
    %v2118 = vunpack.c.l.b16 %v2086
    %v2119 = vpack.c.b16 %v2104, %v2103
    %v2120 = vpack.c.b16 %v2106, %v2105
    %v2121 = vpack.c.b16 %v2108, %v2107
    %v2122 = vpack.c.b16 %v2110, %v2109
    %v2123 = vpack.c.b16 %v2112, %v2111
    %v2124 = vpack.c.b16 %v2114, %v2113
    %v2125 = vpack.c.b16 %v2116, %v2115
    %v2126 = vpack.c.b16 %v2118, %v2117
    %2135 = vmatpush.bf16.msra.mxu0 %v2126
    %2136 = vmatpush.bf16.msra.mxu0 %v2125
    %2137 = vmatpush.bf16.msra.mxu0 %v2124
    %2138 = vmatpush.bf16.msra.mxu0 %v2123
    %2139 = vmatpush.bf16.msra.mxu0 %v2122
    %2140 = vmatpush.bf16.msra.mxu0 %v2121
    %2141 = vmatpush.bf16.msra.mxu0 %v2120
    %2142 = vmatpush.bf16.msra.mxu0 %v2119
    %2143 = vmatmul.bf16.gmra.mxu0 0
    %v2144 = vpop.f32.mrf.mxu0
    %v2145 = vadd.f32 0.0, %v2144
    %v2146 = vpop.f32.mrf.mxu0
    %2147 = vdwg.mxu0
    %v2148 = vadd.f32 %v2056, %v2145
    %v2149 = vxor.u32 %v2148, 2147483648
    %v2150 = vmul.f32 %v2149, 1.442695
    %v2151 = vpow.pop %v2150
    %v2152 = vadd.f32 %v2151, 1.0
    %v2153 = vrcp.pop %v2152
    %v2154 = vmul.f32 %v2152, %v2153
    %v2155 = vsub.f32 1.0, %v2154
    %v2156 = vmul.f32 %v2153, %v2155
    %v2157 = vadd.f32 %v2153, %v2156
    %vm2158 = vweird.f32 %v2152
    %vm2159 = vweird.f32 %v2153
    %vm2160 = vmor %vm2158, %vm2159
    %v2161 = vsel %vm2160, %v2153, %v2157
    %v2162 = vand.u32 2147483647, %v2152
    %vm2163 = vcmp.eq.f32.partialorder %v2162, 8.507059e+37
    %v2164 = vand.u32 %v2152, 2147483648
    %v2165 = vor.u32 1.1754944e-38, %v2164
    %v2166 = vsel %vm2163, %v2165, %v2161
    %v2167 = vmul.f32 1.0, %v2166
    %v2168 = vmul.f32 %v2167, %v133
    %v2169 = vadd.f32 %v2168, %v134
    %2170 = vrot.lane.b32.xlu0 %v2169, 96
    %v2171 = vpop.permute.xlu0 %2170
    %2172 = vrot.lane.b32.xlu0 %v2169, 64
    %v2173 = vpop.permute.xlu0 %2172
    %2174 = vrot.lane.b32.xlu0 %v2169, 32
    %v2175 = vpop.permute.xlu0 %2174
    %v2176 = vmul.f32 %v2171, 0.0
    %v2177 = vmul.f32 %v2169, %v2173
    %v2178 = vadd.f32 %v2176, %v2177
    %v2179 = vtanh.pop %v2178
    %v2180 = vmul.f32 %v2175, %v2179
    %2181 = vst [vmem:[#allocation2] sm:$0xff] %v2180
    %v2182 = vpack.c.bf16 %v2180, %v2180
    %2183 = vmatpush.bf16.msra.mxu0 %v2126
    %2184 = vmatpush.bf16.msra.mxu0 %v2125
    %2185 = vmatpush.bf16.msra.mxu0 %v2124
    %2186 = vmatpush.bf16.msra.mxu0 %v2123
    %2187 = vmatpush.bf16.msra.mxu0 %v2122
    %2188 = vmatpush.bf16.msra.mxu0 %v2121
    %2189 = vmatpush.bf16.msra.mxu0 %v2120
    %2190 = vmatpush.bf16.msra.mxu0 %v2119
    %2191 = vmatmul.bf16.gmra.mxu0 %v2182
    %v2192 = vpop.f32.mrf.mxu0
    %v2193 = vadd.f32 0.0, %v2192
    %v2194 = vpop.f32.mrf.mxu0
    %2195 = vdwg.mxu0
    %v2196 = vadd.f32 %v2058, %v2193
    %v2197 = vxor.u32 %v2196, 2147483648
    %v2198 = vmul.f32 %v2197, 1.442695
    %v2199 = vpow.pop %v2198
    %v2200 = vadd.f32 %v2199, 1.0
    %v2201 = vrcp.pop %v2200
    %v2202 = vmul.f32 %v2200, %v2201
    %v2203 = vsub.f32 1.0, %v2202
    %v2204 = vmul.f32 %v2201, %v2203
    %v2205 = vadd.f32 %v2201, %v2204
    %vm2206 = vweird.f32 %v2200
    %vm2207 = vweird.f32 %v2201
    %vm2208 = vmor %vm2206, %vm2207
    %v2209 = vsel %vm2208, %v2201, %v2205
    %v2210 = vand.u32 2147483647, %v2200
    %vm2211 = vcmp.eq.f32.partialorder %v2210, 8.507059e+37
    %v2212 = vand.u32 %v2200, 2147483648
    %v2213 = vor.u32 1.1754944e-38, %v2212
    %v2214 = vsel %vm2211, %v2213, %v2209
    %v2215 = vmul.f32 1.0, %v2214
    %v2216 = vmul.f32 %v2215, %v133
    %v2217 = vadd.f32 %v2216, %v134
    %2218 = vrot.lane.b32.xlu0 %v2217, 96
    %v2219 = vpop.permute.xlu0 %2218
    %2220 = vrot.lane.b32.xlu0 %v2217, 64
    %v2221 = vpop.permute.xlu0 %2220
    %2222 = vrot.lane.b32.xlu0 %v2217, 32
    %v2223 = vpop.permute.xlu0 %2222
    %v2224 = vmul.f32 %v2219, %v2178
    %v2225 = vmul.f32 %v2217, %v2221
    %v2226 = vadd.f32 %v2224, %v2225
    %v2227 = vtanh.pop %v2226
    %v2228 = vmul.f32 %v2223, %v2227
    %2229 = vst [vmem:[#allocation2 + $0x8] sm:$0xff] %v2228
    %v2230 = vpack.c.bf16 %v2228, %v2228
    %2231 = vmatpush.bf16.msra.mxu0 %v2126
    %2232 = vmatpush.bf16.msra.mxu0 %v2125
    %2233 = vmatpush.bf16.msra.mxu0 %v2124
    %2234 = vmatpush.bf16.msra.mxu0 %v2123
    %2235 = vmatpush.bf16.msra.mxu0 %v2122
    %2236 = vmatpush.bf16.msra.mxu0 %v2121
    %2237 = vmatpush.bf16.msra.mxu0 %v2120
    %2238 = vmatpush.bf16.msra.mxu0 %v2119
    %2239 = vmatmul.bf16.gmra.mxu0 %v2230
    %v2240 = vpop.f32.mrf.mxu0
    %v2241 = vadd.f32 0.0, %v2240
    %v2242 = vpop.f32.mrf.mxu0
    %2243 = vdwg.mxu0
    %v2244 = vadd.f32 %v2061, %v2241
    %v2245 = vxor.u32 %v2244, 2147483648
    %v2246 = vmul.f32 %v2245, 1.442695
    %v2247 = vpow.pop %v2246
    %v2248 = vadd.f32 %v2247, 1.0
    %v2249 = vrcp.pop %v2248
    %v2250 = vmul.f32 %v2248, %v2249
    %v2251 = vsub.f32 1.0, %v2250
    %v2252 = vmul.f32 %v2249, %v2251
    %v2253 = vadd.f32 %v2249, %v2252
    %vm2254 = vweird.f32 %v2248
    %vm2255 = vweird.f32 %v2249
    %vm2256 = vmor %vm2254, %vm2255
    %v2257 = vsel %vm2256, %v2249, %v2253
    %v2258 = vand.u32 2147483647, %v2248
    %vm2259 = vcmp.eq.f32.partialorder %v2258, 8.507059e+37
    %v2260 = vand.u32 %v2248, 2147483648
    %v2261 = vor.u32 1.1754944e-38, %v2260
    %v2262 = vsel %vm2259, %v2261, %v2257
    %v2263 = vmul.f32 1.0, %v2262
    %v2264 = vmul.f32 %v2263, %v133
    %v2265 = vadd.f32 %v2264, %v134
    %2266 = vrot.lane.b32.xlu0 %v2265, 96
    %v2267 = vpop.permute.xlu0 %2266
    %2268 = vrot.lane.b32.xlu0 %v2265, 64
    %v2269 = vpop.permute.xlu0 %2268
    %2270 = vrot.lane.b32.xlu0 %v2265, 32
    %v2271 = vpop.permute.xlu0 %2270
    %v2272 = vmul.f32 %v2267, %v2226
    %v2273 = vmul.f32 %v2265, %v2269
    %v2274 = vadd.f32 %v2272, %v2273
    %v2275 = vtanh.pop %v2274
    %v2276 = vmul.f32 %v2271, %v2275
    %2277 = vst [vmem:[#allocation2 + $0x10] sm:$0xff] %v2276
    %v2278 = vpack.c.bf16 %v2276, %v2276
    %2279 = vmatpush.bf16.msra.mxu0 %v2126
    %2280 = vmatpush.bf16.msra.mxu0 %v2125
    %2281 = vmatpush.bf16.msra.mxu0 %v2124
    %2282 = vmatpush.bf16.msra.mxu0 %v2123
    %2283 = vmatpush.bf16.msra.mxu0 %v2122
    %2284 = vmatpush.bf16.msra.mxu0 %v2121
    %2285 = vmatpush.bf16.msra.mxu0 %v2120
    %2286 = vmatpush.bf16.msra.mxu0 %v2119
    %2287 = vmatmul.bf16.gmra.mxu0 %v2278
    %v2288 = vpop.f32.mrf.mxu0
    %v2289 = vadd.f32 0.0, %v2288
    %v2290 = vpop.f32.mrf.mxu0
    %2291 = vdwg.mxu0
    %v2292 = vadd.f32 %v2063, %v2289
    %v2293 = vxor.u32 %v2292, 2147483648
    %v2294 = vmul.f32 %v2293, 1.442695
    %v2295 = vpow.pop %v2294
    %v2296 = vadd.f32 %v2295, 1.0
    %v2297 = vrcp.pop %v2296
    %v2298 = vmul.f32 %v2296, %v2297
    %v2299 = vsub.f32 1.0, %v2298
    %v2300 = vmul.f32 %v2297, %v2299
    %v2301 = vadd.f32 %v2297, %v2300
    %vm2302 = vweird.f32 %v2296
    %vm2303 = vweird.f32 %v2297
    %vm2304 = vmor %vm2302, %vm2303
    %v2305 = vsel %vm2304, %v2297, %v2301
    %v2306 = vand.u32 2147483647, %v2296
    %vm2307 = vcmp.eq.f32.partialorder %v2306, 8.507059e+37
    %v2308 = vand.u32 %v2296, 2147483648
    %v2309 = vor.u32 1.1754944e-38, %v2308
    %v2310 = vsel %vm2307, %v2309, %v2305
    %v2311 = vmul.f32 1.0, %v2310
    %v2312 = vmul.f32 %v2311, %v133
    %v2313 = vadd.f32 %v2312, %v134
    %2314 = vrot.lane.b32.xlu0 %v2313, 96
    %v2315 = vpop.permute.xlu0 %2314
    %2316 = vrot.lane.b32.xlu0 %v2313, 64
    %v2317 = vpop.permute.xlu0 %2316
    %2318 = vrot.lane.b32.xlu0 %v2313, 32
    %v2319 = vpop.permute.xlu0 %2318
    %v2320 = vmul.f32 %v2315, %v2274
    %v2321 = vmul.f32 %v2313, %v2317
    %v2322 = vadd.f32 %v2320, %v2321
    %v2323 = vtanh.pop %v2322
    %v2324 = vmul.f32 %v2319, %v2323
    %2325 = vst [vmem:[#allocation2 + $0x18] sm:$0xff] %v2324
    %v2326 = vpack.c.bf16 %v2324, %v2324
    %2327 = vmatpush.bf16.msra.mxu0 %v2126
    %2328 = vmatpush.bf16.msra.mxu0 %v2125
    %2329 = vmatpush.bf16.msra.mxu0 %v2124
    %2330 = vmatpush.bf16.msra.mxu0 %v2123
    %2331 = vmatpush.bf16.msra.mxu0 %v2122
    %2332 = vmatpush.bf16.msra.mxu0 %v2121
    %2333 = vmatpush.bf16.msra.mxu0 %v2120
    %2334 = vmatpush.bf16.msra.mxu0 %v2119
    %2335 = vmatmul.bf16.gmra.mxu0 %v2326
    %v2336 = vpop.f32.mrf.mxu0
    %v2337 = vadd.f32 0.0, %v2336
    %v2338 = vpop.f32.mrf.mxu0
    %2339 = vdwg.mxu0
    %v2340 = vadd.f32 %v2066, %v2337
    %v2341 = vxor.u32 %v2340, 2147483648
    %v2342 = vmul.f32 %v2341, 1.442695
    %v2343 = vpow.pop %v2342
    %v2344 = vadd.f32 %v2343, 1.0
    %v2345 = vrcp.pop %v2344
    %v2346 = vmul.f32 %v2344, %v2345
    %v2347 = vsub.f32 1.0, %v2346
    %v2348 = vmul.f32 %v2345, %v2347
    %v2349 = vadd.f32 %v2345, %v2348
    %vm2350 = vweird.f32 %v2344
    %vm2351 = vweird.f32 %v2345
    %vm2352 = vmor %vm2350, %vm2351
    %v2353 = vsel %vm2352, %v2345, %v2349
    %v2354 = vand.u32 2147483647, %v2344
    %vm2355 = vcmp.eq.f32.partialorder %v2354, 8.507059e+37
    %v2356 = vand.u32 %v2344, 2147483648
    %v2357 = vor.u32 1.1754944e-38, %v2356
    %v2358 = vsel %vm2355, %v2357, %v2353
    %v2359 = vmul.f32 1.0, %v2358
    %v2360 = vmul.f32 %v2359, %v133
    %v2361 = vadd.f32 %v2360, %v134
    %2362 = vrot.lane.b32.xlu0 %v2361, 96
    %v2363 = vpop.permute.xlu0 %2362
    %2364 = vrot.lane.b32.xlu0 %v2361, 64
    %v2365 = vpop.permute.xlu0 %2364
    %2366 = vrot.lane.b32.xlu0 %v2361, 32
    %v2367 = vpop.permute.xlu0 %2366
    %v2368 = vmul.f32 %v2363, %v2322
    %v2369 = vmul.f32 %v2361, %v2365
    %v2370 = vadd.f32 %v2368, %v2369
    %v2371 = vtanh.pop %v2370
    %v2372 = vmul.f32 %v2367, %v2371
    %2373 = vst [vmem:[#allocation2 + $0x20] sm:$0xff] %v2372
    %v2374 = vpack.c.bf16 %v2372, %v2372
    %2375 = vmatpush.bf16.msra.mxu0 %v2126
    %2376 = vmatpush.bf16.msra.mxu0 %v2125
    %2377 = vmatpush.bf16.msra.mxu0 %v2124
    %2378 = vmatpush.bf16.msra.mxu0 %v2123
    %2379 = vmatpush.bf16.msra.mxu0 %v2122
    %2380 = vmatpush.bf16.msra.mxu0 %v2121
    %2381 = vmatpush.bf16.msra.mxu0 %v2120
    %2382 = vmatpush.bf16.msra.mxu0 %v2119
    %2383 = vmatmul.bf16.gmra.mxu0 %v2374
    %v2384 = vpop.f32.mrf.mxu0
    %v2385 = vadd.f32 0.0, %v2384
    %v2386 = vpop.f32.mrf.mxu0
    %2387 = vdwg.mxu0
    %v2388 = vadd.f32 %v2068, %v2385
    %v2389 = vxor.u32 %v2388, 2147483648
    %v2390 = vmul.f32 %v2389, 1.442695
    %v2391 = vpow.pop %v2390
    %v2392 = vadd.f32 %v2391, 1.0
    %v2393 = vrcp.pop %v2392
    %v2394 = vmul.f32 %v2392, %v2393
    %v2395 = vsub.f32 1.0, %v2394
    %v2396 = vmul.f32 %v2393, %v2395
    %v2397 = vadd.f32 %v2393, %v2396
    %vm2398 = vweird.f32 %v2392
    %vm2399 = vweird.f32 %v2393
    %vm2400 = vmor %vm2398, %vm2399
    %v2401 = vsel %vm2400, %v2393, %v2397
    %v2402 = vand.u32 2147483647, %v2392
    %vm2403 = vcmp.eq.f32.partialorder %v2402, 8.507059e+37
    %v2404 = vand.u32 %v2392, 2147483648
    %v2405 = vor.u32 1.1754944e-38, %v2404
    %v2406 = vsel %vm2403, %v2405, %v2401
    %v2407 = vmul.f32 1.0, %v2406
    %v2408 = vmul.f32 %v2407, %v133
    %v2409 = vadd.f32 %v2408, %v134
    %2410 = vrot.lane.b32.xlu0 %v2409, 96
    %v2411 = vpop.permute.xlu0 %2410
    %2412 = vrot.lane.b32.xlu0 %v2409, 64
    %v2413 = vpop.permute.xlu0 %2412
    %2414 = vrot.lane.b32.xlu0 %v2409, 32
    %v2415 = vpop.permute.xlu0 %2414
    %v2416 = vmul.f32 %v2411, %v2370
    %v2417 = vmul.f32 %v2409, %v2413
    %v2418 = vadd.f32 %v2416, %v2417
    %v2419 = vtanh.pop %v2418
    %v2420 = vmul.f32 %v2415, %v2419
    %2421 = vst [vmem:[#allocation2 + $0x28] sm:$0xff] %v2420
    %v2422 = vpack.c.bf16 %v2420, %v2420
    %v2423 = vld [vmem:[%s5] sm:$0xf]
    %v2424 = vld [vmem:[%s5 + $0x4] sm:$0xf]
    %v2425 = vld [vmem:[%s5 + $0x8] sm:$0xf]
    %v2426 = vld [vmem:[%s5 + $0xc] sm:$0xf]
    %v2427 = vld [vmem:[%s5 + $0x10] sm:$0xf]
    %v2428 = vld [vmem:[%s5 + $0x14] sm:$0xf]
    %v2429 = vld [vmem:[%s5 + $0x18] sm:$0xf]
    %v2430 = vld [vmem:[%s5 + $0x1c] sm:$0xf]
    %v2431 = vld [vmem:[%s5 + $0x20] sm:$0xf]
    %v2432 = vld [vmem:[%s5 + $0x24] sm:$0xf]
    %v2433 = vld [vmem:[%s5 + $0x28] sm:$0xf]
    %v2434 = vld [vmem:[%s5 + $0x2c] sm:$0xf]
    %v2435 = vld [vmem:[%s5 + $0x30] sm:$0xf]
    %v2436 = vld [vmem:[%s5 + $0x34] sm:$0xf]
    %v2437 = vld [vmem:[%s5 + $0x38] sm:$0xf]
    %v2438 = vld [vmem:[%s5 + $0x3c] sm:$0xf]
    %v2439 = vld [vmem:[%s6] sm:$0x1]
    %v2441 = vperm.slane %v2439, 0
    %v2459 = vunpack.c.l.b16 %v2423
    %v2460 = vunpack.c.l.b16 %v2424
    %v2461 = vunpack.c.l.b16 %v2425
    %v2462 = vunpack.c.l.b16 %v2426
    %v2463 = vunpack.c.l.b16 %v2427
    %v2464 = vunpack.c.l.b16 %v2428
    %v2465 = vunpack.c.l.b16 %v2429
    %v2466 = vunpack.c.l.b16 %v2430
    %v2467 = vunpack.c.l.b16 %v2431
    %v2468 = vunpack.c.l.b16 %v2432
    %v2469 = vunpack.c.l.b16 %v2433
    %v2470 = vunpack.c.l.b16 %v2434
    %v2471 = vunpack.c.l.b16 %v2435
    %v2472 = vunpack.c.l.b16 %v2436
    %v2473 = vunpack.c.l.b16 %v2437
    %v2474 = vunpack.c.l.b16 %v2438
    %v2475 = vpack.c.b16 %v2460, %v2459
    %v2476 = vpack.c.b16 %v2462, %v2461
    %v2477 = vpack.c.b16 %v2464, %v2463
    %v2478 = vpack.c.b16 %v2466, %v2465
    %v2479 = vpack.c.b16 %v2468, %v2467
    %v2480 = vpack.c.b16 %v2470, %v2469
    %v2481 = vpack.c.b16 %v2472, %v2471
    %v2482 = vpack.c.b16 %v2474, %v2473
    %2491 = vmatpush.bf16.msra.mxu0 %v2482
    %2492 = vmatpush.bf16.msra.mxu0 %v2481
    %2493 = vmatpush.bf16.msra.mxu0 %v2480
    %2494 = vmatpush.bf16.msra.mxu0 %v2479
    %2495 = vmatpush.bf16.msra.mxu0 %v2478
    %2496 = vmatpush.bf16.msra.mxu0 %v2477
    %2497 = vmatpush.bf16.msra.mxu0 %v2476
    %2498 = vmatpush.bf16.msra.mxu0 %v2475
    %2499 = vmatmul.bf16.gmra.mxu0 %v2422
    %v2500 = vpop.f32.mrf.mxu0
    %v2501 = vadd.f32 %v2441, %v2500
    %v2502 = vpop.f32.mrf.mxu0
    %2503 = vdwg.mxu0
    %2504 = vst [vmem:[%s15] sm:$0xff] %v2501
    %2505 = vrot.lane.b32.xlu0 %v2501, 112
    %v2506 = vpop.permute.xlu0 %2505
    %v2507 = vld [vmem:[%s1] sm:$0xff]
    %v2508 = vmul.f32 %v2506, 0.5
    %v2509 = vmul.f32 %v2508, 1.442695
    %v2510 = vpow.pop %v2509
    %v2511 = vmul.f32 %v2507, %v2510
    %v2512 = vadd.f32 %v2501, %v2511
    %v2513 = vpack.c.bf16 %v2512, %v2512
    %v2514 = vld [vmem:[%s7] sm:$0xf]
    %v2515 = vld [vmem:[%s7 + $0x4] sm:$0xf]
    %v2516 = vld [vmem:[%s7 + $0x8] sm:$0xf]
    %v2517 = vld [vmem:[%s7 + $0xc] sm:$0xf]
    %v2518 = vld [vmem:[%s7 + $0x10] sm:$0xf]
    %v2519 = vld [vmem:[%s7 + $0x14] sm:$0xf]
    %v2520 = vld [vmem:[%s7 + $0x18] sm:$0xf]
    %v2521 = vld [vmem:[%s7 + $0x1c] sm:$0xf]
    %v2522 = vld [vmem:[%s7 + $0x20] sm:$0xf]
    %v2523 = vld [vmem:[%s7 + $0x24] sm:$0xf]
    %v2524 = vld [vmem:[%s7 + $0x28] sm:$0xf]
    %v2525 = vld [vmem:[%s7 + $0x2c] sm:$0xf]
    %v2526 = vld [vmem:[%s7 + $0x30] sm:$0xf]
    %v2527 = vld [vmem:[%s7 + $0x34] sm:$0xf]
    %v2528 = vld [vmem:[%s7 + $0x38] sm:$0xf]
    %v2529 = vld [vmem:[%s7 + $0x3c] sm:$0xf]
    %v2530 = vld [vmem:[%s8] sm:$0x1]
    %v2532 = vperm.slane %v2530, 0
    %v2550 = vunpack.c.l.b16 %v2514
    %v2551 = vunpack.c.l.b16 %v2515
    %v2552 = vunpack.c.l.b16 %v2516
    %v2553 = vunpack.c.l.b16 %v2517
    %v2554 = vunpack.c.l.b16 %v2518
    %v2555 = vunpack.c.l.b16 %v2519
    %v2556 = vunpack.c.l.b16 %v2520
    %v2557 = vunpack.c.l.b16 %v2521
    %v2558 = vunpack.c.l.b16 %v2522
    %v2559 = vunpack.c.l.b16 %v2523
    %v2560 = vunpack.c.l.b16 %v2524
    %v2561 = vunpack.c.l.b16 %v2525
    %v2562 = vunpack.c.l.b16 %v2526
    %v2563 = vunpack.c.l.b16 %v2527
    %v2564 = vunpack.c.l.b16 %v2528
    %v2565 = vunpack.c.l.b16 %v2529
    %v2566 = vpack.c.b16 %v2551, %v2550
    %v2567 = vpack.c.b16 %v2553, %v2552
    %v2568 = vpack.c.b16 %v2555, %v2554
    %v2569 = vpack.c.b16 %v2557, %v2556
    %v2570 = vpack.c.b16 %v2559, %v2558
    %v2571 = vpack.c.b16 %v2561, %v2560
    %v2572 = vpack.c.b16 %v2563, %v2562
    %v2573 = vpack.c.b16 %v2565, %v2564
    %2582 = vmatpush.bf16.msra.mxu0 %v2573
    %2583 = vmatpush.bf16.msra.mxu0 %v2572
    %2584 = vmatpush.bf16.msra.mxu0 %v2571
    %2585 = vmatpush.bf16.msra.mxu0 %v2570
    %2586 = vmatpush.bf16.msra.mxu0 %v2569
    %2587 = vmatpush.bf16.msra.mxu0 %v2568
    %2588 = vmatpush.bf16.msra.mxu0 %v2567
    %2589 = vmatpush.bf16.msra.mxu0 %v2566
    %2590 = vmatmul.bf16.gmra.mxu0 %v2513
    %v2591 = vpop.f32.mrf.mxu0
    %v2592 = vadd.f32 %v2532, %v2591
    %v2593 = vpop.f32.mrf.mxu0
    %2594 = vdwg.mxu0
    %v2595 = vpack.c.bf16 %v2592, %v2592
    %v2596 = vld [vmem:[#allocation7] sm:$0xf]
    %v2597 = vld [vmem:[#allocation7 + $0x4] sm:$0xf]
    %v2598 = vld [vmem:[#allocation7 + $0x8] sm:$0xf]
    %v2599 = vld [vmem:[#allocation7 + $0xc] sm:$0xf]
    %v2600 = vld [vmem:[#allocation7 + $0x10] sm:$0xf]
    %v2601 = vld [vmem:[#allocation7 + $0x14] sm:$0xf]
    %v2602 = vld [vmem:[#allocation7 + $0x18] sm:$0xf]
    %v2603 = vld [vmem:[#allocation7 + $0x1c] sm:$0xf]
    %v2604 = vld [vmem:[#allocation7 + $0x20] sm:$0xf]
    %v2605 = vld [vmem:[#allocation7 + $0x24] sm:$0xf]
    %v2606 = vld [vmem:[#allocation7 + $0x28] sm:$0xf]
    %v2607 = vld [vmem:[#allocation7 + $0x2c] sm:$0xf]
    %v2608 = vld [vmem:[#allocation7 + $0x30] sm:$0xf]
    %v2609 = vld [vmem:[#allocation7 + $0x34] sm:$0xf]
    %v2610 = vld [vmem:[#allocation7 + $0x38] sm:$0xf]
    %v2611 = vld [vmem:[#allocation7 + $0x3c] sm:$0xf]
    %v2612 = vld [vmem:[%s11] sm:$0x1]
    %v2614 = vperm.slane %v2612, 0
    %v2632 = vunpack.c.l.b16 %v2596
    %v2633 = vunpack.c.l.b16 %v2597
    %v2634 = vunpack.c.l.b16 %v2598
    %v2635 = vunpack.c.l.b16 %v2599
    %v2636 = vunpack.c.l.b16 %v2600
    %v2637 = vunpack.c.l.b16 %v2601
    %v2638 = vunpack.c.l.b16 %v2602
    %v2639 = vunpack.c.l.b16 %v2603
    %v2640 = vunpack.c.l.b16 %v2604
    %v2641 = vunpack.c.l.b16 %v2605
    %v2642 = vunpack.c.l.b16 %v2606
    %v2643 = vunpack.c.l.b16 %v2607
    %v2644 = vunpack.c.l.b16 %v2608
    %v2645 = vunpack.c.l.b16 %v2609
    %v2646 = vunpack.c.l.b16 %v2610
    %v2647 = vunpack.c.l.b16 %v2611
    %v2648 = vpack.c.b16 %v2633, %v2632
    %v2649 = vpack.c.b16 %v2635, %v2634
    %v2650 = vpack.c.b16 %v2637, %v2636
    %v2651 = vpack.c.b16 %v2639, %v2638
    %v2652 = vpack.c.b16 %v2641, %v2640
    %v2653 = vpack.c.b16 %v2643, %v2642
    %v2654 = vpack.c.b16 %v2645, %v2644
    %v2655 = vpack.c.b16 %v2647, %v2646
    %2664 = vmatpush.bf16.msra.mxu0 %v2655
    %2665 = vmatpush.bf16.msra.mxu0 %v2654
    %2666 = vmatpush.bf16.msra.mxu0 %v2653
    %2667 = vmatpush.bf16.msra.mxu0 %v2652
    %2668 = vmatpush.bf16.msra.mxu0 %v2651
    %2669 = vmatpush.bf16.msra.mxu0 %v2650
    %2670 = vmatpush.bf16.msra.mxu0 %v2649
    %2671 = vmatpush.bf16.msra.mxu0 %v2648
    %2672 = vmatmul.bf16.gmra.mxu0 %v2595
    %v2673 = vpop.f32.mrf.mxu0
    %v2674 = vadd.f32 %v2614, %v2673
    %v2675 = vpop.f32.mrf.mxu0
    %2676 = vdwg.mxu0
    %v2677 = vld [vmem:[#allocation8] sm:$0xf]
    %v2678 = vld [vmem:[#allocation8 + $0x4] sm:$0xf]
    %v2679 = vld [vmem:[#allocation8 + $0x8] sm:$0xf]
    %v2680 = vld [vmem:[#allocation8 + $0xc] sm:$0xf]
    %v2681 = vld [vmem:[#allocation8 + $0x10] sm:$0xf]
    %v2682 = vld [vmem:[#allocation8 + $0x14] sm:$0xf]
    %v2683 = vld [vmem:[#allocation8 + $0x18] sm:$0xf]
    %v2684 = vld [vmem:[#allocation8 + $0x1c] sm:$0xf]
    %v2685 = vld [vmem:[#allocation8 + $0x20] sm:$0xf]
    %v2686 = vld [vmem:[#allocation8 + $0x24] sm:$0xf]
    %v2687 = vld [vmem:[#allocation8 + $0x28] sm:$0xf]
    %v2688 = vld [vmem:[#allocation8 + $0x2c] sm:$0xf]
    %v2689 = vld [vmem:[#allocation8 + $0x30] sm:$0xf]
    %v2690 = vld [vmem:[#allocation8 + $0x34] sm:$0xf]
    %v2691 = vld [vmem:[#allocation8 + $0x38] sm:$0xf]
    %v2692 = vld [vmem:[#allocation8 + $0x3c] sm:$0xf]
    %v2709 = vunpack.c.l.b16 %v2677
    %v2710 = vunpack.c.l.b16 %v2678
    %v2711 = vunpack.c.l.b16 %v2679
    %v2712 = vunpack.c.l.b16 %v2680
    %v2713 = vunpack.c.l.b16 %v2681
    %v2714 = vunpack.c.l.b16 %v2682
    %v2715 = vunpack.c.l.b16 %v2683
    %v2716 = vunpack.c.l.b16 %v2684
    %v2717 = vunpack.c.l.b16 %v2685
    %v2718 = vunpack.c.l.b16 %v2686
    %v2719 = vunpack.c.l.b16 %v2687
    %v2720 = vunpack.c.l.b16 %v2688
    %v2721 = vunpack.c.l.b16 %v2689
    %v2722 = vunpack.c.l.b16 %v2690
    %v2723 = vunpack.c.l.b16 %v2691
    %v2724 = vunpack.c.l.b16 %v2692
    %v2725 = vpack.c.b16 %v2710, %v2709
    %v2726 = vpack.c.b16 %v2712, %v2711
    %v2727 = vpack.c.b16 %v2714, %v2713
    %v2728 = vpack.c.b16 %v2716, %v2715
    %v2729 = vpack.c.b16 %v2718, %v2717
    %v2730 = vpack.c.b16 %v2720, %v2719
    %v2731 = vpack.c.b16 %v2722, %v2721
    %v2732 = vpack.c.b16 %v2724, %v2723
    %2741 = vmatpush.bf16.msra.mxu0 %v2732
    %2742 = vmatpush.bf16.msra.mxu0 %v2731
    %2743 = vmatpush.bf16.msra.mxu0 %v2730
    %2744 = vmatpush.bf16.msra.mxu0 %v2729
    %2745 = vmatpush.bf16.msra.mxu0 %v2728
    %2746 = vmatpush.bf16.msra.mxu0 %v2727
    %2747 = vmatpush.bf16.msra.mxu0 %v2726
    %2748 = vmatpush.bf16.msra.mxu0 %v2725
    %2749 = vmatmul.bf16.gmra.mxu0 0
    %v2750 = vpop.f32.mrf.mxu0
    %v2751 = vadd.f32 0.0, %v2750
    %v2752 = vpop.f32.mrf.mxu0
    %2753 = vdwg.mxu0
    %v2754 = vadd.f32 %v2674, %v2751
    %v2755 = vxor.u32 %v2754, 2147483648
    %v2756 = vmul.f32 %v2755, 1.442695
    %v2757 = vpow.pop %v2756
    %v2758 = vadd.f32 %v2757, 1.0
    %v2759 = vrcp.pop %v2758
    %v2760 = vmul.f32 %v2758, %v2759
    %v2761 = vsub.f32 1.0, %v2760
    %v2762 = vmul.f32 %v2759, %v2761
    %v2763 = vadd.f32 %v2759, %v2762
    %vm2764 = vweird.f32 %v2758
    %vm2765 = vweird.f32 %v2759
    %vm2766 = vmor %vm2764, %vm2765
    %v2767 = vsel %vm2766, %v2759, %v2763
    %v2768 = vand.u32 2147483647, %v2758
    %vm2769 = vcmp.eq.f32.partialorder %v2768, 8.507059e+37
    %v2770 = vand.u32 %v2758, 2147483648
    %v2771 = vor.u32 1.1754944e-38, %v2770
    %v2772 = vsel %vm2769, %v2771, %v2767
    %v2773 = vmul.f32 1.0, %v2772
    %v2774 = vmul.f32 %v2773, %v133
    %v2775 = vadd.f32 %v2774, %v134
    %2776 = vrot.lane.b32.xlu0 %v2775, 96
    %v2777 = vpop.permute.xlu0 %2776
    %2778 = vrot.lane.b32.xlu0 %v2775, 64
    %v2779 = vpop.permute.xlu0 %2778
    %2780 = vrot.lane.b32.xlu0 %v2775, 32
    %v2781 = vpop.permute.xlu0 %2780
    %v2782 = vmul.f32 %v2777, 0.0
    %v2783 = vmul.f32 %v2775, %v2779
    %v2784 = vadd.f32 %v2782, %v2783
    %v2785 = vtanh.pop %v2784
    %v2786 = vmul.f32 %v2781, %v2785
    %2787 = vst [vmem:[#allocation2] sm:$0xff] %v2786
    %v2788 = vpack.c.bf16 %v2786, %v2786
    %2789 = vmatpush.bf16.msra.mxu0 %v2732
    %2790 = vmatpush.bf16.msra.mxu0 %v2731
    %2791 = vmatpush.bf16.msra.mxu0 %v2730
    %2792 = vmatpush.bf16.msra.mxu0 %v2729
    %2793 = vmatpush.bf16.msra.mxu0 %v2728
    %2794 = vmatpush.bf16.msra.mxu0 %v2727
    %2795 = vmatpush.bf16.msra.mxu0 %v2726
    %2796 = vmatpush.bf16.msra.mxu0 %v2725
    %2797 = vmatmul.bf16.gmra.mxu0 %v2788
    %v2798 = vpop.f32.mrf.mxu0
    %v2799 = vadd.f32 0.0, %v2798
    %v2800 = vpop.f32.mrf.mxu0
    %2801 = vdwg.mxu0
    %v2802 = vadd.f32 %v2674, %v2799
    %v2803 = vxor.u32 %v2802, 2147483648
    %v2804 = vmul.f32 %v2803, 1.442695
    %v2805 = vpow.pop %v2804
    %v2806 = vadd.f32 %v2805, 1.0
    %v2807 = vrcp.pop %v2806
    %v2808 = vmul.f32 %v2806, %v2807
    %v2809 = vsub.f32 1.0, %v2808
    %v2810 = vmul.f32 %v2807, %v2809
    %v2811 = vadd.f32 %v2807, %v2810
    %vm2812 = vweird.f32 %v2806
    %vm2813 = vweird.f32 %v2807
    %vm2814 = vmor %vm2812, %vm2813
    %v2815 = vsel %vm2814, %v2807, %v2811
    %v2816 = vand.u32 2147483647, %v2806
    %vm2817 = vcmp.eq.f32.partialorder %v2816, 8.507059e+37
    %v2818 = vand.u32 %v2806, 2147483648
    %v2819 = vor.u32 1.1754944e-38, %v2818
    %v2820 = vsel %vm2817, %v2819, %v2815
    %v2821 = vmul.f32 1.0, %v2820
    %v2822 = vmul.f32 %v2821, %v133
    %v2823 = vadd.f32 %v2822, %v134
    %2824 = vrot.lane.b32.xlu0 %v2823, 96
    %v2825 = vpop.permute.xlu0 %2824
    %2826 = vrot.lane.b32.xlu0 %v2823, 64
    %v2827 = vpop.permute.xlu0 %2826
    %2828 = vrot.lane.b32.xlu0 %v2823, 32
    %v2829 = vpop.permute.xlu0 %2828
    %v2830 = vmul.f32 %v2825, %v2784
    %v2831 = vmul.f32 %v2823, %v2827
    %v2832 = vadd.f32 %v2830, %v2831
    %v2833 = vtanh.pop %v2832
    %v2834 = vmul.f32 %v2829, %v2833
    %2835 = vst [vmem:[#allocation2 + $0x8] sm:$0xff] %v2834
    %v2836 = vpack.c.bf16 %v2834, %v2834
    %2837 = vmatpush.bf16.msra.mxu0 %v2732
    %2838 = vmatpush.bf16.msra.mxu0 %v2731
    %2839 = vmatpush.bf16.msra.mxu0 %v2730
    %2840 = vmatpush.bf16.msra.mxu0 %v2729
    %2841 = vmatpush.bf16.msra.mxu0 %v2728
    %2842 = vmatpush.bf16.msra.mxu0 %v2727
    %2843 = vmatpush.bf16.msra.mxu0 %v2726
    %2844 = vmatpush.bf16.msra.mxu0 %v2725
    %2845 = vmatmul.bf16.gmra.mxu0 %v2836
    %v2846 = vpop.f32.mrf.mxu0
    %v2847 = vadd.f32 0.0, %v2846
    %v2848 = vpop.f32.mrf.mxu0
    %2849 = vdwg.mxu0
    %v2850 = vadd.f32 %v2674, %v2847
    %v2851 = vxor.u32 %v2850, 2147483648
    %v2852 = vmul.f32 %v2851, 1.442695
    %v2853 = vpow.pop %v2852
    %v2854 = vadd.f32 %v2853, 1.0
    %v2855 = vrcp.pop %v2854
    %v2856 = vmul.f32 %v2854, %v2855
    %v2857 = vsub.f32 1.0, %v2856
    %v2858 = vmul.f32 %v2855, %v2857
    %v2859 = vadd.f32 %v2855, %v2858
    %vm2860 = vweird.f32 %v2854
    %vm2861 = vweird.f32 %v2855
    %vm2862 = vmor %vm2860, %vm2861
    %v2863 = vsel %vm2862, %v2855, %v2859
    %v2864 = vand.u32 2147483647, %v2854
    %vm2865 = vcmp.eq.f32.partialorder %v2864, 8.507059e+37
    %v2866 = vand.u32 %v2854, 2147483648
    %v2867 = vor.u32 1.1754944e-38, %v2866
    %v2868 = vsel %vm2865, %v2867, %v2863
    %v2869 = vmul.f32 1.0, %v2868
    %v2870 = vmul.f32 %v2869, %v133
    %v2871 = vadd.f32 %v2870, %v134
    %2872 = vrot.lane.b32.xlu0 %v2871, 96
    %v2873 = vpop.permute.xlu0 %2872
    %2874 = vrot.lane.b32.xlu0 %v2871, 64
    %v2875 = vpop.permute.xlu0 %2874
    %2876 = vrot.lane.b32.xlu0 %v2871, 32
    %v2877 = vpop.permute.xlu0 %2876
    %v2878 = vmul.f32 %v2873, %v2832
    %v2879 = vmul.f32 %v2871, %v2875
    %v2880 = vadd.f32 %v2878, %v2879
    %v2881 = vtanh.pop %v2880
    %v2882 = vmul.f32 %v2877, %v2881
    %2883 = vst [vmem:[#allocation2 + $0x10] sm:$0xff] %v2882
    %v2884 = vpack.c.bf16 %v2882, %v2882
    %2885 = vmatpush.bf16.msra.mxu0 %v2732
    %2886 = vmatpush.bf16.msra.mxu0 %v2731
    %2887 = vmatpush.bf16.msra.mxu0 %v2730
    %2888 = vmatpush.bf16.msra.mxu0 %v2729
    %2889 = vmatpush.bf16.msra.mxu0 %v2728
    %2890 = vmatpush.bf16.msra.mxu0 %v2727
    %2891 = vmatpush.bf16.msra.mxu0 %v2726
    %2892 = vmatpush.bf16.msra.mxu0 %v2725
    %2893 = vmatmul.bf16.gmra.mxu0 %v2884
    %v2894 = vpop.f32.mrf.mxu0
    %v2895 = vadd.f32 0.0, %v2894
    %v2896 = vpop.f32.mrf.mxu0
    %2897 = vdwg.mxu0
    %v2898 = vadd.f32 %v2674, %v2895
    %v2899 = vxor.u32 %v2898, 2147483648
    %v2900 = vmul.f32 %v2899, 1.442695
    %v2901 = vpow.pop %v2900
    %v2902 = vadd.f32 %v2901, 1.0
    %v2903 = vrcp.pop %v2902
    %v2904 = vmul.f32 %v2902, %v2903
    %v2905 = vsub.f32 1.0, %v2904
    %v2906 = vmul.f32 %v2903, %v2905
    %v2907 = vadd.f32 %v2903, %v2906
    %vm2908 = vweird.f32 %v2902
    %vm2909 = vweird.f32 %v2903
    %vm2910 = vmor %vm2908, %vm2909
    %v2911 = vsel %vm2910, %v2903, %v2907
    %v2912 = vand.u32 2147483647, %v2902
    %vm2913 = vcmp.eq.f32.partialorder %v2912, 8.507059e+37
    %v2914 = vand.u32 %v2902, 2147483648
    %v2915 = vor.u32 1.1754944e-38, %v2914
    %v2916 = vsel %vm2913, %v2915, %v2911
    %v2917 = vmul.f32 1.0, %v2916
    %v2918 = vmul.f32 %v2917, %v133
    %v2919 = vadd.f32 %v2918, %v134
    %2920 = vrot.lane.b32.xlu0 %v2919, 96
    %v2921 = vpop.permute.xlu0 %2920
    %2922 = vrot.lane.b32.xlu0 %v2919, 64
    %v2923 = vpop.permute.xlu0 %2922
    %2924 = vrot.lane.b32.xlu0 %v2919, 32
    %v2925 = vpop.permute.xlu0 %2924
    %v2926 = vmul.f32 %v2921, %v2880
    %v2927 = vmul.f32 %v2919, %v2923
    %v2928 = vadd.f32 %v2926, %v2927
    %v2929 = vtanh.pop %v2928
    %v2930 = vmul.f32 %v2925, %v2929
    %2931 = vst [vmem:[#allocation2 + $0x18] sm:$0xff] %v2930
    %v2932 = vpack.c.bf16 %v2930, %v2930
    %2933 = vmatpush.bf16.msra.mxu0 %v2732
    %2934 = vmatpush.bf16.msra.mxu0 %v2731
    %2935 = vmatpush.bf16.msra.mxu0 %v2730
    %2936 = vmatpush.bf16.msra.mxu0 %v2729
    %2937 = vmatpush.bf16.msra.mxu0 %v2728
    %2938 = vmatpush.bf16.msra.mxu0 %v2727
    %2939 = vmatpush.bf16.msra.mxu0 %v2726
    %2940 = vmatpush.bf16.msra.mxu0 %v2725
    %2941 = vmatmul.bf16.gmra.mxu0 %v2932
    %v2942 = vpop.f32.mrf.mxu0
    %v2943 = vadd.f32 0.0, %v2942
    %v2944 = vpop.f32.mrf.mxu0
    %2945 = vdwg.mxu0
    %v2946 = vadd.f32 %v2674, %v2943
    %v2947 = vxor.u32 %v2946, 2147483648
    %v2948 = vmul.f32 %v2947, 1.442695
    %v2949 = vpow.pop %v2948
    %v2950 = vadd.f32 %v2949, 1.0
    %v2951 = vrcp.pop %v2950
    %v2952 = vmul.f32 %v2950, %v2951
    %v2953 = vsub.f32 1.0, %v2952
    %v2954 = vmul.f32 %v2951, %v2953
    %v2955 = vadd.f32 %v2951, %v2954
    %vm2956 = vweird.f32 %v2950
    %vm2957 = vweird.f32 %v2951
    %vm2958 = vmor %vm2956, %vm2957
    %v2959 = vsel %vm2958, %v2951, %v2955
    %v2960 = vand.u32 2147483647, %v2950
    %vm2961 = vcmp.eq.f32.partialorder %v2960, 8.507059e+37
    %v2962 = vand.u32 %v2950, 2147483648
    %v2963 = vor.u32 1.1754944e-38, %v2962
    %v2964 = vsel %vm2961, %v2963, %v2959
    %v2965 = vmul.f32 1.0, %v2964
    %v2966 = vmul.f32 %v2965, %v133
    %v2967 = vadd.f32 %v2966, %v134
    %2968 = vrot.lane.b32.xlu0 %v2967, 96
    %v2969 = vpop.permute.xlu0 %2968
    %2970 = vrot.lane.b32.xlu0 %v2967, 64
    %v2971 = vpop.permute.xlu0 %2970
    %2972 = vrot.lane.b32.xlu0 %v2967, 32
    %v2973 = vpop.permute.xlu0 %2972
    %v2974 = vmul.f32 %v2969, %v2928
    %v2975 = vmul.f32 %v2967, %v2971
    %v2976 = vadd.f32 %v2974, %v2975
    %v2977 = vtanh.pop %v2976
    %v2978 = vmul.f32 %v2973, %v2977
    %2979 = vst [vmem:[#allocation2 + $0x20] sm:$0xff] %v2978
    %v2980 = vpack.c.bf16 %v2978, %v2978
    %2981 = vmatpush.bf16.msra.mxu0 %v2732
    %2982 = vmatpush.bf16.msra.mxu0 %v2731
    %2983 = vmatpush.bf16.msra.mxu0 %v2730
    %2984 = vmatpush.bf16.msra.mxu0 %v2729
    %2985 = vmatpush.bf16.msra.mxu0 %v2728
    %2986 = vmatpush.bf16.msra.mxu0 %v2727
    %2987 = vmatpush.bf16.msra.mxu0 %v2726
    %2988 = vmatpush.bf16.msra.mxu0 %v2725
    %2989 = vmatmul.bf16.gmra.mxu0 %v2980
    %v2990 = vpop.f32.mrf.mxu0
    %v2991 = vadd.f32 0.0, %v2990
    %v2992 = vpop.f32.mrf.mxu0
    %2993 = vdwg.mxu0
    %v2994 = vadd.f32 %v2674, %v2991
    %v2995 = vxor.u32 %v2994, 2147483648
    %v2996 = vmul.f32 %v2995, 1.442695
    %v2997 = vpow.pop %v2996
    %v2998 = vadd.f32 %v2997, 1.0
    %v2999 = vrcp.pop %v2998
    %v3000 = vmul.f32 %v2998, %v2999
    %v3001 = vsub.f32 1.0, %v3000
    %v3002 = vmul.f32 %v2999, %v3001
    %v3003 = vadd.f32 %v2999, %v3002
    %vm3004 = vweird.f32 %v2998
    %vm3005 = vweird.f32 %v2999
    %vm3006 = vmor %vm3004, %vm3005
    %v3007 = vsel %vm3006, %v2999, %v3003
    %v3008 = vand.u32 2147483647, %v2998
    %vm3009 = vcmp.eq.f32.partialorder %v3008, 8.507059e+37
    %v3010 = vand.u32 %v2998, 2147483648
    %v3011 = vor.u32 1.1754944e-38, %v3010
    %v3012 = vsel %vm3009, %v3011, %v3007
    %v3013 = vmul.f32 1.0, %v3012
    %v3014 = vmul.f32 %v3013, %v133
    %v3015 = vadd.f32 %v3014, %v134
    %3016 = vrot.lane.b32.xlu0 %v3015, 96
    %v3017 = vpop.permute.xlu0 %3016
    %3018 = vrot.lane.b32.xlu0 %v3015, 64
    %v3019 = vpop.permute.xlu0 %3018
    %3020 = vrot.lane.b32.xlu0 %v3015, 32
    %v3021 = vpop.permute.xlu0 %3020
    %v3022 = vmul.f32 %v3017, %v2976
    %v3023 = vmul.f32 %v3015, %v3019
    %v3024 = vadd.f32 %v3022, %v3023
    %v3025 = vtanh.pop %v3024
    %v3026 = vmul.f32 %v3021, %v3025
    %3027 = vst [vmem:[#allocation2 + $0x28] sm:$0xff] %v3026
    %v3028 = vld [vmem:[#allocation2] sm:$0xff]
    %v3029 = vld [vmem:[#allocation2 + $0x8] sm:$0xff]
    %v3030 = vld [vmem:[#allocation2 + $0x10] sm:$0xff]
    %v3031 = vld [vmem:[#allocation2 + $0x18] sm:$0xff]
    %v3032 = vld [vmem:[#allocation2 + $0x20] sm:$0xff]
    %v3033 = vld [vmem:[#allocation2 + $0x28] sm:$0xff]
    %v3034 = vpack.c.bf16 %v3029, %v3028
    %v3035 = vpack.c.bf16 %v3031, %v3030
    %v3036 = vpack.c.bf16 %v3033, %v3032
    %s3037 = scalar_lea.vmem [#allocation7], 64
    %v3038 = vld [vmem:[%s3037] sm:$0xf]
    %v3039 = vld [vmem:[%s3037 + $0x4] sm:$0xf]
    %v3040 = vld [vmem:[%s3037 + $0x8] sm:$0xf]
    %v3041 = vld [vmem:[%s3037 + $0xc] sm:$0xf]
    %v3042 = vld [vmem:[%s3037 + $0x10] sm:$0xf]
    %v3043 = vld [vmem:[%s3037 + $0x14] sm:$0xf]
    %v3044 = vld [vmem:[%s3037 + $0x18] sm:$0xf]
    %v3045 = vld [vmem:[%s3037 + $0x1c] sm:$0xf]
    %v3046 = vld [vmem:[%s3037 + $0x20] sm:$0xf]
    %v3047 = vld [vmem:[%s3037 + $0x24] sm:$0xf]
    %v3048 = vld [vmem:[%s3037 + $0x28] sm:$0xf]
    %v3049 = vld [vmem:[%s3037 + $0x2c] sm:$0xf]
    %v3050 = vld [vmem:[%s3037 + $0x30] sm:$0xf]
    %v3051 = vld [vmem:[%s3037 + $0x34] sm:$0xf]
    %v3052 = vld [vmem:[%s3037 + $0x38] sm:$0xf]
    %v3053 = vld [vmem:[%s3037 + $0x3c] sm:$0xf]
    %s3054 = scalar_lea.vmem %s11, 1
    %v3055 = vld [vmem:[%s3054] sm:$0x1]
    %v3057 = vperm.slane %v3055, 0
    %v3075 = vunpack.c.l.b16 %v3038
    %v3076 = vunpack.c.l.b16 %v3039
    %v3077 = vunpack.c.l.b16 %v3040
    %v3078 = vunpack.c.l.b16 %v3041
    %v3079 = vunpack.c.l.b16 %v3042
    %v3080 = vunpack.c.l.b16 %v3043
    %v3081 = vunpack.c.l.b16 %v3044
    %v3082 = vunpack.c.l.b16 %v3045
    %v3083 = vunpack.c.l.b16 %v3046
    %v3084 = vunpack.c.l.b16 %v3047
    %v3085 = vunpack.c.l.b16 %v3048
    %v3086 = vunpack.c.l.b16 %v3049
    %v3087 = vunpack.c.l.b16 %v3050
    %v3088 = vunpack.c.l.b16 %v3051
    %v3089 = vunpack.c.l.b16 %v3052
    %v3090 = vunpack.c.l.b16 %v3053
    %v3091 = vpack.c.b16 %v3076, %v3075
    %v3092 = vpack.c.b16 %v3078, %v3077
    %v3093 = vpack.c.b16 %v3080, %v3079
    %v3094 = vpack.c.b16 %v3082, %v3081
    %v3095 = vpack.c.b16 %v3084, %v3083
    %v3096 = vpack.c.b16 %v3086, %v3085
    %v3097 = vpack.c.b16 %v3088, %v3087
    %v3098 = vpack.c.b16 %v3090, %v3089
    %3107 = vmatpush.bf16.msra.mxu0 %v3098
    %3108 = vmatpush.bf16.msra.mxu0 %v3097
    %3109 = vmatpush.bf16.msra.mxu0 %v3096
    %3110 = vmatpush.bf16.msra.mxu0 %v3095
    %3111 = vmatpush.bf16.msra.mxu0 %v3094
    %3112 = vmatpush.bf16.msra.mxu0 %v3093
    %3113 = vmatpush.bf16.msra.mxu0 %v3092
    %3114 = vmatpush.bf16.msra.mxu0 %v3091
    %3115 = vmatmul.bf16.gmra.mxu0 %v3034
    %v3116 = vpop.f32.mrf.mxu0
    %v3117 = vadd.f32 %v3057, %v3116
    %v3118 = vpop.f32.mrf.mxu0
    %v3119 = vadd.f32 %v3057, %v3118
    %3120 = vmatmul.bf16.gmra.mxu0 %v3035
    %v3121 = vpop.f32.mrf.mxu0
    %v3122 = vadd.f32 %v3057, %v3121
    %v3123 = vpop.f32.mrf.mxu0
    %v3124 = vadd.f32 %v3057, %v3123
    %3125 = vmatmul.bf16.gmra.mxu0 %v3036
    %v3126 = vpop.f32.mrf.mxu0
    %v3127 = vadd.f32 %v3057, %v3126
    %v3128 = vpop.f32.mrf.mxu0
    %v3129 = vadd.f32 %v3057, %v3128
    %3130 = vdwg.mxu0
    %s3131 = scalar_lea.vmem [#allocation8], 64
    %v3132 = vld [vmem:[%s3131] sm:$0xf]
    %v3133 = vld [vmem:[%s3131 + $0x4] sm:$0xf]
    %v3134 = vld [vmem:[%s3131 + $0x8] sm:$0xf]
    %v3135 = vld [vmem:[%s3131 + $0xc] sm:$0xf]
    %v3136 = vld [vmem:[%s3131 + $0x10] sm:$0xf]
    %v3137 = vld [vmem:[%s3131 + $0x14] sm:$0xf]
    %v3138 = vld [vmem:[%s3131 + $0x18] sm:$0xf]
    %v3139 = vld [vmem:[%s3131 + $0x1c] sm:$0xf]
    %v3140 = vld [vmem:[%s3131 + $0x20] sm:$0xf]
    %v3141 = vld [vmem:[%s3131 + $0x24] sm:$0xf]
    %v3142 = vld [vmem:[%s3131 + $0x28] sm:$0xf]
    %v3143 = vld [vmem:[%s3131 + $0x2c] sm:$0xf]
    %v3144 = vld [vmem:[%s3131 + $0x30] sm:$0xf]
    %v3145 = vld [vmem:[%s3131 + $0x34] sm:$0xf]
    %v3146 = vld [vmem:[%s3131 + $0x38] sm:$0xf]
    %v3147 = vld [vmem:[%s3131 + $0x3c] sm:$0xf]
    %v3164 = vunpack.c.l.b16 %v3132
    %v3165 = vunpack.c.l.b16 %v3133
    %v3166 = vunpack.c.l.b16 %v3134
    %v3167 = vunpack.c.l.b16 %v3135
    %v3168 = vunpack.c.l.b16 %v3136
    %v3169 = vunpack.c.l.b16 %v3137
    %v3170 = vunpack.c.l.b16 %v3138
    %v3171 = vunpack.c.l.b16 %v3139
    %v3172 = vunpack.c.l.b16 %v3140
    %v3173 = vunpack.c.l.b16 %v3141
    %v3174 = vunpack.c.l.b16 %v3142
    %v3175 = vunpack.c.l.b16 %v3143
    %v3176 = vunpack.c.l.b16 %v3144
    %v3177 = vunpack.c.l.b16 %v3145
    %v3178 = vunpack.c.l.b16 %v3146
    %v3179 = vunpack.c.l.b16 %v3147
    %v3180 = vpack.c.b16 %v3165, %v3164
    %v3181 = vpack.c.b16 %v3167, %v3166
    %v3182 = vpack.c.b16 %v3169, %v3168
    %v3183 = vpack.c.b16 %v3171, %v3170
    %v3184 = vpack.c.b16 %v3173, %v3172
    %v3185 = vpack.c.b16 %v3175, %v3174
    %v3186 = vpack.c.b16 %v3177, %v3176
    %v3187 = vpack.c.b16 %v3179, %v3178
    %3196 = vmatpush.bf16.msra.mxu0 %v3187
    %3197 = vmatpush.bf16.msra.mxu0 %v3186
    %3198 = vmatpush.bf16.msra.mxu0 %v3185
    %3199 = vmatpush.bf16.msra.mxu0 %v3184
    %3200 = vmatpush.bf16.msra.mxu0 %v3183
    %3201 = vmatpush.bf16.msra.mxu0 %v3182
    %3202 = vmatpush.bf16.msra.mxu0 %v3181
    %3203 = vmatpush.bf16.msra.mxu0 %v3180
    %3204 = vmatmul.bf16.gmra.mxu0 0
    %v3205 = vpop.f32.mrf.mxu0
    %v3206 = vadd.f32 0.0, %v3205
    %v3207 = vpop.f32.mrf.mxu0
    %3208 = vdwg.mxu0
    %v3209 = vadd.f32 %v3117, %v3206
    %v3210 = vxor.u32 %v3209, 2147483648
    %v3211 = vmul.f32 %v3210, 1.442695
    %v3212 = vpow.pop %v3211
    %v3213 = vadd.f32 %v3212, 1.0
    %v3214 = vrcp.pop %v3213
    %v3215 = vmul.f32 %v3213, %v3214
    %v3216 = vsub.f32 1.0, %v3215
    %v3217 = vmul.f32 %v3214, %v3216
    %v3218 = vadd.f32 %v3214, %v3217
    %vm3219 = vweird.f32 %v3213
    %vm3220 = vweird.f32 %v3214
    %vm3221 = vmor %vm3219, %vm3220
    %v3222 = vsel %vm3221, %v3214, %v3218
    %v3223 = vand.u32 2147483647, %v3213
    %vm3224 = vcmp.eq.f32.partialorder %v3223, 8.507059e+37
    %v3225 = vand.u32 %v3213, 2147483648
    %v3226 = vor.u32 1.1754944e-38, %v3225
    %v3227 = vsel %vm3224, %v3226, %v3222
    %v3228 = vmul.f32 1.0, %v3227
    %v3229 = vmul.f32 %v3228, %v133
    %v3230 = vadd.f32 %v3229, %v134
    %3231 = vrot.lane.b32.xlu0 %v3230, 96
    %v3232 = vpop.permute.xlu0 %3231
    %3233 = vrot.lane.b32.xlu0 %v3230, 64
    %v3234 = vpop.permute.xlu0 %3233
    %3235 = vrot.lane.b32.xlu0 %v3230, 32
    %v3236 = vpop.permute.xlu0 %3235
    %v3237 = vmul.f32 %v3232, 0.0
    %v3238 = vmul.f32 %v3230, %v3234
    %v3239 = vadd.f32 %v3237, %v3238
    %v3240 = vtanh.pop %v3239
    %v3241 = vmul.f32 %v3236, %v3240
    %3242 = vst [vmem:[#allocation2] sm:$0xff] %v3241
    %v3243 = vpack.c.bf16 %v3241, %v3241
    %3244 = vmatpush.bf16.msra.mxu0 %v3187
    %3245 = vmatpush.bf16.msra.mxu0 %v3186
    %3246 = vmatpush.bf16.msra.mxu0 %v3185
    %3247 = vmatpush.bf16.msra.mxu0 %v3184
    %3248 = vmatpush.bf16.msra.mxu0 %v3183
    %3249 = vmatpush.bf16.msra.mxu0 %v3182
    %3250 = vmatpush.bf16.msra.mxu0 %v3181
    %3251 = vmatpush.bf16.msra.mxu0 %v3180
    %3252 = vmatmul.bf16.gmra.mxu0 %v3243
    %v3253 = vpop.f32.mrf.mxu0
    %v3254 = vadd.f32 0.0, %v3253
    %v3255 = vpop.f32.mrf.mxu0
    %3256 = vdwg.mxu0
    %v3257 = vadd.f32 %v3119, %v3254
    %v3258 = vxor.u32 %v3257, 2147483648
    %v3259 = vmul.f32 %v3258, 1.442695
    %v3260 = vpow.pop %v3259
    %v3261 = vadd.f32 %v3260, 1.0
    %v3262 = vrcp.pop %v3261
    %v3263 = vmul.f32 %v3261, %v3262
    %v3264 = vsub.f32 1.0, %v3263
    %v3265 = vmul.f32 %v3262, %v3264
    %v3266 = vadd.f32 %v3262, %v3265
    %vm3267 = vweird.f32 %v3261
    %vm3268 = vweird.f32 %v3262
    %vm3269 = vmor %vm3267, %vm3268
    %v3270 = vsel %vm3269, %v3262, %v3266
    %v3271 = vand.u32 2147483647, %v3261
    %vm3272 = vcmp.eq.f32.partialorder %v3271, 8.507059e+37
    %v3273 = vand.u32 %v3261, 2147483648
    %v3274 = vor.u32 1.1754944e-38, %v3273
    %v3275 = vsel %vm3272, %v3274, %v3270
    %v3276 = vmul.f32 1.0, %v3275
    %v3277 = vmul.f32 %v3276, %v133
    %v3278 = vadd.f32 %v3277, %v134
    %3279 = vrot.lane.b32.xlu0 %v3278, 96
    %v3280 = vpop.permute.xlu0 %3279
    %3281 = vrot.lane.b32.xlu0 %v3278, 64
    %v3282 = vpop.permute.xlu0 %3281
    %3283 = vrot.lane.b32.xlu0 %v3278, 32
    %v3284 = vpop.permute.xlu0 %3283
    %v3285 = vmul.f32 %v3280, %v3239
    %v3286 = vmul.f32 %v3278, %v3282
    %v3287 = vadd.f32 %v3285, %v3286
    %v3288 = vtanh.pop %v3287
    %v3289 = vmul.f32 %v3284, %v3288
    %3290 = vst [vmem:[#allocation2 + $0x8] sm:$0xff] %v3289
    %v3291 = vpack.c.bf16 %v3289, %v3289
    %3292 = vmatpush.bf16.msra.mxu0 %v3187
    %3293 = vmatpush.bf16.msra.mxu0 %v3186
    %3294 = vmatpush.bf16.msra.mxu0 %v3185
    %3295 = vmatpush.bf16.msra.mxu0 %v3184
    %3296 = vmatpush.bf16.msra.mxu0 %v3183
    %3297 = vmatpush.bf16.msra.mxu0 %v3182
    %3298 = vmatpush.bf16.msra.mxu0 %v3181
    %3299 = vmatpush.bf16.msra.mxu0 %v3180
    %3300 = vmatmul.bf16.gmra.mxu0 %v3291
    %v3301 = vpop.f32.mrf.mxu0
    %v3302 = vadd.f32 0.0, %v3301
    %v3303 = vpop.f32.mrf.mxu0
    %3304 = vdwg.mxu0
    %v3305 = vadd.f32 %v3122, %v3302
    %v3306 = vxor.u32 %v3305, 2147483648
    %v3307 = vmul.f32 %v3306, 1.442695
    %v3308 = vpow.pop %v3307
    %v3309 = vadd.f32 %v3308, 1.0
    %v3310 = vrcp.pop %v3309
    %v3311 = vmul.f32 %v3309, %v3310
    %v3312 = vsub.f32 1.0, %v3311
    %v3313 = vmul.f32 %v3310, %v3312
    %v3314 = vadd.f32 %v3310, %v3313
    %vm3315 = vweird.f32 %v3309
    %vm3316 = vweird.f32 %v3310
    %vm3317 = vmor %vm3315, %vm3316
    %v3318 = vsel %vm3317, %v3310, %v3314
    %v3319 = vand.u32 2147483647, %v3309
    %vm3320 = vcmp.eq.f32.partialorder %v3319, 8.507059e+37
    %v3321 = vand.u32 %v3309, 2147483648
    %v3322 = vor.u32 1.1754944e-38, %v3321
    %v3323 = vsel %vm3320, %v3322, %v3318
    %v3324 = vmul.f32 1.0, %v3323
    %v3325 = vmul.f32 %v3324, %v133
    %v3326 = vadd.f32 %v3325, %v134
    %3327 = vrot.lane.b32.xlu0 %v3326, 96
    %v3328 = vpop.permute.xlu0 %3327
    %3329 = vrot.lane.b32.xlu0 %v3326, 64
    %v3330 = vpop.permute.xlu0 %3329
    %3331 = vrot.lane.b32.xlu0 %v3326, 32
    %v3332 = vpop.permute.xlu0 %3331
    %v3333 = vmul.f32 %v3328, %v3287
    %v3334 = vmul.f32 %v3326, %v3330
    %v3335 = vadd.f32 %v3333, %v3334
    %v3336 = vtanh.pop %v3335
    %v3337 = vmul.f32 %v3332, %v3336
    %3338 = vst [vmem:[#allocation2 + $0x10] sm:$0xff] %v3337
    %v3339 = vpack.c.bf16 %v3337, %v3337
    %3340 = vmatpush.bf16.msra.mxu0 %v3187
    %3341 = vmatpush.bf16.msra.mxu0 %v3186
    %3342 = vmatpush.bf16.msra.mxu0 %v3185
    %3343 = vmatpush.bf16.msra.mxu0 %v3184
    %3344 = vmatpush.bf16.msra.mxu0 %v3183
    %3345 = vmatpush.bf16.msra.mxu0 %v3182
    %3346 = vmatpush.bf16.msra.mxu0 %v3181
    %3347 = vmatpush.bf16.msra.mxu0 %v3180
    %3348 = vmatmul.bf16.gmra.mxu0 %v3339
    %v3349 = vpop.f32.mrf.mxu0
    %v3350 = vadd.f32 0.0, %v3349
    %v3351 = vpop.f32.mrf.mxu0
    %3352 = vdwg.mxu0
    %v3353 = vadd.f32 %v3124, %v3350
    %v3354 = vxor.u32 %v3353, 2147483648
    %v3355 = vmul.f32 %v3354, 1.442695
    %v3356 = vpow.pop %v3355
    %v3357 = vadd.f32 %v3356, 1.0
    %v3358 = vrcp.pop %v3357
    %v3359 = vmul.f32 %v3357, %v3358
    %v3360 = vsub.f32 1.0, %v3359
    %v3361 = vmul.f32 %v3358, %v3360
    %v3362 = vadd.f32 %v3358, %v3361
    %vm3363 = vweird.f32 %v3357
    %vm3364 = vweird.f32 %v3358
    %vm3365 = vmor %vm3363, %vm3364
    %v3366 = vsel %vm3365, %v3358, %v3362
    %v3367 = vand.u32 2147483647, %v3357
    %vm3368 = vcmp.eq.f32.partialorder %v3367, 8.507059e+37
    %v3369 = vand.u32 %v3357, 2147483648
    %v3370 = vor.u32 1.1754944e-38, %v3369
    %v3371 = vsel %vm3368, %v3370, %v3366
    %v3372 = vmul.f32 1.0, %v3371
    %v3373 = vmul.f32 %v3372, %v133
    %v3374 = vadd.f32 %v3373, %v134
    %3375 = vrot.lane.b32.xlu0 %v3374, 96
    %v3376 = vpop.permute.xlu0 %3375
    %3377 = vrot.lane.b32.xlu0 %v3374, 64
    %v3378 = vpop.permute.xlu0 %3377
    %3379 = vrot.lane.b32.xlu0 %v3374, 32
    %v3380 = vpop.permute.xlu0 %3379
    %v3381 = vmul.f32 %v3376, %v3335
    %v3382 = vmul.f32 %v3374, %v3378
    %v3383 = vadd.f32 %v3381, %v3382
    %v3384 = vtanh.pop %v3383
    %v3385 = vmul.f32 %v3380, %v3384
    %3386 = vst [vmem:[#allocation2 + $0x18] sm:$0xff] %v3385
    %v3387 = vpack.c.bf16 %v3385, %v3385
    %3388 = vmatpush.bf16.msra.mxu0 %v3187
    %3389 = vmatpush.bf16.msra.mxu0 %v3186
    %3390 = vmatpush.bf16.msra.mxu0 %v3185
    %3391 = vmatpush.bf16.msra.mxu0 %v3184
    %3392 = vmatpush.bf16.msra.mxu0 %v3183
    %3393 = vmatpush.bf16.msra.mxu0 %v3182
    %3394 = vmatpush.bf16.msra.mxu0 %v3181
    %3395 = vmatpush.bf16.msra.mxu0 %v3180
    %3396 = vmatmul.bf16.gmra.mxu0 %v3387
    %v3397 = vpop.f32.mrf.mxu0
    %v3398 = vadd.f32 0.0, %v3397
    %v3399 = vpop.f32.mrf.mxu0
    %3400 = vdwg.mxu0
    %v3401 = vadd.f32 %v3127, %v3398
    %v3402 = vxor.u32 %v3401, 2147483648
    %v3403 = vmul.f32 %v3402, 1.442695
    %v3404 = vpow.pop %v3403
    %v3405 = vadd.f32 %v3404, 1.0
    %v3406 = vrcp.pop %v3405
    %v3407 = vmul.f32 %v3405, %v3406
    %v3408 = vsub.f32 1.0, %v3407
    %v3409 = vmul.f32 %v3406, %v3408
    %v3410 = vadd.f32 %v3406, %v3409
    %vm3411 = vweird.f32 %v3405
    %vm3412 = vweird.f32 %v3406
    %vm3413 = vmor %vm3411, %vm3412
    %v3414 = vsel %vm3413, %v3406, %v3410
    %v3415 = vand.u32 2147483647, %v3405
    %vm3416 = vcmp.eq.f32.partialorder %v3415, 8.507059e+37
    %v3417 = vand.u32 %v3405, 2147483648
    %v3418 = vor.u32 1.1754944e-38, %v3417
    %v3419 = vsel %vm3416, %v3418, %v3414
    %v3420 = vmul.f32 1.0, %v3419
    %v3421 = vmul.f32 %v3420, %v133
    %v3422 = vadd.f32 %v3421, %v134
    %3423 = vrot.lane.b32.xlu0 %v3422, 96
    %v3424 = vpop.permute.xlu0 %3423
    %3425 = vrot.lane.b32.xlu0 %v3422, 64
    %v3426 = vpop.permute.xlu0 %3425
    %3427 = vrot.lane.b32.xlu0 %v3422, 32
    %v3428 = vpop.permute.xlu0 %3427
    %v3429 = vmul.f32 %v3424, %v3383
    %v3430 = vmul.f32 %v3422, %v3426
    %v3431 = vadd.f32 %v3429, %v3430
    %v3432 = vtanh.pop %v3431
    %v3433 = vmul.f32 %v3428, %v3432
    %3434 = vst [vmem:[#allocation2 + $0x20] sm:$0xff] %v3433
    %v3435 = vpack.c.bf16 %v3433, %v3433
    %3436 = vmatpush.bf16.msra.mxu0 %v3187
    %3437 = vmatpush.bf16.msra.mxu0 %v3186
    %3438 = vmatpush.bf16.msra.mxu0 %v3185
    %3439 = vmatpush.bf16.msra.mxu0 %v3184
    %3440 = vmatpush.bf16.msra.mxu0 %v3183
    %3441 = vmatpush.bf16.msra.mxu0 %v3182
    %3442 = vmatpush.bf16.msra.mxu0 %v3181
    %3443 = vmatpush.bf16.msra.mxu0 %v3180
    %3444 = vmatmul.bf16.gmra.mxu0 %v3435
    %v3445 = vpop.f32.mrf.mxu0
    %v3446 = vadd.f32 0.0, %v3445
    %v3447 = vpop.f32.mrf.mxu0
    %3448 = vdwg.mxu0
    %v3449 = vadd.f32 %v3129, %v3446
    %v3450 = vxor.u32 %v3449, 2147483648
    %v3451 = vmul.f32 %v3450, 1.442695
    %v3452 = vpow.pop %v3451
    %v3453 = vadd.f32 %v3452, 1.0
    %v3454 = vrcp.pop %v3453
    %v3455 = vmul.f32 %v3453, %v3454
    %v3456 = vsub.f32 1.0, %v3455
    %v3457 = vmul.f32 %v3454, %v3456
    %v3458 = vadd.f32 %v3454, %v3457
    %vm3459 = vweird.f32 %v3453
    %vm3460 = vweird.f32 %v3454
    %vm3461 = vmor %vm3459, %vm3460
    %v3462 = vsel %vm3461, %v3454, %v3458
    %v3463 = vand.u32 2147483647, %v3453
    %vm3464 = vcmp.eq.f32.partialorder %v3463, 8.507059e+37
    %v3465 = vand.u32 %v3453, 2147483648
    %v3466 = vor.u32 1.1754944e-38, %v3465
    %v3467 = vsel %vm3464, %v3466, %v3462
    %v3468 = vmul.f32 1.0, %v3467
    %v3469 = vmul.f32 %v3468, %v133
    %v3470 = vadd.f32 %v3469, %v134
    %3471 = vrot.lane.b32.xlu0 %v3470, 96
    %v3472 = vpop.permute.xlu0 %3471
    %3473 = vrot.lane.b32.xlu0 %v3470, 64
    %v3474 = vpop.permute.xlu0 %3473
    %3475 = vrot.lane.b32.xlu0 %v3470, 32
    %v3476 = vpop.permute.xlu0 %3475
    %v3477 = vmul.f32 %v3472, %v3431
    %v3478 = vmul.f32 %v3470, %v3474
    %v3479 = vadd.f32 %v3477, %v3478
    %v3480 = vtanh.pop %v3479
    %v3481 = vmul.f32 %v3476, %v3480
    %3482 = vst [vmem:[#allocation2 + $0x28] sm:$0xff] %v3481
    %v3483 = vld [vmem:[#allocation2] sm:$0xff]
    %v3484 = vld [vmem:[#allocation2 + $0x8] sm:$0xff]
    %v3485 = vld [vmem:[#allocation2 + $0x10] sm:$0xff]
    %v3486 = vld [vmem:[#allocation2 + $0x18] sm:$0xff]
    %v3487 = vld [vmem:[#allocation2 + $0x20] sm:$0xff]
    %v3488 = vld [vmem:[#allocation2 + $0x28] sm:$0xff]
    %v3489 = vpack.c.bf16 %v3484, %v3483
    %v3490 = vpack.c.bf16 %v3486, %v3485
    %v3491 = vpack.c.bf16 %v3488, %v3487
    %s3492 = scalar_lea.vmem [#allocation7], 128
    %v3493 = vld [vmem:[%s3492] sm:$0xf]
    %v3494 = vld [vmem:[%s3492 + $0x4] sm:$0xf]
    %v3495 = vld [vmem:[%s3492 + $0x8] sm:$0xf]
    %v3496 = vld [vmem:[%s3492 + $0xc] sm:$0xf]
    %v3497 = vld [vmem:[%s3492 + $0x10] sm:$0xf]
    %v3498 = vld [vmem:[%s3492 + $0x14] sm:$0xf]
    %v3499 = vld [vmem:[%s3492 + $0x18] sm:$0xf]
    %v3500 = vld [vmem:[%s3492 + $0x1c] sm:$0xf]
    %v3501 = vld [vmem:[%s3492 + $0x20] sm:$0xf]
    %v3502 = vld [vmem:[%s3492 + $0x24] sm:$0xf]
    %v3503 = vld [vmem:[%s3492 + $0x28] sm:$0xf]
    %v3504 = vld [vmem:[%s3492 + $0x2c] sm:$0xf]
    %v3505 = vld [vmem:[%s3492 + $0x30] sm:$0xf]
    %v3506 = vld [vmem:[%s3492 + $0x34] sm:$0xf]
    %v3507 = vld [vmem:[%s3492 + $0x38] sm:$0xf]
    %v3508 = vld [vmem:[%s3492 + $0x3c] sm:$0xf]
    %s3509 = scalar_lea.vmem %s11, 2
    %v3510 = vld [vmem:[%s3509] sm:$0x1]
    %v3512 = vperm.slane %v3510, 0
    %v3530 = vunpack.c.l.b16 %v3493
    %v3531 = vunpack.c.l.b16 %v3494
    %v3532 = vunpack.c.l.b16 %v3495
    %v3533 = vunpack.c.l.b16 %v3496
    %v3534 = vunpack.c.l.b16 %v3497
    %v3535 = vunpack.c.l.b16 %v3498
    %v3536 = vunpack.c.l.b16 %v3499
    %v3537 = vunpack.c.l.b16 %v3500
    %v3538 = vunpack.c.l.b16 %v3501
    %v3539 = vunpack.c.l.b16 %v3502
    %v3540 = vunpack.c.l.b16 %v3503
    %v3541 = vunpack.c.l.b16 %v3504
    %v3542 = vunpack.c.l.b16 %v3505
    %v3543 = vunpack.c.l.b16 %v3506
    %v3544 = vunpack.c.l.b16 %v3507
    %v3545 = vunpack.c.l.b16 %v3508
    %v3546 = vpack.c.b16 %v3531, %v3530
    %v3547 = vpack.c.b16 %v3533, %v3532
    %v3548 = vpack.c.b16 %v3535, %v3534
    %v3549 = vpack.c.b16 %v3537, %v3536
    %v3550 = vpack.c.b16 %v3539, %v3538
    %v3551 = vpack.c.b16 %v3541, %v3540
    %v3552 = vpack.c.b16 %v3543, %v3542
    %v3553 = vpack.c.b16 %v3545, %v3544
    %3562 = vmatpush.bf16.msra.mxu0 %v3553
    %3563 = vmatpush.bf16.msra.mxu0 %v3552
    %3564 = vmatpush.bf16.msra.mxu0 %v3551
    %3565 = vmatpush.bf16.msra.mxu0 %v3550
    %3566 = vmatpush.bf16.msra.mxu0 %v3549
    %3567 = vmatpush.bf16.msra.mxu0 %v3548
    %3568 = vmatpush.bf16.msra.mxu0 %v3547
    %3569 = vmatpush.bf16.msra.mxu0 %v3546
    %3570 = vmatmul.bf16.gmra.mxu0 %v3489
    %v3571 = vpop.f32.mrf.mxu0
    %v3572 = vadd.f32 %v3512, %v3571
    %v3573 = vpop.f32.mrf.mxu0
    %v3574 = vadd.f32 %v3512, %v3573
    %3575 = vmatmul.bf16.gmra.mxu0 %v3490
    %v3576 = vpop.f32.mrf.mxu0
    %v3577 = vadd.f32 %v3512, %v3576
    %v3578 = vpop.f32.mrf.mxu0
    %v3579 = vadd.f32 %v3512, %v3578
    %3580 = vmatmul.bf16.gmra.mxu0 %v3491
    %v3581 = vpop.f32.mrf.mxu0
    %v3582 = vadd.f32 %v3512, %v3581
    %v3583 = vpop.f32.mrf.mxu0
    %v3584 = vadd.f32 %v3512, %v3583
    %3585 = vdwg.mxu0
    %s3586 = scalar_lea.vmem [#allocation8], 128
    %v3587 = vld [vmem:[%s3586] sm:$0xf]
    %v3588 = vld [vmem:[%s3586 + $0x4] sm:$0xf]
    %v3589 = vld [vmem:[%s3586 + $0x8] sm:$0xf]
    %v3590 = vld [vmem:[%s3586 + $0xc] sm:$0xf]
    %v3591 = vld [vmem:[%s3586 + $0x10] sm:$0xf]
    %v3592 = vld [vmem:[%s3586 + $0x14] sm:$0xf]
    %v3593 = vld [vmem:[%s3586 + $0x18] sm:$0xf]
    %v3594 = vld [vmem:[%s3586 + $0x1c] sm:$0xf]
    %v3595 = vld [vmem:[%s3586 + $0x20] sm:$0xf]
    %v3596 = vld [vmem:[%s3586 + $0x24] sm:$0xf]
    %v3597 = vld [vmem:[%s3586 + $0x28] sm:$0xf]
    %v3598 = vld [vmem:[%s3586 + $0x2c] sm:$0xf]
    %v3599 = vld [vmem:[%s3586 + $0x30] sm:$0xf]
    %v3600 = vld [vmem:[%s3586 + $0x34] sm:$0xf]
    %v3601 = vld [vmem:[%s3586 + $0x38] sm:$0xf]
    %v3602 = vld [vmem:[%s3586 + $0x3c] sm:$0xf]
    %v3619 = vunpack.c.l.b16 %v3587
    %v3620 = vunpack.c.l.b16 %v3588
    %v3621 = vunpack.c.l.b16 %v3589
    %v3622 = vunpack.c.l.b16 %v3590
    %v3623 = vunpack.c.l.b16 %v3591
    %v3624 = vunpack.c.l.b16 %v3592
    %v3625 = vunpack.c.l.b16 %v3593
    %v3626 = vunpack.c.l.b16 %v3594
    %v3627 = vunpack.c.l.b16 %v3595
    %v3628 = vunpack.c.l.b16 %v3596
    %v3629 = vunpack.c.l.b16 %v3597
    %v3630 = vunpack.c.l.b16 %v3598
    %v3631 = vunpack.c.l.b16 %v3599
    %v3632 = vunpack.c.l.b16 %v3600
    %v3633 = vunpack.c.l.b16 %v3601
    %v3634 = vunpack.c.l.b16 %v3602
    %v3635 = vpack.c.b16 %v3620, %v3619
    %v3636 = vpack.c.b16 %v3622, %v3621
    %v3637 = vpack.c.b16 %v3624, %v3623
    %v3638 = vpack.c.b16 %v3626, %v3625
    %v3639 = vpack.c.b16 %v3628, %v3627
    %v3640 = vpack.c.b16 %v3630, %v3629
    %v3641 = vpack.c.b16 %v3632, %v3631
    %v3642 = vpack.c.b16 %v3634, %v3633
    %3651 = vmatpush.bf16.msra.mxu0 %v3642
    %3652 = vmatpush.bf16.msra.mxu0 %v3641
    %3653 = vmatpush.bf16.msra.mxu0 %v3640
    %3654 = vmatpush.bf16.msra.mxu0 %v3639
    %3655 = vmatpush.bf16.msra.mxu0 %v3638
    %3656 = vmatpush.bf16.msra.mxu0 %v3637
    %3657 = vmatpush.bf16.msra.mxu0 %v3636
    %3658 = vmatpush.bf16.msra.mxu0 %v3635
    %3659 = vmatmul.bf16.gmra.mxu0 0
    %v3660 = vpop.f32.mrf.mxu0
    %v3661 = vadd.f32 0.0, %v3660
    %v3662 = vpop.f32.mrf.mxu0
    %3663 = vdwg.mxu0
    %v3664 = vadd.f32 %v3572, %v3661
    %v3665 = vxor.u32 %v3664, 2147483648
    %v3666 = vmul.f32 %v3665, 1.442695
    %v3667 = vpow.pop %v3666
    %v3668 = vadd.f32 %v3667, 1.0
    %v3669 = vrcp.pop %v3668
    %v3670 = vmul.f32 %v3668, %v3669
    %v3671 = vsub.f32 1.0, %v3670
    %v3672 = vmul.f32 %v3669, %v3671
    %v3673 = vadd.f32 %v3669, %v3672
    %vm3674 = vweird.f32 %v3668
    %vm3675 = vweird.f32 %v3669
    %vm3676 = vmor %vm3674, %vm3675
    %v3677 = vsel %vm3676, %v3669, %v3673
    %v3678 = vand.u32 2147483647, %v3668
    %vm3679 = vcmp.eq.f32.partialorder %v3678, 8.507059e+37
    %v3680 = vand.u32 %v3668, 2147483648
    %v3681 = vor.u32 1.1754944e-38, %v3680
    %v3682 = vsel %vm3679, %v3681, %v3677
    %v3683 = vmul.f32 1.0, %v3682
    %v3684 = vmul.f32 %v3683, %v133
    %v3685 = vadd.f32 %v3684, %v134
    %3686 = vrot.lane.b32.xlu0 %v3685, 96
    %v3687 = vpop.permute.xlu0 %3686
    %3688 = vrot.lane.b32.xlu0 %v3685, 64
    %v3689 = vpop.permute.xlu0 %3688
    %3690 = vrot.lane.b32.xlu0 %v3685, 32
    %v3691 = vpop.permute.xlu0 %3690
    %v3692 = vmul.f32 %v3687, 0.0
    %v3693 = vmul.f32 %v3685, %v3689
    %v3694 = vadd.f32 %v3692, %v3693
    %v3695 = vtanh.pop %v3694
    %v3696 = vmul.f32 %v3691, %v3695
    %3697 = vst [vmem:[#allocation2] sm:$0xff] %v3696
    %v3698 = vpack.c.bf16 %v3696, %v3696
    %3699 = vmatpush.bf16.msra.mxu0 %v3642
    %3700 = vmatpush.bf16.msra.mxu0 %v3641
    %3701 = vmatpush.bf16.msra.mxu0 %v3640
    %3702 = vmatpush.bf16.msra.mxu0 %v3639
    %3703 = vmatpush.bf16.msra.mxu0 %v3638
    %3704 = vmatpush.bf16.msra.mxu0 %v3637
    %3705 = vmatpush.bf16.msra.mxu0 %v3636
    %3706 = vmatpush.bf16.msra.mxu0 %v3635
    %3707 = vmatmul.bf16.gmra.mxu0 %v3698
    %v3708 = vpop.f32.mrf.mxu0
    %v3709 = vadd.f32 0.0, %v3708
    %v3710 = vpop.f32.mrf.mxu0
    %3711 = vdwg.mxu0
    %v3712 = vadd.f32 %v3574, %v3709
    %v3713 = vxor.u32 %v3712, 2147483648
    %v3714 = vmul.f32 %v3713, 1.442695
    %v3715 = vpow.pop %v3714
    %v3716 = vadd.f32 %v3715, 1.0
    %v3717 = vrcp.pop %v3716
    %v3718 = vmul.f32 %v3716, %v3717
    %v3719 = vsub.f32 1.0, %v3718
    %v3720 = vmul.f32 %v3717, %v3719
    %v3721 = vadd.f32 %v3717, %v3720
    %vm3722 = vweird.f32 %v3716
    %vm3723 = vweird.f32 %v3717
    %vm3724 = vmor %vm3722, %vm3723
    %v3725 = vsel %vm3724, %v3717, %v3721
    %v3726 = vand.u32 2147483647, %v3716
    %vm3727 = vcmp.eq.f32.partialorder %v3726, 8.507059e+37
    %v3728 = vand.u32 %v3716, 2147483648
    %v3729 = vor.u32 1.1754944e-38, %v3728
    %v3730 = vsel %vm3727, %v3729, %v3725
    %v3731 = vmul.f32 1.0, %v3730
    %v3732 = vmul.f32 %v3731, %v133
    %v3733 = vadd.f32 %v3732, %v134
    %3734 = vrot.lane.b32.xlu0 %v3733, 96
    %v3735 = vpop.permute.xlu0 %3734
    %3736 = vrot.lane.b32.xlu0 %v3733, 64
    %v3737 = vpop.permute.xlu0 %3736
    %3738 = vrot.lane.b32.xlu0 %v3733, 32
    %v3739 = vpop.permute.xlu0 %3738
    %v3740 = vmul.f32 %v3735, %v3694
    %v3741 = vmul.f32 %v3733, %v3737
    %v3742 = vadd.f32 %v3740, %v3741
    %v3743 = vtanh.pop %v3742
    %v3744 = vmul.f32 %v3739, %v3743
    %3745 = vst [vmem:[#allocation2 + $0x8] sm:$0xff] %v3744
    %v3746 = vpack.c.bf16 %v3744, %v3744
    %3747 = vmatpush.bf16.msra.mxu0 %v3642
    %3748 = vmatpush.bf16.msra.mxu0 %v3641
    %3749 = vmatpush.bf16.msra.mxu0 %v3640
    %3750 = vmatpush.bf16.msra.mxu0 %v3639
    %3751 = vmatpush.bf16.msra.mxu0 %v3638
    %3752 = vmatpush.bf16.msra.mxu0 %v3637
    %3753 = vmatpush.bf16.msra.mxu0 %v3636
    %3754 = vmatpush.bf16.msra.mxu0 %v3635
    %3755 = vmatmul.bf16.gmra.mxu0 %v3746
    %v3756 = vpop.f32.mrf.mxu0
    %v3757 = vadd.f32 0.0, %v3756
    %v3758 = vpop.f32.mrf.mxu0
    %3759 = vdwg.mxu0
    %v3760 = vadd.f32 %v3577, %v3757
    %v3761 = vxor.u32 %v3760, 2147483648
    %v3762 = vmul.f32 %v3761, 1.442695
    %v3763 = vpow.pop %v3762
    %v3764 = vadd.f32 %v3763, 1.0
    %v3765 = vrcp.pop %v3764
    %v3766 = vmul.f32 %v3764, %v3765
    %v3767 = vsub.f32 1.0, %v3766
    %v3768 = vmul.f32 %v3765, %v3767
    %v3769 = vadd.f32 %v3765, %v3768
    %vm3770 = vweird.f32 %v3764
    %vm3771 = vweird.f32 %v3765
    %vm3772 = vmor %vm3770, %vm3771
    %v3773 = vsel %vm3772, %v3765, %v3769
    %v3774 = vand.u32 2147483647, %v3764
    %vm3775 = vcmp.eq.f32.partialorder %v3774, 8.507059e+37
    %v3776 = vand.u32 %v3764, 2147483648
    %v3777 = vor.u32 1.1754944e-38, %v3776
    %v3778 = vsel %vm3775, %v3777, %v3773
    %v3779 = vmul.f32 1.0, %v3778
    %v3780 = vmul.f32 %v3779, %v133
    %v3781 = vadd.f32 %v3780, %v134
    %3782 = vrot.lane.b32.xlu0 %v3781, 96
    %v3783 = vpop.permute.xlu0 %3782
    %3784 = vrot.lane.b32.xlu0 %v3781, 64
    %v3785 = vpop.permute.xlu0 %3784
    %3786 = vrot.lane.b32.xlu0 %v3781, 32
    %v3787 = vpop.permute.xlu0 %3786
    %v3788 = vmul.f32 %v3783, %v3742
    %v3789 = vmul.f32 %v3781, %v3785
    %v3790 = vadd.f32 %v3788, %v3789
    %v3791 = vtanh.pop %v3790
    %v3792 = vmul.f32 %v3787, %v3791
    %3793 = vst [vmem:[#allocation2 + $0x10] sm:$0xff] %v3792
    %v3794 = vpack.c.bf16 %v3792, %v3792
    %3795 = vmatpush.bf16.msra.mxu0 %v3642
    %3796 = vmatpush.bf16.msra.mxu0 %v3641
    %3797 = vmatpush.bf16.msra.mxu0 %v3640
    %3798 = vmatpush.bf16.msra.mxu0 %v3639
    %3799 = vmatpush.bf16.msra.mxu0 %v3638
    %3800 = vmatpush.bf16.msra.mxu0 %v3637
    %3801 = vmatpush.bf16.msra.mxu0 %v3636
    %3802 = vmatpush.bf16.msra.mxu0 %v3635
    %3803 = vmatmul.bf16.gmra.mxu0 %v3794
    %v3804 = vpop.f32.mrf.mxu0
    %v3805 = vadd.f32 0.0, %v3804
    %v3806 = vpop.f32.mrf.mxu0
    %3807 = vdwg.mxu0
    %v3808 = vadd.f32 %v3579, %v3805
    %v3809 = vxor.u32 %v3808, 2147483648
    %v3810 = vmul.f32 %v3809, 1.442695
    %v3811 = vpow.pop %v3810
    %v3812 = vadd.f32 %v3811, 1.0
    %v3813 = vrcp.pop %v3812
    %v3814 = vmul.f32 %v3812, %v3813
    %v3815 = vsub.f32 1.0, %v3814
    %v3816 = vmul.f32 %v3813, %v3815
    %v3817 = vadd.f32 %v3813, %v3816
    %vm3818 = vweird.f32 %v3812
    %vm3819 = vweird.f32 %v3813
    %vm3820 = vmor %vm3818, %vm3819
    %v3821 = vsel %vm3820, %v3813, %v3817
    %v3822 = vand.u32 2147483647, %v3812
    %vm3823 = vcmp.eq.f32.partialorder %v3822, 8.507059e+37
    %v3824 = vand.u32 %v3812, 2147483648
    %v3825 = vor.u32 1.1754944e-38, %v3824
    %v3826 = vsel %vm3823, %v3825, %v3821
    %v3827 = vmul.f32 1.0, %v3826
    %v3828 = vmul.f32 %v3827, %v133
    %v3829 = vadd.f32 %v3828, %v134
    %3830 = vrot.lane.b32.xlu0 %v3829, 96
    %v3831 = vpop.permute.xlu0 %3830
    %3832 = vrot.lane.b32.xlu0 %v3829, 64
    %v3833 = vpop.permute.xlu0 %3832
    %3834 = vrot.lane.b32.xlu0 %v3829, 32
    %v3835 = vpop.permute.xlu0 %3834
    %v3836 = vmul.f32 %v3831, %v3790
    %v3837 = vmul.f32 %v3829, %v3833
    %v3838 = vadd.f32 %v3836, %v3837
    %v3839 = vtanh.pop %v3838
    %v3840 = vmul.f32 %v3835, %v3839
    %3841 = vst [vmem:[#allocation2 + $0x18] sm:$0xff] %v3840
    %v3842 = vpack.c.bf16 %v3840, %v3840
    %3843 = vmatpush.bf16.msra.mxu0 %v3642
    %3844 = vmatpush.bf16.msra.mxu0 %v3641
    %3845 = vmatpush.bf16.msra.mxu0 %v3640
    %3846 = vmatpush.bf16.msra.mxu0 %v3639
    %3847 = vmatpush.bf16.msra.mxu0 %v3638
    %3848 = vmatpush.bf16.msra.mxu0 %v3637
    %3849 = vmatpush.bf16.msra.mxu0 %v3636
    %3850 = vmatpush.bf16.msra.mxu0 %v3635
    %3851 = vmatmul.bf16.gmra.mxu0 %v3842
    %v3852 = vpop.f32.mrf.mxu0
    %v3853 = vadd.f32 0.0, %v3852
    %v3854 = vpop.f32.mrf.mxu0
    %3855 = vdwg.mxu0
    %v3856 = vadd.f32 %v3582, %v3853
    %v3857 = vxor.u32 %v3856, 2147483648
    %v3858 = vmul.f32 %v3857, 1.442695
    %v3859 = vpow.pop %v3858
    %v3860 = vadd.f32 %v3859, 1.0
    %v3861 = vrcp.pop %v3860
    %v3862 = vmul.f32 %v3860, %v3861
    %v3863 = vsub.f32 1.0, %v3862
    %v3864 = vmul.f32 %v3861, %v3863
    %v3865 = vadd.f32 %v3861, %v3864
    %vm3866 = vweird.f32 %v3860
    %vm3867 = vweird.f32 %v3861
    %vm3868 = vmor %vm3866, %vm3867
    %v3869 = vsel %vm3868, %v3861, %v3865
    %v3870 = vand.u32 2147483647, %v3860
    %vm3871 = vcmp.eq.f32.partialorder %v3870, 8.507059e+37
    %v3872 = vand.u32 %v3860, 2147483648
    %v3873 = vor.u32 1.1754944e-38, %v3872
    %v3874 = vsel %vm3871, %v3873, %v3869
    %v3875 = vmul.f32 1.0, %v3874
    %v3876 = vmul.f32 %v3875, %v133
    %v3877 = vadd.f32 %v3876, %v134
    %3878 = vrot.lane.b32.xlu0 %v3877, 96
    %v3879 = vpop.permute.xlu0 %3878
    %3880 = vrot.lane.b32.xlu0 %v3877, 64
    %v3881 = vpop.permute.xlu0 %3880
    %3882 = vrot.lane.b32.xlu0 %v3877, 32
    %v3883 = vpop.permute.xlu0 %3882
    %v3884 = vmul.f32 %v3879, %v3838
    %v3885 = vmul.f32 %v3877, %v3881
    %v3886 = vadd.f32 %v3884, %v3885
    %v3887 = vtanh.pop %v3886
    %v3888 = vmul.f32 %v3883, %v3887
    %3889 = vst [vmem:[#allocation2 + $0x20] sm:$0xff] %v3888
    %v3890 = vpack.c.bf16 %v3888, %v3888
    %3891 = vmatpush.bf16.msra.mxu0 %v3642
    %3892 = vmatpush.bf16.msra.mxu0 %v3641
    %3893 = vmatpush.bf16.msra.mxu0 %v3640
    %3894 = vmatpush.bf16.msra.mxu0 %v3639
    %3895 = vmatpush.bf16.msra.mxu0 %v3638
    %3896 = vmatpush.bf16.msra.mxu0 %v3637
    %3897 = vmatpush.bf16.msra.mxu0 %v3636
    %3898 = vmatpush.bf16.msra.mxu0 %v3635
    %3899 = vmatmul.bf16.gmra.mxu0 %v3890
    %v3900 = vpop.f32.mrf.mxu0
    %v3901 = vadd.f32 0.0, %v3900
    %v3902 = vpop.f32.mrf.mxu0
    %3903 = vdwg.mxu0
    %v3904 = vadd.f32 %v3584, %v3901
    %v3905 = vxor.u32 %v3904, 2147483648
    %v3906 = vmul.f32 %v3905, 1.442695
    %v3907 = vpow.pop %v3906
    %v3908 = vadd.f32 %v3907, 1.0
    %v3909 = vrcp.pop %v3908
    %v3910 = vmul.f32 %v3908, %v3909
    %v3911 = vsub.f32 1.0, %v3910
    %v3912 = vmul.f32 %v3909, %v3911
    %v3913 = vadd.f32 %v3909, %v3912
    %vm3914 = vweird.f32 %v3908
    %vm3915 = vweird.f32 %v3909
    %vm3916 = vmor %vm3914, %vm3915
    %v3917 = vsel %vm3916, %v3909, %v3913
    %v3918 = vand.u32 2147483647, %v3908
    %vm3919 = vcmp.eq.f32.partialorder %v3918, 8.507059e+37
    %v3920 = vand.u32 %v3908, 2147483648
    %v3921 = vor.u32 1.1754944e-38, %v3920
    %v3922 = vsel %vm3919, %v3921, %v3917
    %v3923 = vmul.f32 1.0, %v3922
    %v3924 = vmul.f32 %v3923, %v133
    %v3925 = vadd.f32 %v3924, %v134
    %3926 = vrot.lane.b32.xlu0 %v3925, 96
    %v3927 = vpop.permute.xlu0 %3926
    %3928 = vrot.lane.b32.xlu0 %v3925, 64
    %v3929 = vpop.permute.xlu0 %3928
    %3930 = vrot.lane.b32.xlu0 %v3925, 32
    %v3931 = vpop.permute.xlu0 %3930
    %v3932 = vmul.f32 %v3927, %v3886
    %v3933 = vmul.f32 %v3925, %v3929
    %v3934 = vadd.f32 %v3932, %v3933
    %v3935 = vtanh.pop %v3934
    %v3936 = vmul.f32 %v3931, %v3935
    %3937 = vst [vmem:[#allocation2 + $0x28] sm:$0xff] %v3936
    %v3938 = vld [vmem:[#allocation2] sm:$0xff]
    %v3939 = vld [vmem:[#allocation2 + $0x8] sm:$0xff]
    %v3940 = vld [vmem:[#allocation2 + $0x10] sm:$0xff]
    %v3941 = vld [vmem:[#allocation2 + $0x18] sm:$0xff]
    %v3942 = vld [vmem:[#allocation2 + $0x20] sm:$0xff]
    %v3943 = vld [vmem:[#allocation2 + $0x28] sm:$0xff]
    %v3944 = vpack.c.bf16 %v3939, %v3938
    %v3945 = vpack.c.bf16 %v3941, %v3940
    %v3946 = vpack.c.bf16 %v3943, %v3942
    %s3947 = scalar_lea.vmem [#allocation7], 192
    %v3948 = vld [vmem:[%s3947] sm:$0xf]
    %v3949 = vld [vmem:[%s3947 + $0x4] sm:$0xf]
    %v3950 = vld [vmem:[%s3947 + $0x8] sm:$0xf]
    %v3951 = vld [vmem:[%s3947 + $0xc] sm:$0xf]
    %v3952 = vld [vmem:[%s3947 + $0x10] sm:$0xf]
    %v3953 = vld [vmem:[%s3947 + $0x14] sm:$0xf]
    %v3954 = vld [vmem:[%s3947 + $0x18] sm:$0xf]
    %v3955 = vld [vmem:[%s3947 + $0x1c] sm:$0xf]
    %v3956 = vld [vmem:[%s3947 + $0x20] sm:$0xf]
    %v3957 = vld [vmem:[%s3947 + $0x24] sm:$0xf]
    %v3958 = vld [vmem:[%s3947 + $0x28] sm:$0xf]
    %v3959 = vld [vmem:[%s3947 + $0x2c] sm:$0xf]
    %v3960 = vld [vmem:[%s3947 + $0x30] sm:$0xf]
    %v3961 = vld [vmem:[%s3947 + $0x34] sm:$0xf]
    %v3962 = vld [vmem:[%s3947 + $0x38] sm:$0xf]
    %v3963 = vld [vmem:[%s3947 + $0x3c] sm:$0xf]
    %s3964 = scalar_lea.vmem %s11, 3
    %v3965 = vld [vmem:[%s3964] sm:$0x1]
    %v3967 = vperm.slane %v3965, 0
    %v3985 = vunpack.c.l.b16 %v3948
    %v3986 = vunpack.c.l.b16 %v3949
    %v3987 = vunpack.c.l.b16 %v3950
    %v3988 = vunpack.c.l.b16 %v3951
    %v3989 = vunpack.c.l.b16 %v3952
    %v3990 = vunpack.c.l.b16 %v3953
    %v3991 = vunpack.c.l.b16 %v3954
    %v3992 = vunpack.c.l.b16 %v3955
    %v3993 = vunpack.c.l.b16 %v3956
    %v3994 = vunpack.c.l.b16 %v3957
    %v3995 = vunpack.c.l.b16 %v3958
    %v3996 = vunpack.c.l.b16 %v3959
    %v3997 = vunpack.c.l.b16 %v3960
    %v3998 = vunpack.c.l.b16 %v3961
    %v3999 = vunpack.c.l.b16 %v3962
    %v4000 = vunpack.c.l.b16 %v3963
    %v4001 = vpack.c.b16 %v3986, %v3985
    %v4002 = vpack.c.b16 %v3988, %v3987
    %v4003 = vpack.c.b16 %v3990, %v3989
    %v4004 = vpack.c.b16 %v3992, %v3991
    %v4005 = vpack.c.b16 %v3994, %v3993
    %v4006 = vpack.c.b16 %v3996, %v3995
    %v4007 = vpack.c.b16 %v3998, %v3997
    %v4008 = vpack.c.b16 %v4000, %v3999
    %4017 = vmatpush.bf16.msra.mxu0 %v4008
    %4018 = vmatpush.bf16.msra.mxu0 %v4007
    %4019 = vmatpush.bf16.msra.mxu0 %v4006
    %4020 = vmatpush.bf16.msra.mxu0 %v4005
    %4021 = vmatpush.bf16.msra.mxu0 %v4004
    %4022 = vmatpush.bf16.msra.mxu0 %v4003
    %4023 = vmatpush.bf16.msra.mxu0 %v4002
    %4024 = vmatpush.bf16.msra.mxu0 %v4001
    %4025 = vmatmul.bf16.gmra.mxu0 %v3944
    %v4026 = vpop.f32.mrf.mxu0
    %v4027 = vadd.f32 %v3967, %v4026
    %v4028 = vpop.f32.mrf.mxu0
    %v4029 = vadd.f32 %v3967, %v4028
    %4030 = vmatmul.bf16.gmra.mxu0 %v3945
    %v4031 = vpop.f32.mrf.mxu0
    %v4032 = vadd.f32 %v3967, %v4031
    %v4033 = vpop.f32.mrf.mxu0
    %v4034 = vadd.f32 %v3967, %v4033
    %4035 = vmatmul.bf16.gmra.mxu0 %v3946
    %v4036 = vpop.f32.mrf.mxu0
    %v4037 = vadd.f32 %v3967, %v4036
    %v4038 = vpop.f32.mrf.mxu0
    %v4039 = vadd.f32 %v3967, %v4038
    %4040 = vdwg.mxu0
    %s4041 = scalar_lea.vmem [#allocation8], 192
    %v4042 = vld [vmem:[%s4041] sm:$0xf]
    %v4043 = vld [vmem:[%s4041 + $0x4] sm:$0xf]
    %v4044 = vld [vmem:[%s4041 + $0x8] sm:$0xf]
    %v4045 = vld [vmem:[%s4041 + $0xc] sm:$0xf]
    %v4046 = vld [vmem:[%s4041 + $0x10] sm:$0xf]
    %v4047 = vld [vmem:[%s4041 + $0x14] sm:$0xf]
    %v4048 = vld [vmem:[%s4041 + $0x18] sm:$0xf]
    %v4049 = vld [vmem:[%s4041 + $0x1c] sm:$0xf]
    %v4050 = vld [vmem:[%s4041 + $0x20] sm:$0xf]
    %v4051 = vld [vmem:[%s4041 + $0x24] sm:$0xf]
    %v4052 = vld [vmem:[%s4041 + $0x28] sm:$0xf]
    %v4053 = vld [vmem:[%s4041 + $0x2c] sm:$0xf]
    %v4054 = vld [vmem:[%s4041 + $0x30] sm:$0xf]
    %v4055 = vld [vmem:[%s4041 + $0x34] sm:$0xf]
    %v4056 = vld [vmem:[%s4041 + $0x38] sm:$0xf]
    %v4057 = vld [vmem:[%s4041 + $0x3c] sm:$0xf]
    %v4074 = vunpack.c.l.b16 %v4042
    %v4075 = vunpack.c.l.b16 %v4043
    %v4076 = vunpack.c.l.b16 %v4044
    %v4077 = vunpack.c.l.b16 %v4045
    %v4078 = vunpack.c.l.b16 %v4046
    %v4079 = vunpack.c.l.b16 %v4047
    %v4080 = vunpack.c.l.b16 %v4048
    %v4081 = vunpack.c.l.b16 %v4049
    %v4082 = vunpack.c.l.b16 %v4050
    %v4083 = vunpack.c.l.b16 %v4051
    %v4084 = vunpack.c.l.b16 %v4052
    %v4085 = vunpack.c.l.b16 %v4053
    %v4086 = vunpack.c.l.b16 %v4054
    %v4087 = vunpack.c.l.b16 %v4055
    %v4088 = vunpack.c.l.b16 %v4056
    %v4089 = vunpack.c.l.b16 %v4057
    %v4090 = vpack.c.b16 %v4075, %v4074
    %v4091 = vpack.c.b16 %v4077, %v4076
    %v4092 = vpack.c.b16 %v4079, %v4078
    %v4093 = vpack.c.b16 %v4081, %v4080
    %v4094 = vpack.c.b16 %v4083, %v4082
    %v4095 = vpack.c.b16 %v4085, %v4084
    %v4096 = vpack.c.b16 %v4087, %v4086
    %v4097 = vpack.c.b16 %v4089, %v4088
    %4106 = vmatpush.bf16.msra.mxu0 %v4097
    %4107 = vmatpush.bf16.msra.mxu0 %v4096
    %4108 = vmatpush.bf16.msra.mxu0 %v4095
    %4109 = vmatpush.bf16.msra.mxu0 %v4094
    %4110 = vmatpush.bf16.msra.mxu0 %v4093
    %4111 = vmatpush.bf16.msra.mxu0 %v4092
    %4112 = vmatpush.bf16.msra.mxu0 %v4091
    %4113 = vmatpush.bf16.msra.mxu0 %v4090
    %4114 = vmatmul.bf16.gmra.mxu0 0
    %v4115 = vpop.f32.mrf.mxu0
    %v4116 = vadd.f32 0.0, %v4115
    %v4117 = vpop.f32.mrf.mxu0
    %4118 = vdwg.mxu0
    %v4119 = vadd.f32 %v4027, %v4116
    %v4120 = vxor.u32 %v4119, 2147483648
    %v4121 = vmul.f32 %v4120, 1.442695
    %v4122 = vpow.pop %v4121
    %v4123 = vadd.f32 %v4122, 1.0
    %v4124 = vrcp.pop %v4123
    %v4125 = vmul.f32 %v4123, %v4124
    %v4126 = vsub.f32 1.0, %v4125
    %v4127 = vmul.f32 %v4124, %v4126
    %v4128 = vadd.f32 %v4124, %v4127
    %vm4129 = vweird.f32 %v4123
    %vm4130 = vweird.f32 %v4124
    %vm4131 = vmor %vm4129, %vm4130
    %v4132 = vsel %vm4131, %v4124, %v4128
    %v4133 = vand.u32 2147483647, %v4123
    %vm4134 = vcmp.eq.f32.partialorder %v4133, 8.507059e+37
    %v4135 = vand.u32 %v4123, 2147483648
    %v4136 = vor.u32 1.1754944e-38, %v4135
    %v4137 = vsel %vm4134, %v4136, %v4132
    %v4138 = vmul.f32 1.0, %v4137
    %v4139 = vmul.f32 %v4138, %v133
    %v4140 = vadd.f32 %v4139, %v134
    %4141 = vrot.lane.b32.xlu0 %v4140, 96
    %v4142 = vpop.permute.xlu0 %4141
    %4143 = vrot.lane.b32.xlu0 %v4140, 64
    %v4144 = vpop.permute.xlu0 %4143
    %4145 = vrot.lane.b32.xlu0 %v4140, 32
    %v4146 = vpop.permute.xlu0 %4145
    %v4147 = vmul.f32 %v4142, 0.0
    %v4148 = vmul.f32 %v4140, %v4144
    %v4149 = vadd.f32 %v4147, %v4148
    %v4150 = vtanh.pop %v4149
    %v4151 = vmul.f32 %v4146, %v4150
    %4152 = vst [vmem:[#allocation2] sm:$0xff] %v4151
    %v4153 = vpack.c.bf16 %v4151, %v4151
    %4154 = vmatpush.bf16.msra.mxu0 %v4097
    %4155 = vmatpush.bf16.msra.mxu0 %v4096
    %4156 = vmatpush.bf16.msra.mxu0 %v4095
    %4157 = vmatpush.bf16.msra.mxu0 %v4094
    %4158 = vmatpush.bf16.msra.mxu0 %v4093
    %4159 = vmatpush.bf16.msra.mxu0 %v4092
    %4160 = vmatpush.bf16.msra.mxu0 %v4091
    %4161 = vmatpush.bf16.msra.mxu0 %v4090
    %4162 = vmatmul.bf16.gmra.mxu0 %v4153
    %v4163 = vpop.f32.mrf.mxu0
    %v4164 = vadd.f32 0.0, %v4163
    %v4165 = vpop.f32.mrf.mxu0
    %4166 = vdwg.mxu0
    %v4167 = vadd.f32 %v4029, %v4164
    %v4168 = vxor.u32 %v4167, 2147483648
    %v4169 = vmul.f32 %v4168, 1.442695
    %v4170 = vpow.pop %v4169
    %v4171 = vadd.f32 %v4170, 1.0
    %v4172 = vrcp.pop %v4171
    %v4173 = vmul.f32 %v4171, %v4172
    %v4174 = vsub.f32 1.0, %v4173
    %v4175 = vmul.f32 %v4172, %v4174
    %v4176 = vadd.f32 %v4172, %v4175
    %vm4177 = vweird.f32 %v4171
    %vm4178 = vweird.f32 %v4172
    %vm4179 = vmor %vm4177, %vm4178
    %v4180 = vsel %vm4179, %v4172, %v4176
    %v4181 = vand.u32 2147483647, %v4171
    %vm4182 = vcmp.eq.f32.partialorder %v4181, 8.507059e+37
    %v4183 = vand.u32 %v4171, 2147483648
    %v4184 = vor.u32 1.1754944e-38, %v4183
    %v4185 = vsel %vm4182, %v4184, %v4180
    %v4186 = vmul.f32 1.0, %v4185
    %v4187 = vmul.f32 %v4186, %v133
    %v4188 = vadd.f32 %v4187, %v134
    %4189 = vrot.lane.b32.xlu0 %v4188, 96
    %v4190 = vpop.permute.xlu0 %4189
    %4191 = vrot.lane.b32.xlu0 %v4188, 64
    %v4192 = vpop.permute.xlu0 %4191
    %4193 = vrot.lane.b32.xlu0 %v4188, 32
    %v4194 = vpop.permute.xlu0 %4193
    %v4195 = vmul.f32 %v4190, %v4149
    %v4196 = vmul.f32 %v4188, %v4192
    %v4197 = vadd.f32 %v4195, %v4196
    %v4198 = vtanh.pop %v4197
    %v4199 = vmul.f32 %v4194, %v4198
    %4200 = vst [vmem:[#allocation2 + $0x8] sm:$0xff] %v4199
    %v4201 = vpack.c.bf16 %v4199, %v4199
    %4202 = vmatpush.bf16.msra.mxu0 %v4097
    %4203 = vmatpush.bf16.msra.mxu0 %v4096
    %4204 = vmatpush.bf16.msra.mxu0 %v4095
    %4205 = vmatpush.bf16.msra.mxu0 %v4094
    %4206 = vmatpush.bf16.msra.mxu0 %v4093
    %4207 = vmatpush.bf16.msra.mxu0 %v4092
    %4208 = vmatpush.bf16.msra.mxu0 %v4091
    %4209 = vmatpush.bf16.msra.mxu0 %v4090
    %4210 = vmatmul.bf16.gmra.mxu0 %v4201
    %v4211 = vpop.f32.mrf.mxu0
    %v4212 = vadd.f32 0.0, %v4211
    %v4213 = vpop.f32.mrf.mxu0
    %4214 = vdwg.mxu0
    %v4215 = vadd.f32 %v4032, %v4212
    %v4216 = vxor.u32 %v4215, 2147483648
    %v4217 = vmul.f32 %v4216, 1.442695
    %v4218 = vpow.pop %v4217
    %v4219 = vadd.f32 %v4218, 1.0
    %v4220 = vrcp.pop %v4219
    %v4221 = vmul.f32 %v4219, %v4220
    %v4222 = vsub.f32 1.0, %v4221
    %v4223 = vmul.f32 %v4220, %v4222
    %v4224 = vadd.f32 %v4220, %v4223
    %vm4225 = vweird.f32 %v4219
    %vm4226 = vweird.f32 %v4220
    %vm4227 = vmor %vm4225, %vm4226
    %v4228 = vsel %vm4227, %v4220, %v4224
    %v4229 = vand.u32 2147483647, %v4219
    %vm4230 = vcmp.eq.f32.partialorder %v4229, 8.507059e+37
    %v4231 = vand.u32 %v4219, 2147483648
    %v4232 = vor.u32 1.1754944e-38, %v4231
    %v4233 = vsel %vm4230, %v4232, %v4228
    %v4234 = vmul.f32 1.0, %v4233
    %v4235 = vmul.f32 %v4234, %v133
    %v4236 = vadd.f32 %v4235, %v134
    %4237 = vrot.lane.b32.xlu0 %v4236, 96
    %v4238 = vpop.permute.xlu0 %4237
    %4239 = vrot.lane.b32.xlu0 %v4236, 64
    %v4240 = vpop.permute.xlu0 %4239
    %4241 = vrot.lane.b32.xlu0 %v4236, 32
    %v4242 = vpop.permute.xlu0 %4241
    %v4243 = vmul.f32 %v4238, %v4197
    %v4244 = vmul.f32 %v4236, %v4240
    %v4245 = vadd.f32 %v4243, %v4244
    %v4246 = vtanh.pop %v4245
    %v4247 = vmul.f32 %v4242, %v4246
    %4248 = vst [vmem:[#allocation2 + $0x10] sm:$0xff] %v4247
    %v4249 = vpack.c.bf16 %v4247, %v4247
    %4250 = vmatpush.bf16.msra.mxu0 %v4097
    %4251 = vmatpush.bf16.msra.mxu0 %v4096
    %4252 = vmatpush.bf16.msra.mxu0 %v4095
    %4253 = vmatpush.bf16.msra.mxu0 %v4094
    %4254 = vmatpush.bf16.msra.mxu0 %v4093
    %4255 = vmatpush.bf16.msra.mxu0 %v4092
    %4256 = vmatpush.bf16.msra.mxu0 %v4091
    %4257 = vmatpush.bf16.msra.mxu0 %v4090
    %4258 = vmatmul.bf16.gmra.mxu0 %v4249
    %v4259 = vpop.f32.mrf.mxu0
    %v4260 = vadd.f32 0.0, %v4259
    %v4261 = vpop.f32.mrf.mxu0
    %4262 = vdwg.mxu0
    %v4263 = vadd.f32 %v4034, %v4260
    %v4264 = vxor.u32 %v4263, 2147483648
    %v4265 = vmul.f32 %v4264, 1.442695
    %v4266 = vpow.pop %v4265
    %v4267 = vadd.f32 %v4266, 1.0
    %v4268 = vrcp.pop %v4267
    %v4269 = vmul.f32 %v4267, %v4268
    %v4270 = vsub.f32 1.0, %v4269
    %v4271 = vmul.f32 %v4268, %v4270
    %v4272 = vadd.f32 %v4268, %v4271
    %vm4273 = vweird.f32 %v4267
    %vm4274 = vweird.f32 %v4268
    %vm4275 = vmor %vm4273, %vm4274
    %v4276 = vsel %vm4275, %v4268, %v4272
    %v4277 = vand.u32 2147483647, %v4267
    %vm4278 = vcmp.eq.f32.partialorder %v4277, 8.507059e+37
    %v4279 = vand.u32 %v4267, 2147483648
    %v4280 = vor.u32 1.1754944e-38, %v4279
    %v4281 = vsel %vm4278, %v4280, %v4276
    %v4282 = vmul.f32 1.0, %v4281
    %v4283 = vmul.f32 %v4282, %v133
    %v4284 = vadd.f32 %v4283, %v134
    %4285 = vrot.lane.b32.xlu0 %v4284, 96
    %v4286 = vpop.permute.xlu0 %4285
    %4287 = vrot.lane.b32.xlu0 %v4284, 64
    %v4288 = vpop.permute.xlu0 %4287
    %4289 = vrot.lane.b32.xlu0 %v4284, 32
    %v4290 = vpop.permute.xlu0 %4289
    %v4291 = vmul.f32 %v4286, %v4245
    %v4292 = vmul.f32 %v4284, %v4288
    %v4293 = vadd.f32 %v4291, %v4292
    %v4294 = vtanh.pop %v4293
    %v4295 = vmul.f32 %v4290, %v4294
    %4296 = vst [vmem:[#allocation2 + $0x18] sm:$0xff] %v4295
    %v4297 = vpack.c.bf16 %v4295, %v4295
    %4298 = vmatpush.bf16.msra.mxu0 %v4097
    %4299 = vmatpush.bf16.msra.mxu0 %v4096
    %4300 = vmatpush.bf16.msra.mxu0 %v4095
    %4301 = vmatpush.bf16.msra.mxu0 %v4094
    %4302 = vmatpush.bf16.msra.mxu0 %v4093
    %4303 = vmatpush.bf16.msra.mxu0 %v4092
    %4304 = vmatpush.bf16.msra.mxu0 %v4091
    %4305 = vmatpush.bf16.msra.mxu0 %v4090
    %4306 = vmatmul.bf16.gmra.mxu0 %v4297
    %v4307 = vpop.f32.mrf.mxu0
    %v4308 = vadd.f32 0.0, %v4307
    %v4309 = vpop.f32.mrf.mxu0
    %4310 = vdwg.mxu0
    %v4311 = vadd.f32 %v4037, %v4308
    %v4312 = vxor.u32 %v4311, 2147483648
    %v4313 = vmul.f32 %v4312, 1.442695
    %v4314 = vpow.pop %v4313
    %v4315 = vadd.f32 %v4314, 1.0
    %v4316 = vrcp.pop %v4315
    %v4317 = vmul.f32 %v4315, %v4316
    %v4318 = vsub.f32 1.0, %v4317
    %v4319 = vmul.f32 %v4316, %v4318
    %v4320 = vadd.f32 %v4316, %v4319
    %vm4321 = vweird.f32 %v4315
    %vm4322 = vweird.f32 %v4316
    %vm4323 = vmor %vm4321, %vm4322
    %v4324 = vsel %vm4323, %v4316, %v4320
    %v4325 = vand.u32 2147483647, %v4315
    %vm4326 = vcmp.eq.f32.partialorder %v4325, 8.507059e+37
    %v4327 = vand.u32 %v4315, 2147483648
    %v4328 = vor.u32 1.1754944e-38, %v4327
    %v4329 = vsel %vm4326, %v4328, %v4324
    %v4330 = vmul.f32 1.0, %v4329
    %v4331 = vmul.f32 %v4330, %v133
    %v4332 = vadd.f32 %v4331, %v134
    %4333 = vrot.lane.b32.xlu0 %v4332, 96
    %v4334 = vpop.permute.xlu0 %4333
    %4335 = vrot.lane.b32.xlu0 %v4332, 64
    %v4336 = vpop.permute.xlu0 %4335
    %4337 = vrot.lane.b32.xlu0 %v4332, 32
    %v4338 = vpop.permute.xlu0 %4337
    %v4339 = vmul.f32 %v4334, %v4293
    %v4340 = vmul.f32 %v4332, %v4336
    %v4341 = vadd.f32 %v4339, %v4340
    %v4342 = vtanh.pop %v4341
    %v4343 = vmul.f32 %v4338, %v4342
    %4344 = vst [vmem:[#allocation2 + $0x20] sm:$0xff] %v4343
    %v4345 = vpack.c.bf16 %v4343, %v4343
    %4346 = vmatpush.bf16.msra.mxu0 %v4097
    %4347 = vmatpush.bf16.msra.mxu0 %v4096
    %4348 = vmatpush.bf16.msra.mxu0 %v4095
    %4349 = vmatpush.bf16.msra.mxu0 %v4094
    %4350 = vmatpush.bf16.msra.mxu0 %v4093
    %4351 = vmatpush.bf16.msra.mxu0 %v4092
    %4352 = vmatpush.bf16.msra.mxu0 %v4091
    %4353 = vmatpush.bf16.msra.mxu0 %v4090
    %4354 = vmatmul.bf16.gmra.mxu0 %v4345
    %v4355 = vpop.f32.mrf.mxu0
    %v4356 = vadd.f32 0.0, %v4355
    %v4357 = vpop.f32.mrf.mxu0
    %4358 = vdwg.mxu0
    %v4359 = vadd.f32 %v4039, %v4356
    %v4360 = vxor.u32 %v4359, 2147483648
    %v4361 = vmul.f32 %v4360, 1.442695
    %v4362 = vpow.pop %v4361
    %v4363 = vadd.f32 %v4362, 1.0
    %v4364 = vrcp.pop %v4363
    %v4365 = vmul.f32 %v4363, %v4364
    %v4366 = vsub.f32 1.0, %v4365
    %v4367 = vmul.f32 %v4364, %v4366
    %v4368 = vadd.f32 %v4364, %v4367
    %vm4369 = vweird.f32 %v4363
    %vm4370 = vweird.f32 %v4364
    %vm4371 = vmor %vm4369, %vm4370
    %v4372 = vsel %vm4371, %v4364, %v4368
    %v4373 = vand.u32 2147483647, %v4363
    %vm4374 = vcmp.eq.f32.partialorder %v4373, 8.507059e+37
    %v4375 = vand.u32 %v4363, 2147483648
    %v4376 = vor.u32 1.1754944e-38, %v4375
    %v4377 = vsel %vm4374, %v4376, %v4372
    %v4378 = vmul.f32 1.0, %v4377
    %v4379 = vmul.f32 %v4378, %v133
    %v4380 = vadd.f32 %v4379, %v134
    %4381 = vrot.lane.b32.xlu0 %v4380, 96
    %v4382 = vpop.permute.xlu0 %4381
    %4383 = vrot.lane.b32.xlu0 %v4380, 64
    %v4384 = vpop.permute.xlu0 %4383
    %4385 = vrot.lane.b32.xlu0 %v4380, 32
    %v4386 = vpop.permute.xlu0 %4385
    %v4387 = vmul.f32 %v4382, %v4341
    %v4388 = vmul.f32 %v4380, %v4384
    %v4389 = vadd.f32 %v4387, %v4388
    %v4390 = vtanh.pop %v4389
    %v4391 = vmul.f32 %v4386, %v4390
    %4392 = vst [vmem:[#allocation2 + $0x28] sm:$0xff] %v4391
    %v4393 = vld [vmem:[#allocation2] sm:$0xff]
    %v4394 = vld [vmem:[#allocation2 + $0x8] sm:$0xff]
    %v4395 = vld [vmem:[#allocation2 + $0x10] sm:$0xff]
    %v4396 = vld [vmem:[#allocation2 + $0x18] sm:$0xff]
    %v4397 = vld [vmem:[#allocation2 + $0x20] sm:$0xff]
    %v4398 = vld [vmem:[#allocation2 + $0x28] sm:$0xff]
    %v4399 = vpack.c.bf16 %v4394, %v4393
    %v4400 = vpack.c.bf16 %v4396, %v4395
    %v4401 = vpack.c.bf16 %v4398, %v4397
    %s4402 = scalar_lea.vmem [#allocation7], 256
    %v4403 = vld [vmem:[%s4402] sm:$0xf]
    %v4404 = vld [vmem:[%s4402 + $0x4] sm:$0xf]
    %v4405 = vld [vmem:[%s4402 + $0x8] sm:$0xf]
    %v4406 = vld [vmem:[%s4402 + $0xc] sm:$0xf]
    %v4407 = vld [vmem:[%s4402 + $0x10] sm:$0xf]
    %v4408 = vld [vmem:[%s4402 + $0x14] sm:$0xf]
    %v4409 = vld [vmem:[%s4402 + $0x18] sm:$0xf]
    %v4410 = vld [vmem:[%s4402 + $0x1c] sm:$0xf]
    %v4411 = vld [vmem:[%s4402 + $0x20] sm:$0xf]
    %v4412 = vld [vmem:[%s4402 + $0x24] sm:$0xf]
    %v4413 = vld [vmem:[%s4402 + $0x28] sm:$0xf]
    %v4414 = vld [vmem:[%s4402 + $0x2c] sm:$0xf]
    %v4415 = vld [vmem:[%s4402 + $0x30] sm:$0xf]
    %v4416 = vld [vmem:[%s4402 + $0x34] sm:$0xf]
    %v4417 = vld [vmem:[%s4402 + $0x38] sm:$0xf]
    %v4418 = vld [vmem:[%s4402 + $0x3c] sm:$0xf]
    %s4419 = scalar_lea.vmem %s11, 4
    %v4420 = vld [vmem:[%s4419] sm:$0x1]
    %v4422 = vperm.slane %v4420, 0
    %v4440 = vunpack.c.l.b16 %v4403
    %v4441 = vunpack.c.l.b16 %v4404
    %v4442 = vunpack.c.l.b16 %v4405
    %v4443 = vunpack.c.l.b16 %v4406
    %v4444 = vunpack.c.l.b16 %v4407
    %v4445 = vunpack.c.l.b16 %v4408
    %v4446 = vunpack.c.l.b16 %v4409
    %v4447 = vunpack.c.l.b16 %v4410
    %v4448 = vunpack.c.l.b16 %v4411
    %v4449 = vunpack.c.l.b16 %v4412
    %v4450 = vunpack.c.l.b16 %v4413
    %v4451 = vunpack.c.l.b16 %v4414
    %v4452 = vunpack.c.l.b16 %v4415
    %v4453 = vunpack.c.l.b16 %v4416
    %v4454 = vunpack.c.l.b16 %v4417
    %v4455 = vunpack.c.l.b16 %v4418
    %v4456 = vpack.c.b16 %v4441, %v4440
    %v4457 = vpack.c.b16 %v4443, %v4442
    %v4458 = vpack.c.b16 %v4445, %v4444
    %v4459 = vpack.c.b16 %v4447, %v4446
    %v4460 = vpack.c.b16 %v4449, %v4448
    %v4461 = vpack.c.b16 %v4451, %v4450
    %v4462 = vpack.c.b16 %v4453, %v4452
    %v4463 = vpack.c.b16 %v4455, %v4454
    %4472 = vmatpush.bf16.msra.mxu0 %v4463
    %4473 = vmatpush.bf16.msra.mxu0 %v4462
    %4474 = vmatpush.bf16.msra.mxu0 %v4461
    %4475 = vmatpush.bf16.msra.mxu0 %v4460
    %4476 = vmatpush.bf16.msra.mxu0 %v4459
    %4477 = vmatpush.bf16.msra.mxu0 %v4458
    %4478 = vmatpush.bf16.msra.mxu0 %v4457
    %4479 = vmatpush.bf16.msra.mxu0 %v4456
    %4480 = vmatmul.bf16.gmra.mxu0 %v4399
    %v4481 = vpop.f32.mrf.mxu0
    %v4482 = vadd.f32 %v4422, %v4481
    %v4483 = vpop.f32.mrf.mxu0
    %v4484 = vadd.f32 %v4422, %v4483
    %4485 = vmatmul.bf16.gmra.mxu0 %v4400
    %v4486 = vpop.f32.mrf.mxu0
    %v4487 = vadd.f32 %v4422, %v4486
    %v4488 = vpop.f32.mrf.mxu0
    %v4489 = vadd.f32 %v4422, %v4488
    %4490 = vmatmul.bf16.gmra.mxu0 %v4401
    %v4491 = vpop.f32.mrf.mxu0
    %v4492 = vadd.f32 %v4422, %v4491
    %v4493 = vpop.f32.mrf.mxu0
    %v4494 = vadd.f32 %v4422, %v4493
    %4495 = vdwg.mxu0
    %s4496 = scalar_lea.vmem [#allocation8], 256
    %v4497 = vld [vmem:[%s4496] sm:$0xf]
    %v4498 = vld [vmem:[%s4496 + $0x4] sm:$0xf]
    %v4499 = vld [vmem:[%s4496 + $0x8] sm:$0xf]
    %v4500 = vld [vmem:[%s4496 + $0xc] sm:$0xf]
    %v4501 = vld [vmem:[%s4496 + $0x10] sm:$0xf]
    %v4502 = vld [vmem:[%s4496 + $0x14] sm:$0xf]
    %v4503 = vld [vmem:[%s4496 + $0x18] sm:$0xf]
    %v4504 = vld [vmem:[%s4496 + $0x1c] sm:$0xf]
    %v4505 = vld [vmem:[%s4496 + $0x20] sm:$0xf]
    %v4506 = vld [vmem:[%s4496 + $0x24] sm:$0xf]
    %v4507 = vld [vmem:[%s4496 + $0x28] sm:$0xf]
    %v4508 = vld [vmem:[%s4496 + $0x2c] sm:$0xf]
    %v4509 = vld [vmem:[%s4496 + $0x30] sm:$0xf]
    %v4510 = vld [vmem:[%s4496 + $0x34] sm:$0xf]
    %v4511 = vld [vmem:[%s4496 + $0x38] sm:$0xf]
    %v4512 = vld [vmem:[%s4496 + $0x3c] sm:$0xf]
    %v4529 = vunpack.c.l.b16 %v4497
    %v4530 = vunpack.c.l.b16 %v4498
    %v4531 = vunpack.c.l.b16 %v4499
    %v4532 = vunpack.c.l.b16 %v4500
    %v4533 = vunpack.c.l.b16 %v4501
    %v4534 = vunpack.c.l.b16 %v4502
    %v4535 = vunpack.c.l.b16 %v4503
    %v4536 = vunpack.c.l.b16 %v4504
    %v4537 = vunpack.c.l.b16 %v4505
    %v4538 = vunpack.c.l.b16 %v4506
    %v4539 = vunpack.c.l.b16 %v4507
    %v4540 = vunpack.c.l.b16 %v4508
    %v4541 = vunpack.c.l.b16 %v4509
    %v4542 = vunpack.c.l.b16 %v4510
    %v4543 = vunpack.c.l.b16 %v4511
    %v4544 = vunpack.c.l.b16 %v4512
    %v4545 = vpack.c.b16 %v4530, %v4529
    %v4546 = vpack.c.b16 %v4532, %v4531
    %v4547 = vpack.c.b16 %v4534, %v4533
    %v4548 = vpack.c.b16 %v4536, %v4535
    %v4549 = vpack.c.b16 %v4538, %v4537
    %v4550 = vpack.c.b16 %v4540, %v4539
    %v4551 = vpack.c.b16 %v4542, %v4541
    %v4552 = vpack.c.b16 %v4544, %v4543
    %4561 = vmatpush.bf16.msra.mxu0 %v4552
    %4562 = vmatpush.bf16.msra.mxu0 %v4551
    %4563 = vmatpush.bf16.msra.mxu0 %v4550
    %4564 = vmatpush.bf16.msra.mxu0 %v4549
    %4565 = vmatpush.bf16.msra.mxu0 %v4548
    %4566 = vmatpush.bf16.msra.mxu0 %v4547
    %4567 = vmatpush.bf16.msra.mxu0 %v4546
    %4568 = vmatpush.bf16.msra.mxu0 %v4545
    %4569 = vmatmul.bf16.gmra.mxu0 0
    %v4570 = vpop.f32.mrf.mxu0
    %v4571 = vadd.f32 0.0, %v4570
    %v4572 = vpop.f32.mrf.mxu0
    %4573 = vdwg.mxu0
    %v4574 = vadd.f32 %v4482, %v4571
    %v4575 = vxor.u32 %v4574, 2147483648
    %v4576 = vmul.f32 %v4575, 1.442695
    %v4577 = vpow.pop %v4576
    %v4578 = vadd.f32 %v4577, 1.0
    %v4579 = vrcp.pop %v4578
    %v4580 = vmul.f32 %v4578, %v4579
    %v4581 = vsub.f32 1.0, %v4580
    %v4582 = vmul.f32 %v4579, %v4581
    %v4583 = vadd.f32 %v4579, %v4582
    %vm4584 = vweird.f32 %v4578
    %vm4585 = vweird.f32 %v4579
    %vm4586 = vmor %vm4584, %vm4585
    %v4587 = vsel %vm4586, %v4579, %v4583
    %v4588 = vand.u32 2147483647, %v4578
    %vm4589 = vcmp.eq.f32.partialorder %v4588, 8.507059e+37
    %v4590 = vand.u32 %v4578, 2147483648
    %v4591 = vor.u32 1.1754944e-38, %v4590
    %v4592 = vsel %vm4589, %v4591, %v4587
    %v4593 = vmul.f32 1.0, %v4592
    %v4594 = vmul.f32 %v4593, %v133
    %v4595 = vadd.f32 %v4594, %v134
    %4596 = vrot.lane.b32.xlu0 %v4595, 96
    %v4597 = vpop.permute.xlu0 %4596
    %4598 = vrot.lane.b32.xlu0 %v4595, 64
    %v4599 = vpop.permute.xlu0 %4598
    %4600 = vrot.lane.b32.xlu0 %v4595, 32
    %v4601 = vpop.permute.xlu0 %4600
    %v4602 = vmul.f32 %v4597, 0.0
    %v4603 = vmul.f32 %v4595, %v4599
    %v4604 = vadd.f32 %v4602, %v4603
    %v4605 = vtanh.pop %v4604
    %v4606 = vmul.f32 %v4601, %v4605
    %4607 = vst [vmem:[#allocation2] sm:$0xff] %v4606
    %v4608 = vpack.c.bf16 %v4606, %v4606
    %4609 = vmatpush.bf16.msra.mxu0 %v4552
    %4610 = vmatpush.bf16.msra.mxu0 %v4551
    %4611 = vmatpush.bf16.msra.mxu0 %v4550
    %4612 = vmatpush.bf16.msra.mxu0 %v4549
    %4613 = vmatpush.bf16.msra.mxu0 %v4548
    %4614 = vmatpush.bf16.msra.mxu0 %v4547
    %4615 = vmatpush.bf16.msra.mxu0 %v4546
    %4616 = vmatpush.bf16.msra.mxu0 %v4545
    %4617 = vmatmul.bf16.gmra.mxu0 %v4608
    %v4618 = vpop.f32.mrf.mxu0
    %v4619 = vadd.f32 0.0, %v4618
    %v4620 = vpop.f32.mrf.mxu0
    %4621 = vdwg.mxu0
    %v4622 = vadd.f32 %v4484, %v4619
    %v4623 = vxor.u32 %v4622, 2147483648
    %v4624 = vmul.f32 %v4623, 1.442695
    %v4625 = vpow.pop %v4624
    %v4626 = vadd.f32 %v4625, 1.0
    %v4627 = vrcp.pop %v4626
    %v4628 = vmul.f32 %v4626, %v4627
    %v4629 = vsub.f32 1.0, %v4628
    %v4630 = vmul.f32 %v4627, %v4629
    %v4631 = vadd.f32 %v4627, %v4630
    %vm4632 = vweird.f32 %v4626
    %vm4633 = vweird.f32 %v4627
    %vm4634 = vmor %vm4632, %vm4633
    %v4635 = vsel %vm4634, %v4627, %v4631
    %v4636 = vand.u32 2147483647, %v4626
    %vm4637 = vcmp.eq.f32.partialorder %v4636, 8.507059e+37
    %v4638 = vand.u32 %v4626, 2147483648
    %v4639 = vor.u32 1.1754944e-38, %v4638
    %v4640 = vsel %vm4637, %v4639, %v4635
    %v4641 = vmul.f32 1.0, %v4640
    %v4642 = vmul.f32 %v4641, %v133
    %v4643 = vadd.f32 %v4642, %v134
    %4644 = vrot.lane.b32.xlu0 %v4643, 96
    %v4645 = vpop.permute.xlu0 %4644
    %4646 = vrot.lane.b32.xlu0 %v4643, 64
    %v4647 = vpop.permute.xlu0 %4646
    %4648 = vrot.lane.b32.xlu0 %v4643, 32
    %v4649 = vpop.permute.xlu0 %4648
    %v4650 = vmul.f32 %v4645, %v4604
    %v4651 = vmul.f32 %v4643, %v4647
    %v4652 = vadd.f32 %v4650, %v4651
    %v4653 = vtanh.pop %v4652
    %v4654 = vmul.f32 %v4649, %v4653
    %4655 = vst [vmem:[#allocation2 + $0x8] sm:$0xff] %v4654
    %v4656 = vpack.c.bf16 %v4654, %v4654
    %4657 = vmatpush.bf16.msra.mxu0 %v4552
    %4658 = vmatpush.bf16.msra.mxu0 %v4551
    %4659 = vmatpush.bf16.msra.mxu0 %v4550
    %4660 = vmatpush.bf16.msra.mxu0 %v4549
    %4661 = vmatpush.bf16.msra.mxu0 %v4548
    %4662 = vmatpush.bf16.msra.mxu0 %v4547
    %4663 = vmatpush.bf16.msra.mxu0 %v4546
    %4664 = vmatpush.bf16.msra.mxu0 %v4545
    %4665 = vmatmul.bf16.gmra.mxu0 %v4656
    %v4666 = vpop.f32.mrf.mxu0
    %v4667 = vadd.f32 0.0, %v4666
    %v4668 = vpop.f32.mrf.mxu0
    %4669 = vdwg.mxu0
    %v4670 = vadd.f32 %v4487, %v4667
    %v4671 = vxor.u32 %v4670, 2147483648
    %v4672 = vmul.f32 %v4671, 1.442695
    %v4673 = vpow.pop %v4672
    %v4674 = vadd.f32 %v4673, 1.0
    %v4675 = vrcp.pop %v4674
    %v4676 = vmul.f32 %v4674, %v4675
    %v4677 = vsub.f32 1.0, %v4676
    %v4678 = vmul.f32 %v4675, %v4677
    %v4679 = vadd.f32 %v4675, %v4678
    %vm4680 = vweird.f32 %v4674
    %vm4681 = vweird.f32 %v4675
    %vm4682 = vmor %vm4680, %vm4681
    %v4683 = vsel %vm4682, %v4675, %v4679
    %v4684 = vand.u32 2147483647, %v4674
    %vm4685 = vcmp.eq.f32.partialorder %v4684, 8.507059e+37
    %v4686 = vand.u32 %v4674, 2147483648
    %v4687 = vor.u32 1.1754944e-38, %v4686
    %v4688 = vsel %vm4685, %v4687, %v4683
    %v4689 = vmul.f32 1.0, %v4688
    %v4690 = vmul.f32 %v4689, %v133
    %v4691 = vadd.f32 %v4690, %v134
    %4692 = vrot.lane.b32.xlu0 %v4691, 96
    %v4693 = vpop.permute.xlu0 %4692
    %4694 = vrot.lane.b32.xlu0 %v4691, 64
    %v4695 = vpop.permute.xlu0 %4694
    %4696 = vrot.lane.b32.xlu0 %v4691, 32
    %v4697 = vpop.permute.xlu0 %4696
    %v4698 = vmul.f32 %v4693, %v4652
    %v4699 = vmul.f32 %v4691, %v4695
    %v4700 = vadd.f32 %v4698, %v4699
    %v4701 = vtanh.pop %v4700
    %v4702 = vmul.f32 %v4697, %v4701
    %4703 = vst [vmem:[#allocation2 + $0x10] sm:$0xff] %v4702
    %v4704 = vpack.c.bf16 %v4702, %v4702
    %4705 = vmatpush.bf16.msra.mxu0 %v4552
    %4706 = vmatpush.bf16.msra.mxu0 %v4551
    %4707 = vmatpush.bf16.msra.mxu0 %v4550
    %4708 = vmatpush.bf16.msra.mxu0 %v4549
    %4709 = vmatpush.bf16.msra.mxu0 %v4548
    %4710 = vmatpush.bf16.msra.mxu0 %v4547
    %4711 = vmatpush.bf16.msra.mxu0 %v4546
    %4712 = vmatpush.bf16.msra.mxu0 %v4545
    %4713 = vmatmul.bf16.gmra.mxu0 %v4704
    %v4714 = vpop.f32.mrf.mxu0
    %v4715 = vadd.f32 0.0, %v4714
    %v4716 = vpop.f32.mrf.mxu0
    %4717 = vdwg.mxu0
    %v4718 = vadd.f32 %v4489, %v4715
    %v4719 = vxor.u32 %v4718, 2147483648
    %v4720 = vmul.f32 %v4719, 1.442695
    %v4721 = vpow.pop %v4720
    %v4722 = vadd.f32 %v4721, 1.0
    %v4723 = vrcp.pop %v4722
    %v4724 = vmul.f32 %v4722, %v4723
    %v4725 = vsub.f32 1.0, %v4724
    %v4726 = vmul.f32 %v4723, %v4725
    %v4727 = vadd.f32 %v4723, %v4726
    %vm4728 = vweird.f32 %v4722
    %vm4729 = vweird.f32 %v4723
    %vm4730 = vmor %vm4728, %vm4729
    %v4731 = vsel %vm4730, %v4723, %v4727
    %v4732 = vand.u32 2147483647, %v4722
    %vm4733 = vcmp.eq.f32.partialorder %v4732, 8.507059e+37
    %v4734 = vand.u32 %v4722, 2147483648
    %v4735 = vor.u32 1.1754944e-38, %v4734
    %v4736 = vsel %vm4733, %v4735, %v4731
    %v4737 = vmul.f32 1.0, %v4736
    %v4738 = vmul.f32 %v4737, %v133
    %v4739 = vadd.f32 %v4738, %v134
    %4740 = vrot.lane.b32.xlu0 %v4739, 96
    %v4741 = vpop.permute.xlu0 %4740
    %4742 = vrot.lane.b32.xlu0 %v4739, 64
    %v4743 = vpop.permute.xlu0 %4742
    %4744 = vrot.lane.b32.xlu0 %v4739, 32
    %v4745 = vpop.permute.xlu0 %4744
    %v4746 = vmul.f32 %v4741, %v4700
    %v4747 = vmul.f32 %v4739, %v4743
    %v4748 = vadd.f32 %v4746, %v4747
    %v4749 = vtanh.pop %v4748
    %v4750 = vmul.f32 %v4745, %v4749
    %4751 = vst [vmem:[#allocation2 + $0x18] sm:$0xff] %v4750
    %v4752 = vpack.c.bf16 %v4750, %v4750
    %4753 = vmatpush.bf16.msra.mxu0 %v4552
    %4754 = vmatpush.bf16.msra.mxu0 %v4551
    %4755 = vmatpush.bf16.msra.mxu0 %v4550
    %4756 = vmatpush.bf16.msra.mxu0 %v4549
    %4757 = vmatpush.bf16.msra.mxu0 %v4548
    %4758 = vmatpush.bf16.msra.mxu0 %v4547
    %4759 = vmatpush.bf16.msra.mxu0 %v4546
    %4760 = vmatpush.bf16.msra.mxu0 %v4545
    %4761 = vmatmul.bf16.gmra.mxu0 %v4752
    %v4762 = vpop.f32.mrf.mxu0
    %v4763 = vadd.f32 0.0, %v4762
    %v4764 = vpop.f32.mrf.mxu0
    %4765 = vdwg.mxu0
    %v4766 = vadd.f32 %v4492, %v4763
    %v4767 = vxor.u32 %v4766, 2147483648
    %v4768 = vmul.f32 %v4767, 1.442695
    %v4769 = vpow.pop %v4768
    %v4770 = vadd.f32 %v4769, 1.0
    %v4771 = vrcp.pop %v4770
    %v4772 = vmul.f32 %v4770, %v4771
    %v4773 = vsub.f32 1.0, %v4772
    %v4774 = vmul.f32 %v4771, %v4773
    %v4775 = vadd.f32 %v4771, %v4774
    %vm4776 = vweird.f32 %v4770
    %vm4777 = vweird.f32 %v4771
    %vm4778 = vmor %vm4776, %vm4777
    %v4779 = vsel %vm4778, %v4771, %v4775
    %v4780 = vand.u32 2147483647, %v4770
    %vm4781 = vcmp.eq.f32.partialorder %v4780, 8.507059e+37
    %v4782 = vand.u32 %v4770, 2147483648
    %v4783 = vor.u32 1.1754944e-38, %v4782
    %v4784 = vsel %vm4781, %v4783, %v4779
    %v4785 = vmul.f32 1.0, %v4784
    %v4786 = vmul.f32 %v4785, %v133
    %v4787 = vadd.f32 %v4786, %v134
    %4788 = vrot.lane.b32.xlu0 %v4787, 96
    %v4789 = vpop.permute.xlu0 %4788
    %4790 = vrot.lane.b32.xlu0 %v4787, 64
    %v4791 = vpop.permute.xlu0 %4790
    %4792 = vrot.lane.b32.xlu0 %v4787, 32
    %v4793 = vpop.permute.xlu0 %4792
    %v4794 = vmul.f32 %v4789, %v4748
    %v4795 = vmul.f32 %v4787, %v4791
    %v4796 = vadd.f32 %v4794, %v4795
    %v4797 = vtanh.pop %v4796
    %v4798 = vmul.f32 %v4793, %v4797
    %4799 = vst [vmem:[#allocation2 + $0x20] sm:$0xff] %v4798
    %v4800 = vpack.c.bf16 %v4798, %v4798
    %4801 = vmatpush.bf16.msra.mxu0 %v4552
    %4802 = vmatpush.bf16.msra.mxu0 %v4551
    %4803 = vmatpush.bf16.msra.mxu0 %v4550
    %4804 = vmatpush.bf16.msra.mxu0 %v4549
    %4805 = vmatpush.bf16.msra.mxu0 %v4548
    %4806 = vmatpush.bf16.msra.mxu0 %v4547
    %4807 = vmatpush.bf16.msra.mxu0 %v4546
    %4808 = vmatpush.bf16.msra.mxu0 %v4545
    %4809 = vmatmul.bf16.gmra.mxu0 %v4800
    %v4810 = vpop.f32.mrf.mxu0
    %v4811 = vadd.f32 0.0, %v4810
    %v4812 = vpop.f32.mrf.mxu0
    %4813 = vdwg.mxu0
    %v4814 = vadd.f32 %v4494, %v4811
    %v4815 = vxor.u32 %v4814, 2147483648
    %v4816 = vmul.f32 %v4815, 1.442695
    %v4817 = vpow.pop %v4816
    %v4818 = vadd.f32 %v4817, 1.0
    %v4819 = vrcp.pop %v4818
    %v4820 = vmul.f32 %v4818, %v4819
    %v4821 = vsub.f32 1.0, %v4820
    %v4822 = vmul.f32 %v4819, %v4821
    %v4823 = vadd.f32 %v4819, %v4822
    %vm4824 = vweird.f32 %v4818
    %vm4825 = vweird.f32 %v4819
    %vm4826 = vmor %vm4824, %vm4825
    %v4827 = vsel %vm4826, %v4819, %v4823
    %v4828 = vand.u32 2147483647, %v4818
    %vm4829 = vcmp.eq.f32.partialorder %v4828, 8.507059e+37
    %v4830 = vand.u32 %v4818, 2147483648
    %v4831 = vor.u32 1.1754944e-38, %v4830
    %v4832 = vsel %vm4829, %v4831, %v4827
    %v4833 = vmul.f32 1.0, %v4832
    %v4834 = vmul.f32 %v4833, %v133
    %v4835 = vadd.f32 %v4834, %v134
    %4836 = vrot.lane.b32.xlu0 %v4835, 96
    %v4837 = vpop.permute.xlu0 %4836
    %4838 = vrot.lane.b32.xlu0 %v4835, 64
    %v4839 = vpop.permute.xlu0 %4838
    %4840 = vrot.lane.b32.xlu0 %v4835, 32
    %v4841 = vpop.permute.xlu0 %4840
    %v4842 = vmul.f32 %v4837, %v4796
    %v4843 = vmul.f32 %v4835, %v4839
    %v4844 = vadd.f32 %v4842, %v4843
    %v4845 = vtanh.pop %v4844
    %v4846 = vmul.f32 %v4841, %v4845
    %4847 = vst [vmem:[#allocation2 + $0x28] sm:$0xff] %v4846
    %v4848 = vld [vmem:[#allocation2] sm:$0xff]
    %v4849 = vld [vmem:[#allocation2 + $0x8] sm:$0xff]
    %v4850 = vld [vmem:[#allocation2 + $0x10] sm:$0xff]
    %v4851 = vld [vmem:[#allocation2 + $0x18] sm:$0xff]
    %v4852 = vld [vmem:[#allocation2 + $0x20] sm:$0xff]
    %v4853 = vld [vmem:[#allocation2 + $0x28] sm:$0xff]
    %v4854 = vpack.c.bf16 %v4849, %v4848
    %v4855 = vpack.c.bf16 %v4851, %v4850
    %v4856 = vpack.c.bf16 %v4853, %v4852
    %v4857 = vld [vmem:[#allocation10] sm:$0xf]
    %v4858 = vld [vmem:[#allocation10 + $0x4] sm:$0xf]
    %v4859 = vld [vmem:[#allocation10 + $0x8] sm:$0xf]
    %v4860 = vld [vmem:[#allocation10 + $0xc] sm:$0xf]
    %v4861 = vld [vmem:[#allocation10 + $0x10] sm:$0xf]
    %v4862 = vld [vmem:[#allocation10 + $0x14] sm:$0xf]
    %v4863 = vld [vmem:[#allocation10 + $0x18] sm:$0xf]
    %v4864 = vld [vmem:[#allocation10 + $0x1c] sm:$0xf]
    %v4865 = vld [vmem:[#allocation10 + $0x20] sm:$0xf]
    %v4866 = vld [vmem:[#allocation10 + $0x24] sm:$0xf]
    %v4867 = vld [vmem:[#allocation10 + $0x28] sm:$0xf]
    %v4868 = vld [vmem:[#allocation10 + $0x2c] sm:$0xf]
    %v4869 = vld [vmem:[#allocation10 + $0x30] sm:$0xf]
    %v4870 = vld [vmem:[#allocation10 + $0x34] sm:$0xf]
    %v4871 = vld [vmem:[#allocation10 + $0x38] sm:$0xf]
    %v4872 = vld [vmem:[#allocation10 + $0x3c] sm:$0xf]
    %v4873 = vld [vmem:[%s13] sm:$0x1]
    %v4875 = vperm.slane %v4873, 0
    %v4893 = vunpack.c.l.b16 %v4857
    %v4894 = vunpack.c.l.b16 %v4858
    %v4895 = vunpack.c.l.b16 %v4859
    %v4896 = vunpack.c.l.b16 %v4860
    %v4897 = vunpack.c.l.b16 %v4861
    %v4898 = vunpack.c.l.b16 %v4862
    %v4899 = vunpack.c.l.b16 %v4863
    %v4900 = vunpack.c.l.b16 %v4864
    %v4901 = vunpack.c.l.b16 %v4865
    %v4902 = vunpack.c.l.b16 %v4866
    %v4903 = vunpack.c.l.b16 %v4867
    %v4904 = vunpack.c.l.b16 %v4868
    %v4905 = vunpack.c.l.b16 %v4869
    %v4906 = vunpack.c.l.b16 %v4870
    %v4907 = vunpack.c.l.b16 %v4871
    %v4908 = vunpack.c.l.b16 %v4872
    %v4909 = vpack.c.b16 %v4894, %v4893
    %v4910 = vpack.c.b16 %v4896, %v4895
    %v4911 = vpack.c.b16 %v4898, %v4897
    %v4912 = vpack.c.b16 %v4900, %v4899
    %v4913 = vpack.c.b16 %v4902, %v4901
    %v4914 = vpack.c.b16 %v4904, %v4903
    %v4915 = vpack.c.b16 %v4906, %v4905
    %v4916 = vpack.c.b16 %v4908, %v4907
    %4925 = vmatpush.bf16.msra.mxu0 %v4916
    %4926 = vmatpush.bf16.msra.mxu0 %v4915
    %4927 = vmatpush.bf16.msra.mxu0 %v4914
    %4928 = vmatpush.bf16.msra.mxu0 %v4913
    %4929 = vmatpush.bf16.msra.mxu0 %v4912
    %4930 = vmatpush.bf16.msra.mxu0 %v4911
    %4931 = vmatpush.bf16.msra.mxu0 %v4910
    %4932 = vmatpush.bf16.msra.mxu0 %v4909
    %4933 = vmatmul.bf16.gmra.mxu0 %v4854
    %v4934 = vpop.f32.mrf.mxu0
    %v4935 = vadd.f32 %v4875, %v4934
    %v4936 = vpop.f32.mrf.mxu0
    %v4937 = vadd.f32 %v4875, %v4936
    %4938 = vmatmul.bf16.gmra.mxu0 %v4855
    %v4939 = vpop.f32.mrf.mxu0
    %v4940 = vadd.f32 %v4875, %v4939
    %v4941 = vpop.f32.mrf.mxu0
    %v4942 = vadd.f32 %v4875, %v4941
    %4943 = vmatmul.bf16.gmra.mxu0 %v4856
    %v4944 = vpop.f32.mrf.mxu0
    %v4945 = vadd.f32 %v4875, %v4944
    %v4946 = vpop.f32.mrf.mxu0
    %v4947 = vadd.f32 %v4875, %v4946
    %4948 = vdwg.mxu0
    %4949 = vst [vmem:[%s14] sm:$0xff] %v4935
    %4950 = vst [vmem:[%s14 + $0x8] sm:$0xff] %v4937
    %4951 = vst [vmem:[%s14 + $0x10] sm:$0xff] %v4940
    %4952 = vst [vmem:[%s14 + $0x18] sm:$0xff] %v4942
    %4953 = vst [vmem:[%s14 + $0x20] sm:$0xff] %v4945
    %4954 = vst [vmem:[%s14 + $0x28] sm:$0xff] %v4947
    // Predicated region
    $region78: #{taxon_vae_forward.1} parent=1 // pred_check
      _
    $region79: #{taxon_vae_forward.1} parent=1 // pred_check_branch
      %4956 = sbr.rel (0) target = $region81
    $region80: #{taxon_vae_forward.1} parent=1 // pred_region
      _
    $region81: #{taxon_vae_forward.1} parent=1 // pred_fallthru
      _
    // Predicated region
    $region82: #{taxon_vae_forward.1} parent=1 // pred_check
      _
    $region83: #{taxon_vae_forward.1} parent=1 // pred_check_branch
      %4958 = sbr.rel (0) target = $region85
    $region84: #{taxon_vae_forward.1} parent=1 // pred_region
      _
    $region85: #{taxon_vae_forward.1} parent=1 // pred_fallthru
      _
    // Predicated region
    $region86: #{taxon_vae_forward.1} parent=1 // pred_check
      _
    $region87: #{taxon_vae_forward.1} parent=1 // pred_check_branch
      %4960 = sbr.rel (0) target = $region89
    $region88: #{taxon_vae_forward.1} parent=1 // pred_region
      _
    $region89: #{taxon_vae_forward.1} parent=1 // pred_fallthru
      _
    // Predicated region
    $region90: #{taxon_vae_forward.1} parent=1 // pred_check
      _
    $region91: #{taxon_vae_forward.1} parent=1 // pred_check_branch
      %4962 = sbr.rel (0) target = $region93
    $region92: #{taxon_vae_forward.1} parent=1 // pred_region
      _
    $region93: #{taxon_vae_forward.1} parent=1 // pred_fallthru
      _
    %4963 = vsyncpa [#allocation4], 1
    %4964 = vsyncpa [#allocation6], 1
    %4965 = vsyncpa [#allocation9], 1

</llo_original>
